<compile_context>
chip_gen: v7x
topology: tpu7x:2x2x1
jax: 0.10.0
libtpu: 0.0.40
codegen_flags: <defaults>
</compile_context>

<pallas_src>
import math

import jax
import jax.numpy as jnp
from jax import lax
from jax.experimental import pallas as pl
from jax.experimental.pallas import tpu as pltpu

_INV_SQRT2 = 1.0 / math.sqrt(2.0)
_BN_EPS = 1e-5

_OFFSETS_3X3 = tuple((kh - 1, kw - 1) for kh in range(3) for kw in range(3))
_OFFSETS_7X7 = tuple((kh - 3, kw - 3) for kh in range(7) for kw in range(7))


def _gelu_exact(x):
    # matches torch.nn.GELU() default (erf-based, non-approximate)
    return 0.5 * x * (1.0 + lax.erf(x * _INV_SQRT2))


def _round_up(v, m):
    return ((v + m - 1) // m) * m


def _vmem_limit_bytes():
    """Scoped-VMEM cap: above the 16/32 MiB defaults, ~25% below physical."""
    fallback = 48 * 1024 * 1024  # safe on v5e/v6e (128 MiB) and v7x (64 MiB)
    try:
        info_fn = getattr(pltpu, "get_tpu_info", None)
        if info_fn is None:
            return fallback
        cap = getattr(info_fn(), "vmem_capacity_bytes", None)
        if not cap:
            return fallback
        return int(min(max(fallback, cap * 3 // 4), 100 * 1024 * 1024))
    except Exception:
        return fallback


def _pick_block_batch(n, c, hwp, vmem_limit_bytes):
    """Batch elements per grid step (amortize per-step overhead / fill VMEM)."""
    # ~10 live (C, HWp) f32 slabs per batch element (double-buffered in/out
    # blocks plus conv/attention intermediates).
    per_n = 10 * c * hwp * 4
    cap = max(1, (vmem_limit_bytes // 2) // per_n)
    cap = min(cap, 8)                      # bound kernel unrolling
    if n >= 2:
        cap = min(cap, n // 2)             # keep >= 2 grid steps (v7x: 2 TCs)
    cap = max(1, min(cap, n))
    nb = 1
    for d in range(1, cap + 1):            # largest divisor of n that fits
        if n % d == 0:
            nb = d
    return nb


def _make_cbam_kernel(nb, C, H, W, HWp):
    HW = H * W
    inv_hw = 1.0 / float(HW)

    def shift_flat(x2d, d):
        # y[:, i] = x2d[:, i + d], zero fill at the overhang (no wraparound).
        if d == 0:
            return x2d
        rows = x2d.shape[0]
        if abs(d) >= HWp:
            return jnp.zeros((rows, HWp), x2d.dtype)
        if d > 0:
            pad = jnp.zeros((rows, d), x2d.dtype)
            return jnp.concatenate([x2d[:, d:], pad], axis=1)
        pad = jnp.zeros((rows, -d), x2d.dtype)
        return jnp.concatenate([pad, x2d[:, : HWp + d]], axis=1)

    def kernel(x_ref, wa_ref, wb_ref, bn_ref, w1_ref, w2_ref, wsam_ref,
               idx_ref, o_ref):
        idx = idx_ref[...]                     # (3, HWp): [h, w, inside]
        hvec = idx[0:1, :]
        wvec = idx[1:2, :]
        inside = idx[2:3, :]                   # 1.0 where hw < H*W else 0.0

        def tap_mask(dy, dx):
            # valid iff the tap's source pixel (h+dy, w+dx) is inside the image
            # (== zero padding of the conv) and the output pixel is real.
            ok = ((hvec >= float(-dy)) & (hvec <= float(H - 1 - dy)) &
                  (wvec >= float(-dx)) & (wvec <= float(W - 1 - dx)))
            return jnp.where(ok, inside, 0.0)  # (1, HWp) in {0, 1}

        def conv3x3(xin, w_ref):
            acc = jnp.zeros((C, HWp), jnp.float32)
            for t, (dy, dx) in enumerate(_OFFSETS_3X3):
                sh = shift_flat(xin, dy * W + dx) * tap_mask(dy, dx)
                acc = acc + jnp.dot(w_ref[t], sh,
                                    preferred_element_type=jnp.float32)
            return acc

        w1 = w1_ref[...]                       # (Cr, C)
        w2 = w2_ref[...]                       # (C, Cr)

        for i in range(nb):                    # small, statically unrolled
            x_n = x_ref[i].astype(jnp.float32)             # (C, HWp)

            # ---- conv3x3 -> BN -> GELU -> conv3x3 -> BN (BN folded) ----
            y = conv3x3(x_n, wa_ref)
            y = y * bn_ref[0] + bn_ref[1]
            y = _gelu_exact(y)
            y = conv3x3(y, wb_ref)
            y = y * bn_ref[2] + bn_ref[3]

            # ---- CAM: fused max/avg pooled FC chain ----
            mx = jnp.max(jnp.where(inside > 0.5, y, -jnp.inf),
                         axis=1, keepdims=True)             # (C, 1)
            avg = jnp.sum(y * inside, axis=1, keepdims=True) * inv_hw
            pooled = jnp.concatenate([mx, avg], axis=1)      # (C, 2)
            hfc = _gelu_exact(jnp.dot(w1, pooled,
                                      preferred_element_type=jnp.float32))
            vfc = jnp.dot(w2, hfc, preferred_element_type=jnp.float32)  # (C,2)
            att_c = jax.nn.sigmoid(vfc[:, 0:1] + vfc[:, 1:2])           # (C,1)
            y = y * att_c

            # ---- SAM: channel mean/max -> 7x7 conv (2->1, pad 3) -> sigmoid --
            ch_avg = jnp.mean(y, axis=0, keepdims=True)      # (1, HWp)
            ch_max = jnp.max(y, axis=0, keepdims=True)       # (1, HWp)
            sm = jnp.concatenate([ch_avg, ch_max], axis=0)   # (2, HWp)
            acc = jnp.zeros((2, HWp), jnp.float32)
            for t, (dy, dx) in enumerate(_OFFSETS_7X7):
                sh = shift_flat(sm, dy * W + dx) * tap_mask(dy, dx)
                acc = acc + sh * wsam_ref[t]                 # (2,HWp)*(2,1)
            att_s = jax.nn.sigmoid(jnp.sum(acc, axis=0, keepdims=True))
            y = y * att_s

            # ---- residual + final GELU ----
            o_ref[i] = _gelu_exact(x_n + y).astype(o_ref.dtype)

    return kernel


def cbam_forward(x, conv1_w, bn1, conv2_w, bn2, cam_w1, cam_w2, sam_w):
    """CBAM forward.  x: (N, C, H, W) f32.  bn1/bn2: (gamma, beta, mean, var)."""
    N, C, H, W = x.shape
    Cr = cam_w1.shape[0]
    HW = H * W
    HWp = _round_up(HW, 128)                 # lane-dense last dim

    def fold_bn(p):
        g, b, m, v = p
        s = g / jnp.sqrt(v + _BN_EPS)
        return s, b - m * s

    s1, t1 = fold_bn(bn1)
    s2, t2 = fold_bn(bn2)
    bn = jnp.stack([s1, t1, s2, t2], axis=0).reshape(4, C, 1).astype(jnp.float32)

    # (C_out, C_in, 3, 3) -> (9, C_out, C_in), tap index t = kh*3 + kw
    wa = jnp.transpose(conv1_w.reshape(C, C, 9), (2, 0, 1)).astype(jnp.float32)
    wb = jnp.transpose(conv2_w.reshape(C, C, 9), (2, 0, 1)).astype(jnp.float32)
    # (1, 2, 7, 7) -> (49, 2, 1), tap index t = kh*7 + kw, channel 0 = avg
    wsam = jnp.transpose(sam_w.reshape(2, 49), (1, 0)).reshape(49, 2, 1)
    wsam = wsam.astype(jnp.float32)

    hw_idx = jnp.arange(HWp, dtype=jnp.int32)
    idx = jnp.stack([(hw_idx // W).astype(jnp.float32),
                     (hw_idx % W).astype(jnp.float32),
                     (hw_idx < HW).astype(jnp.float32)], axis=0)   # (3, HWp)

    x_flat = x.reshape(N, C, HW)
    if HWp != HW:
        x_flat = jnp.pad(x_flat, ((0, 0), (0, 0), (0, HWp - HW)))

    vmem_limit = _vmem_limit_bytes()
    nb = _pick_block_batch(N, C, HWp, vmem_limit)
    grid = (N // nb,)

    # NOTE: for very large C*HW (per-element slab + intermediates beyond the
    # VMEM budget even at nb=1, e.g. on v7x's 64 MiB) a two-pass pool/apply
    # split over HW would be needed; realistic CBAM feature maps fit as-is.
    kernel = _make_cbam_kernel(nb, C, H, W, HWp)

    out_flat = pl.pallas_call(
        kernel,
        out_shape=jax.ShapeDtypeStruct((N, C, HWp), x.dtype),
        grid_spec=pltpu.PrefetchScalarGridSpec(
            num_scalar_prefetch=0,
            grid=grid,
            in_specs=[
                pl.BlockSpec((nb, C, HWp), lambda g: (g, 0, 0)),   # x
                pl.BlockSpec((9, C, C), lambda g: (0, 0, 0)),      # conv1 taps
                pl.BlockSpec((9, C, C), lambda g: (0, 0, 0)),      # conv2 taps
                pl.BlockSpec((4, C, 1), lambda g: (0, 0, 0)),      # BN scale/shift
                pl.BlockSpec((Cr, C), lambda g: (0, 0)),           # CAM fc1
                pl.BlockSpec((C, Cr), lambda g: (0, 0)),           # CAM fc2
                pl.BlockSpec((49, 2, 1), lambda g: (0, 0, 0)),     # SAM 7x7 taps
                pl.BlockSpec((3, HWp), lambda g: (0, 0)),          # h/w/inside
            ],
            out_specs=pl.BlockSpec((nb, C, HWp), lambda g: (g, 0, 0)),
        ),
        compiler_params=pltpu.CompilerParams(
            dimension_semantics=("parallel",),
            vmem_limit_bytes=vmem_limit),
    )(x_flat, wa, wb, bn, cam_w1.astype(jnp.float32),
      cam_w2.astype(jnp.float32), wsam, idx)

    if HWp != HW:
        out_flat = out_flat[..., :HW]
    return out_flat.reshape(N, C, H, W)


def _reference(x, conv1_w, bn1, conv2_w, bn2, cam_w1, cam_w2, sam_w):
    """Pure-JAX reference (eval-mode BN), for correctness checking."""
    def conv(v, w, pad):
        return lax.conv_general_dilated(
            v, w, window_strides=(1, 1), padding=((pad, pad), (pad, pad)),
            dimension_numbers=("NCHW", "OIHW", "NCHW"),
            precision=lax.Precision.HIGHEST)

    def bn(v, p):
        g, b, m, var = p
        s = g / jnp.sqrt(var + _BN_EPS)
        return v * s[None, :, None, None] + (b - m * s)[None, :, None, None]

    y = bn(conv(x, conv1_w, 1), bn1)
    y = _gelu_exact(y)
    y = bn(conv(y, conv2_w, 1), bn2)

    # CAM
    mx = jnp.max(y, axis=(2, 3))
    avg = jnp.mean(y, axis=(2, 3))

    def fc(v):
        h = _gelu_exact(jnp.dot(v, cam_w1.T, precision=lax.Precision.HIGHEST))
        return jnp.dot(h, cam_w2.T, precision=lax.Precision.HIGHEST)

    att_c = jax.nn.sigmoid(fc(mx) + fc(avg))[:, :, None, None]
    y = y * att_c

    # SAM
    s = jnp.concatenate([jnp.mean(y, axis=1, keepdims=True),
                         jnp.max(y, axis=1, keepdims=True)], axis=1)
    att_s = jax.nn.sigmoid(conv(s, sam_w, 3))
    y = y * att_s

    return _gelu_exact(x + y)


if __name__ == "__main__":
    key = jax.random.PRNGKey(0)
    keys = jax.random.split(key, 15)

    N, C, H, W = 2, 32, 16, 16
    reduction = 16
    Cr = C // reduction

    x = jax.random.normal(keys[0], (N, C, H, W), dtype=jnp.float32)
    conv1_w = jax.random.normal(keys[1], (C, C, 3, 3), jnp.float32) / math.sqrt(C * 9)
    conv2_w = jax.random.normal(keys[2], (C, C, 3, 3), jnp.float32) / math.sqrt(C * 9)
    bn1 = (1.0 + 0.1 * jax.random.normal(keys[3], (C,), jnp.float32),
           0.1 * jax.random.normal(keys[4], (C,), jnp.float32),
           0.1 * jax.random.normal(keys[5], (C,), jnp.float32),
           1.0 + 0.1 * jnp.abs(jax.random.normal(keys[6], (C,), jnp.float32)))
    bn2 = (1.0 + 0.1 * jax.random.normal(keys[7], (C,), jnp.float32),
           0.1 * jax.random.normal(keys[8], (C,), jnp.float32),
           0.1 * jax.random.normal(keys[9], (C,), jnp.float32),
           1.0 + 0.1 * jnp.abs(jax.random.normal(keys[10], (C,), jnp.float32)))
    cam_w1 = jax.random.normal(keys[11], (Cr, C), jnp.float32) / math.sqrt(C)
    cam_w2 = jax.random.normal(keys[12], (C, Cr), jnp.float32) / math.sqrt(Cr)
    sam_w = jax.random.normal(keys[13], (1, 2, 7, 7), jnp.float32) / math.sqrt(2 * 49)

    out = jax.block_until_ready(
        cbam_forward(x, conv1_w, bn1, conv2_w, bn2, cam_w1, cam_w2, sam_w))
    ref = _reference(x, conv1_w, bn1, conv2_w, bn2, cam_w1, cam_w2, sam_w)
    assert out.shape == x.shape
    err = float(jnp.max(jnp.abs(out - ref)))
    # tolerance covers MXU multi-pass f32 rounding vs XLA conv; structural bugs
    # (wrong shift/mask/weight mapping) produce errors orders of magnitude larger
    assert err < 2e-2, f"mismatch vs reference: max abs err {err}"

    # Non-multiple-of-128 spatial size: exercises lane padding + masked pooling.
    H2, W2 = 14, 14
    x2 = jax.random.normal(keys[14], (N, C, H2, W2), dtype=jnp.float32)
    out2 = jax.block_until_ready(
        cbam_forward(x2, conv1_w, bn1, conv2_w, bn2, cam_w1, cam_w2, sam_w))
    ref2 = _reference(x2, conv1_w, bn1, conv2_w, bn2, cam_w1, cam_w2, sam_w)
    err2 = float(jnp.max(jnp.abs(out2 - ref2)))
    assert err2 < 2e-2, f"padded-HW mismatch vs reference: max abs err {err2}"

    print("KERNEL_OK")
</pallas_src>

<mosaic_0001>
module attributes {stable_mosaic.version = 11 : i64} {
  func.func @kernel(%arg0: i32, %arg1: memref<1x32x256xf32, #tpu.memory_space<vmem>>, %arg2: memref<9x32x32xf32, #tpu.memory_space<vmem>>, %arg3: memref<9x32x32xf32, #tpu.memory_space<vmem>>, %arg4: memref<4x32x1xf32, #tpu.memory_space<vmem>>, %arg5: memref<2x32xf32, #tpu.memory_space<vmem>>, %arg6: memref<32x2xf32, #tpu.memory_space<vmem>>, %arg7: memref<49x2x1xf32, #tpu.memory_space<vmem>>, %arg8: memref<3x256xf32, #tpu.memory_space<vmem>>, %arg9: memref<1x32x256xf32, #tpu.memory_space<vmem>>) attributes {dimension_semantics = [#tpu.dimension_semantics<parallel>], iteration_bounds = array<i64: 2>, scalar_prefetch = 0 : i64, scratch_operands = 0 : i64, tpu.core_type = #tpu.core_type<tc>, window_params = [{transform_indices = @transform_0, window_bounds = array<i64: 1, 32, 256>}, {pipeline_mode = #tpu.pipeline_mode<synchronous>, transform_indices = @transform_1, window_bounds = array<i64: 9, 32, 32>}, {pipeline_mode = #tpu.pipeline_mode<synchronous>, transform_indices = @transform_2, window_bounds = array<i64: 9, 32, 32>}, {pipeline_mode = #tpu.pipeline_mode<synchronous>, transform_indices = @transform_3, window_bounds = array<i64: 4, 32, 1>}, {pipeline_mode = #tpu.pipeline_mode<synchronous>, transform_indices = @transform_4, window_bounds = array<i64: 2, 32>}, {pipeline_mode = #tpu.pipeline_mode<synchronous>, transform_indices = @transform_5, window_bounds = array<i64: 32, 2>}, {pipeline_mode = #tpu.pipeline_mode<synchronous>, transform_indices = @transform_6, window_bounds = array<i64: 49, 2, 1>}, {pipeline_mode = #tpu.pipeline_mode<synchronous>, transform_indices = @transform_7, window_bounds = array<i64: 3, 256>}, {transform_indices = @transform_8, window_bounds = array<i64: 1, 32, 256>}]} {
    %c0 = arith.constant 0 : index
    %c0_0 = arith.constant 0 : index
    %0 = vector.load %arg8[%c0, %c0_0] : memref<3x256xf32, #tpu.memory_space<vmem>>, vector<3x256xf32>
    %1 = vector.extract_strided_slice %0 {offsets = [0, 0], sizes = [1, 256], strides = [1, 1]} : vector<3x256xf32> to vector<1x256xf32>
    %2 = vector.extract_strided_slice %0 {offsets = [1, 0], sizes = [1, 256], strides = [1, 1]} : vector<3x256xf32> to vector<1x256xf32>
    %3 = vector.extract_strided_slice %0 {offsets = [2, 0], sizes = [1, 256], strides = [1, 1]} : vector<3x256xf32> to vector<1x256xf32>
    %c0_1 = arith.constant 0 : index
    %c0_2 = arith.constant 0 : index
    %4 = vector.load %arg5[%c0_1, %c0_2] : memref<2x32xf32, #tpu.memory_space<vmem>>, vector<2x32xf32>
    %c0_3 = arith.constant 0 : index
    %c0_4 = arith.constant 0 : index
    %5 = vector.load %arg6[%c0_3, %c0_4] : memref<32x2xf32, #tpu.memory_space<vmem>>, vector<32x2xf32>
    %c0_5 = arith.constant 0 : index
    %c0_6 = arith.constant 0 : index
    %c0_7 = arith.constant 0 : index
    %6 = vector.load %arg1[%c0_5, %c0_6, %c0_7] : memref<1x32x256xf32, #tpu.memory_space<vmem>>, vector<1x32x256xf32>
    %7 = vector.shape_cast %6 : vector<1x32x256xf32> to vector<32x256xf32>
    %cst = arith.constant 0.000000e+00 : f32
    %8 = vector.broadcast %cst : f32 to vector<32x256xf32>
    %cst_8 = arith.constant 0.000000e+00 : f32
    %9 = vector.broadcast %cst_8 : f32 to vector<32x17xf32>
    %10 = vector.extract_strided_slice %7 {offsets = [0, 0], sizes = [32, 239], strides = [1, 1]} : vector<32x256xf32> to vector<32x239xf32>
    %11 = tpu.concatenate %9, %10 in 1 : vector<32x17xf32>, vector<32x239xf32> -> vector<32x256xf32>
    %cst_9 = arith.constant 1.000000e+00 : f32
    %12 = vector.broadcast %cst_9 : f32 to vector<1x256xf32>
    %13 = arith.cmpf oge, %1, %12 : vector<1x256xf32>
    %cst_10 = arith.constant 1.600000e+01 : f32
    %14 = vector.broadcast %cst_10 : f32 to vector<1x256xf32>
    %15 = arith.cmpf ole, %1, %14 : vector<1x256xf32>
    %16 = arith.andi %13, %15 : vector<1x256xi1>
    %cst_11 = arith.constant 1.000000e+00 : f32
    %17 = vector.broadcast %cst_11 : f32 to vector<1x256xf32>
    %18 = arith.cmpf oge, %2, %17 : vector<1x256xf32>
    %19 = arith.andi %16, %18 : vector<1x256xi1>
    %cst_12 = arith.constant 1.600000e+01 : f32
    %20 = vector.broadcast %cst_12 : f32 to vector<1x256xf32>
    %21 = arith.cmpf ole, %2, %20 : vector<1x256xf32>
    %22 = arith.andi %19, %21 : vector<1x256xi1>
    %cst_13 = arith.constant 0.000000e+00 : f32
    %23 = vector.broadcast %cst_13 : f32 to vector<1x256xf32>
    %24 = arith.select %22, %3, %23 : vector<1x256xi1>, vector<1x256xf32>
    %25 = vector.broadcast %24 : vector<1x256xf32> to vector<32x256xf32>
    %26 = arith.mulf %11, %25 : vector<32x256xf32>
    %c0_14 = arith.constant 0 : index
    %c0_15 = arith.constant 0 : index
    %c0_16 = arith.constant 0 : index
    %27 = vector.load %arg2[%c0_14, %c0_15, %c0_16] : memref<9x32x32xf32, #tpu.memory_space<vmem>>, vector<1x32x32xf32>
    %28 = vector.shape_cast %27 : vector<1x32x32xf32> to vector<32x32xf32>
    %cst_17 = arith.constant dense<0.000000e+00> : vector<32x256xf32>
    %29 = tpu.matmul %28, %26, %cst_17 {dimension_numbers = #tpu.dot_dimension_numbers<[1], [0], [0], [1], [0, 0, 1, 1], [], []>} : vector<32x32xf32>, vector<32x256xf32>, vector<32x256xf32> -> vector<32x256xf32>
    %30 = arith.addf %8, %29 : vector<32x256xf32>
    %cst_18 = arith.constant 0.000000e+00 : f32
    %31 = vector.broadcast %cst_18 : f32 to vector<32x16xf32>
    %32 = vector.extract_strided_slice %7 {offsets = [0, 0], sizes = [32, 240], strides = [1, 1]} : vector<32x256xf32> to vector<32x240xf32>
    %33 = tpu.concatenate %31, %32 in 1 : vector<32x16xf32>, vector<32x240xf32> -> vector<32x256xf32>
    %cst_19 = arith.constant 1.000000e+00 : f32
    %34 = vector.broadcast %cst_19 : f32 to vector<1x256xf32>
    %35 = arith.cmpf oge, %1, %34 : vector<1x256xf32>
    %cst_20 = arith.constant 1.600000e+01 : f32
    %36 = vector.broadcast %cst_20 : f32 to vector<1x256xf32>
    %37 = arith.cmpf ole, %1, %36 : vector<1x256xf32>
    %38 = arith.andi %35, %37 : vector<1x256xi1>
    %cst_21 = arith.constant 0.000000e+00 : f32
    %39 = vector.broadcast %cst_21 : f32 to vector<1x256xf32>
    %40 = arith.cmpf oge, %2, %39 : vector<1x256xf32>
    %41 = arith.andi %38, %40 : vector<1x256xi1>
    %cst_22 = arith.constant 1.500000e+01 : f32
    %42 = vector.broadcast %cst_22 : f32 to vector<1x256xf32>
    %43 = arith.cmpf ole, %2, %42 : vector<1x256xf32>
    %44 = arith.andi %41, %43 : vector<1x256xi1>
    %cst_23 = arith.constant 0.000000e+00 : f32
    %45 = vector.broadcast %cst_23 : f32 to vector<1x256xf32>
    %46 = arith.select %44, %3, %45 : vector<1x256xi1>, vector<1x256xf32>
    %47 = vector.broadcast %46 : vector<1x256xf32> to vector<32x256xf32>
    %48 = arith.mulf %33, %47 : vector<32x256xf32>
    %c1 = arith.constant 1 : index
    %c0_24 = arith.constant 0 : index
    %c0_25 = arith.constant 0 : index
    %49 = vector.load %arg2[%c1, %c0_24, %c0_25] : memref<9x32x32xf32, #tpu.memory_space<vmem>>, vector<1x32x32xf32>
    %50 = vector.shape_cast %49 : vector<1x32x32xf32> to vector<32x32xf32>
    %cst_26 = arith.constant dense<0.000000e+00> : vector<32x256xf32>
    %51 = tpu.matmul %50, %48, %cst_26 {dimension_numbers = #tpu.dot_dimension_numbers<[1], [0], [0], [1], [0, 0, 1, 1], [], []>} : vector<32x32xf32>, vector<32x256xf32>, vector<32x256xf32> -> vector<32x256xf32>
    %52 = arith.addf %30, %51 : vector<32x256xf32>
    %cst_27 = arith.constant 0.000000e+00 : f32
    %53 = vector.broadcast %cst_27 : f32 to vector<32x15xf32>
    %54 = vector.extract_strided_slice %7 {offsets = [0, 0], sizes = [32, 241], strides = [1, 1]} : vector<32x256xf32> to vector<32x241xf32>
    %55 = tpu.concatenate %53, %54 in 1 : vector<32x15xf32>, vector<32x241xf32> -> vector<32x256xf32>
    %cst_28 = arith.constant 1.000000e+00 : f32
    %56 = vector.broadcast %cst_28 : f32 to vector<1x256xf32>
    %57 = arith.cmpf oge, %1, %56 : vector<1x256xf32>
    %cst_29 = arith.constant 1.600000e+01 : f32
    %58 = vector.broadcast %cst_29 : f32 to vector<1x256xf32>
    %59 = arith.cmpf ole, %1, %58 : vector<1x256xf32>
    %60 = arith.andi %57, %59 : vector<1x256xi1>
    %cst_30 = arith.constant -1.000000e+00 : f32
    %61 = vector.broadcast %cst_30 : f32 to vector<1x256xf32>
    %62 = arith.cmpf oge, %2, %61 : vector<1x256xf32>
    %63 = arith.andi %60, %62 : vector<1x256xi1>
    %cst_31 = arith.constant 1.400000e+01 : f32
    %64 = vector.broadcast %cst_31 : f32 to vector<1x256xf32>
    %65 = arith.cmpf ole, %2, %64 : vector<1x256xf32>
    %66 = arith.andi %63, %65 : vector<1x256xi1>
    %cst_32 = arith.constant 0.000000e+00 : f32
    %67 = vector.broadcast %cst_32 : f32 to vector<1x256xf32>
    %68 = arith.select %66, %3, %67 : vector<1x256xi1>, vector<1x256xf32>
    %69 = vector.broadcast %68 : vector<1x256xf32> to vector<32x256xf32>
    %70 = arith.mulf %55, %69 : vector<32x256xf32>
    %c2 = arith.constant 2 : index
    %c0_33 = arith.constant 0 : index
    %c0_34 = arith.constant 0 : index
    %71 = vector.load %arg2[%c2, %c0_33, %c0_34] : memref<9x32x32xf32, #tpu.memory_space<vmem>>, vector<1x32x32xf32>
    %72 = vector.shape_cast %71 : vector<1x32x32xf32> to vector<32x32xf32>
    %cst_35 = arith.constant dense<0.000000e+00> : vector<32x256xf32>
    %73 = tpu.matmul %72, %70, %cst_35 {dimension_numbers = #tpu.dot_dimension_numbers<[1], [0], [0], [1], [0, 0, 1, 1], [], []>} : vector<32x32xf32>, vector<32x256xf32>, vector<32x256xf32> -> vector<32x256xf32>
    %74 = arith.addf %52, %73 : vector<32x256xf32>
    %cst_36 = arith.constant 0.000000e+00 : f32
    %75 = vector.broadcast %cst_36 : f32 to vector<32x1xf32>
    %76 = vector.extract_strided_slice %7 {offsets = [0, 0], sizes = [32, 255], strides = [1, 1]} : vector<32x256xf32> to vector<32x255xf32>
    %77 = tpu.concatenate %75, %76 in 1 : vector<32x1xf32>, vector<32x255xf32> -> vector<32x256xf32>
    %cst_37 = arith.constant 0.000000e+00 : f32
    %78 = vector.broadcast %cst_37 : f32 to vector<1x256xf32>
    %79 = arith.cmpf oge, %1, %78 : vector<1x256xf32>
    %cst_38 = arith.constant 1.500000e+01 : f32
    %80 = vector.broadcast %cst_38 : f32 to vector<1x256xf32>
    %81 = arith.cmpf ole, %1, %80 : vector<1x256xf32>
    %82 = arith.andi %79, %81 : vector<1x256xi1>
    %cst_39 = arith.constant 1.000000e+00 : f32
    %83 = vector.broadcast %cst_39 : f32 to vector<1x256xf32>
    %84 = arith.cmpf oge, %2, %83 : vector<1x256xf32>
    %85 = arith.andi %82, %84 : vector<1x256xi1>
    %cst_40 = arith.constant 1.600000e+01 : f32
    %86 = vector.broadcast %cst_40 : f32 to vector<1x256xf32>
    %87 = arith.cmpf ole, %2, %86 : vector<1x256xf32>
    %88 = arith.andi %85, %87 : vector<1x256xi1>
    %cst_41 = arith.constant 0.000000e+00 : f32
    %89 = vector.broadcast %cst_41 : f32 to vector<1x256xf32>
    %90 = arith.select %88, %3, %89 : vector<1x256xi1>, vector<1x256xf32>
    %91 = vector.broadcast %90 : vector<1x256xf32> to vector<32x256xf32>
    %92 = arith.mulf %77, %91 : vector<32x256xf32>
    %c3 = arith.constant 3 : index
    %c0_42 = arith.constant 0 : index
    %c0_43 = arith.constant 0 : index
    %93 = vector.load %arg2[%c3, %c0_42, %c0_43] : memref<9x32x32xf32, #tpu.memory_space<vmem>>, vector<1x32x32xf32>
    %94 = vector.shape_cast %93 : vector<1x32x32xf32> to vector<32x32xf32>
    %cst_44 = arith.constant dense<0.000000e+00> : vector<32x256xf32>
    %95 = tpu.matmul %94, %92, %cst_44 {dimension_numbers = #tpu.dot_dimension_numbers<[1], [0], [0], [1], [0, 0, 1, 1], [], []>} : vector<32x32xf32>, vector<32x256xf32>, vector<32x256xf32> -> vector<32x256xf32>
    %96 = arith.addf %74, %95 : vector<32x256xf32>
    %cst_45 = arith.constant 0.000000e+00 : f32
    %97 = vector.broadcast %cst_45 : f32 to vector<1x256xf32>
    %98 = arith.cmpf oge, %1, %97 : vector<1x256xf32>
    %cst_46 = arith.constant 1.500000e+01 : f32
    %99 = vector.broadcast %cst_46 : f32 to vector<1x256xf32>
    %100 = arith.cmpf ole, %1, %99 : vector<1x256xf32>
    %101 = arith.andi %98, %100 : vector<1x256xi1>
    %cst_47 = arith.constant 0.000000e+00 : f32
    %102 = vector.broadcast %cst_47 : f32 to vector<1x256xf32>
    %103 = arith.cmpf oge, %2, %102 : vector<1x256xf32>
    %104 = arith.andi %101, %103 : vector<1x256xi1>
    %cst_48 = arith.constant 1.500000e+01 : f32
    %105 = vector.broadcast %cst_48 : f32 to vector<1x256xf32>
    %106 = arith.cmpf ole, %2, %105 : vector<1x256xf32>
    %107 = arith.andi %104, %106 : vector<1x256xi1>
    %cst_49 = arith.constant 0.000000e+00 : f32
    %108 = vector.broadcast %cst_49 : f32 to vector<1x256xf32>
    %109 = arith.select %107, %3, %108 : vector<1x256xi1>, vector<1x256xf32>
    %110 = vector.broadcast %109 : vector<1x256xf32> to vector<32x256xf32>
    %111 = arith.mulf %7, %110 : vector<32x256xf32>
    %c4 = arith.constant 4 : index
    %c0_50 = arith.constant 0 : index
    %c0_51 = arith.constant 0 : index
    %112 = vector.load %arg2[%c4, %c0_50, %c0_51] : memref<9x32x32xf32, #tpu.memory_space<vmem>>, vector<1x32x32xf32>
    %113 = vector.shape_cast %112 : vector<1x32x32xf32> to vector<32x32xf32>
    %cst_52 = arith.constant dense<0.000000e+00> : vector<32x256xf32>
    %114 = tpu.matmul %113, %111, %cst_52 {dimension_numbers = #tpu.dot_dimension_numbers<[1], [0], [0], [1], [0, 0, 1, 1], [], []>} : vector<32x32xf32>, vector<32x256xf32>, vector<32x256xf32> -> vector<32x256xf32>
    %115 = arith.addf %96, %114 : vector<32x256xf32>
    %cst_53 = arith.constant 0.000000e+00 : f32
    %116 = vector.broadcast %cst_53 : f32 to vector<32x1xf32>
    %117 = vector.extract_strided_slice %7 {offsets = [0, 1], sizes = [32, 255], strides = [1, 1]} : vector<32x256xf32> to vector<32x255xf32>
    %118 = tpu.concatenate %117, %116 in 1 : vector<32x255xf32>, vector<32x1xf32> -> vector<32x256xf32>
    %cst_54 = arith.constant 0.000000e+00 : f32
    %119 = vector.broadcast %cst_54 : f32 to vector<1x256xf32>
    %120 = arith.cmpf oge, %1, %119 : vector<1x256xf32>
    %cst_55 = arith.constant 1.500000e+01 : f32
    %121 = vector.broadcast %cst_55 : f32 to vector<1x256xf32>
    %122 = arith.cmpf ole, %1, %121 : vector<1x256xf32>
    %123 = arith.andi %120, %122 : vector<1x256xi1>
    %cst_56 = arith.constant -1.000000e+00 : f32
    %124 = vector.broadcast %cst_56 : f32 to vector<1x256xf32>
    %125 = arith.cmpf oge, %2, %124 : vector<1x256xf32>
    %126 = arith.andi %123, %125 : vector<1x256xi1>
    %cst_57 = arith.constant 1.400000e+01 : f32
    %127 = vector.broadcast %cst_57 : f32 to vector<1x256xf32>
    %128 = arith.cmpf ole, %2, %127 : vector<1x256xf32>
    %129 = arith.andi %126, %128 : vector<1x256xi1>
    %cst_58 = arith.constant 0.000000e+00 : f32
    %130 = vector.broadcast %cst_58 : f32 to vector<1x256xf32>
    %131 = arith.select %129, %3, %130 : vector<1x256xi1>, vector<1x256xf32>
    %132 = vector.broadcast %131 : vector<1x256xf32> to vector<32x256xf32>
    %133 = arith.mulf %118, %132 : vector<32x256xf32>
    %c5 = arith.constant 5 : index
    %c0_59 = arith.constant 0 : index
    %c0_60 = arith.constant 0 : index
    %134 = vector.load %arg2[%c5, %c0_59, %c0_60] : memref<9x32x32xf32, #tpu.memory_space<vmem>>, vector<1x32x32xf32>
    %135 = vector.shape_cast %134 : vector<1x32x32xf32> to vector<32x32xf32>
    %cst_61 = arith.constant dense<0.000000e+00> : vector<32x256xf32>
    %136 = tpu.matmul %135, %133, %cst_61 {dimension_numbers = #tpu.dot_dimension_numbers<[1], [0], [0], [1], [0, 0, 1, 1], [], []>} : vector<32x32xf32>, vector<32x256xf32>, vector<32x256xf32> -> vector<32x256xf32>
    %137 = arith.addf %115, %136 : vector<32x256xf32>
    %cst_62 = arith.constant 0.000000e+00 : f32
    %138 = vector.broadcast %cst_62 : f32 to vector<32x15xf32>
    %139 = vector.extract_strided_slice %7 {offsets = [0, 15], sizes = [32, 241], strides = [1, 1]} : vector<32x256xf32> to vector<32x241xf32>
    %140 = tpu.concatenate %139, %138 in 1 : vector<32x241xf32>, vector<32x15xf32> -> vector<32x256xf32>
    %cst_63 = arith.constant -1.000000e+00 : f32
    %141 = vector.broadcast %cst_63 : f32 to vector<1x256xf32>
    %142 = arith.cmpf oge, %1, %141 : vector<1x256xf32>
    %cst_64 = arith.constant 1.400000e+01 : f32
    %143 = vector.broadcast %cst_64 : f32 to vector<1x256xf32>
    %144 = arith.cmpf ole, %1, %143 : vector<1x256xf32>
    %145 = arith.andi %142, %144 : vector<1x256xi1>
    %cst_65 = arith.constant 1.000000e+00 : f32
    %146 = vector.broadcast %cst_65 : f32 to vector<1x256xf32>
    %147 = arith.cmpf oge, %2, %146 : vector<1x256xf32>
    %148 = arith.andi %145, %147 : vector<1x256xi1>
    %cst_66 = arith.constant 1.600000e+01 : f32
    %149 = vector.broadcast %cst_66 : f32 to vector<1x256xf32>
    %150 = arith.cmpf ole, %2, %149 : vector<1x256xf32>
    %151 = arith.andi %148, %150 : vector<1x256xi1>
    %cst_67 = arith.constant 0.000000e+00 : f32
    %152 = vector.broadcast %cst_67 : f32 to vector<1x256xf32>
    %153 = arith.select %151, %3, %152 : vector<1x256xi1>, vector<1x256xf32>
    %154 = vector.broadcast %153 : vector<1x256xf32> to vector<32x256xf32>
    %155 = arith.mulf %140, %154 : vector<32x256xf32>
    %c6 = arith.constant 6 : index
    %c0_68 = arith.constant 0 : index
    %c0_69 = arith.constant 0 : index
    %156 = vector.load %arg2[%c6, %c0_68, %c0_69] : memref<9x32x32xf32, #tpu.memory_space<vmem>>, vector<1x32x32xf32>
    %157 = vector.shape_cast %156 : vector<1x32x32xf32> to vector<32x32xf32>
    %cst_70 = arith.constant dense<0.000000e+00> : vector<32x256xf32>
    %158 = tpu.matmul %157, %155, %cst_70 {dimension_numbers = #tpu.dot_dimension_numbers<[1], [0], [0], [1], [0, 0, 1, 1], [], []>} : vector<32x32xf32>, vector<32x256xf32>, vector<32x256xf32> -> vector<32x256xf32>
    %159 = arith.addf %137, %158 : vector<32x256xf32>
    %cst_71 = arith.constant 0.000000e+00 : f32
    %160 = vector.broadcast %cst_71 : f32 to vector<32x16xf32>
    %161 = vector.extract_strided_slice %7 {offsets = [0, 16], sizes = [32, 240], strides = [1, 1]} : vector<32x256xf32> to vector<32x240xf32>
    %162 = tpu.concatenate %161, %160 in 1 : vector<32x240xf32>, vector<32x16xf32> -> vector<32x256xf32>
    %cst_72 = arith.constant -1.000000e+00 : f32
    %163 = vector.broadcast %cst_72 : f32 to vector<1x256xf32>
    %164 = arith.cmpf oge, %1, %163 : vector<1x256xf32>
    %cst_73 = arith.constant 1.400000e+01 : f32
    %165 = vector.broadcast %cst_73 : f32 to vector<1x256xf32>
    %166 = arith.cmpf ole, %1, %165 : vector<1x256xf32>
    %167 = arith.andi %164, %166 : vector<1x256xi1>
    %cst_74 = arith.constant 0.000000e+00 : f32
    %168 = vector.broadcast %cst_74 : f32 to vector<1x256xf32>
    %169 = arith.cmpf oge, %2, %168 : vector<1x256xf32>
    %170 = arith.andi %167, %169 : vector<1x256xi1>
    %cst_75 = arith.constant 1.500000e+01 : f32
    %171 = vector.broadcast %cst_75 : f32 to vector<1x256xf32>
    %172 = arith.cmpf ole, %2, %171 : vector<1x256xf32>
    %173 = arith.andi %170, %172 : vector<1x256xi1>
    %cst_76 = arith.constant 0.000000e+00 : f32
    %174 = vector.broadcast %cst_76 : f32 to vector<1x256xf32>
    %175 = arith.select %173, %3, %174 : vector<1x256xi1>, vector<1x256xf32>
    %176 = vector.broadcast %175 : vector<1x256xf32> to vector<32x256xf32>
    %177 = arith.mulf %162, %176 : vector<32x256xf32>
    %c7 = arith.constant 7 : index
    %c0_77 = arith.constant 0 : index
    %c0_78 = arith.constant 0 : index
    %178 = vector.load %arg2[%c7, %c0_77, %c0_78] : memref<9x32x32xf32, #tpu.memory_space<vmem>>, vector<1x32x32xf32>
    %179 = vector.shape_cast %178 : vector<1x32x32xf32> to vector<32x32xf32>
    %cst_79 = arith.constant dense<0.000000e+00> : vector<32x256xf32>
    %180 = tpu.matmul %179, %177, %cst_79 {dimension_numbers = #tpu.dot_dimension_numbers<[1], [0], [0], [1], [0, 0, 1, 1], [], []>} : vector<32x32xf32>, vector<32x256xf32>, vector<32x256xf32> -> vector<32x256xf32>
    %181 = arith.addf %159, %180 : vector<32x256xf32>
    %cst_80 = arith.constant 0.000000e+00 : f32
    %182 = vector.broadcast %cst_80 : f32 to vector<32x17xf32>
    %183 = vector.extract_strided_slice %7 {offsets = [0, 17], sizes = [32, 239], strides = [1, 1]} : vector<32x256xf32> to vector<32x239xf32>
    %184 = tpu.concatenate %183, %182 in 1 : vector<32x239xf32>, vector<32x17xf32> -> vector<32x256xf32>
    %cst_81 = arith.constant -1.000000e+00 : f32
    %185 = vector.broadcast %cst_81 : f32 to vector<1x256xf32>
    %186 = arith.cmpf oge, %1, %185 : vector<1x256xf32>
    %cst_82 = arith.constant 1.400000e+01 : f32
    %187 = vector.broadcast %cst_82 : f32 to vector<1x256xf32>
    %188 = arith.cmpf ole, %1, %187 : vector<1x256xf32>
    %189 = arith.andi %186, %188 : vector<1x256xi1>
    %cst_83 = arith.constant -1.000000e+00 : f32
    %190 = vector.broadcast %cst_83 : f32 to vector<1x256xf32>
    %191 = arith.cmpf oge, %2, %190 : vector<1x256xf32>
    %192 = arith.andi %189, %191 : vector<1x256xi1>
    %cst_84 = arith.constant 1.400000e+01 : f32
    %193 = vector.broadcast %cst_84 : f32 to vector<1x256xf32>
    %194 = arith.cmpf ole, %2, %193 : vector<1x256xf32>
    %195 = arith.andi %192, %194 : vector<1x256xi1>
    %cst_85 = arith.constant 0.000000e+00 : f32
    %196 = vector.broadcast %cst_85 : f32 to vector<1x256xf32>
    %197 = arith.select %195, %3, %196 : vector<1x256xi1>, vector<1x256xf32>
    %198 = vector.broadcast %197 : vector<1x256xf32> to vector<32x256xf32>
    %199 = arith.mulf %184, %198 : vector<32x256xf32>
    %c8 = arith.constant 8 : index
    %c0_86 = arith.constant 0 : index
    %c0_87 = arith.constant 0 : index
    %200 = vector.load %arg2[%c8, %c0_86, %c0_87] : memref<9x32x32xf32, #tpu.memory_space<vmem>>, vector<1x32x32xf32>
    %201 = vector.shape_cast %200 : vector<1x32x32xf32> to vector<32x32xf32>
    %cst_88 = arith.constant dense<0.000000e+00> : vector<32x256xf32>
    %202 = tpu.matmul %201, %199, %cst_88 {dimension_numbers = #tpu.dot_dimension_numbers<[1], [0], [0], [1], [0, 0, 1, 1], [], []>} : vector<32x32xf32>, vector<32x256xf32>, vector<32x256xf32> -> vector<32x256xf32>
    %203 = arith.addf %181, %202 : vector<32x256xf32>
    %c0_89 = arith.constant 0 : index
    %c0_90 = arith.constant 0 : index
    %c0_91 = arith.constant 0 : index
    %204 = vector.load %arg4[%c0_89, %c0_90, %c0_91] : memref<4x32x1xf32, #tpu.memory_space<vmem>>, vector<1x32x1xf32>
    %205 = vector.shape_cast %204 : vector<1x32x1xf32> to vector<32x1xf32>
    %206 = vector.broadcast %205 : vector<32x1xf32> to vector<32x256xf32>
    %207 = arith.mulf %203, %206 : vector<32x256xf32>
    %c1_92 = arith.constant 1 : index
    %c0_93 = arith.constant 0 : index
    %c0_94 = arith.constant 0 : index
    %208 = vector.load %arg4[%c1_92, %c0_93, %c0_94] : memref<4x32x1xf32, #tpu.memory_space<vmem>>, vector<1x32x1xf32>
    %209 = vector.shape_cast %208 : vector<1x32x1xf32> to vector<32x1xf32>
    %210 = vector.broadcast %209 : vector<32x1xf32> to vector<32x256xf32>
    %211 = arith.addf %207, %210 : vector<32x256xf32>
    %cst_95 = arith.constant 5.000000e-01 : f32
    %212 = vector.broadcast %cst_95 : f32 to vector<32x256xf32>
    %213 = arith.mulf %212, %211 : vector<32x256xf32>
    %cst_96 = arith.constant 0.707106769 : f32
    %214 = vector.broadcast %cst_96 : f32 to vector<32x256xf32>
    %215 = arith.mulf %211, %214 : vector<32x256xf32>
    %216 = math.erf %215 : vector<32x256xf32>
    %cst_97 = arith.constant 1.000000e+00 : f32
    %217 = vector.broadcast %cst_97 : f32 to vector<32x256xf32>
    %218 = arith.addf %217, %216 : vector<32x256xf32>
    %219 = arith.mulf %213, %218 : vector<32x256xf32>
    %cst_98 = arith.constant 0.000000e+00 : f32
    %220 = vector.broadcast %cst_98 : f32 to vector<32x256xf32>
    %cst_99 = arith.constant 0.000000e+00 : f32
    %221 = vector.broadcast %cst_99 : f32 to vector<32x17xf32>
    %222 = vector.extract_strided_slice %219 {offsets = [0, 0], sizes = [32, 239], strides = [1, 1]} : vector<32x256xf32> to vector<32x239xf32>
    %223 = tpu.concatenate %221, %222 in 1 : vector<32x17xf32>, vector<32x239xf32> -> vector<32x256xf32>
    %cst_100 = arith.constant 1.000000e+00 : f32
    %224 = vector.broadcast %cst_100 : f32 to vector<1x256xf32>
    %225 = arith.cmpf oge, %1, %224 : vector<1x256xf32>
    %cst_101 = arith.constant 1.600000e+01 : f32
    %226 = vector.broadcast %cst_101 : f32 to vector<1x256xf32>
    %227 = arith.cmpf ole, %1, %226 : vector<1x256xf32>
    %228 = arith.andi %225, %227 : vector<1x256xi1>
    %cst_102 = arith.constant 1.000000e+00 : f32
    %229 = vector.broadcast %cst_102 : f32 to vector<1x256xf32>
    %230 = arith.cmpf oge, %2, %229 : vector<1x256xf32>
    %231 = arith.andi %228, %230 : vector<1x256xi1>
    %cst_103 = arith.constant 1.600000e+01 : f32
    %232 = vector.broadcast %cst_103 : f32 to vector<1x256xf32>
    %233 = arith.cmpf ole, %2, %232 : vector<1x256xf32>
    %234 = arith.andi %231, %233 : vector<1x256xi1>
    %cst_104 = arith.constant 0.000000e+00 : f32
    %235 = vector.broadcast %cst_104 : f32 to vector<1x256xf32>
    %236 = arith.select %234, %3, %235 : vector<1x256xi1>, vector<1x256xf32>
    %237 = vector.broadcast %236 : vector<1x256xf32> to vector<32x256xf32>
    %238 = arith.mulf %223, %237 : vector<32x256xf32>
    %c0_105 = arith.constant 0 : index
    %c0_106 = arith.constant 0 : index
    %c0_107 = arith.constant 0 : index
    %239 = vector.load %arg3[%c0_105, %c0_106, %c0_107] : memref<9x32x32xf32, #tpu.memory_space<vmem>>, vector<1x32x32xf32>
    %240 = vector.shape_cast %239 : vector<1x32x32xf32> to vector<32x32xf32>
    %cst_108 = arith.constant dense<0.000000e+00> : vector<32x256xf32>
    %241 = tpu.matmul %240, %238, %cst_108 {dimension_numbers = #tpu.dot_dimension_numbers<[1], [0], [0], [1], [0, 0, 1, 1], [], []>} : vector<32x32xf32>, vector<32x256xf32>, vector<32x256xf32> -> vector<32x256xf32>
    %242 = arith.addf %220, %241 : vector<32x256xf32>
    %cst_109 = arith.constant 0.000000e+00 : f32
    %243 = vector.broadcast %cst_109 : f32 to vector<32x16xf32>
    %244 = vector.extract_strided_slice %219 {offsets = [0, 0], sizes = [32, 240], strides = [1, 1]} : vector<32x256xf32> to vector<32x240xf32>
    %245 = tpu.concatenate %243, %244 in 1 : vector<32x16xf32>, vector<32x240xf32> -> vector<32x256xf32>
    %cst_110 = arith.constant 1.000000e+00 : f32
    %246 = vector.broadcast %cst_110 : f32 to vector<1x256xf32>
    %247 = arith.cmpf oge, %1, %246 : vector<1x256xf32>
    %cst_111 = arith.constant 1.600000e+01 : f32
    %248 = vector.broadcast %cst_111 : f32 to vector<1x256xf32>
    %249 = arith.cmpf ole, %1, %248 : vector<1x256xf32>
    %250 = arith.andi %247, %249 : vector<1x256xi1>
    %cst_112 = arith.constant 0.000000e+00 : f32
    %251 = vector.broadcast %cst_112 : f32 to vector<1x256xf32>
    %252 = arith.cmpf oge, %2, %251 : vector<1x256xf32>
    %253 = arith.andi %250, %252 : vector<1x256xi1>
    %cst_113 = arith.constant 1.500000e+01 : f32
    %254 = vector.broadcast %cst_113 : f32 to vector<1x256xf32>
    %255 = arith.cmpf ole, %2, %254 : vector<1x256xf32>
    %256 = arith.andi %253, %255 : vector<1x256xi1>
    %cst_114 = arith.constant 0.000000e+00 : f32
    %257 = vector.broadcast %cst_114 : f32 to vector<1x256xf32>
    %258 = arith.select %256, %3, %257 : vector<1x256xi1>, vector<1x256xf32>
    %259 = vector.broadcast %258 : vector<1x256xf32> to vector<32x256xf32>
    %260 = arith.mulf %245, %259 : vector<32x256xf32>
    %c1_115 = arith.constant 1 : index
    %c0_116 = arith.constant 0 : index
    %c0_117 = arith.constant 0 : index
    %261 = vector.load %arg3[%c1_115, %c0_116, %c0_117] : memref<9x32x32xf32, #tpu.memory_space<vmem>>, vector<1x32x32xf32>
    %262 = vector.shape_cast %261 : vector<1x32x32xf32> to vector<32x32xf32>
    %cst_118 = arith.constant dense<0.000000e+00> : vector<32x256xf32>
    %263 = tpu.matmul %262, %260, %cst_118 {dimension_numbers = #tpu.dot_dimension_numbers<[1], [0], [0], [1], [0, 0, 1, 1], [], []>} : vector<32x32xf32>, vector<32x256xf32>, vector<32x256xf32> -> vector<32x256xf32>
    %264 = arith.addf %242, %263 : vector<32x256xf32>
    %cst_119 = arith.constant 0.000000e+00 : f32
    %265 = vector.broadcast %cst_119 : f32 to vector<32x15xf32>
    %266 = vector.extract_strided_slice %219 {offsets = [0, 0], sizes = [32, 241], strides = [1, 1]} : vector<32x256xf32> to vector<32x241xf32>
    %267 = tpu.concatenate %265, %266 in 1 : vector<32x15xf32>, vector<32x241xf32> -> vector<32x256xf32>
    %cst_120 = arith.constant 1.000000e+00 : f32
    %268 = vector.broadcast %cst_120 : f32 to vector<1x256xf32>
    %269 = arith.cmpf oge, %1, %268 : vector<1x256xf32>
    %cst_121 = arith.constant 1.600000e+01 : f32
    %270 = vector.broadcast %cst_121 : f32 to vector<1x256xf32>
    %271 = arith.cmpf ole, %1, %270 : vector<1x256xf32>
    %272 = arith.andi %269, %271 : vector<1x256xi1>
    %cst_122 = arith.constant -1.000000e+00 : f32
    %273 = vector.broadcast %cst_122 : f32 to vector<1x256xf32>
    %274 = arith.cmpf oge, %2, %273 : vector<1x256xf32>
    %275 = arith.andi %272, %274 : vector<1x256xi1>
    %cst_123 = arith.constant 1.400000e+01 : f32
    %276 = vector.broadcast %cst_123 : f32 to vector<1x256xf32>
    %277 = arith.cmpf ole, %2, %276 : vector<1x256xf32>
    %278 = arith.andi %275, %277 : vector<1x256xi1>
    %cst_124 = arith.constant 0.000000e+00 : f32
    %279 = vector.broadcast %cst_124 : f32 to vector<1x256xf32>
    %280 = arith.select %278, %3, %279 : vector<1x256xi1>, vector<1x256xf32>
    %281 = vector.broadcast %280 : vector<1x256xf32> to vector<32x256xf32>
    %282 = arith.mulf %267, %281 : vector<32x256xf32>
    %c2_125 = arith.constant 2 : index
    %c0_126 = arith.constant 0 : index
    %c0_127 = arith.constant 0 : index
    %283 = vector.load %arg3[%c2_125, %c0_126, %c0_127] : memref<9x32x32xf32, #tpu.memory_space<vmem>>, vector<1x32x32xf32>
    %284 = vector.shape_cast %283 : vector<1x32x32xf32> to vector<32x32xf32>
    %cst_128 = arith.constant dense<0.000000e+00> : vector<32x256xf32>
    %285 = tpu.matmul %284, %282, %cst_128 {dimension_numbers = #tpu.dot_dimension_numbers<[1], [0], [0], [1], [0, 0, 1, 1], [], []>} : vector<32x32xf32>, vector<32x256xf32>, vector<32x256xf32> -> vector<32x256xf32>
    %286 = arith.addf %264, %285 : vector<32x256xf32>
    %cst_129 = arith.constant 0.000000e+00 : f32
    %287 = vector.broadcast %cst_129 : f32 to vector<32x1xf32>
    %288 = vector.extract_strided_slice %219 {offsets = [0, 0], sizes = [32, 255], strides = [1, 1]} : vector<32x256xf32> to vector<32x255xf32>
    %289 = tpu.concatenate %287, %288 in 1 : vector<32x1xf32>, vector<32x255xf32> -> vector<32x256xf32>
    %cst_130 = arith.constant 0.000000e+00 : f32
    %290 = vector.broadcast %cst_130 : f32 to vector<1x256xf32>
    %291 = arith.cmpf oge, %1, %290 : vector<1x256xf32>
    %cst_131 = arith.constant 1.500000e+01 : f32
    %292 = vector.broadcast %cst_131 : f32 to vector<1x256xf32>
    %293 = arith.cmpf ole, %1, %292 : vector<1x256xf32>
    %294 = arith.andi %291, %293 : vector<1x256xi1>
    %cst_132 = arith.constant 1.000000e+00 : f32
    %295 = vector.broadcast %cst_132 : f32 to vector<1x256xf32>
    %296 = arith.cmpf oge, %2, %295 : vector<1x256xf32>
    %297 = arith.andi %294, %296 : vector<1x256xi1>
    %cst_133 = arith.constant 1.600000e+01 : f32
    %298 = vector.broadcast %cst_133 : f32 to vector<1x256xf32>
    %299 = arith.cmpf ole, %2, %298 : vector<1x256xf32>
    %300 = arith.andi %297, %299 : vector<1x256xi1>
    %cst_134 = arith.constant 0.000000e+00 : f32
    %301 = vector.broadcast %cst_134 : f32 to vector<1x256xf32>
    %302 = arith.select %300, %3, %301 : vector<1x256xi1>, vector<1x256xf32>
    %303 = vector.broadcast %302 : vector<1x256xf32> to vector<32x256xf32>
    %304 = arith.mulf %289, %303 : vector<32x256xf32>
    %c3_135 = arith.constant 3 : index
    %c0_136 = arith.constant 0 : index
    %c0_137 = arith.constant 0 : index
    %305 = vector.load %arg3[%c3_135, %c0_136, %c0_137] : memref<9x32x32xf32, #tpu.memory_space<vmem>>, vector<1x32x32xf32>
    %306 = vector.shape_cast %305 : vector<1x32x32xf32> to vector<32x32xf32>
    %cst_138 = arith.constant dense<0.000000e+00> : vector<32x256xf32>
    %307 = tpu.matmul %306, %304, %cst_138 {dimension_numbers = #tpu.dot_dimension_numbers<[1], [0], [0], [1], [0, 0, 1, 1], [], []>} : vector<32x32xf32>, vector<32x256xf32>, vector<32x256xf32> -> vector<32x256xf32>
    %308 = arith.addf %286, %307 : vector<32x256xf32>
    %cst_139 = arith.constant 0.000000e+00 : f32
    %309 = vector.broadcast %cst_139 : f32 to vector<1x256xf32>
    %310 = arith.cmpf oge, %1, %309 : vector<1x256xf32>
    %cst_140 = arith.constant 1.500000e+01 : f32
    %311 = vector.broadcast %cst_140 : f32 to vector<1x256xf32>
    %312 = arith.cmpf ole, %1, %311 : vector<1x256xf32>
    %313 = arith.andi %310, %312 : vector<1x256xi1>
    %cst_141 = arith.constant 0.000000e+00 : f32
    %314 = vector.broadcast %cst_141 : f32 to vector<1x256xf32>
    %315 = arith.cmpf oge, %2, %314 : vector<1x256xf32>
    %316 = arith.andi %313, %315 : vector<1x256xi1>
    %cst_142 = arith.constant 1.500000e+01 : f32
    %317 = vector.broadcast %cst_142 : f32 to vector<1x256xf32>
    %318 = arith.cmpf ole, %2, %317 : vector<1x256xf32>
    %319 = arith.andi %316, %318 : vector<1x256xi1>
    %cst_143 = arith.constant 0.000000e+00 : f32
    %320 = vector.broadcast %cst_143 : f32 to vector<1x256xf32>
    %321 = arith.select %319, %3, %320 : vector<1x256xi1>, vector<1x256xf32>
    %322 = vector.broadcast %321 : vector<1x256xf32> to vector<32x256xf32>
    %323 = arith.mulf %219, %322 : vector<32x256xf32>
    %c4_144 = arith.constant 4 : index
    %c0_145 = arith.constant 0 : index
    %c0_146 = arith.constant 0 : index
    %324 = vector.load %arg3[%c4_144, %c0_145, %c0_146] : memref<9x32x32xf32, #tpu.memory_space<vmem>>, vector<1x32x32xf32>
    %325 = vector.shape_cast %324 : vector<1x32x32xf32> to vector<32x32xf32>
    %cst_147 = arith.constant dense<0.000000e+00> : vector<32x256xf32>
    %326 = tpu.matmul %325, %323, %cst_147 {dimension_numbers = #tpu.dot_dimension_numbers<[1], [0], [0], [1], [0, 0, 1, 1], [], []>} : vector<32x32xf32>, vector<32x256xf32>, vector<32x256xf32> -> vector<32x256xf32>
    %327 = arith.addf %308, %326 : vector<32x256xf32>
    %cst_148 = arith.constant 0.000000e+00 : f32
    %328 = vector.broadcast %cst_148 : f32 to vector<32x1xf32>
    %329 = vector.extract_strided_slice %219 {offsets = [0, 1], sizes = [32, 255], strides = [1, 1]} : vector<32x256xf32> to vector<32x255xf32>
    %330 = tpu.concatenate %329, %328 in 1 : vector<32x255xf32>, vector<32x1xf32> -> vector<32x256xf32>
    %cst_149 = arith.constant 0.000000e+00 : f32
    %331 = vector.broadcast %cst_149 : f32 to vector<1x256xf32>
    %332 = arith.cmpf oge, %1, %331 : vector<1x256xf32>
    %cst_150 = arith.constant 1.500000e+01 : f32
    %333 = vector.broadcast %cst_150 : f32 to vector<1x256xf32>
    %334 = arith.cmpf ole, %1, %333 : vector<1x256xf32>
    %335 = arith.andi %332, %334 : vector<1x256xi1>
    %cst_151 = arith.constant -1.000000e+00 : f32
    %336 = vector.broadcast %cst_151 : f32 to vector<1x256xf32>
    %337 = arith.cmpf oge, %2, %336 : vector<1x256xf32>
    %338 = arith.andi %335, %337 : vector<1x256xi1>
    %cst_152 = arith.constant 1.400000e+01 : f32
    %339 = vector.broadcast %cst_152 : f32 to vector<1x256xf32>
    %340 = arith.cmpf ole, %2, %339 : vector<1x256xf32>
    %341 = arith.andi %338, %340 : vector<1x256xi1>
    %cst_153 = arith.constant 0.000000e+00 : f32
    %342 = vector.broadcast %cst_153 : f32 to vector<1x256xf32>
    %343 = arith.select %341, %3, %342 : vector<1x256xi1>, vector<1x256xf32>
    %344 = vector.broadcast %343 : vector<1x256xf32> to vector<32x256xf32>
    %345 = arith.mulf %330, %344 : vector<32x256xf32>
    %c5_154 = arith.constant 5 : index
    %c0_155 = arith.constant 0 : index
    %c0_156 = arith.constant 0 : index
    %346 = vector.load %arg3[%c5_154, %c0_155, %c0_156] : memref<9x32x32xf32, #tpu.memory_space<vmem>>, vector<1x32x32xf32>
    %347 = vector.shape_cast %346 : vector<1x32x32xf32> to vector<32x32xf32>
    %cst_157 = arith.constant dense<0.000000e+00> : vector<32x256xf32>
    %348 = tpu.matmul %347, %345, %cst_157 {dimension_numbers = #tpu.dot_dimension_numbers<[1], [0], [0], [1], [0, 0, 1, 1], [], []>} : vector<32x32xf32>, vector<32x256xf32>, vector<32x256xf32> -> vector<32x256xf32>
    %349 = arith.addf %327, %348 : vector<32x256xf32>
    %cst_158 = arith.constant 0.000000e+00 : f32
    %350 = vector.broadcast %cst_158 : f32 to vector<32x15xf32>
    %351 = vector.extract_strided_slice %219 {offsets = [0, 15], sizes = [32, 241], strides = [1, 1]} : vector<32x256xf32> to vector<32x241xf32>
    %352 = tpu.concatenate %351, %350 in 1 : vector<32x241xf32>, vector<32x15xf32> -> vector<32x256xf32>
    %cst_159 = arith.constant -1.000000e+00 : f32
    %353 = vector.broadcast %cst_159 : f32 to vector<1x256xf32>
    %354 = arith.cmpf oge, %1, %353 : vector<1x256xf32>
    %cst_160 = arith.constant 1.400000e+01 : f32
    %355 = vector.broadcast %cst_160 : f32 to vector<1x256xf32>
    %356 = arith.cmpf ole, %1, %355 : vector<1x256xf32>
    %357 = arith.andi %354, %356 : vector<1x256xi1>
    %cst_161 = arith.constant 1.000000e+00 : f32
    %358 = vector.broadcast %cst_161 : f32 to vector<1x256xf32>
    %359 = arith.cmpf oge, %2, %358 : vector<1x256xf32>
    %360 = arith.andi %357, %359 : vector<1x256xi1>
    %cst_162 = arith.constant 1.600000e+01 : f32
    %361 = vector.broadcast %cst_162 : f32 to vector<1x256xf32>
    %362 = arith.cmpf ole, %2, %361 : vector<1x256xf32>
    %363 = arith.andi %360, %362 : vector<1x256xi1>
    %cst_163 = arith.constant 0.000000e+00 : f32
    %364 = vector.broadcast %cst_163 : f32 to vector<1x256xf32>
    %365 = arith.select %363, %3, %364 : vector<1x256xi1>, vector<1x256xf32>
    %366 = vector.broadcast %365 : vector<1x256xf32> to vector<32x256xf32>
    %367 = arith.mulf %352, %366 : vector<32x256xf32>
    %c6_164 = arith.constant 6 : index
    %c0_165 = arith.constant 0 : index
    %c0_166 = arith.constant 0 : index
    %368 = vector.load %arg3[%c6_164, %c0_165, %c0_166] : memref<9x32x32xf32, #tpu.memory_space<vmem>>, vector<1x32x32xf32>
    %369 = vector.shape_cast %368 : vector<1x32x32xf32> to vector<32x32xf32>
    %cst_167 = arith.constant dense<0.000000e+00> : vector<32x256xf32>
    %370 = tpu.matmul %369, %367, %cst_167 {dimension_numbers = #tpu.dot_dimension_numbers<[1], [0], [0], [1], [0, 0, 1, 1], [], []>} : vector<32x32xf32>, vector<32x256xf32>, vector<32x256xf32> -> vector<32x256xf32>
    %371 = arith.addf %349, %370 : vector<32x256xf32>
    %cst_168 = arith.constant 0.000000e+00 : f32
    %372 = vector.broadcast %cst_168 : f32 to vector<32x16xf32>
    %373 = vector.extract_strided_slice %219 {offsets = [0, 16], sizes = [32, 240], strides = [1, 1]} : vector<32x256xf32> to vector<32x240xf32>
    %374 = tpu.concatenate %373, %372 in 1 : vector<32x240xf32>, vector<32x16xf32> -> vector<32x256xf32>
    %cst_169 = arith.constant -1.000000e+00 : f32
    %375 = vector.broadcast %cst_169 : f32 to vector<1x256xf32>
    %376 = arith.cmpf oge, %1, %375 : vector<1x256xf32>
    %cst_170 = arith.constant 1.400000e+01 : f32
    %377 = vector.broadcast %cst_170 : f32 to vector<1x256xf32>
    %378 = arith.cmpf ole, %1, %377 : vector<1x256xf32>
    %379 = arith.andi %376, %378 : vector<1x256xi1>
    %cst_171 = arith.constant 0.000000e+00 : f32
    %380 = vector.broadcast %cst_171 : f32 to vector<1x256xf32>
    %381 = arith.cmpf oge, %2, %380 : vector<1x256xf32>
    %382 = arith.andi %379, %381 : vector<1x256xi1>
    %cst_172 = arith.constant 1.500000e+01 : f32
    %383 = vector.broadcast %cst_172 : f32 to vector<1x256xf32>
    %384 = arith.cmpf ole, %2, %383 : vector<1x256xf32>
    %385 = arith.andi %382, %384 : vector<1x256xi1>
    %cst_173 = arith.constant 0.000000e+00 : f32
    %386 = vector.broadcast %cst_173 : f32 to vector<1x256xf32>
    %387 = arith.select %385, %3, %386 : vector<1x256xi1>, vector<1x256xf32>
    %388 = vector.broadcast %387 : vector<1x256xf32> to vector<32x256xf32>
    %389 = arith.mulf %374, %388 : vector<32x256xf32>
    %c7_174 = arith.constant 7 : index
    %c0_175 = arith.constant 0 : index
    %c0_176 = arith.constant 0 : index
    %390 = vector.load %arg3[%c7_174, %c0_175, %c0_176] : memref<9x32x32xf32, #tpu.memory_space<vmem>>, vector<1x32x32xf32>
    %391 = vector.shape_cast %390 : vector<1x32x32xf32> to vector<32x32xf32>
    %cst_177 = arith.constant dense<0.000000e+00> : vector<32x256xf32>
    %392 = tpu.matmul %391, %389, %cst_177 {dimension_numbers = #tpu.dot_dimension_numbers<[1], [0], [0], [1], [0, 0, 1, 1], [], []>} : vector<32x32xf32>, vector<32x256xf32>, vector<32x256xf32> -> vector<32x256xf32>
    %393 = arith.addf %371, %392 : vector<32x256xf32>
    %cst_178 = arith.constant 0.000000e+00 : f32
    %394 = vector.broadcast %cst_178 : f32 to vector<32x17xf32>
    %395 = vector.extract_strided_slice %219 {offsets = [0, 17], sizes = [32, 239], strides = [1, 1]} : vector<32x256xf32> to vector<32x239xf32>
    %396 = tpu.concatenate %395, %394 in 1 : vector<32x239xf32>, vector<32x17xf32> -> vector<32x256xf32>
    %cst_179 = arith.constant -1.000000e+00 : f32
    %397 = vector.broadcast %cst_179 : f32 to vector<1x256xf32>
    %398 = arith.cmpf oge, %1, %397 : vector<1x256xf32>
    %cst_180 = arith.constant 1.400000e+01 : f32
    %399 = vector.broadcast %cst_180 : f32 to vector<1x256xf32>
    %400 = arith.cmpf ole, %1, %399 : vector<1x256xf32>
    %401 = arith.andi %398, %400 : vector<1x256xi1>
    %cst_181 = arith.constant -1.000000e+00 : f32
    %402 = vector.broadcast %cst_181 : f32 to vector<1x256xf32>
    %403 = arith.cmpf oge, %2, %402 : vector<1x256xf32>
    %404 = arith.andi %401, %403 : vector<1x256xi1>
    %cst_182 = arith.constant 1.400000e+01 : f32
    %405 = vector.broadcast %cst_182 : f32 to vector<1x256xf32>
    %406 = arith.cmpf ole, %2, %405 : vector<1x256xf32>
    %407 = arith.andi %404, %406 : vector<1x256xi1>
    %cst_183 = arith.constant 0.000000e+00 : f32
    %408 = vector.broadcast %cst_183 : f32 to vector<1x256xf32>
    %409 = arith.select %407, %3, %408 : vector<1x256xi1>, vector<1x256xf32>
    %410 = vector.broadcast %409 : vector<1x256xf32> to vector<32x256xf32>
    %411 = arith.mulf %396, %410 : vector<32x256xf32>
    %c8_184 = arith.constant 8 : index
    %c0_185 = arith.constant 0 : index
    %c0_186 = arith.constant 0 : index
    %412 = vector.load %arg3[%c8_184, %c0_185, %c0_186] : memref<9x32x32xf32, #tpu.memory_space<vmem>>, vector<1x32x32xf32>
    %413 = vector.shape_cast %412 : vector<1x32x32xf32> to vector<32x32xf32>
    %cst_187 = arith.constant dense<0.000000e+00> : vector<32x256xf32>
    %414 = tpu.matmul %413, %411, %cst_187 {dimension_numbers = #tpu.dot_dimension_numbers<[1], [0], [0], [1], [0, 0, 1, 1], [], []>} : vector<32x32xf32>, vector<32x256xf32>, vector<32x256xf32> -> vector<32x256xf32>
    %415 = arith.addf %393, %414 : vector<32x256xf32>
    %c2_188 = arith.constant 2 : index
    %c0_189 = arith.constant 0 : index
    %c0_190 = arith.constant 0 : index
    %416 = vector.load %arg4[%c2_188, %c0_189, %c0_190] : memref<4x32x1xf32, #tpu.memory_space<vmem>>, vector<1x32x1xf32>
    %417 = vector.shape_cast %416 : vector<1x32x1xf32> to vector<32x1xf32>
    %418 = vector.broadcast %417 : vector<32x1xf32> to vector<32x256xf32>
    %419 = arith.mulf %415, %418 : vector<32x256xf32>
    %c3_191 = arith.constant 3 : index
    %c0_192 = arith.constant 0 : index
    %c0_193 = arith.constant 0 : index
    %420 = vector.load %arg4[%c3_191, %c0_192, %c0_193] : memref<4x32x1xf32, #tpu.memory_space<vmem>>, vector<1x32x1xf32>
    %421 = vector.shape_cast %420 : vector<1x32x1xf32> to vector<32x1xf32>
    %422 = vector.broadcast %421 : vector<32x1xf32> to vector<32x256xf32>
    %423 = arith.addf %419, %422 : vector<32x256xf32>
    %cst_194 = arith.constant 5.000000e-01 : f32
    %424 = vector.broadcast %cst_194 : f32 to vector<1x256xf32>
    %425 = arith.cmpf ogt, %3, %424 : vector<1x256xf32>
    %cst_195 = arith.constant 0xFF800000 : f32
    %426 = vector.shape_cast %425 : vector<1x256xi1> to vector<1x256xi1>
    %427 = vector.broadcast %426 : vector<1x256xi1> to vector<32x256xi1>
    %428 = vector.broadcast %cst_195 : f32 to vector<32x256xf32>
    %429 = arith.select %427, %423, %428 : vector<32x256xi1>, vector<32x256xf32>
    %cst_196 = arith.constant dense<0xFF800000> : vector<32xf32>
    %430 = vector.multi_reduction <maximumf>, %429, %cst_196 [1] : vector<32x256xf32> to vector<32xf32>
    %431 = vector.shape_cast %430 : vector<32xf32> to vector<32x1xf32>
    %432 = vector.broadcast %3 : vector<1x256xf32> to vector<32x256xf32>
    %433 = arith.mulf %423, %432 : vector<32x256xf32>
    %cst_197 = arith.constant dense<0.000000e+00> : vector<32xf32>
    %434 = vector.multi_reduction <add>, %433, %cst_197 [1] : vector<32x256xf32> to vector<32xf32>
    %435 = vector.shape_cast %434 : vector<32xf32> to vector<32x1xf32>
    %cst_198 = arith.constant 3.906250e-03 : f32
    %436 = vector.broadcast %cst_198 : f32 to vector<32x1xf32>
    %437 = arith.mulf %435, %436 : vector<32x1xf32>
    %438 = tpu.concatenate %431, %437 in 1 : vector<32x1xf32>, vector<32x1xf32> -> vector<32x2xf32>
    %cst_199 = arith.constant dense<0.000000e+00> : vector<2x2xf32>
    %439 = tpu.matmul %4, %438, %cst_199 {dimension_numbers = #tpu.dot_dimension_numbers<[1], [0], [0], [1], [0, 0, 1, 1], [], []>} : vector<2x32xf32>, vector<32x2xf32>, vector<2x2xf32> -> vector<2x2xf32>
    %cst_200 = arith.constant 5.000000e-01 : f32
    %440 = vector.broadcast %cst_200 : f32 to vector<2x2xf32>
    %441 = arith.mulf %440, %439 : vector<2x2xf32>
    %cst_201 = arith.constant 0.707106769 : f32
    %442 = vector.broadcast %cst_201 : f32 to vector<2x2xf32>
    %443 = arith.mulf %439, %442 : vector<2x2xf32>
    %444 = math.erf %443 : vector<2x2xf32>
    %cst_202 = arith.constant 1.000000e+00 : f32
    %445 = vector.broadcast %cst_202 : f32 to vector<2x2xf32>
    %446 = arith.addf %445, %444 : vector<2x2xf32>
    %447 = arith.mulf %441, %446 : vector<2x2xf32>
    %cst_203 = arith.constant dense<0.000000e+00> : vector<32x2xf32>
    %448 = tpu.matmul %5, %447, %cst_203 {dimension_numbers = #tpu.dot_dimension_numbers<[1], [0], [0], [1], [0, 0, 1, 1], [], []>} : vector<32x2xf32>, vector<2x2xf32>, vector<32x2xf32> -> vector<32x2xf32>
    %449 = vector.extract_strided_slice %448 {offsets = [0, 0], sizes = [32, 1], strides = [1, 1]} : vector<32x2xf32> to vector<32x1xf32>
    %450 = vector.extract_strided_slice %448 {offsets = [0, 1], sizes = [32, 1], strides = [1, 1]} : vector<32x2xf32> to vector<32x1xf32>
    %451 = arith.addf %449, %450 : vector<32x1xf32>
    %452 = arith.negf %451 : vector<32x1xf32>
    %453 = math.exp %452 : vector<32x1xf32>
    %cst_204 = arith.constant 1.000000e+00 : f32
    %454 = vector.broadcast %cst_204 : f32 to vector<32x1xf32>
    %455 = arith.addf %454, %453 : vector<32x1xf32>
    %456 = arith.divf %454, %455 : vector<32x1xf32>
    %457 = vector.broadcast %456 : vector<32x1xf32> to vector<32x256xf32>
    %458 = arith.mulf %423, %457 : vector<32x256xf32>
    %cst_205 = arith.constant dense<0.000000e+00> : vector<256xf32>
    %459 = vector.multi_reduction <add>, %458, %cst_205 [0] : vector<32x256xf32> to vector<256xf32>
    %460 = vector.shape_cast %459 : vector<256xf32> to vector<1x256xf32>
    %cst_206 = arith.constant 3.200000e+01 : f32
    %461 = vector.broadcast %cst_206 : f32 to vector<1x256xf32>
    %462 = arith.divf %460, %461 : vector<1x256xf32>
    %cst_207 = arith.constant dense<0xFF800000> : vector<256xf32>
    %463 = vector.multi_reduction <maximumf>, %458, %cst_207 [0] : vector<32x256xf32> to vector<256xf32>
    %464 = vector.shape_cast %463 : vector<256xf32> to vector<1x256xf32>
    %465 = tpu.concatenate %462, %464 in 0 : vector<1x256xf32>, vector<1x256xf32> -> vector<2x256xf32>
    %cst_208 = arith.constant 0.000000e+00 : f32
    %466 = vector.broadcast %cst_208 : f32 to vector<2x256xf32>
    %cst_209 = arith.constant 0.000000e+00 : f32
    %467 = vector.broadcast %cst_209 : f32 to vector<2x51xf32>
    %468 = vector.extract_strided_slice %465 {offsets = [0, 0], sizes = [2, 205], strides = [1, 1]} : vector<2x256xf32> to vector<2x205xf32>
    %469 = tpu.concatenate %467, %468 in 1 : vector<2x51xf32>, vector<2x205xf32> -> vector<2x256xf32>
    %cst_210 = arith.constant 3.000000e+00 : f32
    %470 = vector.broadcast %cst_210 : f32 to vector<1x256xf32>
    %471 = arith.cmpf oge, %1, %470 : vector<1x256xf32>
    %cst_211 = arith.constant 1.800000e+01 : f32
    %472 = vector.broadcast %cst_211 : f32 to vector<1x256xf32>
    %473 = arith.cmpf ole, %1, %472 : vector<1x256xf32>
    %474 = arith.andi %471, %473 : vector<1x256xi1>
    %cst_212 = arith.constant 3.000000e+00 : f32
    %475 = vector.broadcast %cst_212 : f32 to vector<1x256xf32>
    %476 = arith.cmpf oge, %2, %475 : vector<1x256xf32>
    %477 = arith.andi %474, %476 : vector<1x256xi1>
    %cst_213 = arith.constant 1.800000e+01 : f32
    %478 = vector.broadcast %cst_213 : f32 to vector<1x256xf32>
    %479 = arith.cmpf ole, %2, %478 : vector<1x256xf32>
    %480 = arith.andi %477, %479 : vector<1x256xi1>
    %cst_214 = arith.constant 0.000000e+00 : f32
    %481 = vector.broadcast %cst_214 : f32 to vector<1x256xf32>
    %482 = arith.select %480, %3, %481 : vector<1x256xi1>, vector<1x256xf32>
    %483 = vector.broadcast %482 : vector<1x256xf32> to vector<2x256xf32>
    %484 = arith.mulf %469, %483 : vector<2x256xf32>
    %c0_215 = arith.constant 0 : index
    %c0_216 = arith.constant 0 : index
    %c0_217 = arith.constant 0 : index
    %485 = vector.load %arg7[%c0_215, %c0_216, %c0_217] : memref<49x2x1xf32, #tpu.memory_space<vmem>>, vector<1x2x1xf32>
    %486 = vector.shape_cast %485 : vector<1x2x1xf32> to vector<2x1xf32>
    %487 = vector.broadcast %486 : vector<2x1xf32> to vector<2x256xf32>
    %488 = arith.mulf %484, %487 : vector<2x256xf32>
    %489 = arith.addf %466, %488 : vector<2x256xf32>
    %cst_218 = arith.constant 0.000000e+00 : f32
    %490 = vector.broadcast %cst_218 : f32 to vector<2x50xf32>
    %491 = vector.extract_strided_slice %465 {offsets = [0, 0], sizes = [2, 206], strides = [1, 1]} : vector<2x256xf32> to vector<2x206xf32>
    %492 = tpu.concatenate %490, %491 in 1 : vector<2x50xf32>, vector<2x206xf32> -> vector<2x256xf32>
    %cst_219 = arith.constant 3.000000e+00 : f32
    %493 = vector.broadcast %cst_219 : f32 to vector<1x256xf32>
    %494 = arith.cmpf oge, %1, %493 : vector<1x256xf32>
    %cst_220 = arith.constant 1.800000e+01 : f32
    %495 = vector.broadcast %cst_220 : f32 to vector<1x256xf32>
    %496 = arith.cmpf ole, %1, %495 : vector<1x256xf32>
    %497 = arith.andi %494, %496 : vector<1x256xi1>
    %cst_221 = arith.constant 2.000000e+00 : f32
    %498 = vector.broadcast %cst_221 : f32 to vector<1x256xf32>
    %499 = arith.cmpf oge, %2, %498 : vector<1x256xf32>
    %500 = arith.andi %497, %499 : vector<1x256xi1>
    %cst_222 = arith.constant 1.700000e+01 : f32
    %501 = vector.broadcast %cst_222 : f32 to vector<1x256xf32>
    %502 = arith.cmpf ole, %2, %501 : vector<1x256xf32>
    %503 = arith.andi %500, %502 : vector<1x256xi1>
    %cst_223 = arith.constant 0.000000e+00 : f32
    %504 = vector.broadcast %cst_223 : f32 to vector<1x256xf32>
    %505 = arith.select %503, %3, %504 : vector<1x256xi1>, vector<1x256xf32>
    %506 = vector.broadcast %505 : vector<1x256xf32> to vector<2x256xf32>
    %507 = arith.mulf %492, %506 : vector<2x256xf32>
    %c1_224 = arith.constant 1 : index
    %c0_225 = arith.constant 0 : index
    %c0_226 = arith.constant 0 : index
    %508 = vector.load %arg7[%c1_224, %c0_225, %c0_226] : memref<49x2x1xf32, #tpu.memory_space<vmem>>, vector<1x2x1xf32>
    %509 = vector.shape_cast %508 : vector<1x2x1xf32> to vector<2x1xf32>
    %510 = vector.broadcast %509 : vector<2x1xf32> to vector<2x256xf32>
    %511 = arith.mulf %507, %510 : vector<2x256xf32>
    %512 = arith.addf %489, %511 : vector<2x256xf32>
    %cst_227 = arith.constant 0.000000e+00 : f32
    %513 = vector.broadcast %cst_227 : f32 to vector<2x49xf32>
    %514 = vector.extract_strided_slice %465 {offsets = [0, 0], sizes = [2, 207], strides = [1, 1]} : vector<2x256xf32> to vector<2x207xf32>
    %515 = tpu.concatenate %513, %514 in 1 : vector<2x49xf32>, vector<2x207xf32> -> vector<2x256xf32>
    %cst_228 = arith.constant 3.000000e+00 : f32
    %516 = vector.broadcast %cst_228 : f32 to vector<1x256xf32>
    %517 = arith.cmpf oge, %1, %516 : vector<1x256xf32>
    %cst_229 = arith.constant 1.800000e+01 : f32
    %518 = vector.broadcast %cst_229 : f32 to vector<1x256xf32>
    %519 = arith.cmpf ole, %1, %518 : vector<1x256xf32>
    %520 = arith.andi %517, %519 : vector<1x256xi1>
    %cst_230 = arith.constant 1.000000e+00 : f32
    %521 = vector.broadcast %cst_230 : f32 to vector<1x256xf32>
    %522 = arith.cmpf oge, %2, %521 : vector<1x256xf32>
    %523 = arith.andi %520, %522 : vector<1x256xi1>
    %cst_231 = arith.constant 1.600000e+01 : f32
    %524 = vector.broadcast %cst_231 : f32 to vector<1x256xf32>
    %525 = arith.cmpf ole, %2, %524 : vector<1x256xf32>
    %526 = arith.andi %523, %525 : vector<1x256xi1>
    %cst_232 = arith.constant 0.000000e+00 : f32
    %527 = vector.broadcast %cst_232 : f32 to vector<1x256xf32>
    %528 = arith.select %526, %3, %527 : vector<1x256xi1>, vector<1x256xf32>
    %529 = vector.broadcast %528 : vector<1x256xf32> to vector<2x256xf32>
    %530 = arith.mulf %515, %529 : vector<2x256xf32>
    %c2_233 = arith.constant 2 : index
    %c0_234 = arith.constant 0 : index
    %c0_235 = arith.constant 0 : index
    %531 = vector.load %arg7[%c2_233, %c0_234, %c0_235] : memref<49x2x1xf32, #tpu.memory_space<vmem>>, vector<1x2x1xf32>
    %532 = vector.shape_cast %531 : vector<1x2x1xf32> to vector<2x1xf32>
    %533 = vector.broadcast %532 : vector<2x1xf32> to vector<2x256xf32>
    %534 = arith.mulf %530, %533 : vector<2x256xf32>
    %535 = arith.addf %512, %534 : vector<2x256xf32>
    %cst_236 = arith.constant 0.000000e+00 : f32
    %536 = vector.broadcast %cst_236 : f32 to vector<2x48xf32>
    %537 = vector.extract_strided_slice %465 {offsets = [0, 0], sizes = [2, 208], strides = [1, 1]} : vector<2x256xf32> to vector<2x208xf32>
    %538 = tpu.concatenate %536, %537 in 1 : vector<2x48xf32>, vector<2x208xf32> -> vector<2x256xf32>
    %cst_237 = arith.constant 3.000000e+00 : f32
    %539 = vector.broadcast %cst_237 : f32 to vector<1x256xf32>
    %540 = arith.cmpf oge, %1, %539 : vector<1x256xf32>
    %cst_238 = arith.constant 1.800000e+01 : f32
    %541 = vector.broadcast %cst_238 : f32 to vector<1x256xf32>
    %542 = arith.cmpf ole, %1, %541 : vector<1x256xf32>
    %543 = arith.andi %540, %542 : vector<1x256xi1>
    %cst_239 = arith.constant 0.000000e+00 : f32
    %544 = vector.broadcast %cst_239 : f32 to vector<1x256xf32>
    %545 = arith.cmpf oge, %2, %544 : vector<1x256xf32>
    %546 = arith.andi %543, %545 : vector<1x256xi1>
    %cst_240 = arith.constant 1.500000e+01 : f32
    %547 = vector.broadcast %cst_240 : f32 to vector<1x256xf32>
    %548 = arith.cmpf ole, %2, %547 : vector<1x256xf32>
    %549 = arith.andi %546, %548 : vector<1x256xi1>
    %cst_241 = arith.constant 0.000000e+00 : f32
    %550 = vector.broadcast %cst_241 : f32 to vector<1x256xf32>
    %551 = arith.select %549, %3, %550 : vector<1x256xi1>, vector<1x256xf32>
    %552 = vector.broadcast %551 : vector<1x256xf32> to vector<2x256xf32>
    %553 = arith.mulf %538, %552 : vector<2x256xf32>
    %c3_242 = arith.constant 3 : index
    %c0_243 = arith.constant 0 : index
    %c0_244 = arith.constant 0 : index
    %554 = vector.load %arg7[%c3_242, %c0_243, %c0_244] : memref<49x2x1xf32, #tpu.memory_space<vmem>>, vector<1x2x1xf32>
    %555 = vector.shape_cast %554 : vector<1x2x1xf32> to vector<2x1xf32>
    %556 = vector.broadcast %555 : vector<2x1xf32> to vector<2x256xf32>
    %557 = arith.mulf %553, %556 : vector<2x256xf32>
    %558 = arith.addf %535, %557 : vector<2x256xf32>
    %cst_245 = arith.constant 0.000000e+00 : f32
    %559 = vector.broadcast %cst_245 : f32 to vector<2x47xf32>
    %560 = vector.extract_strided_slice %465 {offsets = [0, 0], sizes = [2, 209], strides = [1, 1]} : vector<2x256xf32> to vector<2x209xf32>
    %561 = tpu.concatenate %559, %560 in 1 : vector<2x47xf32>, vector<2x209xf32> -> vector<2x256xf32>
    %cst_246 = arith.constant 3.000000e+00 : f32
    %562 = vector.broadcast %cst_246 : f32 to vector<1x256xf32>
    %563 = arith.cmpf oge, %1, %562 : vector<1x256xf32>
    %cst_247 = arith.constant 1.800000e+01 : f32
    %564 = vector.broadcast %cst_247 : f32 to vector<1x256xf32>
    %565 = arith.cmpf ole, %1, %564 : vector<1x256xf32>
    %566 = arith.andi %563, %565 : vector<1x256xi1>
    %cst_248 = arith.constant -1.000000e+00 : f32
    %567 = vector.broadcast %cst_248 : f32 to vector<1x256xf32>
    %568 = arith.cmpf oge, %2, %567 : vector<1x256xf32>
    %569 = arith.andi %566, %568 : vector<1x256xi1>
    %cst_249 = arith.constant 1.400000e+01 : f32
    %570 = vector.broadcast %cst_249 : f32 to vector<1x256xf32>
    %571 = arith.cmpf ole, %2, %570 : vector<1x256xf32>
    %572 = arith.andi %569, %571 : vector<1x256xi1>
    %cst_250 = arith.constant 0.000000e+00 : f32
    %573 = vector.broadcast %cst_250 : f32 to vector<1x256xf32>
    %574 = arith.select %572, %3, %573 : vector<1x256xi1>, vector<1x256xf32>
    %575 = vector.broadcast %574 : vector<1x256xf32> to vector<2x256xf32>
    %576 = arith.mulf %561, %575 : vector<2x256xf32>
    %c4_251 = arith.constant 4 : index
    %c0_252 = arith.constant 0 : index
    %c0_253 = arith.constant 0 : index
    %577 = vector.load %arg7[%c4_251, %c0_252, %c0_253] : memref<49x2x1xf32, #tpu.memory_space<vmem>>, vector<1x2x1xf32>
    %578 = vector.shape_cast %577 : vector<1x2x1xf32> to vector<2x1xf32>
    %579 = vector.broadcast %578 : vector<2x1xf32> to vector<2x256xf32>
    %580 = arith.mulf %576, %579 : vector<2x256xf32>
    %581 = arith.addf %558, %580 : vector<2x256xf32>
    %cst_254 = arith.constant 0.000000e+00 : f32
    %582 = vector.broadcast %cst_254 : f32 to vector<2x46xf32>
    %583 = vector.extract_strided_slice %465 {offsets = [0, 0], sizes = [2, 210], strides = [1, 1]} : vector<2x256xf32> to vector<2x210xf32>
    %584 = tpu.concatenate %582, %583 in 1 : vector<2x46xf32>, vector<2x210xf32> -> vector<2x256xf32>
    %cst_255 = arith.constant 3.000000e+00 : f32
    %585 = vector.broadcast %cst_255 : f32 to vector<1x256xf32>
    %586 = arith.cmpf oge, %1, %585 : vector<1x256xf32>
    %cst_256 = arith.constant 1.800000e+01 : f32
    %587 = vector.broadcast %cst_256 : f32 to vector<1x256xf32>
    %588 = arith.cmpf ole, %1, %587 : vector<1x256xf32>
    %589 = arith.andi %586, %588 : vector<1x256xi1>
    %cst_257 = arith.constant -2.000000e+00 : f32
    %590 = vector.broadcast %cst_257 : f32 to vector<1x256xf32>
    %591 = arith.cmpf oge, %2, %590 : vector<1x256xf32>
    %592 = arith.andi %589, %591 : vector<1x256xi1>
    %cst_258 = arith.constant 1.300000e+01 : f32
    %593 = vector.broadcast %cst_258 : f32 to vector<1x256xf32>
    %594 = arith.cmpf ole, %2, %593 : vector<1x256xf32>
    %595 = arith.andi %592, %594 : vector<1x256xi1>
    %cst_259 = arith.constant 0.000000e+00 : f32
    %596 = vector.broadcast %cst_259 : f32 to vector<1x256xf32>
    %597 = arith.select %595, %3, %596 : vector<1x256xi1>, vector<1x256xf32>
    %598 = vector.broadcast %597 : vector<1x256xf32> to vector<2x256xf32>
    %599 = arith.mulf %584, %598 : vector<2x256xf32>
    %c5_260 = arith.constant 5 : index
    %c0_261 = arith.constant 0 : index
    %c0_262 = arith.constant 0 : index
    %600 = vector.load %arg7[%c5_260, %c0_261, %c0_262] : memref<49x2x1xf32, #tpu.memory_space<vmem>>, vector<1x2x1xf32>
    %601 = vector.shape_cast %600 : vector<1x2x1xf32> to vector<2x1xf32>
    %602 = vector.broadcast %601 : vector<2x1xf32> to vector<2x256xf32>
    %603 = arith.mulf %599, %602 : vector<2x256xf32>
    %604 = arith.addf %581, %603 : vector<2x256xf32>
    %cst_263 = arith.constant 0.000000e+00 : f32
    %605 = vector.broadcast %cst_263 : f32 to vector<2x45xf32>
    %606 = vector.extract_strided_slice %465 {offsets = [0, 0], sizes = [2, 211], strides = [1, 1]} : vector<2x256xf32> to vector<2x211xf32>
    %607 = tpu.concatenate %605, %606 in 1 : vector<2x45xf32>, vector<2x211xf32> -> vector<2x256xf32>
    %cst_264 = arith.constant 3.000000e+00 : f32
    %608 = vector.broadcast %cst_264 : f32 to vector<1x256xf32>
    %609 = arith.cmpf oge, %1, %608 : vector<1x256xf32>
    %cst_265 = arith.constant 1.800000e+01 : f32
    %610 = vector.broadcast %cst_265 : f32 to vector<1x256xf32>
    %611 = arith.cmpf ole, %1, %610 : vector<1x256xf32>
    %612 = arith.andi %609, %611 : vector<1x256xi1>
    %cst_266 = arith.constant -3.000000e+00 : f32
    %613 = vector.broadcast %cst_266 : f32 to vector<1x256xf32>
    %614 = arith.cmpf oge, %2, %613 : vector<1x256xf32>
    %615 = arith.andi %612, %614 : vector<1x256xi1>
    %cst_267 = arith.constant 1.200000e+01 : f32
    %616 = vector.broadcast %cst_267 : f32 to vector<1x256xf32>
    %617 = arith.cmpf ole, %2, %616 : vector<1x256xf32>
    %618 = arith.andi %615, %617 : vector<1x256xi1>
    %cst_268 = arith.constant 0.000000e+00 : f32
    %619 = vector.broadcast %cst_268 : f32 to vector<1x256xf32>
    %620 = arith.select %618, %3, %619 : vector<1x256xi1>, vector<1x256xf32>
    %621 = vector.broadcast %620 : vector<1x256xf32> to vector<2x256xf32>
    %622 = arith.mulf %607, %621 : vector<2x256xf32>
    %c6_269 = arith.constant 6 : index
    %c0_270 = arith.constant 0 : index
    %c0_271 = arith.constant 0 : index
    %623 = vector.load %arg7[%c6_269, %c0_270, %c0_271] : memref<49x2x1xf32, #tpu.memory_space<vmem>>, vector<1x2x1xf32>
    %624 = vector.shape_cast %623 : vector<1x2x1xf32> to vector<2x1xf32>
    %625 = vector.broadcast %624 : vector<2x1xf32> to vector<2x256xf32>
    %626 = arith.mulf %622, %625 : vector<2x256xf32>
    %627 = arith.addf %604, %626 : vector<2x256xf32>
    %cst_272 = arith.constant 0.000000e+00 : f32
    %628 = vector.broadcast %cst_272 : f32 to vector<2x35xf32>
    %629 = vector.extract_strided_slice %465 {offsets = [0, 0], sizes = [2, 221], strides = [1, 1]} : vector<2x256xf32> to vector<2x221xf32>
    %630 = tpu.concatenate %628, %629 in 1 : vector<2x35xf32>, vector<2x221xf32> -> vector<2x256xf32>
    %cst_273 = arith.constant 2.000000e+00 : f32
    %631 = vector.broadcast %cst_273 : f32 to vector<1x256xf32>
    %632 = arith.cmpf oge, %1, %631 : vector<1x256xf32>
    %cst_274 = arith.constant 1.700000e+01 : f32
    %633 = vector.broadcast %cst_274 : f32 to vector<1x256xf32>
    %634 = arith.cmpf ole, %1, %633 : vector<1x256xf32>
    %635 = arith.andi %632, %634 : vector<1x256xi1>
    %cst_275 = arith.constant 3.000000e+00 : f32
    %636 = vector.broadcast %cst_275 : f32 to vector<1x256xf32>
    %637 = arith.cmpf oge, %2, %636 : vector<1x256xf32>
    %638 = arith.andi %635, %637 : vector<1x256xi1>
    %cst_276 = arith.constant 1.800000e+01 : f32
    %639 = vector.broadcast %cst_276 : f32 to vector<1x256xf32>
    %640 = arith.cmpf ole, %2, %639 : vector<1x256xf32>
    %641 = arith.andi %638, %640 : vector<1x256xi1>
    %cst_277 = arith.constant 0.000000e+00 : f32
    %642 = vector.broadcast %cst_277 : f32 to vector<1x256xf32>
    %643 = arith.select %641, %3, %642 : vector<1x256xi1>, vector<1x256xf32>
    %644 = vector.broadcast %643 : vector<1x256xf32> to vector<2x256xf32>
    %645 = arith.mulf %630, %644 : vector<2x256xf32>
    %c7_278 = arith.constant 7 : index
    %c0_279 = arith.constant 0 : index
    %c0_280 = arith.constant 0 : index
    %646 = vector.load %arg7[%c7_278, %c0_279, %c0_280] : memref<49x2x1xf32, #tpu.memory_space<vmem>>, vector<1x2x1xf32>
    %647 = vector.shape_cast %646 : vector<1x2x1xf32> to vector<2x1xf32>
    %648 = vector.broadcast %647 : vector<2x1xf32> to vector<2x256xf32>
    %649 = arith.mulf %645, %648 : vector<2x256xf32>
    %650 = arith.addf %627, %649 : vector<2x256xf32>
    %cst_281 = arith.constant 0.000000e+00 : f32
    %651 = vector.broadcast %cst_281 : f32 to vector<2x34xf32>
    %652 = vector.extract_strided_slice %465 {offsets = [0, 0], sizes = [2, 222], strides = [1, 1]} : vector<2x256xf32> to vector<2x222xf32>
    %653 = tpu.concatenate %651, %652 in 1 : vector<2x34xf32>, vector<2x222xf32> -> vector<2x256xf32>
    %cst_282 = arith.constant 2.000000e+00 : f32
    %654 = vector.broadcast %cst_282 : f32 to vector<1x256xf32>
    %655 = arith.cmpf oge, %1, %654 : vector<1x256xf32>
    %cst_283 = arith.constant 1.700000e+01 : f32
    %656 = vector.broadcast %cst_283 : f32 to vector<1x256xf32>
    %657 = arith.cmpf ole, %1, %656 : vector<1x256xf32>
    %658 = arith.andi %655, %657 : vector<1x256xi1>
    %cst_284 = arith.constant 2.000000e+00 : f32
    %659 = vector.broadcast %cst_284 : f32 to vector<1x256xf32>
    %660 = arith.cmpf oge, %2, %659 : vector<1x256xf32>
    %661 = arith.andi %658, %660 : vector<1x256xi1>
    %cst_285 = arith.constant 1.700000e+01 : f32
    %662 = vector.broadcast %cst_285 : f32 to vector<1x256xf32>
    %663 = arith.cmpf ole, %2, %662 : vector<1x256xf32>
    %664 = arith.andi %661, %663 : vector<1x256xi1>
    %cst_286 = arith.constant 0.000000e+00 : f32
    %665 = vector.broadcast %cst_286 : f32 to vector<1x256xf32>
    %666 = arith.select %664, %3, %665 : vector<1x256xi1>, vector<1x256xf32>
    %667 = vector.broadcast %666 : vector<1x256xf32> to vector<2x256xf32>
    %668 = arith.mulf %653, %667 : vector<2x256xf32>
    %c8_287 = arith.constant 8 : index
    %c0_288 = arith.constant 0 : index
    %c0_289 = arith.constant 0 : index
    %669 = vector.load %arg7[%c8_287, %c0_288, %c0_289] : memref<49x2x1xf32, #tpu.memory_space<vmem>>, vector<1x2x1xf32>
    %670 = vector.shape_cast %669 : vector<1x2x1xf32> to vector<2x1xf32>
    %671 = vector.broadcast %670 : vector<2x1xf32> to vector<2x256xf32>
    %672 = arith.mulf %668, %671 : vector<2x256xf32>
    %673 = arith.addf %650, %672 : vector<2x256xf32>
    %cst_290 = arith.constant 0.000000e+00 : f32
    %674 = vector.broadcast %cst_290 : f32 to vector<2x33xf32>
    %675 = vector.extract_strided_slice %465 {offsets = [0, 0], sizes = [2, 223], strides = [1, 1]} : vector<2x256xf32> to vector<2x223xf32>
    %676 = tpu.concatenate %674, %675 in 1 : vector<2x33xf32>, vector<2x223xf32> -> vector<2x256xf32>
    %cst_291 = arith.constant 2.000000e+00 : f32
    %677 = vector.broadcast %cst_291 : f32 to vector<1x256xf32>
    %678 = arith.cmpf oge, %1, %677 : vector<1x256xf32>
    %cst_292 = arith.constant 1.700000e+01 : f32
    %679 = vector.broadcast %cst_292 : f32 to vector<1x256xf32>
    %680 = arith.cmpf ole, %1, %679 : vector<1x256xf32>
    %681 = arith.andi %678, %680 : vector<1x256xi1>
    %cst_293 = arith.constant 1.000000e+00 : f32
    %682 = vector.broadcast %cst_293 : f32 to vector<1x256xf32>
    %683 = arith.cmpf oge, %2, %682 : vector<1x256xf32>
    %684 = arith.andi %681, %683 : vector<1x256xi1>
    %cst_294 = arith.constant 1.600000e+01 : f32
    %685 = vector.broadcast %cst_294 : f32 to vector<1x256xf32>
    %686 = arith.cmpf ole, %2, %685 : vector<1x256xf32>
    %687 = arith.andi %684, %686 : vector<1x256xi1>
    %cst_295 = arith.constant 0.000000e+00 : f32
    %688 = vector.broadcast %cst_295 : f32 to vector<1x256xf32>
    %689 = arith.select %687, %3, %688 : vector<1x256xi1>, vector<1x256xf32>
    %690 = vector.broadcast %689 : vector<1x256xf32> to vector<2x256xf32>
    %691 = arith.mulf %676, %690 : vector<2x256xf32>
    %c9 = arith.constant 9 : index
    %c0_296 = arith.constant 0 : index
    %c0_297 = arith.constant 0 : index
    %692 = vector.load %arg7[%c9, %c0_296, %c0_297] : memref<49x2x1xf32, #tpu.memory_space<vmem>>, vector<1x2x1xf32>
    %693 = vector.shape_cast %692 : vector<1x2x1xf32> to vector<2x1xf32>
    %694 = vector.broadcast %693 : vector<2x1xf32> to vector<2x256xf32>
    %695 = arith.mulf %691, %694 : vector<2x256xf32>
    %696 = arith.addf %673, %695 : vector<2x256xf32>
    %cst_298 = arith.constant 0.000000e+00 : f32
    %697 = vector.broadcast %cst_298 : f32 to vector<2x32xf32>
    %698 = vector.extract_strided_slice %465 {offsets = [0, 0], sizes = [2, 224], strides = [1, 1]} : vector<2x256xf32> to vector<2x224xf32>
    %699 = tpu.concatenate %697, %698 in 1 : vector<2x32xf32>, vector<2x224xf32> -> vector<2x256xf32>
    %cst_299 = arith.constant 2.000000e+00 : f32
    %700 = vector.broadcast %cst_299 : f32 to vector<1x256xf32>
    %701 = arith.cmpf oge, %1, %700 : vector<1x256xf32>
    %cst_300 = arith.constant 1.700000e+01 : f32
    %702 = vector.broadcast %cst_300 : f32 to vector<1x256xf32>
    %703 = arith.cmpf ole, %1, %702 : vector<1x256xf32>
    %704 = arith.andi %701, %703 : vector<1x256xi1>
    %cst_301 = arith.constant 0.000000e+00 : f32
    %705 = vector.broadcast %cst_301 : f32 to vector<1x256xf32>
    %706 = arith.cmpf oge, %2, %705 : vector<1x256xf32>
    %707 = arith.andi %704, %706 : vector<1x256xi1>
    %cst_302 = arith.constant 1.500000e+01 : f32
    %708 = vector.broadcast %cst_302 : f32 to vector<1x256xf32>
    %709 = arith.cmpf ole, %2, %708 : vector<1x256xf32>
    %710 = arith.andi %707, %709 : vector<1x256xi1>
    %cst_303 = arith.constant 0.000000e+00 : f32
    %711 = vector.broadcast %cst_303 : f32 to vector<1x256xf32>
    %712 = arith.select %710, %3, %711 : vector<1x256xi1>, vector<1x256xf32>
    %713 = vector.broadcast %712 : vector<1x256xf32> to vector<2x256xf32>
    %714 = arith.mulf %699, %713 : vector<2x256xf32>
    %c10 = arith.constant 10 : index
    %c0_304 = arith.constant 0 : index
    %c0_305 = arith.constant 0 : index
    %715 = vector.load %arg7[%c10, %c0_304, %c0_305] : memref<49x2x1xf32, #tpu.memory_space<vmem>>, vector<1x2x1xf32>
    %716 = vector.shape_cast %715 : vector<1x2x1xf32> to vector<2x1xf32>
    %717 = vector.broadcast %716 : vector<2x1xf32> to vector<2x256xf32>
    %718 = arith.mulf %714, %717 : vector<2x256xf32>
    %719 = arith.addf %696, %718 : vector<2x256xf32>
    %cst_306 = arith.constant 0.000000e+00 : f32
    %720 = vector.broadcast %cst_306 : f32 to vector<2x31xf32>
    %721 = vector.extract_strided_slice %465 {offsets = [0, 0], sizes = [2, 225], strides = [1, 1]} : vector<2x256xf32> to vector<2x225xf32>
    %722 = tpu.concatenate %720, %721 in 1 : vector<2x31xf32>, vector<2x225xf32> -> vector<2x256xf32>
    %cst_307 = arith.constant 2.000000e+00 : f32
    %723 = vector.broadcast %cst_307 : f32 to vector<1x256xf32>
    %724 = arith.cmpf oge, %1, %723 : vector<1x256xf32>
    %cst_308 = arith.constant 1.700000e+01 : f32
    %725 = vector.broadcast %cst_308 : f32 to vector<1x256xf32>
    %726 = arith.cmpf ole, %1, %725 : vector<1x256xf32>
    %727 = arith.andi %724, %726 : vector<1x256xi1>
    %cst_309 = arith.constant -1.000000e+00 : f32
    %728 = vector.broadcast %cst_309 : f32 to vector<1x256xf32>
    %729 = arith.cmpf oge, %2, %728 : vector<1x256xf32>
    %730 = arith.andi %727, %729 : vector<1x256xi1>
    %cst_310 = arith.constant 1.400000e+01 : f32
    %731 = vector.broadcast %cst_310 : f32 to vector<1x256xf32>
    %732 = arith.cmpf ole, %2, %731 : vector<1x256xf32>
    %733 = arith.andi %730, %732 : vector<1x256xi1>
    %cst_311 = arith.constant 0.000000e+00 : f32
    %734 = vector.broadcast %cst_311 : f32 to vector<1x256xf32>
    %735 = arith.select %733, %3, %734 : vector<1x256xi1>, vector<1x256xf32>
    %736 = vector.broadcast %735 : vector<1x256xf32> to vector<2x256xf32>
    %737 = arith.mulf %722, %736 : vector<2x256xf32>
    %c11 = arith.constant 11 : index
    %c0_312 = arith.constant 0 : index
    %c0_313 = arith.constant 0 : index
    %738 = vector.load %arg7[%c11, %c0_312, %c0_313] : memref<49x2x1xf32, #tpu.memory_space<vmem>>, vector<1x2x1xf32>
    %739 = vector.shape_cast %738 : vector<1x2x1xf32> to vector<2x1xf32>
    %740 = vector.broadcast %739 : vector<2x1xf32> to vector<2x256xf32>
    %741 = arith.mulf %737, %740 : vector<2x256xf32>
    %742 = arith.addf %719, %741 : vector<2x256xf32>
    %cst_314 = arith.constant 0.000000e+00 : f32
    %743 = vector.broadcast %cst_314 : f32 to vector<2x30xf32>
    %744 = vector.extract_strided_slice %465 {offsets = [0, 0], sizes = [2, 226], strides = [1, 1]} : vector<2x256xf32> to vector<2x226xf32>
    %745 = tpu.concatenate %743, %744 in 1 : vector<2x30xf32>, vector<2x226xf32> -> vector<2x256xf32>
    %cst_315 = arith.constant 2.000000e+00 : f32
    %746 = vector.broadcast %cst_315 : f32 to vector<1x256xf32>
    %747 = arith.cmpf oge, %1, %746 : vector<1x256xf32>
    %cst_316 = arith.constant 1.700000e+01 : f32
    %748 = vector.broadcast %cst_316 : f32 to vector<1x256xf32>
    %749 = arith.cmpf ole, %1, %748 : vector<1x256xf32>
    %750 = arith.andi %747, %749 : vector<1x256xi1>
    %cst_317 = arith.constant -2.000000e+00 : f32
    %751 = vector.broadcast %cst_317 : f32 to vector<1x256xf32>
    %752 = arith.cmpf oge, %2, %751 : vector<1x256xf32>
    %753 = arith.andi %750, %752 : vector<1x256xi1>
    %cst_318 = arith.constant 1.300000e+01 : f32
    %754 = vector.broadcast %cst_318 : f32 to vector<1x256xf32>
    %755 = arith.cmpf ole, %2, %754 : vector<1x256xf32>
    %756 = arith.andi %753, %755 : vector<1x256xi1>
    %cst_319 = arith.constant 0.000000e+00 : f32
    %757 = vector.broadcast %cst_319 : f32 to vector<1x256xf32>
    %758 = arith.select %756, %3, %757 : vector<1x256xi1>, vector<1x256xf32>
    %759 = vector.broadcast %758 : vector<1x256xf32> to vector<2x256xf32>
    %760 = arith.mulf %745, %759 : vector<2x256xf32>
    %c12 = arith.constant 12 : index
    %c0_320 = arith.constant 0 : index
    %c0_321 = arith.constant 0 : index
    %761 = vector.load %arg7[%c12, %c0_320, %c0_321] : memref<49x2x1xf32, #tpu.memory_space<vmem>>, vector<1x2x1xf32>
    %762 = vector.shape_cast %761 : vector<1x2x1xf32> to vector<2x1xf32>
    %763 = vector.broadcast %762 : vector<2x1xf32> to vector<2x256xf32>
    %764 = arith.mulf %760, %763 : vector<2x256xf32>
    %765 = arith.addf %742, %764 : vector<2x256xf32>
    %cst_322 = arith.constant 0.000000e+00 : f32
    %766 = vector.broadcast %cst_322 : f32 to vector<2x29xf32>
    %767 = vector.extract_strided_slice %465 {offsets = [0, 0], sizes = [2, 227], strides = [1, 1]} : vector<2x256xf32> to vector<2x227xf32>
    %768 = tpu.concatenate %766, %767 in 1 : vector<2x29xf32>, vector<2x227xf32> -> vector<2x256xf32>
    %cst_323 = arith.constant 2.000000e+00 : f32
    %769 = vector.broadcast %cst_323 : f32 to vector<1x256xf32>
    %770 = arith.cmpf oge, %1, %769 : vector<1x256xf32>
    %cst_324 = arith.constant 1.700000e+01 : f32
    %771 = vector.broadcast %cst_324 : f32 to vector<1x256xf32>
    %772 = arith.cmpf ole, %1, %771 : vector<1x256xf32>
    %773 = arith.andi %770, %772 : vector<1x256xi1>
    %cst_325 = arith.constant -3.000000e+00 : f32
    %774 = vector.broadcast %cst_325 : f32 to vector<1x256xf32>
    %775 = arith.cmpf oge, %2, %774 : vector<1x256xf32>
    %776 = arith.andi %773, %775 : vector<1x256xi1>
    %cst_326 = arith.constant 1.200000e+01 : f32
    %777 = vector.broadcast %cst_326 : f32 to vector<1x256xf32>
    %778 = arith.cmpf ole, %2, %777 : vector<1x256xf32>
    %779 = arith.andi %776, %778 : vector<1x256xi1>
    %cst_327 = arith.constant 0.000000e+00 : f32
    %780 = vector.broadcast %cst_327 : f32 to vector<1x256xf32>
    %781 = arith.select %779, %3, %780 : vector<1x256xi1>, vector<1x256xf32>
    %782 = vector.broadcast %781 : vector<1x256xf32> to vector<2x256xf32>
    %783 = arith.mulf %768, %782 : vector<2x256xf32>
    %c13 = arith.constant 13 : index
    %c0_328 = arith.constant 0 : index
    %c0_329 = arith.constant 0 : index
    %784 = vector.load %arg7[%c13, %c0_328, %c0_329] : memref<49x2x1xf32, #tpu.memory_space<vmem>>, vector<1x2x1xf32>
    %785 = vector.shape_cast %784 : vector<1x2x1xf32> to vector<2x1xf32>
    %786 = vector.broadcast %785 : vector<2x1xf32> to vector<2x256xf32>
    %787 = arith.mulf %783, %786 : vector<2x256xf32>
    %788 = arith.addf %765, %787 : vector<2x256xf32>
    %cst_330 = arith.constant 0.000000e+00 : f32
    %789 = vector.broadcast %cst_330 : f32 to vector<2x19xf32>
    %790 = vector.extract_strided_slice %465 {offsets = [0, 0], sizes = [2, 237], strides = [1, 1]} : vector<2x256xf32> to vector<2x237xf32>
    %791 = tpu.concatenate %789, %790 in 1 : vector<2x19xf32>, vector<2x237xf32> -> vector<2x256xf32>
    %cst_331 = arith.constant 1.000000e+00 : f32
    %792 = vector.broadcast %cst_331 : f32 to vector<1x256xf32>
    %793 = arith.cmpf oge, %1, %792 : vector<1x256xf32>
    %cst_332 = arith.constant 1.600000e+01 : f32
    %794 = vector.broadcast %cst_332 : f32 to vector<1x256xf32>
    %795 = arith.cmpf ole, %1, %794 : vector<1x256xf32>
    %796 = arith.andi %793, %795 : vector<1x256xi1>
    %cst_333 = arith.constant 3.000000e+00 : f32
    %797 = vector.broadcast %cst_333 : f32 to vector<1x256xf32>
    %798 = arith.cmpf oge, %2, %797 : vector<1x256xf32>
    %799 = arith.andi %796, %798 : vector<1x256xi1>
    %cst_334 = arith.constant 1.800000e+01 : f32
    %800 = vector.broadcast %cst_334 : f32 to vector<1x256xf32>
    %801 = arith.cmpf ole, %2, %800 : vector<1x256xf32>
    %802 = arith.andi %799, %801 : vector<1x256xi1>
    %cst_335 = arith.constant 0.000000e+00 : f32
    %803 = vector.broadcast %cst_335 : f32 to vector<1x256xf32>
    %804 = arith.select %802, %3, %803 : vector<1x256xi1>, vector<1x256xf32>
    %805 = vector.broadcast %804 : vector<1x256xf32> to vector<2x256xf32>
    %806 = arith.mulf %791, %805 : vector<2x256xf32>
    %c14 = arith.constant 14 : index
    %c0_336 = arith.constant 0 : index
    %c0_337 = arith.constant 0 : index
    %807 = vector.load %arg7[%c14, %c0_336, %c0_337] : memref<49x2x1xf32, #tpu.memory_space<vmem>>, vector<1x2x1xf32>
    %808 = vector.shape_cast %807 : vector<1x2x1xf32> to vector<2x1xf32>
    %809 = vector.broadcast %808 : vector<2x1xf32> to vector<2x256xf32>
    %810 = arith.mulf %806, %809 : vector<2x256xf32>
    %811 = arith.addf %788, %810 : vector<2x256xf32>
    %cst_338 = arith.constant 0.000000e+00 : f32
    %812 = vector.broadcast %cst_338 : f32 to vector<2x18xf32>
    %813 = vector.extract_strided_slice %465 {offsets = [0, 0], sizes = [2, 238], strides = [1, 1]} : vector<2x256xf32> to vector<2x238xf32>
    %814 = tpu.concatenate %812, %813 in 1 : vector<2x18xf32>, vector<2x238xf32> -> vector<2x256xf32>
    %cst_339 = arith.constant 1.000000e+00 : f32
    %815 = vector.broadcast %cst_339 : f32 to vector<1x256xf32>
    %816 = arith.cmpf oge, %1, %815 : vector<1x256xf32>
    %cst_340 = arith.constant 1.600000e+01 : f32
    %817 = vector.broadcast %cst_340 : f32 to vector<1x256xf32>
    %818 = arith.cmpf ole, %1, %817 : vector<1x256xf32>
    %819 = arith.andi %816, %818 : vector<1x256xi1>
    %cst_341 = arith.constant 2.000000e+00 : f32
    %820 = vector.broadcast %cst_341 : f32 to vector<1x256xf32>
    %821 = arith.cmpf oge, %2, %820 : vector<1x256xf32>
    %822 = arith.andi %819, %821 : vector<1x256xi1>
    %cst_342 = arith.constant 1.700000e+01 : f32
    %823 = vector.broadcast %cst_342 : f32 to vector<1x256xf32>
    %824 = arith.cmpf ole, %2, %823 : vector<1x256xf32>
    %825 = arith.andi %822, %824 : vector<1x256xi1>
    %cst_343 = arith.constant 0.000000e+00 : f32
    %826 = vector.broadcast %cst_343 : f32 to vector<1x256xf32>
    %827 = arith.select %825, %3, %826 : vector<1x256xi1>, vector<1x256xf32>
    %828 = vector.broadcast %827 : vector<1x256xf32> to vector<2x256xf32>
    %829 = arith.mulf %814, %828 : vector<2x256xf32>
    %c15 = arith.constant 15 : index
    %c0_344 = arith.constant 0 : index
    %c0_345 = arith.constant 0 : index
    %830 = vector.load %arg7[%c15, %c0_344, %c0_345] : memref<49x2x1xf32, #tpu.memory_space<vmem>>, vector<1x2x1xf32>
    %831 = vector.shape_cast %830 : vector<1x2x1xf32> to vector<2x1xf32>
    %832 = vector.broadcast %831 : vector<2x1xf32> to vector<2x256xf32>
    %833 = arith.mulf %829, %832 : vector<2x256xf32>
    %834 = arith.addf %811, %833 : vector<2x256xf32>
    %cst_346 = arith.constant 0.000000e+00 : f32
    %835 = vector.broadcast %cst_346 : f32 to vector<2x17xf32>
    %836 = vector.extract_strided_slice %465 {offsets = [0, 0], sizes = [2, 239], strides = [1, 1]} : vector<2x256xf32> to vector<2x239xf32>
    %837 = tpu.concatenate %835, %836 in 1 : vector<2x17xf32>, vector<2x239xf32> -> vector<2x256xf32>
    %cst_347 = arith.constant 1.000000e+00 : f32
    %838 = vector.broadcast %cst_347 : f32 to vector<1x256xf32>
    %839 = arith.cmpf oge, %1, %838 : vector<1x256xf32>
    %cst_348 = arith.constant 1.600000e+01 : f32
    %840 = vector.broadcast %cst_348 : f32 to vector<1x256xf32>
    %841 = arith.cmpf ole, %1, %840 : vector<1x256xf32>
    %842 = arith.andi %839, %841 : vector<1x256xi1>
    %cst_349 = arith.constant 1.000000e+00 : f32
    %843 = vector.broadcast %cst_349 : f32 to vector<1x256xf32>
    %844 = arith.cmpf oge, %2, %843 : vector<1x256xf32>
    %845 = arith.andi %842, %844 : vector<1x256xi1>
    %cst_350 = arith.constant 1.600000e+01 : f32
    %846 = vector.broadcast %cst_350 : f32 to vector<1x256xf32>
    %847 = arith.cmpf ole, %2, %846 : vector<1x256xf32>
    %848 = arith.andi %845, %847 : vector<1x256xi1>
    %cst_351 = arith.constant 0.000000e+00 : f32
    %849 = vector.broadcast %cst_351 : f32 to vector<1x256xf32>
    %850 = arith.select %848, %3, %849 : vector<1x256xi1>, vector<1x256xf32>
    %851 = vector.broadcast %850 : vector<1x256xf32> to vector<2x256xf32>
    %852 = arith.mulf %837, %851 : vector<2x256xf32>
    %c16 = arith.constant 16 : index
    %c0_352 = arith.constant 0 : index
    %c0_353 = arith.constant 0 : index
    %853 = vector.load %arg7[%c16, %c0_352, %c0_353] : memref<49x2x1xf32, #tpu.memory_space<vmem>>, vector<1x2x1xf32>
    %854 = vector.shape_cast %853 : vector<1x2x1xf32> to vector<2x1xf32>
    %855 = vector.broadcast %854 : vector<2x1xf32> to vector<2x256xf32>
    %856 = arith.mulf %852, %855 : vector<2x256xf32>
    %857 = arith.addf %834, %856 : vector<2x256xf32>
    %cst_354 = arith.constant 0.000000e+00 : f32
    %858 = vector.broadcast %cst_354 : f32 to vector<2x16xf32>
    %859 = vector.extract_strided_slice %465 {offsets = [0, 0], sizes = [2, 240], strides = [1, 1]} : vector<2x256xf32> to vector<2x240xf32>
    %860 = tpu.concatenate %858, %859 in 1 : vector<2x16xf32>, vector<2x240xf32> -> vector<2x256xf32>
    %cst_355 = arith.constant 1.000000e+00 : f32
    %861 = vector.broadcast %cst_355 : f32 to vector<1x256xf32>
    %862 = arith.cmpf oge, %1, %861 : vector<1x256xf32>
    %cst_356 = arith.constant 1.600000e+01 : f32
    %863 = vector.broadcast %cst_356 : f32 to vector<1x256xf32>
    %864 = arith.cmpf ole, %1, %863 : vector<1x256xf32>
    %865 = arith.andi %862, %864 : vector<1x256xi1>
    %cst_357 = arith.constant 0.000000e+00 : f32
    %866 = vector.broadcast %cst_357 : f32 to vector<1x256xf32>
    %867 = arith.cmpf oge, %2, %866 : vector<1x256xf32>
    %868 = arith.andi %865, %867 : vector<1x256xi1>
    %cst_358 = arith.constant 1.500000e+01 : f32
    %869 = vector.broadcast %cst_358 : f32 to vector<1x256xf32>
    %870 = arith.cmpf ole, %2, %869 : vector<1x256xf32>
    %871 = arith.andi %868, %870 : vector<1x256xi1>
    %cst_359 = arith.constant 0.000000e+00 : f32
    %872 = vector.broadcast %cst_359 : f32 to vector<1x256xf32>
    %873 = arith.select %871, %3, %872 : vector<1x256xi1>, vector<1x256xf32>
    %874 = vector.broadcast %873 : vector<1x256xf32> to vector<2x256xf32>
    %875 = arith.mulf %860, %874 : vector<2x256xf32>
    %c17 = arith.constant 17 : index
    %c0_360 = arith.constant 0 : index
    %c0_361 = arith.constant 0 : index
    %876 = vector.load %arg7[%c17, %c0_360, %c0_361] : memref<49x2x1xf32, #tpu.memory_space<vmem>>, vector<1x2x1xf32>
    %877 = vector.shape_cast %876 : vector<1x2x1xf32> to vector<2x1xf32>
    %878 = vector.broadcast %877 : vector<2x1xf32> to vector<2x256xf32>
    %879 = arith.mulf %875, %878 : vector<2x256xf32>
    %880 = arith.addf %857, %879 : vector<2x256xf32>
    %cst_362 = arith.constant 0.000000e+00 : f32
    %881 = vector.broadcast %cst_362 : f32 to vector<2x15xf32>
    %882 = vector.extract_strided_slice %465 {offsets = [0, 0], sizes = [2, 241], strides = [1, 1]} : vector<2x256xf32> to vector<2x241xf32>
    %883 = tpu.concatenate %881, %882 in 1 : vector<2x15xf32>, vector<2x241xf32> -> vector<2x256xf32>
    %cst_363 = arith.constant 1.000000e+00 : f32
    %884 = vector.broadcast %cst_363 : f32 to vector<1x256xf32>
    %885 = arith.cmpf oge, %1, %884 : vector<1x256xf32>
    %cst_364 = arith.constant 1.600000e+01 : f32
    %886 = vector.broadcast %cst_364 : f32 to vector<1x256xf32>
    %887 = arith.cmpf ole, %1, %886 : vector<1x256xf32>
    %888 = arith.andi %885, %887 : vector<1x256xi1>
    %cst_365 = arith.constant -1.000000e+00 : f32
    %889 = vector.broadcast %cst_365 : f32 to vector<1x256xf32>
    %890 = arith.cmpf oge, %2, %889 : vector<1x256xf32>
    %891 = arith.andi %888, %890 : vector<1x256xi1>
    %cst_366 = arith.constant 1.400000e+01 : f32
    %892 = vector.broadcast %cst_366 : f32 to vector<1x256xf32>
    %893 = arith.cmpf ole, %2, %892 : vector<1x256xf32>
    %894 = arith.andi %891, %893 : vector<1x256xi1>
    %cst_367 = arith.constant 0.000000e+00 : f32
    %895 = vector.broadcast %cst_367 : f32 to vector<1x256xf32>
    %896 = arith.select %894, %3, %895 : vector<1x256xi1>, vector<1x256xf32>
    %897 = vector.broadcast %896 : vector<1x256xf32> to vector<2x256xf32>
    %898 = arith.mulf %883, %897 : vector<2x256xf32>
    %c18 = arith.constant 18 : index
    %c0_368 = arith.constant 0 : index
    %c0_369 = arith.constant 0 : index
    %899 = vector.load %arg7[%c18, %c0_368, %c0_369] : memref<49x2x1xf32, #tpu.memory_space<vmem>>, vector<1x2x1xf32>
    %900 = vector.shape_cast %899 : vector<1x2x1xf32> to vector<2x1xf32>
    %901 = vector.broadcast %900 : vector<2x1xf32> to vector<2x256xf32>
    %902 = arith.mulf %898, %901 : vector<2x256xf32>
    %903 = arith.addf %880, %902 : vector<2x256xf32>
    %cst_370 = arith.constant 0.000000e+00 : f32
    %904 = vector.broadcast %cst_370 : f32 to vector<2x14xf32>
    %905 = vector.extract_strided_slice %465 {offsets = [0, 0], sizes = [2, 242], strides = [1, 1]} : vector<2x256xf32> to vector<2x242xf32>
    %906 = tpu.concatenate %904, %905 in 1 : vector<2x14xf32>, vector<2x242xf32> -> vector<2x256xf32>
    %cst_371 = arith.constant 1.000000e+00 : f32
    %907 = vector.broadcast %cst_371 : f32 to vector<1x256xf32>
    %908 = arith.cmpf oge, %1, %907 : vector<1x256xf32>
    %cst_372 = arith.constant 1.600000e+01 : f32
    %909 = vector.broadcast %cst_372 : f32 to vector<1x256xf32>
    %910 = arith.cmpf ole, %1, %909 : vector<1x256xf32>
    %911 = arith.andi %908, %910 : vector<1x256xi1>
    %cst_373 = arith.constant -2.000000e+00 : f32
    %912 = vector.broadcast %cst_373 : f32 to vector<1x256xf32>
    %913 = arith.cmpf oge, %2, %912 : vector<1x256xf32>
    %914 = arith.andi %911, %913 : vector<1x256xi1>
    %cst_374 = arith.constant 1.300000e+01 : f32
    %915 = vector.broadcast %cst_374 : f32 to vector<1x256xf32>
    %916 = arith.cmpf ole, %2, %915 : vector<1x256xf32>
    %917 = arith.andi %914, %916 : vector<1x256xi1>
    %cst_375 = arith.constant 0.000000e+00 : f32
    %918 = vector.broadcast %cst_375 : f32 to vector<1x256xf32>
    %919 = arith.select %917, %3, %918 : vector<1x256xi1>, vector<1x256xf32>
    %920 = vector.broadcast %919 : vector<1x256xf32> to vector<2x256xf32>
    %921 = arith.mulf %906, %920 : vector<2x256xf32>
    %c19 = arith.constant 19 : index
    %c0_376 = arith.constant 0 : index
    %c0_377 = arith.constant 0 : index
    %922 = vector.load %arg7[%c19, %c0_376, %c0_377] : memref<49x2x1xf32, #tpu.memory_space<vmem>>, vector<1x2x1xf32>
    %923 = vector.shape_cast %922 : vector<1x2x1xf32> to vector<2x1xf32>
    %924 = vector.broadcast %923 : vector<2x1xf32> to vector<2x256xf32>
    %925 = arith.mulf %921, %924 : vector<2x256xf32>
    %926 = arith.addf %903, %925 : vector<2x256xf32>
    %cst_378 = arith.constant 0.000000e+00 : f32
    %927 = vector.broadcast %cst_378 : f32 to vector<2x13xf32>
    %928 = vector.extract_strided_slice %465 {offsets = [0, 0], sizes = [2, 243], strides = [1, 1]} : vector<2x256xf32> to vector<2x243xf32>
    %929 = tpu.concatenate %927, %928 in 1 : vector<2x13xf32>, vector<2x243xf32> -> vector<2x256xf32>
    %cst_379 = arith.constant 1.000000e+00 : f32
    %930 = vector.broadcast %cst_379 : f32 to vector<1x256xf32>
    %931 = arith.cmpf oge, %1, %930 : vector<1x256xf32>
    %cst_380 = arith.constant 1.600000e+01 : f32
    %932 = vector.broadcast %cst_380 : f32 to vector<1x256xf32>
    %933 = arith.cmpf ole, %1, %932 : vector<1x256xf32>
    %934 = arith.andi %931, %933 : vector<1x256xi1>
    %cst_381 = arith.constant -3.000000e+00 : f32
    %935 = vector.broadcast %cst_381 : f32 to vector<1x256xf32>
    %936 = arith.cmpf oge, %2, %935 : vector<1x256xf32>
    %937 = arith.andi %934, %936 : vector<1x256xi1>
    %cst_382 = arith.constant 1.200000e+01 : f32
    %938 = vector.broadcast %cst_382 : f32 to vector<1x256xf32>
    %939 = arith.cmpf ole, %2, %938 : vector<1x256xf32>
    %940 = arith.andi %937, %939 : vector<1x256xi1>
    %cst_383 = arith.constant 0.000000e+00 : f32
    %941 = vector.broadcast %cst_383 : f32 to vector<1x256xf32>
    %942 = arith.select %940, %3, %941 : vector<1x256xi1>, vector<1x256xf32>
    %943 = vector.broadcast %942 : vector<1x256xf32> to vector<2x256xf32>
    %944 = arith.mulf %929, %943 : vector<2x256xf32>
    %c20 = arith.constant 20 : index
    %c0_384 = arith.constant 0 : index
    %c0_385 = arith.constant 0 : index
    %945 = vector.load %arg7[%c20, %c0_384, %c0_385] : memref<49x2x1xf32, #tpu.memory_space<vmem>>, vector<1x2x1xf32>
    %946 = vector.shape_cast %945 : vector<1x2x1xf32> to vector<2x1xf32>
    %947 = vector.broadcast %946 : vector<2x1xf32> to vector<2x256xf32>
    %948 = arith.mulf %944, %947 : vector<2x256xf32>
    %949 = arith.addf %926, %948 : vector<2x256xf32>
    %cst_386 = arith.constant 0.000000e+00 : f32
    %950 = vector.broadcast %cst_386 : f32 to vector<2x3xf32>
    %951 = vector.extract_strided_slice %465 {offsets = [0, 0], sizes = [2, 253], strides = [1, 1]} : vector<2x256xf32> to vector<2x253xf32>
    %952 = tpu.concatenate %950, %951 in 1 : vector<2x3xf32>, vector<2x253xf32> -> vector<2x256xf32>
    %cst_387 = arith.constant 0.000000e+00 : f32
    %953 = vector.broadcast %cst_387 : f32 to vector<1x256xf32>
    %954 = arith.cmpf oge, %1, %953 : vector<1x256xf32>
    %cst_388 = arith.constant 1.500000e+01 : f32
    %955 = vector.broadcast %cst_388 : f32 to vector<1x256xf32>
    %956 = arith.cmpf ole, %1, %955 : vector<1x256xf32>
    %957 = arith.andi %954, %956 : vector<1x256xi1>
    %cst_389 = arith.constant 3.000000e+00 : f32
    %958 = vector.broadcast %cst_389 : f32 to vector<1x256xf32>
    %959 = arith.cmpf oge, %2, %958 : vector<1x256xf32>
    %960 = arith.andi %957, %959 : vector<1x256xi1>
    %cst_390 = arith.constant 1.800000e+01 : f32
    %961 = vector.broadcast %cst_390 : f32 to vector<1x256xf32>
    %962 = arith.cmpf ole, %2, %961 : vector<1x256xf32>
    %963 = arith.andi %960, %962 : vector<1x256xi1>
    %cst_391 = arith.constant 0.000000e+00 : f32
    %964 = vector.broadcast %cst_391 : f32 to vector<1x256xf32>
    %965 = arith.select %963, %3, %964 : vector<1x256xi1>, vector<1x256xf32>
    %966 = vector.broadcast %965 : vector<1x256xf32> to vector<2x256xf32>
    %967 = arith.mulf %952, %966 : vector<2x256xf32>
    %c21 = arith.constant 21 : index
    %c0_392 = arith.constant 0 : index
    %c0_393 = arith.constant 0 : index
    %968 = vector.load %arg7[%c21, %c0_392, %c0_393] : memref<49x2x1xf32, #tpu.memory_space<vmem>>, vector<1x2x1xf32>
    %969 = vector.shape_cast %968 : vector<1x2x1xf32> to vector<2x1xf32>
    %970 = vector.broadcast %969 : vector<2x1xf32> to vector<2x256xf32>
    %971 = arith.mulf %967, %970 : vector<2x256xf32>
    %972 = arith.addf %949, %971 : vector<2x256xf32>
    %cst_394 = arith.constant 0.000000e+00 : f32
    %973 = vector.broadcast %cst_394 : f32 to vector<2x2xf32>
    %974 = vector.extract_strided_slice %465 {offsets = [0, 0], sizes = [2, 254], strides = [1, 1]} : vector<2x256xf32> to vector<2x254xf32>
    %975 = tpu.concatenate %973, %974 in 1 : vector<2x2xf32>, vector<2x254xf32> -> vector<2x256xf32>
    %cst_395 = arith.constant 0.000000e+00 : f32
    %976 = vector.broadcast %cst_395 : f32 to vector<1x256xf32>
    %977 = arith.cmpf oge, %1, %976 : vector<1x256xf32>
    %cst_396 = arith.constant 1.500000e+01 : f32
    %978 = vector.broadcast %cst_396 : f32 to vector<1x256xf32>
    %979 = arith.cmpf ole, %1, %978 : vector<1x256xf32>
    %980 = arith.andi %977, %979 : vector<1x256xi1>
    %cst_397 = arith.constant 2.000000e+00 : f32
    %981 = vector.broadcast %cst_397 : f32 to vector<1x256xf32>
    %982 = arith.cmpf oge, %2, %981 : vector<1x256xf32>
    %983 = arith.andi %980, %982 : vector<1x256xi1>
    %cst_398 = arith.constant 1.700000e+01 : f32
    %984 = vector.broadcast %cst_398 : f32 to vector<1x256xf32>
    %985 = arith.cmpf ole, %2, %984 : vector<1x256xf32>
    %986 = arith.andi %983, %985 : vector<1x256xi1>
    %cst_399 = arith.constant 0.000000e+00 : f32
    %987 = vector.broadcast %cst_399 : f32 to vector<1x256xf32>
    %988 = arith.select %986, %3, %987 : vector<1x256xi1>, vector<1x256xf32>
    %989 = vector.broadcast %988 : vector<1x256xf32> to vector<2x256xf32>
    %990 = arith.mulf %975, %989 : vector<2x256xf32>
    %c22 = arith.constant 22 : index
    %c0_400 = arith.constant 0 : index
    %c0_401 = arith.constant 0 : index
    %991 = vector.load %arg7[%c22, %c0_400, %c0_401] : memref<49x2x1xf32, #tpu.memory_space<vmem>>, vector<1x2x1xf32>
    %992 = vector.shape_cast %991 : vector<1x2x1xf32> to vector<2x1xf32>
    %993 = vector.broadcast %992 : vector<2x1xf32> to vector<2x256xf32>
    %994 = arith.mulf %990, %993 : vector<2x256xf32>
    %995 = arith.addf %972, %994 : vector<2x256xf32>
    %cst_402 = arith.constant 0.000000e+00 : f32
    %996 = vector.broadcast %cst_402 : f32 to vector<2x1xf32>
    %997 = vector.extract_strided_slice %465 {offsets = [0, 0], sizes = [2, 255], strides = [1, 1]} : vector<2x256xf32> to vector<2x255xf32>
    %998 = tpu.concatenate %996, %997 in 1 : vector<2x1xf32>, vector<2x255xf32> -> vector<2x256xf32>
    %cst_403 = arith.constant 0.000000e+00 : f32
    %999 = vector.broadcast %cst_403 : f32 to vector<1x256xf32>
    %1000 = arith.cmpf oge, %1, %999 : vector<1x256xf32>
    %cst_404 = arith.constant 1.500000e+01 : f32
    %1001 = vector.broadcast %cst_404 : f32 to vector<1x256xf32>
    %1002 = arith.cmpf ole, %1, %1001 : vector<1x256xf32>
    %1003 = arith.andi %1000, %1002 : vector<1x256xi1>
    %cst_405 = arith.constant 1.000000e+00 : f32
    %1004 = vector.broadcast %cst_405 : f32 to vector<1x256xf32>
    %1005 = arith.cmpf oge, %2, %1004 : vector<1x256xf32>
    %1006 = arith.andi %1003, %1005 : vector<1x256xi1>
    %cst_406 = arith.constant 1.600000e+01 : f32
    %1007 = vector.broadcast %cst_406 : f32 to vector<1x256xf32>
    %1008 = arith.cmpf ole, %2, %1007 : vector<1x256xf32>
    %1009 = arith.andi %1006, %1008 : vector<1x256xi1>
    %cst_407 = arith.constant 0.000000e+00 : f32
    %1010 = vector.broadcast %cst_407 : f32 to vector<1x256xf32>
    %1011 = arith.select %1009, %3, %1010 : vector<1x256xi1>, vector<1x256xf32>
    %1012 = vector.broadcast %1011 : vector<1x256xf32> to vector<2x256xf32>
    %1013 = arith.mulf %998, %1012 : vector<2x256xf32>
    %c23 = arith.constant 23 : index
    %c0_408 = arith.constant 0 : index
    %c0_409 = arith.constant 0 : index
    %1014 = vector.load %arg7[%c23, %c0_408, %c0_409] : memref<49x2x1xf32, #tpu.memory_space<vmem>>, vector<1x2x1xf32>
    %1015 = vector.shape_cast %1014 : vector<1x2x1xf32> to vector<2x1xf32>
    %1016 = vector.broadcast %1015 : vector<2x1xf32> to vector<2x256xf32>
    %1017 = arith.mulf %1013, %1016 : vector<2x256xf32>
    %1018 = arith.addf %995, %1017 : vector<2x256xf32>
    %cst_410 = arith.constant 0.000000e+00 : f32
    %1019 = vector.broadcast %cst_410 : f32 to vector<1x256xf32>
    %1020 = arith.cmpf oge, %1, %1019 : vector<1x256xf32>
    %cst_411 = arith.constant 1.500000e+01 : f32
    %1021 = vector.broadcast %cst_411 : f32 to vector<1x256xf32>
    %1022 = arith.cmpf ole, %1, %1021 : vector<1x256xf32>
    %1023 = arith.andi %1020, %1022 : vector<1x256xi1>
    %cst_412 = arith.constant 0.000000e+00 : f32
    %1024 = vector.broadcast %cst_412 : f32 to vector<1x256xf32>
    %1025 = arith.cmpf oge, %2, %1024 : vector<1x256xf32>
    %1026 = arith.andi %1023, %1025 : vector<1x256xi1>
    %cst_413 = arith.constant 1.500000e+01 : f32
    %1027 = vector.broadcast %cst_413 : f32 to vector<1x256xf32>
    %1028 = arith.cmpf ole, %2, %1027 : vector<1x256xf32>
    %1029 = arith.andi %1026, %1028 : vector<1x256xi1>
    %cst_414 = arith.constant 0.000000e+00 : f32
    %1030 = vector.broadcast %cst_414 : f32 to vector<1x256xf32>
    %1031 = arith.select %1029, %3, %1030 : vector<1x256xi1>, vector<1x256xf32>
    %1032 = vector.broadcast %1031 : vector<1x256xf32> to vector<2x256xf32>
    %1033 = arith.mulf %465, %1032 : vector<2x256xf32>
    %c24 = arith.constant 24 : index
    %c0_415 = arith.constant 0 : index
    %c0_416 = arith.constant 0 : index
    %1034 = vector.load %arg7[%c24, %c0_415, %c0_416] : memref<49x2x1xf32, #tpu.memory_space<vmem>>, vector<1x2x1xf32>
    %1035 = vector.shape_cast %1034 : vector<1x2x1xf32> to vector<2x1xf32>
    %1036 = vector.broadcast %1035 : vector<2x1xf32> to vector<2x256xf32>
    %1037 = arith.mulf %1033, %1036 : vector<2x256xf32>
    %1038 = arith.addf %1018, %1037 : vector<2x256xf32>
    %cst_417 = arith.constant 0.000000e+00 : f32
    %1039 = vector.broadcast %cst_417 : f32 to vector<2x1xf32>
    %1040 = vector.extract_strided_slice %465 {offsets = [0, 1], sizes = [2, 255], strides = [1, 1]} : vector<2x256xf32> to vector<2x255xf32>
    %1041 = tpu.concatenate %1040, %1039 in 1 : vector<2x255xf32>, vector<2x1xf32> -> vector<2x256xf32>
    %cst_418 = arith.constant 0.000000e+00 : f32
    %1042 = vector.broadcast %cst_418 : f32 to vector<1x256xf32>
    %1043 = arith.cmpf oge, %1, %1042 : vector<1x256xf32>
    %cst_419 = arith.constant 1.500000e+01 : f32
    %1044 = vector.broadcast %cst_419 : f32 to vector<1x256xf32>
    %1045 = arith.cmpf ole, %1, %1044 : vector<1x256xf32>
    %1046 = arith.andi %1043, %1045 : vector<1x256xi1>
    %cst_420 = arith.constant -1.000000e+00 : f32
    %1047 = vector.broadcast %cst_420 : f32 to vector<1x256xf32>
    %1048 = arith.cmpf oge, %2, %1047 : vector<1x256xf32>
    %1049 = arith.andi %1046, %1048 : vector<1x256xi1>
    %cst_421 = arith.constant 1.400000e+01 : f32
    %1050 = vector.broadcast %cst_421 : f32 to vector<1x256xf32>
    %1051 = arith.cmpf ole, %2, %1050 : vector<1x256xf32>
    %1052 = arith.andi %1049, %1051 : vector<1x256xi1>
    %cst_422 = arith.constant 0.000000e+00 : f32
    %1053 = vector.broadcast %cst_422 : f32 to vector<1x256xf32>
    %1054 = arith.select %1052, %3, %1053 : vector<1x256xi1>, vector<1x256xf32>
    %1055 = vector.broadcast %1054 : vector<1x256xf32> to vector<2x256xf32>
    %1056 = arith.mulf %1041, %1055 : vector<2x256xf32>
    %c25 = arith.constant 25 : index
    %c0_423 = arith.constant 0 : index
    %c0_424 = arith.constant 0 : index
    %1057 = vector.load %arg7[%c25, %c0_423, %c0_424] : memref<49x2x1xf32, #tpu.memory_space<vmem>>, vector<1x2x1xf32>
    %1058 = vector.shape_cast %1057 : vector<1x2x1xf32> to vector<2x1xf32>
    %1059 = vector.broadcast %1058 : vector<2x1xf32> to vector<2x256xf32>
    %1060 = arith.mulf %1056, %1059 : vector<2x256xf32>
    %1061 = arith.addf %1038, %1060 : vector<2x256xf32>
    %cst_425 = arith.constant 0.000000e+00 : f32
    %1062 = vector.broadcast %cst_425 : f32 to vector<2x2xf32>
    %1063 = vector.extract_strided_slice %465 {offsets = [0, 2], sizes = [2, 254], strides = [1, 1]} : vector<2x256xf32> to vector<2x254xf32>
    %1064 = tpu.concatenate %1063, %1062 in 1 : vector<2x254xf32>, vector<2x2xf32> -> vector<2x256xf32>
    %cst_426 = arith.constant 0.000000e+00 : f32
    %1065 = vector.broadcast %cst_426 : f32 to vector<1x256xf32>
    %1066 = arith.cmpf oge, %1, %1065 : vector<1x256xf32>
    %cst_427 = arith.constant 1.500000e+01 : f32
    %1067 = vector.broadcast %cst_427 : f32 to vector<1x256xf32>
    %1068 = arith.cmpf ole, %1, %1067 : vector<1x256xf32>
    %1069 = arith.andi %1066, %1068 : vector<1x256xi1>
    %cst_428 = arith.constant -2.000000e+00 : f32
    %1070 = vector.broadcast %cst_428 : f32 to vector<1x256xf32>
    %1071 = arith.cmpf oge, %2, %1070 : vector<1x256xf32>
    %1072 = arith.andi %1069, %1071 : vector<1x256xi1>
    %cst_429 = arith.constant 1.300000e+01 : f32
    %1073 = vector.broadcast %cst_429 : f32 to vector<1x256xf32>
    %1074 = arith.cmpf ole, %2, %1073 : vector<1x256xf32>
    %1075 = arith.andi %1072, %1074 : vector<1x256xi1>
    %cst_430 = arith.constant 0.000000e+00 : f32
    %1076 = vector.broadcast %cst_430 : f32 to vector<1x256xf32>
    %1077 = arith.select %1075, %3, %1076 : vector<1x256xi1>, vector<1x256xf32>
    %1078 = vector.broadcast %1077 : vector<1x256xf32> to vector<2x256xf32>
    %1079 = arith.mulf %1064, %1078 : vector<2x256xf32>
    %c26 = arith.constant 26 : index
    %c0_431 = arith.constant 0 : index
    %c0_432 = arith.constant 0 : index
    %1080 = vector.load %arg7[%c26, %c0_431, %c0_432] : memref<49x2x1xf32, #tpu.memory_space<vmem>>, vector<1x2x1xf32>
    %1081 = vector.shape_cast %1080 : vector<1x2x1xf32> to vector<2x1xf32>
    %1082 = vector.broadcast %1081 : vector<2x1xf32> to vector<2x256xf32>
    %1083 = arith.mulf %1079, %1082 : vector<2x256xf32>
    %1084 = arith.addf %1061, %1083 : vector<2x256xf32>
    %cst_433 = arith.constant 0.000000e+00 : f32
    %1085 = vector.broadcast %cst_433 : f32 to vector<2x3xf32>
    %1086 = vector.extract_strided_slice %465 {offsets = [0, 3], sizes = [2, 253], strides = [1, 1]} : vector<2x256xf32> to vector<2x253xf32>
    %1087 = tpu.concatenate %1086, %1085 in 1 : vector<2x253xf32>, vector<2x3xf32> -> vector<2x256xf32>
    %cst_434 = arith.constant 0.000000e+00 : f32
    %1088 = vector.broadcast %cst_434 : f32 to vector<1x256xf32>
    %1089 = arith.cmpf oge, %1, %1088 : vector<1x256xf32>
    %cst_435 = arith.constant 1.500000e+01 : f32
    %1090 = vector.broadcast %cst_435 : f32 to vector<1x256xf32>
    %1091 = arith.cmpf ole, %1, %1090 : vector<1x256xf32>
    %1092 = arith.andi %1089, %1091 : vector<1x256xi1>
    %cst_436 = arith.constant -3.000000e+00 : f32
    %1093 = vector.broadcast %cst_436 : f32 to vector<1x256xf32>
    %1094 = arith.cmpf oge, %2, %1093 : vector<1x256xf32>
    %1095 = arith.andi %1092, %1094 : vector<1x256xi1>
    %cst_437 = arith.constant 1.200000e+01 : f32
    %1096 = vector.broadcast %cst_437 : f32 to vector<1x256xf32>
    %1097 = arith.cmpf ole, %2, %1096 : vector<1x256xf32>
    %1098 = arith.andi %1095, %1097 : vector<1x256xi1>
    %cst_438 = arith.constant 0.000000e+00 : f32
    %1099 = vector.broadcast %cst_438 : f32 to vector<1x256xf32>
    %1100 = arith.select %1098, %3, %1099 : vector<1x256xi1>, vector<1x256xf32>
    %1101 = vector.broadcast %1100 : vector<1x256xf32> to vector<2x256xf32>
    %1102 = arith.mulf %1087, %1101 : vector<2x256xf32>
    %c27 = arith.constant 27 : index
    %c0_439 = arith.constant 0 : index
    %c0_440 = arith.constant 0 : index
    %1103 = vector.load %arg7[%c27, %c0_439, %c0_440] : memref<49x2x1xf32, #tpu.memory_space<vmem>>, vector<1x2x1xf32>
    %1104 = vector.shape_cast %1103 : vector<1x2x1xf32> to vector<2x1xf32>
    %1105 = vector.broadcast %1104 : vector<2x1xf32> to vector<2x256xf32>
    %1106 = arith.mulf %1102, %1105 : vector<2x256xf32>
    %1107 = arith.addf %1084, %1106 : vector<2x256xf32>
    %cst_441 = arith.constant 0.000000e+00 : f32
    %1108 = vector.broadcast %cst_441 : f32 to vector<2x13xf32>
    %1109 = vector.extract_strided_slice %465 {offsets = [0, 13], sizes = [2, 243], strides = [1, 1]} : vector<2x256xf32> to vector<2x243xf32>
    %1110 = tpu.concatenate %1109, %1108 in 1 : vector<2x243xf32>, vector<2x13xf32> -> vector<2x256xf32>
    %cst_442 = arith.constant -1.000000e+00 : f32
    %1111 = vector.broadcast %cst_442 : f32 to vector<1x256xf32>
    %1112 = arith.cmpf oge, %1, %1111 : vector<1x256xf32>
    %cst_443 = arith.constant 1.400000e+01 : f32
    %1113 = vector.broadcast %cst_443 : f32 to vector<1x256xf32>
    %1114 = arith.cmpf ole, %1, %1113 : vector<1x256xf32>
    %1115 = arith.andi %1112, %1114 : vector<1x256xi1>
    %cst_444 = arith.constant 3.000000e+00 : f32
    %1116 = vector.broadcast %cst_444 : f32 to vector<1x256xf32>
    %1117 = arith.cmpf oge, %2, %1116 : vector<1x256xf32>
    %1118 = arith.andi %1115, %1117 : vector<1x256xi1>
    %cst_445 = arith.constant 1.800000e+01 : f32
    %1119 = vector.broadcast %cst_445 : f32 to vector<1x256xf32>
    %1120 = arith.cmpf ole, %2, %1119 : vector<1x256xf32>
    %1121 = arith.andi %1118, %1120 : vector<1x256xi1>
    %cst_446 = arith.constant 0.000000e+00 : f32
    %1122 = vector.broadcast %cst_446 : f32 to vector<1x256xf32>
    %1123 = arith.select %1121, %3, %1122 : vector<1x256xi1>, vector<1x256xf32>
    %1124 = vector.broadcast %1123 : vector<1x256xf32> to vector<2x256xf32>
    %1125 = arith.mulf %1110, %1124 : vector<2x256xf32>
    %c28 = arith.constant 28 : index
    %c0_447 = arith.constant 0 : index
    %c0_448 = arith.constant 0 : index
    %1126 = vector.load %arg7[%c28, %c0_447, %c0_448] : memref<49x2x1xf32, #tpu.memory_space<vmem>>, vector<1x2x1xf32>
    %1127 = vector.shape_cast %1126 : vector<1x2x1xf32> to vector<2x1xf32>
    %1128 = vector.broadcast %1127 : vector<2x1xf32> to vector<2x256xf32>
    %1129 = arith.mulf %1125, %1128 : vector<2x256xf32>
    %1130 = arith.addf %1107, %1129 : vector<2x256xf32>
    %cst_449 = arith.constant 0.000000e+00 : f32
    %1131 = vector.broadcast %cst_449 : f32 to vector<2x14xf32>
    %1132 = vector.extract_strided_slice %465 {offsets = [0, 14], sizes = [2, 242], strides = [1, 1]} : vector<2x256xf32> to vector<2x242xf32>
    %1133 = tpu.concatenate %1132, %1131 in 1 : vector<2x242xf32>, vector<2x14xf32> -> vector<2x256xf32>
    %cst_450 = arith.constant -1.000000e+00 : f32
    %1134 = vector.broadcast %cst_450 : f32 to vector<1x256xf32>
    %1135 = arith.cmpf oge, %1, %1134 : vector<1x256xf32>
    %cst_451 = arith.constant 1.400000e+01 : f32
    %1136 = vector.broadcast %cst_451 : f32 to vector<1x256xf32>
    %1137 = arith.cmpf ole, %1, %1136 : vector<1x256xf32>
    %1138 = arith.andi %1135, %1137 : vector<1x256xi1>
    %cst_452 = arith.constant 2.000000e+00 : f32
    %1139 = vector.broadcast %cst_452 : f32 to vector<1x256xf32>
    %1140 = arith.cmpf oge, %2, %1139 : vector<1x256xf32>
    %1141 = arith.andi %1138, %1140 : vector<1x256xi1>
    %cst_453 = arith.constant 1.700000e+01 : f32
    %1142 = vector.broadcast %cst_453 : f32 to vector<1x256xf32>
    %1143 = arith.cmpf ole, %2, %1142 : vector<1x256xf32>
    %1144 = arith.andi %1141, %1143 : vector<1x256xi1>
    %cst_454 = arith.constant 0.000000e+00 : f32
    %1145 = vector.broadcast %cst_454 : f32 to vector<1x256xf32>
    %1146 = arith.select %1144, %3, %1145 : vector<1x256xi1>, vector<1x256xf32>
    %1147 = vector.broadcast %1146 : vector<1x256xf32> to vector<2x256xf32>
    %1148 = arith.mulf %1133, %1147 : vector<2x256xf32>
    %c29 = arith.constant 29 : index
    %c0_455 = arith.constant 0 : index
    %c0_456 = arith.constant 0 : index
    %1149 = vector.load %arg7[%c29, %c0_455, %c0_456] : memref<49x2x1xf32, #tpu.memory_space<vmem>>, vector<1x2x1xf32>
    %1150 = vector.shape_cast %1149 : vector<1x2x1xf32> to vector<2x1xf32>
    %1151 = vector.broadcast %1150 : vector<2x1xf32> to vector<2x256xf32>
    %1152 = arith.mulf %1148, %1151 : vector<2x256xf32>
    %1153 = arith.addf %1130, %1152 : vector<2x256xf32>
    %cst_457 = arith.constant 0.000000e+00 : f32
    %1154 = vector.broadcast %cst_457 : f32 to vector<2x15xf32>
    %1155 = vector.extract_strided_slice %465 {offsets = [0, 15], sizes = [2, 241], strides = [1, 1]} : vector<2x256xf32> to vector<2x241xf32>
    %1156 = tpu.concatenate %1155, %1154 in 1 : vector<2x241xf32>, vector<2x15xf32> -> vector<2x256xf32>
    %cst_458 = arith.constant -1.000000e+00 : f32
    %1157 = vector.broadcast %cst_458 : f32 to vector<1x256xf32>
    %1158 = arith.cmpf oge, %1, %1157 : vector<1x256xf32>
    %cst_459 = arith.constant 1.400000e+01 : f32
    %1159 = vector.broadcast %cst_459 : f32 to vector<1x256xf32>
    %1160 = arith.cmpf ole, %1, %1159 : vector<1x256xf32>
    %1161 = arith.andi %1158, %1160 : vector<1x256xi1>
    %cst_460 = arith.constant 1.000000e+00 : f32
    %1162 = vector.broadcast %cst_460 : f32 to vector<1x256xf32>
    %1163 = arith.cmpf oge, %2, %1162 : vector<1x256xf32>
    %1164 = arith.andi %1161, %1163 : vector<1x256xi1>
    %cst_461 = arith.constant 1.600000e+01 : f32
    %1165 = vector.broadcast %cst_461 : f32 to vector<1x256xf32>
    %1166 = arith.cmpf ole, %2, %1165 : vector<1x256xf32>
    %1167 = arith.andi %1164, %1166 : vector<1x256xi1>
    %cst_462 = arith.constant 0.000000e+00 : f32
    %1168 = vector.broadcast %cst_462 : f32 to vector<1x256xf32>
    %1169 = arith.select %1167, %3, %1168 : vector<1x256xi1>, vector<1x256xf32>
    %1170 = vector.broadcast %1169 : vector<1x256xf32> to vector<2x256xf32>
    %1171 = arith.mulf %1156, %1170 : vector<2x256xf32>
    %c30 = arith.constant 30 : index
    %c0_463 = arith.constant 0 : index
    %c0_464 = arith.constant 0 : index
    %1172 = vector.load %arg7[%c30, %c0_463, %c0_464] : memref<49x2x1xf32, #tpu.memory_space<vmem>>, vector<1x2x1xf32>
    %1173 = vector.shape_cast %1172 : vector<1x2x1xf32> to vector<2x1xf32>
    %1174 = vector.broadcast %1173 : vector<2x1xf32> to vector<2x256xf32>
    %1175 = arith.mulf %1171, %1174 : vector<2x256xf32>
    %1176 = arith.addf %1153, %1175 : vector<2x256xf32>
    %cst_465 = arith.constant 0.000000e+00 : f32
    %1177 = vector.broadcast %cst_465 : f32 to vector<2x16xf32>
    %1178 = vector.extract_strided_slice %465 {offsets = [0, 16], sizes = [2, 240], strides = [1, 1]} : vector<2x256xf32> to vector<2x240xf32>
    %1179 = tpu.concatenate %1178, %1177 in 1 : vector<2x240xf32>, vector<2x16xf32> -> vector<2x256xf32>
    %cst_466 = arith.constant -1.000000e+00 : f32
    %1180 = vector.broadcast %cst_466 : f32 to vector<1x256xf32>
    %1181 = arith.cmpf oge, %1, %1180 : vector<1x256xf32>
    %cst_467 = arith.constant 1.400000e+01 : f32
    %1182 = vector.broadcast %cst_467 : f32 to vector<1x256xf32>
    %1183 = arith.cmpf ole, %1, %1182 : vector<1x256xf32>
    %1184 = arith.andi %1181, %1183 : vector<1x256xi1>
    %cst_468 = arith.constant 0.000000e+00 : f32
    %1185 = vector.broadcast %cst_468 : f32 to vector<1x256xf32>
    %1186 = arith.cmpf oge, %2, %1185 : vector<1x256xf32>
    %1187 = arith.andi %1184, %1186 : vector<1x256xi1>
    %cst_469 = arith.constant 1.500000e+01 : f32
    %1188 = vector.broadcast %cst_469 : f32 to vector<1x256xf32>
    %1189 = arith.cmpf ole, %2, %1188 : vector<1x256xf32>
    %1190 = arith.andi %1187, %1189 : vector<1x256xi1>
    %cst_470 = arith.constant 0.000000e+00 : f32
    %1191 = vector.broadcast %cst_470 : f32 to vector<1x256xf32>
    %1192 = arith.select %1190, %3, %1191 : vector<1x256xi1>, vector<1x256xf32>
    %1193 = vector.broadcast %1192 : vector<1x256xf32> to vector<2x256xf32>
    %1194 = arith.mulf %1179, %1193 : vector<2x256xf32>
    %c31 = arith.constant 31 : index
    %c0_471 = arith.constant 0 : index
    %c0_472 = arith.constant 0 : index
    %1195 = vector.load %arg7[%c31, %c0_471, %c0_472] : memref<49x2x1xf32, #tpu.memory_space<vmem>>, vector<1x2x1xf32>
    %1196 = vector.shape_cast %1195 : vector<1x2x1xf32> to vector<2x1xf32>
    %1197 = vector.broadcast %1196 : vector<2x1xf32> to vector<2x256xf32>
    %1198 = arith.mulf %1194, %1197 : vector<2x256xf32>
    %1199 = arith.addf %1176, %1198 : vector<2x256xf32>
    %cst_473 = arith.constant 0.000000e+00 : f32
    %1200 = vector.broadcast %cst_473 : f32 to vector<2x17xf32>
    %1201 = vector.extract_strided_slice %465 {offsets = [0, 17], sizes = [2, 239], strides = [1, 1]} : vector<2x256xf32> to vector<2x239xf32>
    %1202 = tpu.concatenate %1201, %1200 in 1 : vector<2x239xf32>, vector<2x17xf32> -> vector<2x256xf32>
    %cst_474 = arith.constant -1.000000e+00 : f32
    %1203 = vector.broadcast %cst_474 : f32 to vector<1x256xf32>
    %1204 = arith.cmpf oge, %1, %1203 : vector<1x256xf32>
    %cst_475 = arith.constant 1.400000e+01 : f32
    %1205 = vector.broadcast %cst_475 : f32 to vector<1x256xf32>
    %1206 = arith.cmpf ole, %1, %1205 : vector<1x256xf32>
    %1207 = arith.andi %1204, %1206 : vector<1x256xi1>
    %cst_476 = arith.constant -1.000000e+00 : f32
    %1208 = vector.broadcast %cst_476 : f32 to vector<1x256xf32>
    %1209 = arith.cmpf oge, %2, %1208 : vector<1x256xf32>
    %1210 = arith.andi %1207, %1209 : vector<1x256xi1>
    %cst_477 = arith.constant 1.400000e+01 : f32
    %1211 = vector.broadcast %cst_477 : f32 to vector<1x256xf32>
    %1212 = arith.cmpf ole, %2, %1211 : vector<1x256xf32>
    %1213 = arith.andi %1210, %1212 : vector<1x256xi1>
    %cst_478 = arith.constant 0.000000e+00 : f32
    %1214 = vector.broadcast %cst_478 : f32 to vector<1x256xf32>
    %1215 = arith.select %1213, %3, %1214 : vector<1x256xi1>, vector<1x256xf32>
    %1216 = vector.broadcast %1215 : vector<1x256xf32> to vector<2x256xf32>
    %1217 = arith.mulf %1202, %1216 : vector<2x256xf32>
    %c32 = arith.constant 32 : index
    %c0_479 = arith.constant 0 : index
    %c0_480 = arith.constant 0 : index
    %1218 = vector.load %arg7[%c32, %c0_479, %c0_480] : memref<49x2x1xf32, #tpu.memory_space<vmem>>, vector<1x2x1xf32>
    %1219 = vector.shape_cast %1218 : vector<1x2x1xf32> to vector<2x1xf32>
    %1220 = vector.broadcast %1219 : vector<2x1xf32> to vector<2x256xf32>
    %1221 = arith.mulf %1217, %1220 : vector<2x256xf32>
    %1222 = arith.addf %1199, %1221 : vector<2x256xf32>
    %cst_481 = arith.constant 0.000000e+00 : f32
    %1223 = vector.broadcast %cst_481 : f32 to vector<2x18xf32>
    %1224 = vector.extract_strided_slice %465 {offsets = [0, 18], sizes = [2, 238], strides = [1, 1]} : vector<2x256xf32> to vector<2x238xf32>
    %1225 = tpu.concatenate %1224, %1223 in 1 : vector<2x238xf32>, vector<2x18xf32> -> vector<2x256xf32>
    %cst_482 = arith.constant -1.000000e+00 : f32
    %1226 = vector.broadcast %cst_482 : f32 to vector<1x256xf32>
    %1227 = arith.cmpf oge, %1, %1226 : vector<1x256xf32>
    %cst_483 = arith.constant 1.400000e+01 : f32
    %1228 = vector.broadcast %cst_483 : f32 to vector<1x256xf32>
    %1229 = arith.cmpf ole, %1, %1228 : vector<1x256xf32>
    %1230 = arith.andi %1227, %1229 : vector<1x256xi1>
    %cst_484 = arith.constant -2.000000e+00 : f32
    %1231 = vector.broadcast %cst_484 : f32 to vector<1x256xf32>
    %1232 = arith.cmpf oge, %2, %1231 : vector<1x256xf32>
    %1233 = arith.andi %1230, %1232 : vector<1x256xi1>
    %cst_485 = arith.constant 1.300000e+01 : f32
    %1234 = vector.broadcast %cst_485 : f32 to vector<1x256xf32>
    %1235 = arith.cmpf ole, %2, %1234 : vector<1x256xf32>
    %1236 = arith.andi %1233, %1235 : vector<1x256xi1>
    %cst_486 = arith.constant 0.000000e+00 : f32
    %1237 = vector.broadcast %cst_486 : f32 to vector<1x256xf32>
    %1238 = arith.select %1236, %3, %1237 : vector<1x256xi1>, vector<1x256xf32>
    %1239 = vector.broadcast %1238 : vector<1x256xf32> to vector<2x256xf32>
    %1240 = arith.mulf %1225, %1239 : vector<2x256xf32>
    %c33 = arith.constant 33 : index
    %c0_487 = arith.constant 0 : index
    %c0_488 = arith.constant 0 : index
    %1241 = vector.load %arg7[%c33, %c0_487, %c0_488] : memref<49x2x1xf32, #tpu.memory_space<vmem>>, vector<1x2x1xf32>
    %1242 = vector.shape_cast %1241 : vector<1x2x1xf32> to vector<2x1xf32>
    %1243 = vector.broadcast %1242 : vector<2x1xf32> to vector<2x256xf32>
    %1244 = arith.mulf %1240, %1243 : vector<2x256xf32>
    %1245 = arith.addf %1222, %1244 : vector<2x256xf32>
    %cst_489 = arith.constant 0.000000e+00 : f32
    %1246 = vector.broadcast %cst_489 : f32 to vector<2x19xf32>
    %1247 = vector.extract_strided_slice %465 {offsets = [0, 19], sizes = [2, 237], strides = [1, 1]} : vector<2x256xf32> to vector<2x237xf32>
    %1248 = tpu.concatenate %1247, %1246 in 1 : vector<2x237xf32>, vector<2x19xf32> -> vector<2x256xf32>
    %cst_490 = arith.constant -1.000000e+00 : f32
    %1249 = vector.broadcast %cst_490 : f32 to vector<1x256xf32>
    %1250 = arith.cmpf oge, %1, %1249 : vector<1x256xf32>
    %cst_491 = arith.constant 1.400000e+01 : f32
    %1251 = vector.broadcast %cst_491 : f32 to vector<1x256xf32>
    %1252 = arith.cmpf ole, %1, %1251 : vector<1x256xf32>
    %1253 = arith.andi %1250, %1252 : vector<1x256xi1>
    %cst_492 = arith.constant -3.000000e+00 : f32
    %1254 = vector.broadcast %cst_492 : f32 to vector<1x256xf32>
    %1255 = arith.cmpf oge, %2, %1254 : vector<1x256xf32>
    %1256 = arith.andi %1253, %1255 : vector<1x256xi1>
    %cst_493 = arith.constant 1.200000e+01 : f32
    %1257 = vector.broadcast %cst_493 : f32 to vector<1x256xf32>
    %1258 = arith.cmpf ole, %2, %1257 : vector<1x256xf32>
    %1259 = arith.andi %1256, %1258 : vector<1x256xi1>
    %cst_494 = arith.constant 0.000000e+00 : f32
    %1260 = vector.broadcast %cst_494 : f32 to vector<1x256xf32>
    %1261 = arith.select %1259, %3, %1260 : vector<1x256xi1>, vector<1x256xf32>
    %1262 = vector.broadcast %1261 : vector<1x256xf32> to vector<2x256xf32>
    %1263 = arith.mulf %1248, %1262 : vector<2x256xf32>
    %c34 = arith.constant 34 : index
    %c0_495 = arith.constant 0 : index
    %c0_496 = arith.constant 0 : index
    %1264 = vector.load %arg7[%c34, %c0_495, %c0_496] : memref<49x2x1xf32, #tpu.memory_space<vmem>>, vector<1x2x1xf32>
    %1265 = vector.shape_cast %1264 : vector<1x2x1xf32> to vector<2x1xf32>
    %1266 = vector.broadcast %1265 : vector<2x1xf32> to vector<2x256xf32>
    %1267 = arith.mulf %1263, %1266 : vector<2x256xf32>
    %1268 = arith.addf %1245, %1267 : vector<2x256xf32>
    %cst_497 = arith.constant 0.000000e+00 : f32
    %1269 = vector.broadcast %cst_497 : f32 to vector<2x29xf32>
    %1270 = vector.extract_strided_slice %465 {offsets = [0, 29], sizes = [2, 227], strides = [1, 1]} : vector<2x256xf32> to vector<2x227xf32>
    %1271 = tpu.concatenate %1270, %1269 in 1 : vector<2x227xf32>, vector<2x29xf32> -> vector<2x256xf32>
    %cst_498 = arith.constant -2.000000e+00 : f32
    %1272 = vector.broadcast %cst_498 : f32 to vector<1x256xf32>
    %1273 = arith.cmpf oge, %1, %1272 : vector<1x256xf32>
    %cst_499 = arith.constant 1.300000e+01 : f32
    %1274 = vector.broadcast %cst_499 : f32 to vector<1x256xf32>
    %1275 = arith.cmpf ole, %1, %1274 : vector<1x256xf32>
    %1276 = arith.andi %1273, %1275 : vector<1x256xi1>
    %cst_500 = arith.constant 3.000000e+00 : f32
    %1277 = vector.broadcast %cst_500 : f32 to vector<1x256xf32>
    %1278 = arith.cmpf oge, %2, %1277 : vector<1x256xf32>
    %1279 = arith.andi %1276, %1278 : vector<1x256xi1>
    %cst_501 = arith.constant 1.800000e+01 : f32
    %1280 = vector.broadcast %cst_501 : f32 to vector<1x256xf32>
    %1281 = arith.cmpf ole, %2, %1280 : vector<1x256xf32>
    %1282 = arith.andi %1279, %1281 : vector<1x256xi1>
    %cst_502 = arith.constant 0.000000e+00 : f32
    %1283 = vector.broadcast %cst_502 : f32 to vector<1x256xf32>
    %1284 = arith.select %1282, %3, %1283 : vector<1x256xi1>, vector<1x256xf32>
    %1285 = vector.broadcast %1284 : vector<1x256xf32> to vector<2x256xf32>
    %1286 = arith.mulf %1271, %1285 : vector<2x256xf32>
    %c35 = arith.constant 35 : index
    %c0_503 = arith.constant 0 : index
    %c0_504 = arith.constant 0 : index
    %1287 = vector.load %arg7[%c35, %c0_503, %c0_504] : memref<49x2x1xf32, #tpu.memory_space<vmem>>, vector<1x2x1xf32>
    %1288 = vector.shape_cast %1287 : vector<1x2x1xf32> to vector<2x1xf32>
    %1289 = vector.broadcast %1288 : vector<2x1xf32> to vector<2x256xf32>
    %1290 = arith.mulf %1286, %1289 : vector<2x256xf32>
    %1291 = arith.addf %1268, %1290 : vector<2x256xf32>
    %cst_505 = arith.constant 0.000000e+00 : f32
    %1292 = vector.broadcast %cst_505 : f32 to vector<2x30xf32>
    %1293 = vector.extract_strided_slice %465 {offsets = [0, 30], sizes = [2, 226], strides = [1, 1]} : vector<2x256xf32> to vector<2x226xf32>
    %1294 = tpu.concatenate %1293, %1292 in 1 : vector<2x226xf32>, vector<2x30xf32> -> vector<2x256xf32>
    %cst_506 = arith.constant -2.000000e+00 : f32
    %1295 = vector.broadcast %cst_506 : f32 to vector<1x256xf32>
    %1296 = arith.cmpf oge, %1, %1295 : vector<1x256xf32>
    %cst_507 = arith.constant 1.300000e+01 : f32
    %1297 = vector.broadcast %cst_507 : f32 to vector<1x256xf32>
    %1298 = arith.cmpf ole, %1, %1297 : vector<1x256xf32>
    %1299 = arith.andi %1296, %1298 : vector<1x256xi1>
    %cst_508 = arith.constant 2.000000e+00 : f32
    %1300 = vector.broadcast %cst_508 : f32 to vector<1x256xf32>
    %1301 = arith.cmpf oge, %2, %1300 : vector<1x256xf32>
    %1302 = arith.andi %1299, %1301 : vector<1x256xi1>
    %cst_509 = arith.constant 1.700000e+01 : f32
    %1303 = vector.broadcast %cst_509 : f32 to vector<1x256xf32>
    %1304 = arith.cmpf ole, %2, %1303 : vector<1x256xf32>
    %1305 = arith.andi %1302, %1304 : vector<1x256xi1>
    %cst_510 = arith.constant 0.000000e+00 : f32
    %1306 = vector.broadcast %cst_510 : f32 to vector<1x256xf32>
    %1307 = arith.select %1305, %3, %1306 : vector<1x256xi1>, vector<1x256xf32>
    %1308 = vector.broadcast %1307 : vector<1x256xf32> to vector<2x256xf32>
    %1309 = arith.mulf %1294, %1308 : vector<2x256xf32>
    %c36 = arith.constant 36 : index
    %c0_511 = arith.constant 0 : index
    %c0_512 = arith.constant 0 : index
    %1310 = vector.load %arg7[%c36, %c0_511, %c0_512] : memref<49x2x1xf32, #tpu.memory_space<vmem>>, vector<1x2x1xf32>
    %1311 = vector.shape_cast %1310 : vector<1x2x1xf32> to vector<2x1xf32>
    %1312 = vector.broadcast %1311 : vector<2x1xf32> to vector<2x256xf32>
    %1313 = arith.mulf %1309, %1312 : vector<2x256xf32>
    %1314 = arith.addf %1291, %1313 : vector<2x256xf32>
    %cst_513 = arith.constant 0.000000e+00 : f32
    %1315 = vector.broadcast %cst_513 : f32 to vector<2x31xf32>
    %1316 = vector.extract_strided_slice %465 {offsets = [0, 31], sizes = [2, 225], strides = [1, 1]} : vector<2x256xf32> to vector<2x225xf32>
    %1317 = tpu.concatenate %1316, %1315 in 1 : vector<2x225xf32>, vector<2x31xf32> -> vector<2x256xf32>
    %cst_514 = arith.constant -2.000000e+00 : f32
    %1318 = vector.broadcast %cst_514 : f32 to vector<1x256xf32>
    %1319 = arith.cmpf oge, %1, %1318 : vector<1x256xf32>
    %cst_515 = arith.constant 1.300000e+01 : f32
    %1320 = vector.broadcast %cst_515 : f32 to vector<1x256xf32>
    %1321 = arith.cmpf ole, %1, %1320 : vector<1x256xf32>
    %1322 = arith.andi %1319, %1321 : vector<1x256xi1>
    %cst_516 = arith.constant 1.000000e+00 : f32
    %1323 = vector.broadcast %cst_516 : f32 to vector<1x256xf32>
    %1324 = arith.cmpf oge, %2, %1323 : vector<1x256xf32>
    %1325 = arith.andi %1322, %1324 : vector<1x256xi1>
    %cst_517 = arith.constant 1.600000e+01 : f32
    %1326 = vector.broadcast %cst_517 : f32 to vector<1x256xf32>
    %1327 = arith.cmpf ole, %2, %1326 : vector<1x256xf32>
    %1328 = arith.andi %1325, %1327 : vector<1x256xi1>
    %cst_518 = arith.constant 0.000000e+00 : f32
    %1329 = vector.broadcast %cst_518 : f32 to vector<1x256xf32>
    %1330 = arith.select %1328, %3, %1329 : vector<1x256xi1>, vector<1x256xf32>
    %1331 = vector.broadcast %1330 : vector<1x256xf32> to vector<2x256xf32>
    %1332 = arith.mulf %1317, %1331 : vector<2x256xf32>
    %c37 = arith.constant 37 : index
    %c0_519 = arith.constant 0 : index
    %c0_520 = arith.constant 0 : index
    %1333 = vector.load %arg7[%c37, %c0_519, %c0_520] : memref<49x2x1xf32, #tpu.memory_space<vmem>>, vector<1x2x1xf32>
    %1334 = vector.shape_cast %1333 : vector<1x2x1xf32> to vector<2x1xf32>
    %1335 = vector.broadcast %1334 : vector<2x1xf32> to vector<2x256xf32>
    %1336 = arith.mulf %1332, %1335 : vector<2x256xf32>
    %1337 = arith.addf %1314, %1336 : vector<2x256xf32>
    %cst_521 = arith.constant 0.000000e+00 : f32
    %1338 = vector.broadcast %cst_521 : f32 to vector<2x32xf32>
    %1339 = vector.extract_strided_slice %465 {offsets = [0, 32], sizes = [2, 224], strides = [1, 1]} : vector<2x256xf32> to vector<2x224xf32>
    %1340 = tpu.concatenate %1339, %1338 in 1 : vector<2x224xf32>, vector<2x32xf32> -> vector<2x256xf32>
    %cst_522 = arith.constant -2.000000e+00 : f32
    %1341 = vector.broadcast %cst_522 : f32 to vector<1x256xf32>
    %1342 = arith.cmpf oge, %1, %1341 : vector<1x256xf32>
    %cst_523 = arith.constant 1.300000e+01 : f32
    %1343 = vector.broadcast %cst_523 : f32 to vector<1x256xf32>
    %1344 = arith.cmpf ole, %1, %1343 : vector<1x256xf32>
    %1345 = arith.andi %1342, %1344 : vector<1x256xi1>
    %cst_524 = arith.constant 0.000000e+00 : f32
    %1346 = vector.broadcast %cst_524 : f32 to vector<1x256xf32>
    %1347 = arith.cmpf oge, %2, %1346 : vector<1x256xf32>
    %1348 = arith.andi %1345, %1347 : vector<1x256xi1>
    %cst_525 = arith.constant 1.500000e+01 : f32
    %1349 = vector.broadcast %cst_525 : f32 to vector<1x256xf32>
    %1350 = arith.cmpf ole, %2, %1349 : vector<1x256xf32>
    %1351 = arith.andi %1348, %1350 : vector<1x256xi1>
    %cst_526 = arith.constant 0.000000e+00 : f32
    %1352 = vector.broadcast %cst_526 : f32 to vector<1x256xf32>
    %1353 = arith.select %1351, %3, %1352 : vector<1x256xi1>, vector<1x256xf32>
    %1354 = vector.broadcast %1353 : vector<1x256xf32> to vector<2x256xf32>
    %1355 = arith.mulf %1340, %1354 : vector<2x256xf32>
    %c38 = arith.constant 38 : index
    %c0_527 = arith.constant 0 : index
    %c0_528 = arith.constant 0 : index
    %1356 = vector.load %arg7[%c38, %c0_527, %c0_528] : memref<49x2x1xf32, #tpu.memory_space<vmem>>, vector<1x2x1xf32>
    %1357 = vector.shape_cast %1356 : vector<1x2x1xf32> to vector<2x1xf32>
    %1358 = vector.broadcast %1357 : vector<2x1xf32> to vector<2x256xf32>
    %1359 = arith.mulf %1355, %1358 : vector<2x256xf32>
    %1360 = arith.addf %1337, %1359 : vector<2x256xf32>
    %cst_529 = arith.constant 0.000000e+00 : f32
    %1361 = vector.broadcast %cst_529 : f32 to vector<2x33xf32>
    %1362 = vector.extract_strided_slice %465 {offsets = [0, 33], sizes = [2, 223], strides = [1, 1]} : vector<2x256xf32> to vector<2x223xf32>
    %1363 = tpu.concatenate %1362, %1361 in 1 : vector<2x223xf32>, vector<2x33xf32> -> vector<2x256xf32>
    %cst_530 = arith.constant -2.000000e+00 : f32
    %1364 = vector.broadcast %cst_530 : f32 to vector<1x256xf32>
    %1365 = arith.cmpf oge, %1, %1364 : vector<1x256xf32>
    %cst_531 = arith.constant 1.300000e+01 : f32
    %1366 = vector.broadcast %cst_531 : f32 to vector<1x256xf32>
    %1367 = arith.cmpf ole, %1, %1366 : vector<1x256xf32>
    %1368 = arith.andi %1365, %1367 : vector<1x256xi1>
    %cst_532 = arith.constant -1.000000e+00 : f32
    %1369 = vector.broadcast %cst_532 : f32 to vector<1x256xf32>
    %1370 = arith.cmpf oge, %2, %1369 : vector<1x256xf32>
    %1371 = arith.andi %1368, %1370 : vector<1x256xi1>
    %cst_533 = arith.constant 1.400000e+01 : f32
    %1372 = vector.broadcast %cst_533 : f32 to vector<1x256xf32>
    %1373 = arith.cmpf ole, %2, %1372 : vector<1x256xf32>
    %1374 = arith.andi %1371, %1373 : vector<1x256xi1>
    %cst_534 = arith.constant 0.000000e+00 : f32
    %1375 = vector.broadcast %cst_534 : f32 to vector<1x256xf32>
    %1376 = arith.select %1374, %3, %1375 : vector<1x256xi1>, vector<1x256xf32>
    %1377 = vector.broadcast %1376 : vector<1x256xf32> to vector<2x256xf32>
    %1378 = arith.mulf %1363, %1377 : vector<2x256xf32>
    %c39 = arith.constant 39 : index
    %c0_535 = arith.constant 0 : index
    %c0_536 = arith.constant 0 : index
    %1379 = vector.load %arg7[%c39, %c0_535, %c0_536] : memref<49x2x1xf32, #tpu.memory_space<vmem>>, vector<1x2x1xf32>
    %1380 = vector.shape_cast %1379 : vector<1x2x1xf32> to vector<2x1xf32>
    %1381 = vector.broadcast %1380 : vector<2x1xf32> to vector<2x256xf32>
    %1382 = arith.mulf %1378, %1381 : vector<2x256xf32>
    %1383 = arith.addf %1360, %1382 : vector<2x256xf32>
    %cst_537 = arith.constant 0.000000e+00 : f32
    %1384 = vector.broadcast %cst_537 : f32 to vector<2x34xf32>
    %1385 = vector.extract_strided_slice %465 {offsets = [0, 34], sizes = [2, 222], strides = [1, 1]} : vector<2x256xf32> to vector<2x222xf32>
    %1386 = tpu.concatenate %1385, %1384 in 1 : vector<2x222xf32>, vector<2x34xf32> -> vector<2x256xf32>
    %cst_538 = arith.constant -2.000000e+00 : f32
    %1387 = vector.broadcast %cst_538 : f32 to vector<1x256xf32>
    %1388 = arith.cmpf oge, %1, %1387 : vector<1x256xf32>
    %cst_539 = arith.constant 1.300000e+01 : f32
    %1389 = vector.broadcast %cst_539 : f32 to vector<1x256xf32>
    %1390 = arith.cmpf ole, %1, %1389 : vector<1x256xf32>
    %1391 = arith.andi %1388, %1390 : vector<1x256xi1>
    %cst_540 = arith.constant -2.000000e+00 : f32
    %1392 = vector.broadcast %cst_540 : f32 to vector<1x256xf32>
    %1393 = arith.cmpf oge, %2, %1392 : vector<1x256xf32>
    %1394 = arith.andi %1391, %1393 : vector<1x256xi1>
    %cst_541 = arith.constant 1.300000e+01 : f32
    %1395 = vector.broadcast %cst_541 : f32 to vector<1x256xf32>
    %1396 = arith.cmpf ole, %2, %1395 : vector<1x256xf32>
    %1397 = arith.andi %1394, %1396 : vector<1x256xi1>
    %cst_542 = arith.constant 0.000000e+00 : f32
    %1398 = vector.broadcast %cst_542 : f32 to vector<1x256xf32>
    %1399 = arith.select %1397, %3, %1398 : vector<1x256xi1>, vector<1x256xf32>
    %1400 = vector.broadcast %1399 : vector<1x256xf32> to vector<2x256xf32>
    %1401 = arith.mulf %1386, %1400 : vector<2x256xf32>
    %c40 = arith.constant 40 : index
    %c0_543 = arith.constant 0 : index
    %c0_544 = arith.constant 0 : index
    %1402 = vector.load %arg7[%c40, %c0_543, %c0_544] : memref<49x2x1xf32, #tpu.memory_space<vmem>>, vector<1x2x1xf32>
    %1403 = vector.shape_cast %1402 : vector<1x2x1xf32> to vector<2x1xf32>
    %1404 = vector.broadcast %1403 : vector<2x1xf32> to vector<2x256xf32>
    %1405 = arith.mulf %1401, %1404 : vector<2x256xf32>
    %1406 = arith.addf %1383, %1405 : vector<2x256xf32>
    %cst_545 = arith.constant 0.000000e+00 : f32
    %1407 = vector.broadcast %cst_545 : f32 to vector<2x35xf32>
    %1408 = vector.extract_strided_slice %465 {offsets = [0, 35], sizes = [2, 221], strides = [1, 1]} : vector<2x256xf32> to vector<2x221xf32>
    %1409 = tpu.concatenate %1408, %1407 in 1 : vector<2x221xf32>, vector<2x35xf32> -> vector<2x256xf32>
    %cst_546 = arith.constant -2.000000e+00 : f32
    %1410 = vector.broadcast %cst_546 : f32 to vector<1x256xf32>
    %1411 = arith.cmpf oge, %1, %1410 : vector<1x256xf32>
    %cst_547 = arith.constant 1.300000e+01 : f32
    %1412 = vector.broadcast %cst_547 : f32 to vector<1x256xf32>
    %1413 = arith.cmpf ole, %1, %1412 : vector<1x256xf32>
    %1414 = arith.andi %1411, %1413 : vector<1x256xi1>
    %cst_548 = arith.constant -3.000000e+00 : f32
    %1415 = vector.broadcast %cst_548 : f32 to vector<1x256xf32>
    %1416 = arith.cmpf oge, %2, %1415 : vector<1x256xf32>
    %1417 = arith.andi %1414, %1416 : vector<1x256xi1>
    %cst_549 = arith.constant 1.200000e+01 : f32
    %1418 = vector.broadcast %cst_549 : f32 to vector<1x256xf32>
    %1419 = arith.cmpf ole, %2, %1418 : vector<1x256xf32>
    %1420 = arith.andi %1417, %1419 : vector<1x256xi1>
    %cst_550 = arith.constant 0.000000e+00 : f32
    %1421 = vector.broadcast %cst_550 : f32 to vector<1x256xf32>
    %1422 = arith.select %1420, %3, %1421 : vector<1x256xi1>, vector<1x256xf32>
    %1423 = vector.broadcast %1422 : vector<1x256xf32> to vector<2x256xf32>
    %1424 = arith.mulf %1409, %1423 : vector<2x256xf32>
    %c41 = arith.constant 41 : index
    %c0_551 = arith.constant 0 : index
    %c0_552 = arith.constant 0 : index
    %1425 = vector.load %arg7[%c41, %c0_551, %c0_552] : memref<49x2x1xf32, #tpu.memory_space<vmem>>, vector<1x2x1xf32>
    %1426 = vector.shape_cast %1425 : vector<1x2x1xf32> to vector<2x1xf32>
    %1427 = vector.broadcast %1426 : vector<2x1xf32> to vector<2x256xf32>
    %1428 = arith.mulf %1424, %1427 : vector<2x256xf32>
    %1429 = arith.addf %1406, %1428 : vector<2x256xf32>
    %cst_553 = arith.constant 0.000000e+00 : f32
    %1430 = vector.broadcast %cst_553 : f32 to vector<2x45xf32>
    %1431 = vector.extract_strided_slice %465 {offsets = [0, 45], sizes = [2, 211], strides = [1, 1]} : vector<2x256xf32> to vector<2x211xf32>
    %1432 = tpu.concatenate %1431, %1430 in 1 : vector<2x211xf32>, vector<2x45xf32> -> vector<2x256xf32>
    %cst_554 = arith.constant -3.000000e+00 : f32
    %1433 = vector.broadcast %cst_554 : f32 to vector<1x256xf32>
    %1434 = arith.cmpf oge, %1, %1433 : vector<1x256xf32>
    %cst_555 = arith.constant 1.200000e+01 : f32
    %1435 = vector.broadcast %cst_555 : f32 to vector<1x256xf32>
    %1436 = arith.cmpf ole, %1, %1435 : vector<1x256xf32>
    %1437 = arith.andi %1434, %1436 : vector<1x256xi1>
    %cst_556 = arith.constant 3.000000e+00 : f32
    %1438 = vector.broadcast %cst_556 : f32 to vector<1x256xf32>
    %1439 = arith.cmpf oge, %2, %1438 : vector<1x256xf32>
    %1440 = arith.andi %1437, %1439 : vector<1x256xi1>
    %cst_557 = arith.constant 1.800000e+01 : f32
    %1441 = vector.broadcast %cst_557 : f32 to vector<1x256xf32>
    %1442 = arith.cmpf ole, %2, %1441 : vector<1x256xf32>
    %1443 = arith.andi %1440, %1442 : vector<1x256xi1>
    %cst_558 = arith.constant 0.000000e+00 : f32
    %1444 = vector.broadcast %cst_558 : f32 to vector<1x256xf32>
    %1445 = arith.select %1443, %3, %1444 : vector<1x256xi1>, vector<1x256xf32>
    %1446 = vector.broadcast %1445 : vector<1x256xf32> to vector<2x256xf32>
    %1447 = arith.mulf %1432, %1446 : vector<2x256xf32>
    %c42 = arith.constant 42 : index
    %c0_559 = arith.constant 0 : index
    %c0_560 = arith.constant 0 : index
    %1448 = vector.load %arg7[%c42, %c0_559, %c0_560] : memref<49x2x1xf32, #tpu.memory_space<vmem>>, vector<1x2x1xf32>
    %1449 = vector.shape_cast %1448 : vector<1x2x1xf32> to vector<2x1xf32>
    %1450 = vector.broadcast %1449 : vector<2x1xf32> to vector<2x256xf32>
    %1451 = arith.mulf %1447, %1450 : vector<2x256xf32>
    %1452 = arith.addf %1429, %1451 : vector<2x256xf32>
    %cst_561 = arith.constant 0.000000e+00 : f32
    %1453 = vector.broadcast %cst_561 : f32 to vector<2x46xf32>
    %1454 = vector.extract_strided_slice %465 {offsets = [0, 46], sizes = [2, 210], strides = [1, 1]} : vector<2x256xf32> to vector<2x210xf32>
    %1455 = tpu.concatenate %1454, %1453 in 1 : vector<2x210xf32>, vector<2x46xf32> -> vector<2x256xf32>
    %cst_562 = arith.constant -3.000000e+00 : f32
    %1456 = vector.broadcast %cst_562 : f32 to vector<1x256xf32>
    %1457 = arith.cmpf oge, %1, %1456 : vector<1x256xf32>
    %cst_563 = arith.constant 1.200000e+01 : f32
    %1458 = vector.broadcast %cst_563 : f32 to vector<1x256xf32>
    %1459 = arith.cmpf ole, %1, %1458 : vector<1x256xf32>
    %1460 = arith.andi %1457, %1459 : vector<1x256xi1>
    %cst_564 = arith.constant 2.000000e+00 : f32
    %1461 = vector.broadcast %cst_564 : f32 to vector<1x256xf32>
    %1462 = arith.cmpf oge, %2, %1461 : vector<1x256xf32>
    %1463 = arith.andi %1460, %1462 : vector<1x256xi1>
    %cst_565 = arith.constant 1.700000e+01 : f32
    %1464 = vector.broadcast %cst_565 : f32 to vector<1x256xf32>
    %1465 = arith.cmpf ole, %2, %1464 : vector<1x256xf32>
    %1466 = arith.andi %1463, %1465 : vector<1x256xi1>
    %cst_566 = arith.constant 0.000000e+00 : f32
    %1467 = vector.broadcast %cst_566 : f32 to vector<1x256xf32>
    %1468 = arith.select %1466, %3, %1467 : vector<1x256xi1>, vector<1x256xf32>
    %1469 = vector.broadcast %1468 : vector<1x256xf32> to vector<2x256xf32>
    %1470 = arith.mulf %1455, %1469 : vector<2x256xf32>
    %c43 = arith.constant 43 : index
    %c0_567 = arith.constant 0 : index
    %c0_568 = arith.constant 0 : index
    %1471 = vector.load %arg7[%c43, %c0_567, %c0_568] : memref<49x2x1xf32, #tpu.memory_space<vmem>>, vector<1x2x1xf32>
    %1472 = vector.shape_cast %1471 : vector<1x2x1xf32> to vector<2x1xf32>
    %1473 = vector.broadcast %1472 : vector<2x1xf32> to vector<2x256xf32>
    %1474 = arith.mulf %1470, %1473 : vector<2x256xf32>
    %1475 = arith.addf %1452, %1474 : vector<2x256xf32>
    %cst_569 = arith.constant 0.000000e+00 : f32
    %1476 = vector.broadcast %cst_569 : f32 to vector<2x47xf32>
    %1477 = vector.extract_strided_slice %465 {offsets = [0, 47], sizes = [2, 209], strides = [1, 1]} : vector<2x256xf32> to vector<2x209xf32>
    %1478 = tpu.concatenate %1477, %1476 in 1 : vector<2x209xf32>, vector<2x47xf32> -> vector<2x256xf32>
    %cst_570 = arith.constant -3.000000e+00 : f32
    %1479 = vector.broadcast %cst_570 : f32 to vector<1x256xf32>
    %1480 = arith.cmpf oge, %1, %1479 : vector<1x256xf32>
    %cst_571 = arith.constant 1.200000e+01 : f32
    %1481 = vector.broadcast %cst_571 : f32 to vector<1x256xf32>
    %1482 = arith.cmpf ole, %1, %1481 : vector<1x256xf32>
    %1483 = arith.andi %1480, %1482 : vector<1x256xi1>
    %cst_572 = arith.constant 1.000000e+00 : f32
    %1484 = vector.broadcast %cst_572 : f32 to vector<1x256xf32>
    %1485 = arith.cmpf oge, %2, %1484 : vector<1x256xf32>
    %1486 = arith.andi %1483, %1485 : vector<1x256xi1>
    %cst_573 = arith.constant 1.600000e+01 : f32
    %1487 = vector.broadcast %cst_573 : f32 to vector<1x256xf32>
    %1488 = arith.cmpf ole, %2, %1487 : vector<1x256xf32>
    %1489 = arith.andi %1486, %1488 : vector<1x256xi1>
    %cst_574 = arith.constant 0.000000e+00 : f32
    %1490 = vector.broadcast %cst_574 : f32 to vector<1x256xf32>
    %1491 = arith.select %1489, %3, %1490 : vector<1x256xi1>, vector<1x256xf32>
    %1492 = vector.broadcast %1491 : vector<1x256xf32> to vector<2x256xf32>
    %1493 = arith.mulf %1478, %1492 : vector<2x256xf32>
    %c44 = arith.constant 44 : index
    %c0_575 = arith.constant 0 : index
    %c0_576 = arith.constant 0 : index
    %1494 = vector.load %arg7[%c44, %c0_575, %c0_576] : memref<49x2x1xf32, #tpu.memory_space<vmem>>, vector<1x2x1xf32>
    %1495 = vector.shape_cast %1494 : vector<1x2x1xf32> to vector<2x1xf32>
    %1496 = vector.broadcast %1495 : vector<2x1xf32> to vector<2x256xf32>
    %1497 = arith.mulf %1493, %1496 : vector<2x256xf32>
    %1498 = arith.addf %1475, %1497 : vector<2x256xf32>
    %cst_577 = arith.constant 0.000000e+00 : f32
    %1499 = vector.broadcast %cst_577 : f32 to vector<2x48xf32>
    %1500 = vector.extract_strided_slice %465 {offsets = [0, 48], sizes = [2, 208], strides = [1, 1]} : vector<2x256xf32> to vector<2x208xf32>
    %1501 = tpu.concatenate %1500, %1499 in 1 : vector<2x208xf32>, vector<2x48xf32> -> vector<2x256xf32>
    %cst_578 = arith.constant -3.000000e+00 : f32
    %1502 = vector.broadcast %cst_578 : f32 to vector<1x256xf32>
    %1503 = arith.cmpf oge, %1, %1502 : vector<1x256xf32>
    %cst_579 = arith.constant 1.200000e+01 : f32
    %1504 = vector.broadcast %cst_579 : f32 to vector<1x256xf32>
    %1505 = arith.cmpf ole, %1, %1504 : vector<1x256xf32>
    %1506 = arith.andi %1503, %1505 : vector<1x256xi1>
    %cst_580 = arith.constant 0.000000e+00 : f32
    %1507 = vector.broadcast %cst_580 : f32 to vector<1x256xf32>
    %1508 = arith.cmpf oge, %2, %1507 : vector<1x256xf32>
    %1509 = arith.andi %1506, %1508 : vector<1x256xi1>
    %cst_581 = arith.constant 1.500000e+01 : f32
    %1510 = vector.broadcast %cst_581 : f32 to vector<1x256xf32>
    %1511 = arith.cmpf ole, %2, %1510 : vector<1x256xf32>
    %1512 = arith.andi %1509, %1511 : vector<1x256xi1>
    %cst_582 = arith.constant 0.000000e+00 : f32
    %1513 = vector.broadcast %cst_582 : f32 to vector<1x256xf32>
    %1514 = arith.select %1512, %3, %1513 : vector<1x256xi1>, vector<1x256xf32>
    %1515 = vector.broadcast %1514 : vector<1x256xf32> to vector<2x256xf32>
    %1516 = arith.mulf %1501, %1515 : vector<2x256xf32>
    %c45 = arith.constant 45 : index
    %c0_583 = arith.constant 0 : index
    %c0_584 = arith.constant 0 : index
    %1517 = vector.load %arg7[%c45, %c0_583, %c0_584] : memref<49x2x1xf32, #tpu.memory_space<vmem>>, vector<1x2x1xf32>
    %1518 = vector.shape_cast %1517 : vector<1x2x1xf32> to vector<2x1xf32>
    %1519 = vector.broadcast %1518 : vector<2x1xf32> to vector<2x256xf32>
    %1520 = arith.mulf %1516, %1519 : vector<2x256xf32>
    %1521 = arith.addf %1498, %1520 : vector<2x256xf32>
    %cst_585 = arith.constant 0.000000e+00 : f32
    %1522 = vector.broadcast %cst_585 : f32 to vector<2x49xf32>
    %1523 = vector.extract_strided_slice %465 {offsets = [0, 49], sizes = [2, 207], strides = [1, 1]} : vector<2x256xf32> to vector<2x207xf32>
    %1524 = tpu.concatenate %1523, %1522 in 1 : vector<2x207xf32>, vector<2x49xf32> -> vector<2x256xf32>
    %cst_586 = arith.constant -3.000000e+00 : f32
    %1525 = vector.broadcast %cst_586 : f32 to vector<1x256xf32>
    %1526 = arith.cmpf oge, %1, %1525 : vector<1x256xf32>
    %cst_587 = arith.constant 1.200000e+01 : f32
    %1527 = vector.broadcast %cst_587 : f32 to vector<1x256xf32>
    %1528 = arith.cmpf ole, %1, %1527 : vector<1x256xf32>
    %1529 = arith.andi %1526, %1528 : vector<1x256xi1>
    %cst_588 = arith.constant -1.000000e+00 : f32
    %1530 = vector.broadcast %cst_588 : f32 to vector<1x256xf32>
    %1531 = arith.cmpf oge, %2, %1530 : vector<1x256xf32>
    %1532 = arith.andi %1529, %1531 : vector<1x256xi1>
    %cst_589 = arith.constant 1.400000e+01 : f32
    %1533 = vector.broadcast %cst_589 : f32 to vector<1x256xf32>
    %1534 = arith.cmpf ole, %2, %1533 : vector<1x256xf32>
    %1535 = arith.andi %1532, %1534 : vector<1x256xi1>
    %cst_590 = arith.constant 0.000000e+00 : f32
    %1536 = vector.broadcast %cst_590 : f32 to vector<1x256xf32>
    %1537 = arith.select %1535, %3, %1536 : vector<1x256xi1>, vector<1x256xf32>
    %1538 = vector.broadcast %1537 : vector<1x256xf32> to vector<2x256xf32>
    %1539 = arith.mulf %1524, %1538 : vector<2x256xf32>
    %c46 = arith.constant 46 : index
    %c0_591 = arith.constant 0 : index
    %c0_592 = arith.constant 0 : index
    %1540 = vector.load %arg7[%c46, %c0_591, %c0_592] : memref<49x2x1xf32, #tpu.memory_space<vmem>>, vector<1x2x1xf32>
    %1541 = vector.shape_cast %1540 : vector<1x2x1xf32> to vector<2x1xf32>
    %1542 = vector.broadcast %1541 : vector<2x1xf32> to vector<2x256xf32>
    %1543 = arith.mulf %1539, %1542 : vector<2x256xf32>
    %1544 = arith.addf %1521, %1543 : vector<2x256xf32>
    %cst_593 = arith.constant 0.000000e+00 : f32
    %1545 = vector.broadcast %cst_593 : f32 to vector<2x50xf32>
    %1546 = vector.extract_strided_slice %465 {offsets = [0, 50], sizes = [2, 206], strides = [1, 1]} : vector<2x256xf32> to vector<2x206xf32>
    %1547 = tpu.concatenate %1546, %1545 in 1 : vector<2x206xf32>, vector<2x50xf32> -> vector<2x256xf32>
    %cst_594 = arith.constant -3.000000e+00 : f32
    %1548 = vector.broadcast %cst_594 : f32 to vector<1x256xf32>
    %1549 = arith.cmpf oge, %1, %1548 : vector<1x256xf32>
    %cst_595 = arith.constant 1.200000e+01 : f32
    %1550 = vector.broadcast %cst_595 : f32 to vector<1x256xf32>
    %1551 = arith.cmpf ole, %1, %1550 : vector<1x256xf32>
    %1552 = arith.andi %1549, %1551 : vector<1x256xi1>
    %cst_596 = arith.constant -2.000000e+00 : f32
    %1553 = vector.broadcast %cst_596 : f32 to vector<1x256xf32>
    %1554 = arith.cmpf oge, %2, %1553 : vector<1x256xf32>
    %1555 = arith.andi %1552, %1554 : vector<1x256xi1>
    %cst_597 = arith.constant 1.300000e+01 : f32
    %1556 = vector.broadcast %cst_597 : f32 to vector<1x256xf32>
    %1557 = arith.cmpf ole, %2, %1556 : vector<1x256xf32>
    %1558 = arith.andi %1555, %1557 : vector<1x256xi1>
    %cst_598 = arith.constant 0.000000e+00 : f32
    %1559 = vector.broadcast %cst_598 : f32 to vector<1x256xf32>
    %1560 = arith.select %1558, %3, %1559 : vector<1x256xi1>, vector<1x256xf32>
    %1561 = vector.broadcast %1560 : vector<1x256xf32> to vector<2x256xf32>
    %1562 = arith.mulf %1547, %1561 : vector<2x256xf32>
    %c47 = arith.constant 47 : index
    %c0_599 = arith.constant 0 : index
    %c0_600 = arith.constant 0 : index
    %1563 = vector.load %arg7[%c47, %c0_599, %c0_600] : memref<49x2x1xf32, #tpu.memory_space<vmem>>, vector<1x2x1xf32>
    %1564 = vector.shape_cast %1563 : vector<1x2x1xf32> to vector<2x1xf32>
    %1565 = vector.broadcast %1564 : vector<2x1xf32> to vector<2x256xf32>
    %1566 = arith.mulf %1562, %1565 : vector<2x256xf32>
    %1567 = arith.addf %1544, %1566 : vector<2x256xf32>
    %cst_601 = arith.constant 0.000000e+00 : f32
    %1568 = vector.broadcast %cst_601 : f32 to vector<2x51xf32>
    %1569 = vector.extract_strided_slice %465 {offsets = [0, 51], sizes = [2, 205], strides = [1, 1]} : vector<2x256xf32> to vector<2x205xf32>
    %1570 = tpu.concatenate %1569, %1568 in 1 : vector<2x205xf32>, vector<2x51xf32> -> vector<2x256xf32>
    %cst_602 = arith.constant -3.000000e+00 : f32
    %1571 = vector.broadcast %cst_602 : f32 to vector<1x256xf32>
    %1572 = arith.cmpf oge, %1, %1571 : vector<1x256xf32>
    %cst_603 = arith.constant 1.200000e+01 : f32
    %1573 = vector.broadcast %cst_603 : f32 to vector<1x256xf32>
    %1574 = arith.cmpf ole, %1, %1573 : vector<1x256xf32>
    %1575 = arith.andi %1572, %1574 : vector<1x256xi1>
    %cst_604 = arith.constant -3.000000e+00 : f32
    %1576 = vector.broadcast %cst_604 : f32 to vector<1x256xf32>
    %1577 = arith.cmpf oge, %2, %1576 : vector<1x256xf32>
    %1578 = arith.andi %1575, %1577 : vector<1x256xi1>
    %cst_605 = arith.constant 1.200000e+01 : f32
    %1579 = vector.broadcast %cst_605 : f32 to vector<1x256xf32>
    %1580 = arith.cmpf ole, %2, %1579 : vector<1x256xf32>
    %1581 = arith.andi %1578, %1580 : vector<1x256xi1>
    %cst_606 = arith.constant 0.000000e+00 : f32
    %1582 = vector.broadcast %cst_606 : f32 to vector<1x256xf32>
    %1583 = arith.select %1581, %3, %1582 : vector<1x256xi1>, vector<1x256xf32>
    %1584 = vector.broadcast %1583 : vector<1x256xf32> to vector<2x256xf32>
    %1585 = arith.mulf %1570, %1584 : vector<2x256xf32>
    %c48 = arith.constant 48 : index
    %c0_607 = arith.constant 0 : index
    %c0_608 = arith.constant 0 : index
    %1586 = vector.load %arg7[%c48, %c0_607, %c0_608] : memref<49x2x1xf32, #tpu.memory_space<vmem>>, vector<1x2x1xf32>
    %1587 = vector.shape_cast %1586 : vector<1x2x1xf32> to vector<2x1xf32>
    %1588 = vector.broadcast %1587 : vector<2x1xf32> to vector<2x256xf32>
    %1589 = arith.mulf %1585, %1588 : vector<2x256xf32>
    %1590 = arith.addf %1567, %1589 : vector<2x256xf32>
    %cst_609 = arith.constant dense<0.000000e+00> : vector<256xf32>
    %1591 = vector.multi_reduction <add>, %1590, %cst_609 [0] : vector<2x256xf32> to vector<256xf32>
    %1592 = vector.shape_cast %1591 : vector<256xf32> to vector<1x256xf32>
    %1593 = arith.negf %1592 : vector<1x256xf32>
    %1594 = math.exp %1593 : vector<1x256xf32>
    %cst_610 = arith.constant 1.000000e+00 : f32
    %1595 = vector.broadcast %cst_610 : f32 to vector<1x256xf32>
    %1596 = arith.addf %1595, %1594 : vector<1x256xf32>
    %1597 = arith.divf %1595, %1596 : vector<1x256xf32>
    %1598 = vector.broadcast %1597 : vector<1x256xf32> to vector<32x256xf32>
    %1599 = arith.mulf %458, %1598 : vector<32x256xf32>
    %1600 = arith.addf %7, %1599 : vector<32x256xf32>
    %cst_611 = arith.constant 5.000000e-01 : f32
    %1601 = vector.broadcast %cst_611 : f32 to vector<32x256xf32>
    %1602 = arith.mulf %1601, %1600 : vector<32x256xf32>
    %cst_612 = arith.constant 0.707106769 : f32
    %1603 = vector.broadcast %cst_612 : f32 to vector<32x256xf32>
    %1604 = arith.mulf %1600, %1603 : vector<32x256xf32>
    %1605 = math.erf %1604 : vector<32x256xf32>
    %cst_613 = arith.constant 1.000000e+00 : f32
    %1606 = vector.broadcast %cst_613 : f32 to vector<32x256xf32>
    %1607 = arith.addf %1606, %1605 : vector<32x256xf32>
    %1608 = arith.mulf %1602, %1607 : vector<32x256xf32>
    %c0_614 = arith.constant 0 : index
    %c0_615 = arith.constant 0 : index
    %c0_616 = arith.constant 0 : index
    %1609 = vector.load %arg9[%c0_614, %c0_615, %c0_616] : memref<1x32x256xf32, #tpu.memory_space<vmem>>, vector<1x32x256xf32>
    %1610 = vector.shape_cast %1609 : vector<1x32x256xf32> to vector<32x256xf32>
    %1611 = vector.shape_cast %1608 : vector<32x256xf32> to vector<1x32x256xf32>
    tpu.vector_store %arg9[%c0_614, %c0_615, %c0_616], %1611 {strides = array<i32>} : memref<1x32x256xf32, #tpu.memory_space<vmem>>, vector<1x32x256xf32>,
    return
  }
  func.func @transform_0(%arg0: i32) -> (i32, i32, i32) {
    %c0_i32 = arith.constant 0 : i32
    %c0_i32_0 = arith.constant 0 : i32
    %c0_i32_1 = arith.constant 0 : i32
    return %arg0, %c0_i32, %c0_i32_0 : i32, i32, i32
  }
  func.func @transform_1(%arg0: i32) -> (i32, i32, i32) {
    %c0_i32 = arith.constant 0 : i32
    %c0_i32_0 = arith.constant 0 : i32
    %c0_i32_1 = arith.constant 0 : i32
    %c0_i32_2 = arith.constant 0 : i32
    return %c0_i32, %c0_i32_0, %c0_i32_1 : i32, i32, i32
  }
  func.func @transform_2(%arg0: i32) -> (i32, i32, i32) {
    %c0_i32 = arith.constant 0 : i32
    %c0_i32_0 = arith.constant 0 : i32
    %c0_i32_1 = arith.constant 0 : i32
    %c0_i32_2 = arith.constant 0 : i32
    return %c0_i32, %c0_i32_0, %c0_i32_1 : i32, i32, i32
  }
  func.func @transform_3(%arg0: i32) -> (i32, i32, i32) {
    %c0_i32 = arith.constant 0 : i32
    %c0_i32_0 = arith.constant 0 : i32
    %c0_i32_1 = arith.constant 0 : i32
    %c0_i32_2 = arith.constant 0 : i32
    return %c0_i32, %c0_i32_0, %c0_i32_1 : i32, i32, i32
  }
  func.func @transform_4(%arg0: i32) -> (i32, i32) {
    %c0_i32 = arith.constant 0 : i32
    %c0_i32_0 = arith.constant 0 : i32
    %c0_i32_1 = arith.constant 0 : i32
    return %c0_i32, %c0_i32_0 : i32, i32
  }
  func.func @transform_5(%arg0: i32) -> (i32, i32) {
    %c0_i32 = arith.constant 0 : i32
    %c0_i32_0 = arith.constant 0 : i32
    %c0_i32_1 = arith.constant 0 : i32
    return %c0_i32, %c0_i32_0 : i32, i32
  }
  func.func @transform_6(%arg0: i32) -> (i32, i32, i32) {
    %c0_i32 = arith.constant 0 : i32
    %c0_i32_0 = arith.constant 0 : i32
    %c0_i32_1 = arith.constant 0 : i32
    %c0_i32_2 = arith.constant 0 : i32
    return %c0_i32, %c0_i32_0, %c0_i32_1 : i32, i32, i32
  }
  func.func @transform_7(%arg0: i32) -> (i32, i32) {
    %c0_i32 = arith.constant 0 : i32
    %c0_i32_0 = arith.constant 0 : i32
    %c0_i32_1 = arith.constant 0 : i32
    return %c0_i32, %c0_i32_0 : i32, i32
  }
  func.func @transform_8(%arg0: i32) -> (i32, i32, i32) {
    %c0_i32 = arith.constant 0 : i32
    %c0_i32_0 = arith.constant 0 : i32
    %c0_i32_1 = arith.constant 0 : i32
    return %arg0, %c0_i32, %c0_i32_0 : i32, i32, i32
  }
}

</mosaic_0001>

<llo_original>
// kernel: tpu_custom_call.1
$region0: #{tpu_custom_call.1}
  #allocation0 [shape = 'u32[]', space=smem, size = 0x4, offset = 0x4, fixed_abs, tag = 'smem constant byte address 0x4 - core index']
  #allocation1 [shape = 'u32[144,128]{1,0:T(1,128)}', space=vmem, size = 0x12000, scoped, tag = 'internal scratch']
  %s0 = inlined_call_operand.vmem [shape: f32[2,32,256], index: 0, kind: input, shape index: {}]
  %s1 = inlined_call_operand.hbm [shape: f32[9,32,32], index: 1, kind: input, shape index: {}]
  %s2 = inlined_call_operand.hbm [shape: f32[9,32,32], index: 2, kind: input, shape index: {}]
  %s3 = inlined_call_operand.vmem [shape: f32[4,32,1], index: 3, kind: input, shape index: {}]
  %s4 = inlined_call_operand.vmem [shape: f32[2,32], index: 4, kind: input, shape index: {}]
  %s5 = inlined_call_operand.vmem [shape: f32[32,2], index: 5, kind: input, shape index: {}]
  %s6 = inlined_call_operand.vmem [shape: f32[49,2,1], index: 6, kind: input, shape index: {}]
  %s7 = inlined_call_operand.vmem [shape: f32[3,256], index: 7, kind: input, shape index: {}]
  %s8 = inlined_call_operand.hbm [shape: f32[2,32,256], index: 8, kind: output, shape index: {}]
  %s9 = sld [smem:[#allocation0]]
  $region73: #{tpu_custom_call.1} parent=0
    _
  %s11 = ssub.s32 1, %s9
  %s12 = scalar_select 0, %s11, %s9
  $region1: #{tpu_custom_call.1} parent=0
    #allocation2 [shape = 'u8[147456]{0}', space=vmem, size = 0x24000, scoped, tag = 'input window, operand 1, single buffered']
    #allocation3 [shape = 's32[2]{0}', space=sflag, size = 0x8, scoped, tag = 'scoped memory for tpu_custom_call.1']
    #allocation4 [shape = 's32[2]{0}', space=sflag, size = 0x8, scoped, tag = 'scoped memory for tpu_custom_call.1']
    #allocation5 [shape = 'u8[147456]{0}', space=vmem, size = 0x24000, scoped, tag = 'input window, operand 2, single buffered']
    #allocation6 [shape = 's32[1]{0}', space=sflag, size = 0x4, scoped, tag = 'scoped memory for tpu_custom_call.1']
    #allocation7 [shape = 'u8[65536]{0}', space=vmem, size = 0x10000, scoped, tag = 'output window, operand 0']
    %13 = vsyncpa [#allocation3], 0
    %14 = vsyncpa [#allocation6], 0
    %15 = vsyncpa [#allocation4], 0
    %s16 = scalar_lea.sflag [#allocation4], 1
    %17 = vsyncpa %s16, 0
    loop: start=0, step=1, limit=4
    $region2: #{tpu_custom_call.1} parent=1 // loop_pre_header
      _
    $region3: #{tpu_custom_call.1} parent=1 // loop_header
      %s19 = sphi 0, %s23
      %p20 = scmp.ge.s32.totalorder %s19, 4
      %s29 = sphi 0, %s31
      %s32 = sphi 0, %s29
      %s33 = sphi 0, %s32
      %s49 = sphi 0, %s33
      %s53 = sphi 0, %s53
      %s55 = sphi 0, %s53
      %s56 = sphi 0, %s55
      %s70 = sphi 0, %s56
      %s74 = sphi 0, %s74
      %s76 = sphi 0, %s74
      %s77 = sphi 0, %s76
      %s91 = sphi 0, %s77
      %s95 = sphi 0, %s95
      %s97 = sphi 0, %s95
      %s98 = sphi 0, %s97
      %s112 = sphi 0, %s98
      %s116 = sphi 0, %s116
      %s118 = sphi 0, %s116
      %s119 = sphi 0, %s118
      %s133 = sphi 0, %s119
      %s137 = sphi 0, %s137
      %s139 = sphi 0, %s137
      %s140 = sphi 0, %s139
      %s154 = sphi 0, %s140
      %s158 = sphi 0, %s158
      %s160 = sphi 0, %s158
      %s161 = sphi 0, %s160
      %s175 = sphi 0, %s161
      %s179 = sphi 0, %s179
      %s181 = sphi 0, %s179
      %s182 = sphi 0, %s181
      %s196 = sphi 0, %s182
      %s202 = sphi 0, %s204
      %s205 = sphi 0, %s202
      %s206 = sphi 0, %s205
      %s222 = sphi 0, %s206
    $region4: #{tpu_custom_call.1} parent=1 // loop_header_branch
      %22 = sbr.rel (%p20) target = $region8
    $region5: #{tpu_custom_call.1} parent=1 // loop_body
      %s24 = ssub.s32 %s19, 1
      %s25 = ssub.s32 %s19, 2
      %s26 = sadd.s32 %s19, 1
      %s27 = ssub.s32 %s19, %s26
      %p28 = scmp.eq.s32.totalorder %s27, 0
      %s30 = sadd.s32 %s29, 1
      %s31 = scalar_select %p28, %s29, %s30
      %p34 = pneg %p28
      %p35 = scmp.eq.s32.totalorder %s19, 1
      %p36 = por %p34, %p35
      %p37 = scmp.ne.s32.totalorder %s29, %s32
      %p38 = scmp.eq.s32.totalorder %s19, 0
      %p39 = por %p37, %p38
      %p40 = scmp.ne.s32.totalorder %s29, %s32
      %p41 = scmp.eq.s32.totalorder %s24, 1
      %p42 = por %p40, %p41
      %p43 = scmp.ne.s32.totalorder %s32, %s33
      %p44 = scmp.eq.s32.totalorder %s24, 0
      %p45 = por %p43, %p44
      %p46 = scmp.ne.s32.totalorder %s32, %s33
      %p47 = scmp.eq.s32.totalorder %s25, 1
      %p48 = por %p46, %p47
      %p50 = scmp.ne.s32.totalorder %s33, %s49
      %p51 = scmp.eq.s32.totalorder %s25, 0
      %p52 = por %p50, %p51
      %s54 = sadd.s32 %s53, 1
      %p57 = scmp.eq.s32.totalorder %s19, 1
      %p58 = scmp.ne.s32.totalorder %s53, %s55
      %p59 = scmp.eq.s32.totalorder %s19, 0
      %p60 = por %p58, %p59
      %p61 = scmp.ne.s32.totalorder %s53, %s55
      %p62 = scmp.eq.s32.totalorder %s24, 1
      %p63 = por %p61, %p62
      %p64 = scmp.ne.s32.totalorder %s55, %s56
      %p65 = scmp.eq.s32.totalorder %s24, 0
      %p66 = por %p64, %p65
      %p67 = scmp.ne.s32.totalorder %s55, %s56
      %p68 = scmp.eq.s32.totalorder %s25, 1
      %p69 = por %p67, %p68
      %p71 = scmp.ne.s32.totalorder %s56, %s70
      %p72 = scmp.eq.s32.totalorder %s25, 0
      %p73 = por %p71, %p72
      %s75 = sadd.s32 %s74, 1
      %p78 = scmp.eq.s32.totalorder %s19, 1
      %p79 = scmp.ne.s32.totalorder %s74, %s76
      %p80 = scmp.eq.s32.totalorder %s19, 0
      %p81 = por %p79, %p80
      %p82 = scmp.ne.s32.totalorder %s74, %s76
      %p83 = scmp.eq.s32.totalorder %s24, 1
      %p84 = por %p82, %p83
      %p85 = scmp.ne.s32.totalorder %s76, %s77
      %p86 = scmp.eq.s32.totalorder %s24, 0
      %p87 = por %p85, %p86
      %p88 = scmp.ne.s32.totalorder %s76, %s77
      %p89 = scmp.eq.s32.totalorder %s25, 1
      %p90 = por %p88, %p89
      %p92 = scmp.ne.s32.totalorder %s77, %s91
      %p93 = scmp.eq.s32.totalorder %s25, 0
      %p94 = por %p92, %p93
      %s96 = sadd.s32 %s95, 1
      %p99 = scmp.eq.s32.totalorder %s19, 1
      %p100 = scmp.ne.s32.totalorder %s95, %s97
      %p101 = scmp.eq.s32.totalorder %s19, 0
      %p102 = por %p100, %p101
      %p103 = scmp.ne.s32.totalorder %s95, %s97
      %p104 = scmp.eq.s32.totalorder %s24, 1
      %p105 = por %p103, %p104
      %p106 = scmp.ne.s32.totalorder %s97, %s98
      %p107 = scmp.eq.s32.totalorder %s24, 0
      %p108 = por %p106, %p107
      %p109 = scmp.ne.s32.totalorder %s97, %s98
      %p110 = scmp.eq.s32.totalorder %s25, 1
      %p111 = por %p109, %p110
      %p113 = scmp.ne.s32.totalorder %s98, %s112
      %p114 = scmp.eq.s32.totalorder %s25, 0
      %p115 = por %p113, %p114
      %s117 = sadd.s32 %s116, 1
      %p120 = scmp.eq.s32.totalorder %s19, 1
      %p121 = scmp.ne.s32.totalorder %s116, %s118
      %p122 = scmp.eq.s32.totalorder %s19, 0
      %p123 = por %p121, %p122
      %p124 = scmp.ne.s32.totalorder %s116, %s118
      %p125 = scmp.eq.s32.totalorder %s24, 1
      %p126 = por %p124, %p125
      %p127 = scmp.ne.s32.totalorder %s118, %s119
      %p128 = scmp.eq.s32.totalorder %s24, 0
      %p129 = por %p127, %p128
      %p130 = scmp.ne.s32.totalorder %s118, %s119
      %p131 = scmp.eq.s32.totalorder %s25, 1
      %p132 = por %p130, %p131
      %p134 = scmp.ne.s32.totalorder %s119, %s133
      %p135 = scmp.eq.s32.totalorder %s25, 0
      %p136 = por %p134, %p135
      %s138 = sadd.s32 %s137, 1
      %p141 = scmp.eq.s32.totalorder %s19, 1
      %p142 = scmp.ne.s32.totalorder %s137, %s139
      %p143 = scmp.eq.s32.totalorder %s19, 0
      %p144 = por %p142, %p143
      %p145 = scmp.ne.s32.totalorder %s137, %s139
      %p146 = scmp.eq.s32.totalorder %s24, 1
      %p147 = por %p145, %p146
      %p148 = scmp.ne.s32.totalorder %s139, %s140
      %p149 = scmp.eq.s32.totalorder %s24, 0
      %p150 = por %p148, %p149
      %p151 = scmp.ne.s32.totalorder %s139, %s140
      %p152 = scmp.eq.s32.totalorder %s25, 1
      %p153 = por %p151, %p152
      %p155 = scmp.ne.s32.totalorder %s140, %s154
      %p156 = scmp.eq.s32.totalorder %s25, 0
      %p157 = por %p155, %p156
      %s159 = sadd.s32 %s158, 1
      %p162 = scmp.eq.s32.totalorder %s19, 1
      %p163 = scmp.ne.s32.totalorder %s158, %s160
      %p164 = scmp.eq.s32.totalorder %s19, 0
      %p165 = por %p163, %p164
      %p166 = scmp.ne.s32.totalorder %s158, %s160
      %p167 = scmp.eq.s32.totalorder %s24, 1
      %p168 = por %p166, %p167
      %p169 = scmp.ne.s32.totalorder %s160, %s161
      %p170 = scmp.eq.s32.totalorder %s24, 0
      %p171 = por %p169, %p170
      %p172 = scmp.ne.s32.totalorder %s160, %s161
      %p173 = scmp.eq.s32.totalorder %s25, 1
      %p174 = por %p172, %p173
      %p176 = scmp.ne.s32.totalorder %s161, %s175
      %p177 = scmp.eq.s32.totalorder %s25, 0
      %p178 = por %p176, %p177
      %s180 = sadd.s32 %s179, 1
      %p183 = scmp.eq.s32.totalorder %s19, 1
      %p184 = scmp.ne.s32.totalorder %s179, %s181
      %p185 = scmp.eq.s32.totalorder %s19, 0
      %p186 = por %p184, %p185
      %p187 = scmp.ne.s32.totalorder %s179, %s181
      %p188 = scmp.eq.s32.totalorder %s24, 1
      %p189 = por %p187, %p188
      %p190 = scmp.ne.s32.totalorder %s181, %s182
      %p191 = scmp.eq.s32.totalorder %s24, 0
      %p192 = por %p190, %p191
      %p193 = scmp.ne.s32.totalorder %s181, %s182
      %p194 = scmp.eq.s32.totalorder %s25, 1
      %p195 = por %p193, %p194
      %p197 = scmp.ne.s32.totalorder %s182, %s196
      %p198 = scmp.eq.s32.totalorder %s25, 0
      %p199 = por %p197, %p198
      %s200 = ssub.s32 %s19, %s26
      %p201 = scmp.eq.s32.totalorder %s200, 0
      %s203 = sadd.s32 %s202, 1
      %s204 = scalar_select %p201, %s202, %s203
      %p207 = pneg %p201
      %p208 = scmp.eq.s32.totalorder %s19, 1
      %p209 = por %p207, %p208
      %p210 = scmp.ne.s32.totalorder %s202, %s205
      %p211 = scmp.eq.s32.totalorder %s19, 0
      %p212 = por %p210, %p211
      %p213 = scmp.ne.s32.totalorder %s202, %s205
      %p214 = scmp.eq.s32.totalorder %s24, 1
      %p215 = por %p213, %p214
      %p216 = scmp.ne.s32.totalorder %s205, %s206
      %p217 = scmp.eq.s32.totalorder %s24, 0
      %p218 = por %p216, %p217
      %p219 = scmp.ne.s32.totalorder %s205, %s206
      %p220 = scmp.eq.s32.totalorder %s25, 1
      %p221 = por %p219, %p220
      %p223 = scmp.ne.s32.totalorder %s206, %s222
      %p224 = scmp.eq.s32.totalorder %s25, 0
      %p225 = por %p223, %p224
      %p226 = scmp.le.s32.totalorder 1, %s19
      %p227 = scmp.lt.s32.totalorder %s19, 3
      %p228 = pnand %p226, %p227
      %p229 = pneg %p228
      // Predicated region
      $region9: #{tpu_custom_call.1} parent=5 // pred_check
        _
      $region10: #{tpu_custom_call.1} parent=5 // pred_check_branch
        %231 = sbr.rel (%p228) target = $region12
      $region11: #{tpu_custom_call.1} parent=5 // pred_region
        %s232 = ssub.s32 %s19, 1
        // Predicated region
        $region13: #{tpu_custom_call.1} parent=11 // pred_check
          %p233 = pneg %p66
        $region14: #{tpu_custom_call.1} parent=11 // pred_check_branch
          %235 = sbr.rel (%p233) target = $region16
        $region15: #{tpu_custom_call.1} parent=11 // pred_region
          %s237 = ssub.s32 4608, 4608
          %238 = vsyncadd [#allocation3], %s237
          %s239 = sshll.u32 [#allocation2], 4
          %s240 = int_to_ptr.vmem [resolvable:$true] %s239
          %245 = dma.hbm_to_vmem [thread:$0]  %s1, 4608, %s240, [#allocation3], 128, 128, 8
        $region16: #{tpu_custom_call.1} parent=11 // pred_fallthru
          _
        // Predicated region
        $region17: #{tpu_custom_call.1} parent=11 // pred_check
          %p246 = pneg %p87
        $region18: #{tpu_custom_call.1} parent=11 // pred_check_branch
          %248 = sbr.rel (%p246) target = $region20
        $region19: #{tpu_custom_call.1} parent=11 // pred_region
          %s250 = ssub.s32 4608, 4608
          %251 = vsyncadd [#allocation6], %s250
          %s252 = sshll.u32 [#allocation5], 4
          %s253 = int_to_ptr.vmem [resolvable:$true] %s252
          %258 = dma.hbm_to_vmem [thread:$0]  %s2, 4608, %s253, [#allocation6], 128, 128, 8
        $region20: #{tpu_custom_call.1} parent=11 // pred_fallthru
          _
        // Predicated region
        $region21: #{tpu_custom_call.1} parent=11 // pred_check
          %p259 = pneg %p108
        $region22: #{tpu_custom_call.1} parent=11 // pred_check_branch
          %261 = sbr.rel (%p259) target = $region24
        $region23: #{tpu_custom_call.1} parent=11 // pred_region
          _
        $region24: #{tpu_custom_call.1} parent=11 // pred_fallthru
          _
        // Predicated region
        $region25: #{tpu_custom_call.1} parent=11 // pred_check
          %p262 = pneg %p129
        $region26: #{tpu_custom_call.1} parent=11 // pred_check_branch
          %264 = sbr.rel (%p262) target = $region28
        $region27: #{tpu_custom_call.1} parent=11 // pred_region
          _
        $region28: #{tpu_custom_call.1} parent=11 // pred_fallthru
          _
        // Predicated region
        $region29: #{tpu_custom_call.1} parent=11 // pred_check
          %p265 = pneg %p150
        $region30: #{tpu_custom_call.1} parent=11 // pred_check_branch
          %267 = sbr.rel (%p265) target = $region32
        $region31: #{tpu_custom_call.1} parent=11 // pred_region
          _
        $region32: #{tpu_custom_call.1} parent=11 // pred_fallthru
          _
        // Predicated region
        $region33: #{tpu_custom_call.1} parent=11 // pred_check
          %p268 = pneg %p171
        $region34: #{tpu_custom_call.1} parent=11 // pred_check_branch
          %270 = sbr.rel (%p268) target = $region36
        $region35: #{tpu_custom_call.1} parent=11 // pred_region
          _
        $region36: #{tpu_custom_call.1} parent=11 // pred_fallthru
          _
        // Predicated region
        $region37: #{tpu_custom_call.1} parent=11 // pred_check
          %p271 = pneg %p192
        $region38: #{tpu_custom_call.1} parent=11 // pred_check_branch
          %273 = sbr.rel (%p271) target = $region40
        $region39: #{tpu_custom_call.1} parent=11 // pred_region
          _
        $region40: #{tpu_custom_call.1} parent=11 // pred_fallthru
          _
      $region12: #{tpu_custom_call.1} parent=5 // pred_fallthru
        _
      %p274 = scmp.lt.s32.totalorder %s19, 2
      // Predicated region
      $region41: #{tpu_custom_call.1} parent=5 // pred_check
        %p275 = pneg %p274
      $region42: #{tpu_custom_call.1} parent=5 // pred_check_branch
        %277 = sbr.rel (%p275) target = $region44
      $region43: #{tpu_custom_call.1} parent=5 // pred_region
        // Predicated region
        $region45: #{tpu_custom_call.1} parent=43 // pred_check
          %p278 = pneg %p39
        $region46: #{tpu_custom_call.1} parent=43 // pred_check_branch
          %280 = sbr.rel (%p278) target = $region48
        $region47: #{tpu_custom_call.1} parent=43 // pred_region
          %p281 = scmp.lt.s32.totalorder %s19, 1
          %s282 = scalar_select %p281, %s19, 1
          %s283 = smul.addr %s282, 8
          %s284 = smul.addr %s283, 8
          %s285 = scalar_lea.vmem %s0, %s284
        $region48: #{tpu_custom_call.1} parent=43 // pred_fallthru
          _
      $region44: #{tpu_custom_call.1} parent=5 // pred_fallthru
        _
      %p286 = scmp.le.s32.totalorder 1, %s19
      %p287 = scmp.lt.s32.totalorder %s19, 3
      %p288 = pnand %p286, %p287
      %p289 = pneg %p288
      // Predicated region
      $region49: #{tpu_custom_call.1} parent=5 // pred_check
        _
      $region50: #{tpu_custom_call.1} parent=5 // pred_check_branch
        %291 = sbr.rel (%p288) target = $region52
      $region51: #{tpu_custom_call.1} parent=5 // pred_region
        %s292 = ssub.s32 %s19, 1
        // Predicated region
        $region53: #{tpu_custom_call.1} parent=51 // pred_check
          %p293 = pneg %p66
        $region54: #{tpu_custom_call.1} parent=51 // pred_check_branch
          %295 = sbr.rel (%p293) target = $region56
        $region55: #{tpu_custom_call.1} parent=51 // pred_region
          %296 = dma.done [#allocation3], 4608
        $region56: #{tpu_custom_call.1} parent=51 // pred_fallthru
          _
        // Predicated region
        $region57: #{tpu_custom_call.1} parent=51 // pred_check
          %p297 = pneg %p87
        $region58: #{tpu_custom_call.1} parent=51 // pred_check_branch
          %299 = sbr.rel (%p297) target = $region60
        $region59: #{tpu_custom_call.1} parent=51 // pred_region
          %300 = dma.done [#allocation6], 4608
        $region60: #{tpu_custom_call.1} parent=51 // pred_fallthru
          _
        %p301 = scmp.lt.s32.totalorder %s24, 1
        %s302 = scalar_select %p301, %s24, 1
        %s303 = smul.addr %s302, 8
        %s304 = smul.addr %s303, 8
        %s305 = scalar_lea.vmem %s0, %s304
        %p306 = pneg %p45
        %p307 = pneg %p42
        %p308 = pneg %p66
        %p309 = pneg %p63
        %p310 = pneg %p87
        %p311 = pneg %p84
        %p312 = pneg %p108
        %p313 = pneg %p105
        %p314 = pneg %p129
        %p315 = pneg %p126
        %p316 = pneg %p150
        %p317 = pneg %p147
        %p318 = pneg %p171
        %p319 = pneg %p168
        %p320 = pneg %p192
        %p321 = pneg %p189
        %p322 = pneg %p218
        %p323 = pneg %p215
        %s324 = sand.u32 %s205, 1
        %s325 = scalar_lea.sflag [#allocation4], %s324
        %s326 = sand.u32 %s205, 1
        %s327 = smul.addr %s326, 64
        %s328 = scalar_lea.vmem [#allocation7], %s327
        %p329 = scmp.lt.s32.totalorder %s24, 1
        %s330 = scalar_select %p329, %s24, 1
        %s331 = smul.addr %s330, 8
        %s332 = smul.addr %s331, 8
        %s333 = scalar_lea.vmem %s0, %s332
        %v334 = vld [vmem:[%s7] sm:$0x77]
        %v335 = vld [vmem:[%s4] sm:$0x3]
        %v336 = vld [vmem:[%s5] sm:$0xff]
        %v337 = vld [vmem:[%s5 + $0x8] sm:$0xff]
        %v338 = vld [vmem:[%s5 + $0x10] sm:$0xff]
        %v339 = vld [vmem:[%s5 + $0x18] sm:$0xff]
        %v340 = vld [vmem:[%s333] sm:$0xff]
        %v341 = vld [vmem:[%s333 + $0x8] sm:$0xff]
        %v342 = vld [vmem:[%s333 + $0x10] sm:$0xff]
        %v343 = vld [vmem:[%s333 + $0x18] sm:$0xff]
        %v344 = vld [vmem:[%s333 + $0x20] sm:$0xff]
        %v345 = vld [vmem:[%s333 + $0x28] sm:$0xff]
        %v346 = vld [vmem:[%s333 + $0x30] sm:$0xff]
        %v347 = vld [vmem:[%s333 + $0x38] sm:$0xff]
        %356 = vrot.lane.b32.xlu0 %v340, 17
        %v357 = vpop.permute.xlu0 %356
        %358 = vrot.lane.b32.xlu0 %v341, 17
        %v359 = vpop.permute.xlu0 %358
        %360 = vrot.lane.b32.xlu0 %v342, 17
        %v361 = vpop.permute.xlu0 %360
        %362 = vrot.lane.b32.xlu0 %v343, 17
        %v363 = vpop.permute.xlu0 %362
        %364 = vrot.lane.b32.xlu0 %v344, 17
        %v365 = vpop.permute.xlu0 %364
        %366 = vrot.lane.b32.xlu0 %v345, 17
        %v367 = vpop.permute.xlu0 %366
        %368 = vrot.lane.b32.xlu0 %v346, 17
        %v369 = vpop.permute.xlu0 %368
        %370 = vrot.lane.b32.xlu0 %v347, 17
        %v371 = vpop.permute.xlu0 %370
        %vm372 = vcmask 138240
        %v373 = vsel %vm372, %v357, %v359
        %v374 = vsel %vm372, %v361, %v363
        %v375 = vsel %vm372, %v365, %v367
        %v376 = vsel %vm372, %v369, %v371
        %v385 = vsel %vm372, 0.0, %v357
        %v386 = vsel %vm372, 0.0, %v361
        %v387 = vsel %vm372, 0.0, %v365
        %v388 = vsel %vm372, 0.0, %v369
        %vm389 = vcmp.ge.f32.partialorder %v334, 1.0
        %vm390 = vcmp.le.f32.partialorder %v334, 16.0
        %vm391 = vmand %vm389, %vm390
        %v392 = vsel %vm389, 1, 0
        %v393 = vrot.slane %v392, 5
        %v394 = vrot.slane %v393, 4
        %vm395 = vcmp.ne.s32.totalorder %v394, 0
        %vm396 = vmand %vm391, %vm395
        %v397 = vsel %vm390, 1, 0
        %v398 = vrot.slane %v397, 5
        %v399 = vrot.slane %v398, 4
        %vm400 = vcmp.ne.s32.totalorder %v399, 0
        %vm401 = vmand %vm396, %vm400
        %v403 = vrot.slane %v334, 6
        %v404 = vrot.slane %v403, 4
        %v406 = vsel %vm401, %v404, 0.0
        %v408 = vlaneseq
        %v409 = vshrl.u32 %v408, 7
        %v410 = vsub.s32 0, %v409
        %v411 = vrot.slane %v406, %v410
        %v412 = vlaneseq
        %v413 = vshrl.u32 %v412, 7
        %v414 = vsub.s32 4, %v413
        %v415 = vrot.slane %v406, %v414
        %v418 = vlaneseq
        %v419 = vshrl.u32 %v418, 7
        %v420 = vsub.s32 0, %v419
        %v421 = vrot.slane %v411, %v420
        %v422 = vlaneseq
        %v423 = vshrl.u32 %v422, 7
        %v424 = vsub.s32 0, %v423
        %v425 = vrot.slane %v415, %v424
        %v426 = vmul.f32 %v385, %v421
        %v427 = vmul.f32 %v373, %v425
        %v428 = vmul.f32 %v386, %v421
        %v429 = vmul.f32 %v374, %v425
        %v430 = vmul.f32 %v387, %v421
        %v431 = vmul.f32 %v375, %v425
        %v432 = vmul.f32 %v388, %v421
        %v433 = vmul.f32 %v376, %v425
        %v434 = vld [vmem:[#allocation2] sm:$0xff]
        %v435 = vld [vmem:[#allocation2 + $0x8] sm:$0xff]
        %v436 = vld [vmem:[#allocation2 + $0x10] sm:$0xff]
        %v437 = vld [vmem:[#allocation2 + $0x18] sm:$0xff]
        %438 = vrot.lane.b32.xlu0 %v340, 16
        %v439 = vpop.permute.xlu0 %438
        %440 = vrot.lane.b32.xlu0 %v341, 16
        %v441 = vpop.permute.xlu0 %440
        %442 = vrot.lane.b32.xlu0 %v342, 16
        %v443 = vpop.permute.xlu0 %442
        %444 = vrot.lane.b32.xlu0 %v343, 16
        %v445 = vpop.permute.xlu0 %444
        %446 = vrot.lane.b32.xlu0 %v344, 16
        %v447 = vpop.permute.xlu0 %446
        %448 = vrot.lane.b32.xlu0 %v345, 16
        %v449 = vpop.permute.xlu0 %448
        %450 = vrot.lane.b32.xlu0 %v346, 16
        %v451 = vpop.permute.xlu0 %450
        %452 = vrot.lane.b32.xlu0 %v347, 16
        %v453 = vpop.permute.xlu0 %452
        %vm454 = vcmask 130048
        %v455 = vsel %vm454, %v439, %v441
        %v456 = vsel %vm454, %v443, %v445
        %v457 = vsel %vm454, %v447, %v449
        %v458 = vsel %vm454, %v451, %v453
        %v467 = vsel %vm454, 0.0, %v439
        %v468 = vsel %vm454, 0.0, %v443
        %v469 = vsel %vm454, 0.0, %v447
        %v470 = vsel %vm454, 0.0, %v451
        %vm471 = vcmp.ge.f32.partialorder %v334, 0.0
        %v472 = vsel %vm471, 1, 0
        %v473 = vrot.slane %v472, 5
        %v474 = vrot.slane %v473, 4
        %vm475 = vcmp.ne.s32.totalorder %v474, 0
        %vm476 = vmand %vm391, %vm475
        %vm477 = vcmp.le.f32.partialorder %v334, 15.0
        %v478 = vsel %vm477, 1, 0
        %v479 = vrot.slane %v478, 5
        %v480 = vrot.slane %v479, 4
        %vm481 = vcmp.ne.s32.totalorder %v480, 0
        %vm482 = vmand %vm476, %vm481
        %v483 = vsel %vm482, %v404, 0.0
        %v485 = vlaneseq
        %v486 = vshrl.u32 %v485, 7
        %v487 = vsub.s32 0, %v486
        %v488 = vrot.slane %v483, %v487
        %v489 = vlaneseq
        %v490 = vshrl.u32 %v489, 7
        %v491 = vsub.s32 4, %v490
        %v492 = vrot.slane %v483, %v491
        %v495 = vlaneseq
        %v496 = vshrl.u32 %v495, 7
        %v497 = vsub.s32 0, %v496
        %v498 = vrot.slane %v488, %v497
        %v499 = vlaneseq
        %v500 = vshrl.u32 %v499, 7
        %v501 = vsub.s32 0, %v500
        %v502 = vrot.slane %v492, %v501
        %v503 = vmul.f32 %v467, %v498
        %v504 = vmul.f32 %v455, %v502
        %v505 = vmul.f32 %v468, %v498
        %v506 = vmul.f32 %v456, %v502
        %v507 = vmul.f32 %v469, %v498
        %v508 = vmul.f32 %v457, %v502
        %v509 = vmul.f32 %v470, %v498
        %v510 = vmul.f32 %v458, %v502
        %s511 = scalar_lea.vmem [#allocation2], 32
        %v512 = vld [vmem:[%s511] sm:$0xff]
        %v513 = vld [vmem:[%s511 + $0x8] sm:$0xff]
        %v514 = vld [vmem:[%s511 + $0x10] sm:$0xff]
        %v515 = vld [vmem:[%s511 + $0x18] sm:$0xff]
        %vm516 = vcmask 261120
        %v518 = vsel %vm516, %v512, 0
        %v521 = vsel %vm516, %v513, 0
        %v524 = vsel %vm516, %v514, 0
        %v527 = vsel %vm516, %v515, 0
        %529 = vmatprep.subr.mxu0 %v504
        %530 = vmatpush1.msra.mxu0 %v503
        %531 = vmatprep.subr.mxu0 %v506
        %532 = vmatpush1.msra.mxu0 %v505
        %533 = vmatprep.subr.mxu0 %v508
        %534 = vmatpush1.msra.mxu0 %v507
        %535 = vmatprep.subr.mxu0 %v510
        %536 = vmatpush1.msra.mxu0 %v509
        %537 = vmatprep.subr.mxu0 0.0
        %538 = vmatpush1.msra.mxu0 0.0
        %539 = vmatprep.subr.mxu0 0.0
        %540 = vmatpush1.msra.mxu0 0.0
        %541 = vmatprep.subr.mxu0 0.0
        %542 = vmatpush1.msra.mxu0 0.0
        %543 = vmatprep.subr.mxu0 0.0
        %544 = vmatpush1.msra.mxu0 0.0
        %545 = vmatprep.subr.mxu0 0.0
        %546 = vmatpush1.msra.mxu0 0.0
        %547 = vmatprep.subr.mxu0 0.0
        %548 = vmatpush1.msra.mxu0 0.0
        %549 = vmatprep.subr.mxu0 0.0
        %550 = vmatpush1.msra.mxu0 0.0
        %551 = vmatprep.subr.mxu0 0.0
        %552 = vmatpush1.msra.mxu0 0.0
        %553 = vmatprep.subr.mxu0 0.0
        %554 = vmatpush1.msra.mxu0 0.0
        %555 = vmatprep.subr.mxu0 0.0
        %556 = vmatpush1.msra.mxu0 0.0
        %557 = vmatprep.subr.mxu0 0.0
        %558 = vmatpush1.msra.mxu0 0.0
        %559 = vmatprep.subr.mxu0 0.0
        %560 = vmatpush1.msra.mxu0 0.0
        %561 = vmatprep.subr.mxu0 0.0
        %562 = vmatpush1.msra.mxu0 0.0
        %563 = vmatprep.subr.mxu0 0.0
        %564 = vmatpush1.msra.mxu0 0.0
        %565 = vmatprep.subr.mxu0 0.0
        %566 = vmatpush1.msra.mxu0 0.0
        %567 = vmatprep.subr.mxu0 0.0
        %568 = vmatpush1.msra.mxu0 0.0
        %569 = vmatprep.subr.mxu0 0.0
        %570 = vmatpush1.msra.mxu0 0.0
        %571 = vmatprep.subr.mxu0 0.0
        %572 = vmatpush1.msra.mxu0 0.0
        %573 = vmatprep.subr.mxu0 0.0
        %574 = vmatpush1.msra.mxu0 0.0
        %575 = vmatprep.subr.mxu0 0.0
        %576 = vmatpush1.msra.mxu0 0.0
        %577 = vmatprep.subr.mxu0 0.0
        %578 = vmatpush1.msra.mxu0 0.0
        %579 = vmatprep.subr.mxu0 0.0
        %580 = vmatpush1.msra.mxu0 0.0
        %581 = vmatprep.subr.mxu0 0.0
        %582 = vmatpush1.msra.mxu0 0.0
        %583 = vmatprep.subr.mxu0 0.0
        %584 = vmatpush1.msra.mxu0 0.0
        %585 = vmatprep.subr.mxu0 0.0
        %586 = vmatpush1.msra.mxu0 0.0
        %587 = vmatprep.subr.mxu0 0.0
        %588 = vmatpush1.msra.mxu0 0.0
        %589 = vmatprep.subr.mxu0 0.0
        %590 = vmatpush1.msra.mxu0 0.0
        %591 = vmatprep.subr.mxu0 0.0
        %592 = vmatpush1.msra.mxu0 0.0
        %593 = vmatprep.mubr.f32.mxu0 0.0
        %594 = vmatmul.mubr.f32.gmra.mrb[0].mxu0 %v518
        %v595 = vpop.f32.mrb[0].mxu0
        %v596 = vadd.f32 0.0, %v595
        %v597 = vpop.f32.mrb[0].mxu0
        %v598 = vadd.f32 0.0, %v597
        %599 = vmatprep.mubr.f32.mxu0 0.0
        %600 = vmatmul.mubr.f32.gmra.mrb[0].mxu0 %v521
        %v601 = vpop.f32.mrb[0].mxu0
        %v602 = vadd.f32 0.0, %v601
        %v603 = vpop.f32.mrb[0].mxu0
        %v604 = vadd.f32 0.0, %v603
        %605 = vmatprep.mubr.f32.mxu0 0.0
        %606 = vmatmul.mubr.f32.gmra.mrb[0].mxu0 %v524
        %v607 = vpop.f32.mrb[0].mxu0
        %v608 = vadd.f32 0.0, %v607
        %v609 = vpop.f32.mrb[0].mxu0
        %v610 = vadd.f32 0.0, %v609
        %611 = vmatprep.mubr.f32.mxu0 0.0
        %612 = vmatmul.mubr.f32.gmra.mrb[0].mxu0 %v527
        %v613 = vpop.f32.mrb[0].mxu0
        %v614 = vadd.f32 0.0, %v613
        %v615 = vpop.f32.mrb[0].mxu0
        %v616 = vadd.f32 0.0, %v615
        %617 = vdwg.mxu0
        %v619 = vsel %vm516, %v434, 0
        %v622 = vsel %vm516, %v435, 0
        %v625 = vsel %vm516, %v436, 0
        %v628 = vsel %vm516, %v437, 0
        %630 = vmatprep.subr.mxu0 %v427
        %631 = vmatpush1.msra.mxu0 %v426
        %632 = vmatprep.subr.mxu0 %v429
        %633 = vmatpush1.msra.mxu0 %v428
        %634 = vmatprep.subr.mxu0 %v431
        %635 = vmatpush1.msra.mxu0 %v430
        %636 = vmatprep.subr.mxu0 %v433
        %637 = vmatpush1.msra.mxu0 %v432
        %638 = vmatprep.subr.mxu0 0.0
        %639 = vmatpush1.msra.mxu0 0.0
        %640 = vmatprep.subr.mxu0 0.0
        %641 = vmatpush1.msra.mxu0 0.0
        %642 = vmatprep.subr.mxu0 0.0
        %643 = vmatpush1.msra.mxu0 0.0
        %644 = vmatprep.subr.mxu0 0.0
        %645 = vmatpush1.msra.mxu0 0.0
        %646 = vmatprep.subr.mxu0 0.0
        %647 = vmatpush1.msra.mxu0 0.0
        %648 = vmatprep.subr.mxu0 0.0
        %649 = vmatpush1.msra.mxu0 0.0
        %650 = vmatprep.subr.mxu0 0.0
        %651 = vmatpush1.msra.mxu0 0.0
        %652 = vmatprep.subr.mxu0 0.0
        %653 = vmatpush1.msra.mxu0 0.0
        %654 = vmatprep.subr.mxu0 0.0
        %655 = vmatpush1.msra.mxu0 0.0
        %656 = vmatprep.subr.mxu0 0.0
        %657 = vmatpush1.msra.mxu0 0.0
        %658 = vmatprep.subr.mxu0 0.0
        %659 = vmatpush1.msra.mxu0 0.0
        %660 = vmatprep.subr.mxu0 0.0
        %661 = vmatpush1.msra.mxu0 0.0
        %662 = vmatprep.subr.mxu0 0.0
        %663 = vmatpush1.msra.mxu0 0.0
        %664 = vmatprep.subr.mxu0 0.0
        %665 = vmatpush1.msra.mxu0 0.0
        %666 = vmatprep.subr.mxu0 0.0
        %667 = vmatpush1.msra.mxu0 0.0
        %668 = vmatprep.subr.mxu0 0.0
        %669 = vmatpush1.msra.mxu0 0.0
        %670 = vmatprep.subr.mxu0 0.0
        %671 = vmatpush1.msra.mxu0 0.0
        %672 = vmatprep.subr.mxu0 0.0
        %673 = vmatpush1.msra.mxu0 0.0
        %674 = vmatprep.subr.mxu0 0.0
        %675 = vmatpush1.msra.mxu0 0.0
        %676 = vmatprep.subr.mxu0 0.0
        %677 = vmatpush1.msra.mxu0 0.0
        %678 = vmatprep.subr.mxu0 0.0
        %679 = vmatpush1.msra.mxu0 0.0
        %680 = vmatprep.subr.mxu0 0.0
        %681 = vmatpush1.msra.mxu0 0.0
        %682 = vmatprep.subr.mxu0 0.0
        %683 = vmatpush1.msra.mxu0 0.0
        %684 = vmatprep.subr.mxu0 0.0
        %685 = vmatpush1.msra.mxu0 0.0
        %686 = vmatprep.subr.mxu0 0.0
        %687 = vmatpush1.msra.mxu0 0.0
        %688 = vmatprep.subr.mxu0 0.0
        %689 = vmatpush1.msra.mxu0 0.0
        %690 = vmatprep.subr.mxu0 0.0
        %691 = vmatpush1.msra.mxu0 0.0
        %692 = vmatprep.subr.mxu0 0.0
        %693 = vmatpush1.msra.mxu0 0.0
        %694 = vmatprep.mubr.f32.mxu0 0.0
        %695 = vmatmul.mubr.f32.gmra.mrb[0].mxu0 %v619
        %v696 = vpop.f32.mrb[0].mxu0
        %v697 = vadd.f32 %v596, %v696
        %v698 = vpop.f32.mrb[0].mxu0
        %v699 = vadd.f32 %v598, %v698
        %700 = vmatprep.mubr.f32.mxu0 0.0
        %701 = vmatmul.mubr.f32.gmra.mrb[0].mxu0 %v622
        %v702 = vpop.f32.mrb[0].mxu0
        %v703 = vadd.f32 %v602, %v702
        %v704 = vpop.f32.mrb[0].mxu0
        %v705 = vadd.f32 %v604, %v704
        %706 = vmatprep.mubr.f32.mxu0 0.0
        %707 = vmatmul.mubr.f32.gmra.mrb[0].mxu0 %v625
        %v708 = vpop.f32.mrb[0].mxu0
        %v709 = vadd.f32 %v608, %v708
        %v710 = vpop.f32.mrb[0].mxu0
        %v711 = vadd.f32 %v610, %v710
        %712 = vmatprep.mubr.f32.mxu0 0.0
        %713 = vmatmul.mubr.f32.gmra.mrb[0].mxu0 %v628
        %v714 = vpop.f32.mrb[0].mxu0
        %v715 = vadd.f32 %v614, %v714
        %v716 = vpop.f32.mrb[0].mxu0
        %v717 = vadd.f32 %v616, %v716
        %718 = vdwg.mxu0
        %719 = vrot.lane.b32.xlu0 %v340, 15
        %v720 = vpop.permute.xlu0 %719
        %721 = vrot.lane.b32.xlu0 %v341, 15
        %v722 = vpop.permute.xlu0 %721
        %723 = vrot.lane.b32.xlu0 %v342, 15
        %v724 = vpop.permute.xlu0 %723
        %725 = vrot.lane.b32.xlu0 %v343, 15
        %v726 = vpop.permute.xlu0 %725
        %727 = vrot.lane.b32.xlu0 %v344, 15
        %v728 = vpop.permute.xlu0 %727
        %729 = vrot.lane.b32.xlu0 %v345, 15
        %v730 = vpop.permute.xlu0 %729
        %731 = vrot.lane.b32.xlu0 %v346, 15
        %v732 = vpop.permute.xlu0 %731
        %733 = vrot.lane.b32.xlu0 %v347, 15
        %v734 = vpop.permute.xlu0 %733
        %vm735 = vcmask 121856
        %v736 = vsel %vm735, %v720, %v722
        %v737 = vsel %vm735, %v724, %v726
        %v738 = vsel %vm735, %v728, %v730
        %v739 = vsel %vm735, %v732, %v734
        %v748 = vsel %vm735, 0.0, %v720
        %v749 = vsel %vm735, 0.0, %v724
        %v750 = vsel %vm735, 0.0, %v728
        %v751 = vsel %vm735, 0.0, %v732
        %vm752 = vcmp.ge.f32.partialorder %v334, -1.0
        %v753 = vsel %vm752, 1, 0
        %v754 = vrot.slane %v753, 5
        %v755 = vrot.slane %v754, 4
        %vm756 = vcmp.ne.s32.totalorder %v755, 0
        %vm757 = vmand %vm391, %vm756
        %vm758 = vcmp.le.f32.partialorder %v334, 14.0
        %v759 = vsel %vm758, 1, 0
        %v760 = vrot.slane %v759, 5
        %v761 = vrot.slane %v760, 4
        %vm762 = vcmp.ne.s32.totalorder %v761, 0
        %vm763 = vmand %vm757, %vm762
        %v764 = vsel %vm763, %v404, 0.0
        %v766 = vlaneseq
        %v767 = vshrl.u32 %v766, 7
        %v768 = vsub.s32 0, %v767
        %v769 = vrot.slane %v764, %v768
        %v770 = vlaneseq
        %v771 = vshrl.u32 %v770, 7
        %v772 = vsub.s32 4, %v771
        %v773 = vrot.slane %v764, %v772
        %v776 = vlaneseq
        %v777 = vshrl.u32 %v776, 7
        %v778 = vsub.s32 0, %v777
        %v779 = vrot.slane %v769, %v778
        %v780 = vlaneseq
        %v781 = vshrl.u32 %v780, 7
        %v782 = vsub.s32 0, %v781
        %v783 = vrot.slane %v773, %v782
        %v784 = vmul.f32 %v748, %v779
        %v785 = vmul.f32 %v736, %v783
        %v786 = vmul.f32 %v749, %v779
        %v787 = vmul.f32 %v737, %v783
        %v788 = vmul.f32 %v750, %v779
        %v789 = vmul.f32 %v738, %v783
        %v790 = vmul.f32 %v751, %v779
        %v791 = vmul.f32 %v739, %v783
        %s792 = scalar_lea.vmem [#allocation2], 64
        %v793 = vld [vmem:[%s792] sm:$0xff]
        %v794 = vld [vmem:[%s792 + $0x8] sm:$0xff]
        %v795 = vld [vmem:[%s792 + $0x10] sm:$0xff]
        %v796 = vld [vmem:[%s792 + $0x18] sm:$0xff]
        %v798 = vsel %vm516, %v793, 0
        %v801 = vsel %vm516, %v794, 0
        %v804 = vsel %vm516, %v795, 0
        %v807 = vsel %vm516, %v796, 0
        %809 = vmatprep.subr.mxu0 %v785
        %810 = vmatpush1.msra.mxu0 %v784
        %811 = vmatprep.subr.mxu0 %v787
        %812 = vmatpush1.msra.mxu0 %v786
        %813 = vmatprep.subr.mxu0 %v789
        %814 = vmatpush1.msra.mxu0 %v788
        %815 = vmatprep.subr.mxu0 %v791
        %816 = vmatpush1.msra.mxu0 %v790
        %817 = vmatprep.subr.mxu0 0.0
        %818 = vmatpush1.msra.mxu0 0.0
        %819 = vmatprep.subr.mxu0 0.0
        %820 = vmatpush1.msra.mxu0 0.0
        %821 = vmatprep.subr.mxu0 0.0
        %822 = vmatpush1.msra.mxu0 0.0
        %823 = vmatprep.subr.mxu0 0.0
        %824 = vmatpush1.msra.mxu0 0.0
        %825 = vmatprep.subr.mxu0 0.0
        %826 = vmatpush1.msra.mxu0 0.0
        %827 = vmatprep.subr.mxu0 0.0
        %828 = vmatpush1.msra.mxu0 0.0
        %829 = vmatprep.subr.mxu0 0.0
        %830 = vmatpush1.msra.mxu0 0.0
        %831 = vmatprep.subr.mxu0 0.0
        %832 = vmatpush1.msra.mxu0 0.0
        %833 = vmatprep.subr.mxu0 0.0
        %834 = vmatpush1.msra.mxu0 0.0
        %835 = vmatprep.subr.mxu0 0.0
        %836 = vmatpush1.msra.mxu0 0.0
        %837 = vmatprep.subr.mxu0 0.0
        %838 = vmatpush1.msra.mxu0 0.0
        %839 = vmatprep.subr.mxu0 0.0
        %840 = vmatpush1.msra.mxu0 0.0
        %841 = vmatprep.subr.mxu0 0.0
        %842 = vmatpush1.msra.mxu0 0.0
        %843 = vmatprep.subr.mxu0 0.0
        %844 = vmatpush1.msra.mxu0 0.0
        %845 = vmatprep.subr.mxu0 0.0
        %846 = vmatpush1.msra.mxu0 0.0
        %847 = vmatprep.subr.mxu0 0.0
        %848 = vmatpush1.msra.mxu0 0.0
        %849 = vmatprep.subr.mxu0 0.0
        %850 = vmatpush1.msra.mxu0 0.0
        %851 = vmatprep.subr.mxu0 0.0
        %852 = vmatpush1.msra.mxu0 0.0
        %853 = vmatprep.subr.mxu0 0.0
        %854 = vmatpush1.msra.mxu0 0.0
        %855 = vmatprep.subr.mxu0 0.0
        %856 = vmatpush1.msra.mxu0 0.0
        %857 = vmatprep.subr.mxu0 0.0
        %858 = vmatpush1.msra.mxu0 0.0
        %859 = vmatprep.subr.mxu0 0.0
        %860 = vmatpush1.msra.mxu0 0.0
        %861 = vmatprep.subr.mxu0 0.0
        %862 = vmatpush1.msra.mxu0 0.0
        %863 = vmatprep.subr.mxu0 0.0
        %864 = vmatpush1.msra.mxu0 0.0
        %865 = vmatprep.subr.mxu0 0.0
        %866 = vmatpush1.msra.mxu0 0.0
        %867 = vmatprep.subr.mxu0 0.0
        %868 = vmatpush1.msra.mxu0 0.0
        %869 = vmatprep.subr.mxu0 0.0
        %870 = vmatpush1.msra.mxu0 0.0
        %871 = vmatprep.subr.mxu0 0.0
        %872 = vmatpush1.msra.mxu0 0.0
        %873 = vmatprep.mubr.f32.mxu0 0.0
        %874 = vmatmul.mubr.f32.gmra.mrb[0].mxu0 %v798
        %v875 = vpop.f32.mrb[0].mxu0
        %v876 = vadd.f32 0.0, %v875
        %v877 = vpop.f32.mrb[0].mxu0
        %v878 = vadd.f32 0.0, %v877
        %879 = vmatprep.mubr.f32.mxu0 0.0
        %880 = vmatmul.mubr.f32.gmra.mrb[0].mxu0 %v801
        %v881 = vpop.f32.mrb[0].mxu0
        %v882 = vadd.f32 0.0, %v881
        %v883 = vpop.f32.mrb[0].mxu0
        %v884 = vadd.f32 0.0, %v883
        %885 = vmatprep.mubr.f32.mxu0 0.0
        %886 = vmatmul.mubr.f32.gmra.mrb[0].mxu0 %v804
        %v887 = vpop.f32.mrb[0].mxu0
        %v888 = vadd.f32 0.0, %v887
        %v889 = vpop.f32.mrb[0].mxu0
        %v890 = vadd.f32 0.0, %v889
        %891 = vmatprep.mubr.f32.mxu0 0.0
        %892 = vmatmul.mubr.f32.gmra.mrb[0].mxu0 %v807
        %v893 = vpop.f32.mrb[0].mxu0
        %v894 = vadd.f32 0.0, %v893
        %v895 = vpop.f32.mrb[0].mxu0
        %v896 = vadd.f32 0.0, %v895
        %897 = vdwg.mxu0
        %v898 = vadd.f32 %v697, %v876
        %v899 = vadd.f32 %v699, %v878
        %v900 = vadd.f32 %v703, %v882
        %v901 = vadd.f32 %v705, %v884
        %v902 = vadd.f32 %v709, %v888
        %v903 = vadd.f32 %v711, %v890
        %v904 = vadd.f32 %v715, %v894
        %v905 = vadd.f32 %v717, %v896
        %906 = vrot.lane.b32.xlu0 %v340, 1
        %v907 = vpop.permute.xlu0 %906
        %908 = vrot.lane.b32.xlu0 %v341, 1
        %v909 = vpop.permute.xlu0 %908
        %910 = vrot.lane.b32.xlu0 %v342, 1
        %v911 = vpop.permute.xlu0 %910
        %912 = vrot.lane.b32.xlu0 %v343, 1
        %v913 = vpop.permute.xlu0 %912
        %914 = vrot.lane.b32.xlu0 %v344, 1
        %v915 = vpop.permute.xlu0 %914
        %916 = vrot.lane.b32.xlu0 %v345, 1
        %v917 = vpop.permute.xlu0 %916
        %918 = vrot.lane.b32.xlu0 %v346, 1
        %v919 = vpop.permute.xlu0 %918
        %920 = vrot.lane.b32.xlu0 %v347, 1
        %v921 = vpop.permute.xlu0 %920
        %vm922 = vcmask 7168
        %v923 = vsel %vm922, %v907, %v909
        %v924 = vsel %vm922, %v911, %v913
        %v925 = vsel %vm922, %v915, %v917
        %v926 = vsel %vm922, %v919, %v921
        %v935 = vsel %vm922, 0.0, %v907
        %v936 = vsel %vm922, 0.0, %v911
        %v937 = vsel %vm922, 0.0, %v915
        %v938 = vsel %vm922, 0.0, %v919
        %vm939 = vmand %vm471, %vm477
        %vm940 = vmand %vm939, %vm395
        %vm941 = vmand %vm940, %vm400
        %v942 = vsel %vm941, %v404, 0.0
        %v944 = vlaneseq
        %v945 = vshrl.u32 %v944, 7
        %v946 = vsub.s32 0, %v945
        %v947 = vrot.slane %v942, %v946
        %v948 = vlaneseq
        %v949 = vshrl.u32 %v948, 7
        %v950 = vsub.s32 4, %v949
        %v951 = vrot.slane %v942, %v950
        %v954 = vlaneseq
        %v955 = vshrl.u32 %v954, 7
        %v956 = vsub.s32 0, %v955
        %v957 = vrot.slane %v947, %v956
        %v958 = vlaneseq
        %v959 = vshrl.u32 %v958, 7
        %v960 = vsub.s32 0, %v959
        %v961 = vrot.slane %v951, %v960
        %v962 = vmul.f32 %v935, %v957
        %v963 = vmul.f32 %v923, %v961
        %v964 = vmul.f32 %v936, %v957
        %v965 = vmul.f32 %v924, %v961
        %v966 = vmul.f32 %v937, %v957
        %v967 = vmul.f32 %v925, %v961
        %v968 = vmul.f32 %v938, %v957
        %v969 = vmul.f32 %v926, %v961
        %s970 = scalar_lea.vmem [#allocation2], 96
        %v971 = vld [vmem:[%s970] sm:$0xff]
        %v972 = vld [vmem:[%s970 + $0x8] sm:$0xff]
        %v973 = vld [vmem:[%s970 + $0x10] sm:$0xff]
        %v974 = vld [vmem:[%s970 + $0x18] sm:$0xff]
        %v976 = vsel %vm516, %v971, 0
        %v979 = vsel %vm516, %v972, 0
        %v982 = vsel %vm516, %v973, 0
        %v985 = vsel %vm516, %v974, 0
        %987 = vmatprep.subr.mxu0 %v963
        %988 = vmatpush1.msra.mxu0 %v962
        %989 = vmatprep.subr.mxu0 %v965
        %990 = vmatpush1.msra.mxu0 %v964
        %991 = vmatprep.subr.mxu0 %v967
        %992 = vmatpush1.msra.mxu0 %v966
        %993 = vmatprep.subr.mxu0 %v969
        %994 = vmatpush1.msra.mxu0 %v968
        %995 = vmatprep.subr.mxu0 0.0
        %996 = vmatpush1.msra.mxu0 0.0
        %997 = vmatprep.subr.mxu0 0.0
        %998 = vmatpush1.msra.mxu0 0.0
        %999 = vmatprep.subr.mxu0 0.0
        %1000 = vmatpush1.msra.mxu0 0.0
        %1001 = vmatprep.subr.mxu0 0.0
        %1002 = vmatpush1.msra.mxu0 0.0
        %1003 = vmatprep.subr.mxu0 0.0
        %1004 = vmatpush1.msra.mxu0 0.0
        %1005 = vmatprep.subr.mxu0 0.0
        %1006 = vmatpush1.msra.mxu0 0.0
        %1007 = vmatprep.subr.mxu0 0.0
        %1008 = vmatpush1.msra.mxu0 0.0
        %1009 = vmatprep.subr.mxu0 0.0
        %1010 = vmatpush1.msra.mxu0 0.0
        %1011 = vmatprep.subr.mxu0 0.0
        %1012 = vmatpush1.msra.mxu0 0.0
        %1013 = vmatprep.subr.mxu0 0.0
        %1014 = vmatpush1.msra.mxu0 0.0
        %1015 = vmatprep.subr.mxu0 0.0
        %1016 = vmatpush1.msra.mxu0 0.0
        %1017 = vmatprep.subr.mxu0 0.0
        %1018 = vmatpush1.msra.mxu0 0.0
        %1019 = vmatprep.subr.mxu0 0.0
        %1020 = vmatpush1.msra.mxu0 0.0
        %1021 = vmatprep.subr.mxu0 0.0
        %1022 = vmatpush1.msra.mxu0 0.0
        %1023 = vmatprep.subr.mxu0 0.0
        %1024 = vmatpush1.msra.mxu0 0.0
        %1025 = vmatprep.subr.mxu0 0.0
        %1026 = vmatpush1.msra.mxu0 0.0
        %1027 = vmatprep.subr.mxu0 0.0
        %1028 = vmatpush1.msra.mxu0 0.0
        %1029 = vmatprep.subr.mxu0 0.0
        %1030 = vmatpush1.msra.mxu0 0.0
        %1031 = vmatprep.subr.mxu0 0.0
        %1032 = vmatpush1.msra.mxu0 0.0
        %1033 = vmatprep.subr.mxu0 0.0
        %1034 = vmatpush1.msra.mxu0 0.0
        %1035 = vmatprep.subr.mxu0 0.0
        %1036 = vmatpush1.msra.mxu0 0.0
        %1037 = vmatprep.subr.mxu0 0.0
        %1038 = vmatpush1.msra.mxu0 0.0
        %1039 = vmatprep.subr.mxu0 0.0
        %1040 = vmatpush1.msra.mxu0 0.0
        %1041 = vmatprep.subr.mxu0 0.0
        %1042 = vmatpush1.msra.mxu0 0.0
        %1043 = vmatprep.subr.mxu0 0.0
        %1044 = vmatpush1.msra.mxu0 0.0
        %1045 = vmatprep.subr.mxu0 0.0
        %1046 = vmatpush1.msra.mxu0 0.0
        %1047 = vmatprep.subr.mxu0 0.0
        %1048 = vmatpush1.msra.mxu0 0.0
        %1049 = vmatprep.subr.mxu0 0.0
        %1050 = vmatpush1.msra.mxu0 0.0
        %1051 = vmatprep.mubr.f32.mxu0 0.0
        %1052 = vmatmul.mubr.f32.gmra.mrb[0].mxu0 %v976
        %v1053 = vpop.f32.mrb[0].mxu0
        %v1054 = vadd.f32 0.0, %v1053
        %v1055 = vpop.f32.mrb[0].mxu0
        %v1056 = vadd.f32 0.0, %v1055
        %1057 = vmatprep.mubr.f32.mxu0 0.0
        %1058 = vmatmul.mubr.f32.gmra.mrb[0].mxu0 %v979
        %v1059 = vpop.f32.mrb[0].mxu0
        %v1060 = vadd.f32 0.0, %v1059
        %v1061 = vpop.f32.mrb[0].mxu0
        %v1062 = vadd.f32 0.0, %v1061
        %1063 = vmatprep.mubr.f32.mxu0 0.0
        %1064 = vmatmul.mubr.f32.gmra.mrb[0].mxu0 %v982
        %v1065 = vpop.f32.mrb[0].mxu0
        %v1066 = vadd.f32 0.0, %v1065
        %v1067 = vpop.f32.mrb[0].mxu0
        %v1068 = vadd.f32 0.0, %v1067
        %1069 = vmatprep.mubr.f32.mxu0 0.0
        %1070 = vmatmul.mubr.f32.gmra.mrb[0].mxu0 %v985
        %v1071 = vpop.f32.mrb[0].mxu0
        %v1072 = vadd.f32 0.0, %v1071
        %v1073 = vpop.f32.mrb[0].mxu0
        %v1074 = vadd.f32 0.0, %v1073
        %1075 = vdwg.mxu0
        %v1076 = vadd.f32 %v898, %v1054
        %v1077 = vadd.f32 %v899, %v1056
        %v1078 = vadd.f32 %v900, %v1060
        %v1079 = vadd.f32 %v901, %v1062
        %v1080 = vadd.f32 %v902, %v1066
        %v1081 = vadd.f32 %v903, %v1068
        %v1082 = vadd.f32 %v904, %v1072
        %v1083 = vadd.f32 %v905, %v1074
        %vm1084 = vmand %vm939, %vm475
        %vm1085 = vmand %vm1084, %vm481
        %v1086 = vsel %vm1085, %v404, 0.0
        %v1088 = vlaneseq
        %v1089 = vshrl.u32 %v1088, 7
        %v1090 = vsub.s32 0, %v1089
        %v1091 = vrot.slane %v1086, %v1090
        %v1092 = vlaneseq
        %v1093 = vshrl.u32 %v1092, 7
        %v1094 = vsub.s32 4, %v1093
        %v1095 = vrot.slane %v1086, %v1094
        %v1098 = vlaneseq
        %v1099 = vshrl.u32 %v1098, 7
        %v1100 = vsub.s32 0, %v1099
        %v1101 = vrot.slane %v1091, %v1100
        %v1102 = vlaneseq
        %v1103 = vshrl.u32 %v1102, 7
        %v1104 = vsub.s32 0, %v1103
        %v1105 = vrot.slane %v1095, %v1104
        %v1106 = vmul.f32 %v340, %v1101
        %v1107 = vmul.f32 %v341, %v1105
        %v1108 = vmul.f32 %v342, %v1101
        %v1109 = vmul.f32 %v343, %v1105
        %v1110 = vmul.f32 %v344, %v1101
        %v1111 = vmul.f32 %v345, %v1105
        %v1112 = vmul.f32 %v346, %v1101
        %v1113 = vmul.f32 %v347, %v1105
        %s1114 = scalar_lea.vmem [#allocation2], 128
        %v1115 = vld [vmem:[%s1114] sm:$0xff]
        %v1116 = vld [vmem:[%s1114 + $0x8] sm:$0xff]
        %v1117 = vld [vmem:[%s1114 + $0x10] sm:$0xff]
        %v1118 = vld [vmem:[%s1114 + $0x18] sm:$0xff]
        %v1120 = vsel %vm516, %v1115, 0
        %v1123 = vsel %vm516, %v1116, 0
        %v1126 = vsel %vm516, %v1117, 0
        %v1129 = vsel %vm516, %v1118, 0
        %1131 = vmatprep.subr.mxu0 %v1107
        %1132 = vmatpush1.msra.mxu0 %v1106
        %1133 = vmatprep.subr.mxu0 %v1109
        %1134 = vmatpush1.msra.mxu0 %v1108
        %1135 = vmatprep.subr.mxu0 %v1111
        %1136 = vmatpush1.msra.mxu0 %v1110
        %1137 = vmatprep.subr.mxu0 %v1113
        %1138 = vmatpush1.msra.mxu0 %v1112
        %1139 = vmatprep.subr.mxu0 0.0
        %1140 = vmatpush1.msra.mxu0 0.0
        %1141 = vmatprep.subr.mxu0 0.0
        %1142 = vmatpush1.msra.mxu0 0.0
        %1143 = vmatprep.subr.mxu0 0.0
        %1144 = vmatpush1.msra.mxu0 0.0
        %1145 = vmatprep.subr.mxu0 0.0
        %1146 = vmatpush1.msra.mxu0 0.0
        %1147 = vmatprep.subr.mxu0 0.0
        %1148 = vmatpush1.msra.mxu0 0.0
        %1149 = vmatprep.subr.mxu0 0.0
        %1150 = vmatpush1.msra.mxu0 0.0
        %1151 = vmatprep.subr.mxu0 0.0
        %1152 = vmatpush1.msra.mxu0 0.0
        %1153 = vmatprep.subr.mxu0 0.0
        %1154 = vmatpush1.msra.mxu0 0.0
        %1155 = vmatprep.subr.mxu0 0.0
        %1156 = vmatpush1.msra.mxu0 0.0
        %1157 = vmatprep.subr.mxu0 0.0
        %1158 = vmatpush1.msra.mxu0 0.0
        %1159 = vmatprep.subr.mxu0 0.0
        %1160 = vmatpush1.msra.mxu0 0.0
        %1161 = vmatprep.subr.mxu0 0.0
        %1162 = vmatpush1.msra.mxu0 0.0
        %1163 = vmatprep.subr.mxu0 0.0
        %1164 = vmatpush1.msra.mxu0 0.0
        %1165 = vmatprep.subr.mxu0 0.0
        %1166 = vmatpush1.msra.mxu0 0.0
        %1167 = vmatprep.subr.mxu0 0.0
        %1168 = vmatpush1.msra.mxu0 0.0
        %1169 = vmatprep.subr.mxu0 0.0
        %1170 = vmatpush1.msra.mxu0 0.0
        %1171 = vmatprep.subr.mxu0 0.0
        %1172 = vmatpush1.msra.mxu0 0.0
        %1173 = vmatprep.subr.mxu0 0.0
        %1174 = vmatpush1.msra.mxu0 0.0
        %1175 = vmatprep.subr.mxu0 0.0
        %1176 = vmatpush1.msra.mxu0 0.0
        %1177 = vmatprep.subr.mxu0 0.0
        %1178 = vmatpush1.msra.mxu0 0.0
        %1179 = vmatprep.subr.mxu0 0.0
        %1180 = vmatpush1.msra.mxu0 0.0
        %1181 = vmatprep.subr.mxu0 0.0
        %1182 = vmatpush1.msra.mxu0 0.0
        %1183 = vmatprep.subr.mxu0 0.0
        %1184 = vmatpush1.msra.mxu0 0.0
        %1185 = vmatprep.subr.mxu0 0.0
        %1186 = vmatpush1.msra.mxu0 0.0
        %1187 = vmatprep.subr.mxu0 0.0
        %1188 = vmatpush1.msra.mxu0 0.0
        %1189 = vmatprep.subr.mxu0 0.0
        %1190 = vmatpush1.msra.mxu0 0.0
        %1191 = vmatprep.subr.mxu0 0.0
        %1192 = vmatpush1.msra.mxu0 0.0
        %1193 = vmatprep.subr.mxu0 0.0
        %1194 = vmatpush1.msra.mxu0 0.0
        %1195 = vmatprep.mubr.f32.mxu0 0.0
        %1196 = vmatmul.mubr.f32.gmra.mrb[0].mxu0 %v1120
        %v1197 = vpop.f32.mrb[0].mxu0
        %v1198 = vadd.f32 0.0, %v1197
        %v1199 = vpop.f32.mrb[0].mxu0
        %v1200 = vadd.f32 0.0, %v1199
        %1201 = vmatprep.mubr.f32.mxu0 0.0
        %1202 = vmatmul.mubr.f32.gmra.mrb[0].mxu0 %v1123
        %v1203 = vpop.f32.mrb[0].mxu0
        %v1204 = vadd.f32 0.0, %v1203
        %v1205 = vpop.f32.mrb[0].mxu0
        %v1206 = vadd.f32 0.0, %v1205
        %1207 = vmatprep.mubr.f32.mxu0 0.0
        %1208 = vmatmul.mubr.f32.gmra.mrb[0].mxu0 %v1126
        %v1209 = vpop.f32.mrb[0].mxu0
        %v1210 = vadd.f32 0.0, %v1209
        %v1211 = vpop.f32.mrb[0].mxu0
        %v1212 = vadd.f32 0.0, %v1211
        %1213 = vmatprep.mubr.f32.mxu0 0.0
        %1214 = vmatmul.mubr.f32.gmra.mrb[0].mxu0 %v1129
        %v1215 = vpop.f32.mrb[0].mxu0
        %v1216 = vadd.f32 0.0, %v1215
        %v1217 = vpop.f32.mrb[0].mxu0
        %v1218 = vadd.f32 0.0, %v1217
        %1219 = vdwg.mxu0
        %v1220 = vadd.f32 %v1076, %v1198
        %v1221 = vadd.f32 %v1077, %v1200
        %v1222 = vadd.f32 %v1078, %v1204
        %v1223 = vadd.f32 %v1079, %v1206
        %v1224 = vadd.f32 %v1080, %v1210
        %v1225 = vadd.f32 %v1081, %v1212
        %v1226 = vadd.f32 %v1082, %v1216
        %v1227 = vadd.f32 %v1083, %v1218
        %1228 = vrot.lane.b32.xlu0 %v340, 127
        %v1229 = vpop.permute.xlu0 %1228
        %1230 = vrot.lane.b32.xlu0 %v341, 127
        %v1231 = vpop.permute.xlu0 %1230
        %1232 = vrot.lane.b32.xlu0 %v342, 127
        %v1233 = vpop.permute.xlu0 %1232
        %1234 = vrot.lane.b32.xlu0 %v343, 127
        %v1235 = vpop.permute.xlu0 %1234
        %1236 = vrot.lane.b32.xlu0 %v344, 127
        %v1237 = vpop.permute.xlu0 %1236
        %1238 = vrot.lane.b32.xlu0 %v345, 127
        %v1239 = vpop.permute.xlu0 %1238
        %1240 = vrot.lane.b32.xlu0 %v346, 127
        %v1241 = vpop.permute.xlu0 %1240
        %1242 = vrot.lane.b32.xlu0 %v347, 127
        %v1243 = vpop.permute.xlu0 %1242
        %vm1244 = vcmask 1039360
        %v1245 = vsel %vm1244, %v1229, %v1231
        %v1246 = vsel %vm1244, %v1233, %v1235
        %v1247 = vsel %vm1244, %v1237, %v1239
        %v1248 = vsel %vm1244, %v1241, %v1243
        %v1257 = vsel %vm1244, %v1231, 0.0
        %v1258 = vsel %vm1244, %v1235, 0.0
        %v1259 = vsel %vm1244, %v1239, 0.0
        %v1260 = vsel %vm1244, %v1243, 0.0
        %vm1261 = vmand %vm939, %vm756
        %vm1262 = vmand %vm1261, %vm762
        %v1263 = vsel %vm1262, %v404, 0.0
        %v1265 = vlaneseq
        %v1266 = vshrl.u32 %v1265, 7
        %v1267 = vsub.s32 0, %v1266
        %v1268 = vrot.slane %v1263, %v1267
        %v1269 = vlaneseq
        %v1270 = vshrl.u32 %v1269, 7
        %v1271 = vsub.s32 4, %v1270
        %v1272 = vrot.slane %v1263, %v1271
        %v1275 = vlaneseq
        %v1276 = vshrl.u32 %v1275, 7
        %v1277 = vsub.s32 0, %v1276
        %v1278 = vrot.slane %v1268, %v1277
        %v1279 = vlaneseq
        %v1280 = vshrl.u32 %v1279, 7
        %v1281 = vsub.s32 0, %v1280
        %v1282 = vrot.slane %v1272, %v1281
        %v1283 = vmul.f32 %v1245, %v1278
        %v1284 = vmul.f32 %v1257, %v1282
        %v1285 = vmul.f32 %v1246, %v1278
        %v1286 = vmul.f32 %v1258, %v1282
        %v1287 = vmul.f32 %v1247, %v1278
        %v1288 = vmul.f32 %v1259, %v1282
        %v1289 = vmul.f32 %v1248, %v1278
        %v1290 = vmul.f32 %v1260, %v1282
        %s1291 = scalar_lea.vmem [#allocation2], 160
        %v1292 = vld [vmem:[%s1291] sm:$0xff]
        %v1293 = vld [vmem:[%s1291 + $0x8] sm:$0xff]
        %v1294 = vld [vmem:[%s1291 + $0x10] sm:$0xff]
        %v1295 = vld [vmem:[%s1291 + $0x18] sm:$0xff]
        %v1297 = vsel %vm516, %v1292, 0
        %v1300 = vsel %vm516, %v1293, 0
        %v1303 = vsel %vm516, %v1294, 0
        %v1306 = vsel %vm516, %v1295, 0
        %1308 = vmatprep.subr.mxu0 %v1284
        %1309 = vmatpush1.msra.mxu0 %v1283
        %1310 = vmatprep.subr.mxu0 %v1286
        %1311 = vmatpush1.msra.mxu0 %v1285
        %1312 = vmatprep.subr.mxu0 %v1288
        %1313 = vmatpush1.msra.mxu0 %v1287
        %1314 = vmatprep.subr.mxu0 %v1290
        %1315 = vmatpush1.msra.mxu0 %v1289
        %1316 = vmatprep.subr.mxu0 0.0
        %1317 = vmatpush1.msra.mxu0 0.0
        %1318 = vmatprep.subr.mxu0 0.0
        %1319 = vmatpush1.msra.mxu0 0.0
        %1320 = vmatprep.subr.mxu0 0.0
        %1321 = vmatpush1.msra.mxu0 0.0
        %1322 = vmatprep.subr.mxu0 0.0
        %1323 = vmatpush1.msra.mxu0 0.0
        %1324 = vmatprep.subr.mxu0 0.0
        %1325 = vmatpush1.msra.mxu0 0.0
        %1326 = vmatprep.subr.mxu0 0.0
        %1327 = vmatpush1.msra.mxu0 0.0
        %1328 = vmatprep.subr.mxu0 0.0
        %1329 = vmatpush1.msra.mxu0 0.0
        %1330 = vmatprep.subr.mxu0 0.0
        %1331 = vmatpush1.msra.mxu0 0.0
        %1332 = vmatprep.subr.mxu0 0.0
        %1333 = vmatpush1.msra.mxu0 0.0
        %1334 = vmatprep.subr.mxu0 0.0
        %1335 = vmatpush1.msra.mxu0 0.0
        %1336 = vmatprep.subr.mxu0 0.0
        %1337 = vmatpush1.msra.mxu0 0.0
        %1338 = vmatprep.subr.mxu0 0.0
        %1339 = vmatpush1.msra.mxu0 0.0
        %1340 = vmatprep.subr.mxu0 0.0
        %1341 = vmatpush1.msra.mxu0 0.0
        %1342 = vmatprep.subr.mxu0 0.0
        %1343 = vmatpush1.msra.mxu0 0.0
        %1344 = vmatprep.subr.mxu0 0.0
        %1345 = vmatpush1.msra.mxu0 0.0
        %1346 = vmatprep.subr.mxu0 0.0
        %1347 = vmatpush1.msra.mxu0 0.0
        %1348 = vmatprep.subr.mxu0 0.0
        %1349 = vmatpush1.msra.mxu0 0.0
        %1350 = vmatprep.subr.mxu0 0.0
        %1351 = vmatpush1.msra.mxu0 0.0
        %1352 = vmatprep.subr.mxu0 0.0
        %1353 = vmatpush1.msra.mxu0 0.0
        %1354 = vmatprep.subr.mxu0 0.0
        %1355 = vmatpush1.msra.mxu0 0.0
        %1356 = vmatprep.subr.mxu0 0.0
        %1357 = vmatpush1.msra.mxu0 0.0
        %1358 = vmatprep.subr.mxu0 0.0
        %1359 = vmatpush1.msra.mxu0 0.0
        %1360 = vmatprep.subr.mxu0 0.0
        %1361 = vmatpush1.msra.mxu0 0.0
        %1362 = vmatprep.subr.mxu0 0.0
        %1363 = vmatpush1.msra.mxu0 0.0
        %1364 = vmatprep.subr.mxu0 0.0
        %1365 = vmatpush1.msra.mxu0 0.0
        %1366 = vmatprep.subr.mxu0 0.0
        %1367 = vmatpush1.msra.mxu0 0.0
        %1368 = vmatprep.subr.mxu0 0.0
        %1369 = vmatpush1.msra.mxu0 0.0
        %1370 = vmatprep.subr.mxu0 0.0
        %1371 = vmatpush1.msra.mxu0 0.0
        %1372 = vmatprep.mubr.f32.mxu0 0.0
        %1373 = vmatmul.mubr.f32.gmra.mrb[0].mxu0 %v1297
        %v1374 = vpop.f32.mrb[0].mxu0
        %v1375 = vadd.f32 0.0, %v1374
        %v1376 = vpop.f32.mrb[0].mxu0
        %v1377 = vadd.f32 0.0, %v1376
        %1378 = vmatprep.mubr.f32.mxu0 0.0
        %1379 = vmatmul.mubr.f32.gmra.mrb[0].mxu0 %v1300
        %v1380 = vpop.f32.mrb[0].mxu0
        %v1381 = vadd.f32 0.0, %v1380
        %v1382 = vpop.f32.mrb[0].mxu0
        %v1383 = vadd.f32 0.0, %v1382
        %1384 = vmatprep.mubr.f32.mxu0 0.0
        %1385 = vmatmul.mubr.f32.gmra.mrb[0].mxu0 %v1303
        %v1386 = vpop.f32.mrb[0].mxu0
        %v1387 = vadd.f32 0.0, %v1386
        %v1388 = vpop.f32.mrb[0].mxu0
        %v1389 = vadd.f32 0.0, %v1388
        %1390 = vmatprep.mubr.f32.mxu0 0.0
        %1391 = vmatmul.mubr.f32.gmra.mrb[0].mxu0 %v1306
        %v1392 = vpop.f32.mrb[0].mxu0
        %v1393 = vadd.f32 0.0, %v1392
        %v1394 = vpop.f32.mrb[0].mxu0
        %v1395 = vadd.f32 0.0, %v1394
        %1396 = vdwg.mxu0
        %v1397 = vadd.f32 %v1220, %v1375
        %v1398 = vadd.f32 %v1221, %v1377
        %v1399 = vadd.f32 %v1222, %v1381
        %v1400 = vadd.f32 %v1223, %v1383
        %v1401 = vadd.f32 %v1224, %v1387
        %v1402 = vadd.f32 %v1225, %v1389
        %v1403 = vadd.f32 %v1226, %v1393
        %v1404 = vadd.f32 %v1227, %v1395
        %1405 = vrot.lane.b32.xlu0 %v340, 113
        %v1406 = vpop.permute.xlu0 %1405
        %1407 = vrot.lane.b32.xlu0 %v341, 113
        %v1408 = vpop.permute.xlu0 %1407
        %1409 = vrot.lane.b32.xlu0 %v342, 113
        %v1410 = vpop.permute.xlu0 %1409
        %1411 = vrot.lane.b32.xlu0 %v343, 113
        %v1412 = vpop.permute.xlu0 %1411
        %1413 = vrot.lane.b32.xlu0 %v344, 113
        %v1414 = vpop.permute.xlu0 %1413
        %1415 = vrot.lane.b32.xlu0 %v345, 113
        %v1416 = vpop.permute.xlu0 %1415
        %1417 = vrot.lane.b32.xlu0 %v346, 113
        %v1418 = vpop.permute.xlu0 %1417
        %1419 = vrot.lane.b32.xlu0 %v347, 113
        %v1420 = vpop.permute.xlu0 %1419
        %vm1421 = vcmask 924672
        %v1422 = vsel %vm1421, %v1406, %v1408
        %v1423 = vsel %vm1421, %v1410, %v1412
        %v1424 = vsel %vm1421, %v1414, %v1416
        %v1425 = vsel %vm1421, %v1418, %v1420
        %v1434 = vsel %vm1421, %v1408, 0.0
        %v1435 = vsel %vm1421, %v1412, 0.0
        %v1436 = vsel %vm1421, %v1416, 0.0
        %v1437 = vsel %vm1421, %v1420, 0.0
        %vm1438 = vmand %vm752, %vm758
        %vm1439 = vmand %vm1438, %vm395
        %vm1440 = vmand %vm1439, %vm400
        %v1441 = vsel %vm1440, %v404, 0.0
        %v1443 = vlaneseq
        %v1444 = vshrl.u32 %v1443, 7
        %v1445 = vsub.s32 0, %v1444
        %v1446 = vrot.slane %v1441, %v1445
        %v1447 = vlaneseq
        %v1448 = vshrl.u32 %v1447, 7
        %v1449 = vsub.s32 4, %v1448
        %v1450 = vrot.slane %v1441, %v1449
        %v1453 = vlaneseq
        %v1454 = vshrl.u32 %v1453, 7
        %v1455 = vsub.s32 0, %v1454
        %v1456 = vrot.slane %v1446, %v1455
        %v1457 = vlaneseq
        %v1458 = vshrl.u32 %v1457, 7
        %v1459 = vsub.s32 0, %v1458
        %v1460 = vrot.slane %v1450, %v1459
        %v1461 = vmul.f32 %v1422, %v1456
        %v1462 = vmul.f32 %v1434, %v1460
        %v1463 = vmul.f32 %v1423, %v1456
        %v1464 = vmul.f32 %v1435, %v1460
        %v1465 = vmul.f32 %v1424, %v1456
        %v1466 = vmul.f32 %v1436, %v1460
        %v1467 = vmul.f32 %v1425, %v1456
        %v1468 = vmul.f32 %v1437, %v1460
        %s1469 = scalar_lea.vmem [#allocation2], 192
        %v1470 = vld [vmem:[%s1469] sm:$0xff]
        %v1471 = vld [vmem:[%s1469 + $0x8] sm:$0xff]
        %v1472 = vld [vmem:[%s1469 + $0x10] sm:$0xff]
        %v1473 = vld [vmem:[%s1469 + $0x18] sm:$0xff]
        %v1475 = vsel %vm516, %v1470, 0
        %v1478 = vsel %vm516, %v1471, 0
        %v1481 = vsel %vm516, %v1472, 0
        %v1484 = vsel %vm516, %v1473, 0
        %1486 = vmatprep.subr.mxu0 %v1462
        %1487 = vmatpush1.msra.mxu0 %v1461
        %1488 = vmatprep.subr.mxu0 %v1464
        %1489 = vmatpush1.msra.mxu0 %v1463
        %1490 = vmatprep.subr.mxu0 %v1466
        %1491 = vmatpush1.msra.mxu0 %v1465
        %1492 = vmatprep.subr.mxu0 %v1468
        %1493 = vmatpush1.msra.mxu0 %v1467
        %1494 = vmatprep.subr.mxu0 0.0
        %1495 = vmatpush1.msra.mxu0 0.0
        %1496 = vmatprep.subr.mxu0 0.0
        %1497 = vmatpush1.msra.mxu0 0.0
        %1498 = vmatprep.subr.mxu0 0.0
        %1499 = vmatpush1.msra.mxu0 0.0
        %1500 = vmatprep.subr.mxu0 0.0
        %1501 = vmatpush1.msra.mxu0 0.0
        %1502 = vmatprep.subr.mxu0 0.0
        %1503 = vmatpush1.msra.mxu0 0.0
        %1504 = vmatprep.subr.mxu0 0.0
        %1505 = vmatpush1.msra.mxu0 0.0
        %1506 = vmatprep.subr.mxu0 0.0
        %1507 = vmatpush1.msra.mxu0 0.0
        %1508 = vmatprep.subr.mxu0 0.0
        %1509 = vmatpush1.msra.mxu0 0.0
        %1510 = vmatprep.subr.mxu0 0.0
        %1511 = vmatpush1.msra.mxu0 0.0
        %1512 = vmatprep.subr.mxu0 0.0
        %1513 = vmatpush1.msra.mxu0 0.0
        %1514 = vmatprep.subr.mxu0 0.0
        %1515 = vmatpush1.msra.mxu0 0.0
        %1516 = vmatprep.subr.mxu0 0.0
        %1517 = vmatpush1.msra.mxu0 0.0
        %1518 = vmatprep.subr.mxu0 0.0
        %1519 = vmatpush1.msra.mxu0 0.0
        %1520 = vmatprep.subr.mxu0 0.0
        %1521 = vmatpush1.msra.mxu0 0.0
        %1522 = vmatprep.subr.mxu0 0.0
        %1523 = vmatpush1.msra.mxu0 0.0
        %1524 = vmatprep.subr.mxu0 0.0
        %1525 = vmatpush1.msra.mxu0 0.0
        %1526 = vmatprep.subr.mxu0 0.0
        %1527 = vmatpush1.msra.mxu0 0.0
        %1528 = vmatprep.subr.mxu0 0.0
        %1529 = vmatpush1.msra.mxu0 0.0
        %1530 = vmatprep.subr.mxu0 0.0
        %1531 = vmatpush1.msra.mxu0 0.0
        %1532 = vmatprep.subr.mxu0 0.0
        %1533 = vmatpush1.msra.mxu0 0.0
        %1534 = vmatprep.subr.mxu0 0.0
        %1535 = vmatpush1.msra.mxu0 0.0
        %1536 = vmatprep.subr.mxu0 0.0
        %1537 = vmatpush1.msra.mxu0 0.0
        %1538 = vmatprep.subr.mxu0 0.0
        %1539 = vmatpush1.msra.mxu0 0.0
        %1540 = vmatprep.subr.mxu0 0.0
        %1541 = vmatpush1.msra.mxu0 0.0
        %1542 = vmatprep.subr.mxu0 0.0
        %1543 = vmatpush1.msra.mxu0 0.0
        %1544 = vmatprep.subr.mxu0 0.0
        %1545 = vmatpush1.msra.mxu0 0.0
        %1546 = vmatprep.subr.mxu0 0.0
        %1547 = vmatpush1.msra.mxu0 0.0
        %1548 = vmatprep.subr.mxu0 0.0
        %1549 = vmatpush1.msra.mxu0 0.0
        %1550 = vmatprep.mubr.f32.mxu0 0.0
        %1551 = vmatmul.mubr.f32.gmra.mrb[0].mxu0 %v1475
        %v1552 = vpop.f32.mrb[0].mxu0
        %v1553 = vadd.f32 0.0, %v1552
        %v1554 = vpop.f32.mrb[0].mxu0
        %v1555 = vadd.f32 0.0, %v1554
        %1556 = vmatprep.mubr.f32.mxu0 0.0
        %1557 = vmatmul.mubr.f32.gmra.mrb[0].mxu0 %v1478
        %v1558 = vpop.f32.mrb[0].mxu0
        %v1559 = vadd.f32 0.0, %v1558
        %v1560 = vpop.f32.mrb[0].mxu0
        %v1561 = vadd.f32 0.0, %v1560
        %1562 = vmatprep.mubr.f32.mxu0 0.0
        %1563 = vmatmul.mubr.f32.gmra.mrb[0].mxu0 %v1481
        %v1564 = vpop.f32.mrb[0].mxu0
        %v1565 = vadd.f32 0.0, %v1564
        %v1566 = vpop.f32.mrb[0].mxu0
        %v1567 = vadd.f32 0.0, %v1566
        %1568 = vmatprep.mubr.f32.mxu0 0.0
        %1569 = vmatmul.mubr.f32.gmra.mrb[0].mxu0 %v1484
        %v1570 = vpop.f32.mrb[0].mxu0
        %v1571 = vadd.f32 0.0, %v1570
        %v1572 = vpop.f32.mrb[0].mxu0
        %v1573 = vadd.f32 0.0, %v1572
        %1574 = vdwg.mxu0
        %v1575 = vadd.f32 %v1397, %v1553
        %v1576 = vadd.f32 %v1398, %v1555
        %v1577 = vadd.f32 %v1399, %v1559
        %v1578 = vadd.f32 %v1400, %v1561
        %v1579 = vadd.f32 %v1401, %v1565
        %v1580 = vadd.f32 %v1402, %v1567
        %v1581 = vadd.f32 %v1403, %v1571
        %v1582 = vadd.f32 %v1404, %v1573
        %1583 = vrot.lane.b32.xlu0 %v340, 112
        %v1584 = vpop.permute.xlu0 %1583
        %1585 = vrot.lane.b32.xlu0 %v341, 112
        %v1586 = vpop.permute.xlu0 %1585
        %1587 = vrot.lane.b32.xlu0 %v342, 112
        %v1588 = vpop.permute.xlu0 %1587
        %1589 = vrot.lane.b32.xlu0 %v343, 112
        %v1590 = vpop.permute.xlu0 %1589
        %1591 = vrot.lane.b32.xlu0 %v344, 112
        %v1592 = vpop.permute.xlu0 %1591
        %1593 = vrot.lane.b32.xlu0 %v345, 112
        %v1594 = vpop.permute.xlu0 %1593
        %1595 = vrot.lane.b32.xlu0 %v346, 112
        %v1596 = vpop.permute.xlu0 %1595
        %1597 = vrot.lane.b32.xlu0 %v347, 112
        %v1598 = vpop.permute.xlu0 %1597
        %vm1599 = vcmask 916480
        %v1600 = vsel %vm1599, %v1584, %v1586
        %v1601 = vsel %vm1599, %v1588, %v1590
        %v1602 = vsel %vm1599, %v1592, %v1594
        %v1603 = vsel %vm1599, %v1596, %v1598
        %v1612 = vsel %vm1599, %v1586, 0.0
        %v1613 = vsel %vm1599, %v1590, 0.0
        %v1614 = vsel %vm1599, %v1594, 0.0
        %v1615 = vsel %vm1599, %v1598, 0.0
        %vm1616 = vmand %vm1438, %vm475
        %vm1617 = vmand %vm1616, %vm481
        %v1618 = vsel %vm1617, %v404, 0.0
        %v1620 = vlaneseq
        %v1621 = vshrl.u32 %v1620, 7
        %v1622 = vsub.s32 0, %v1621
        %v1623 = vrot.slane %v1618, %v1622
        %v1624 = vlaneseq
        %v1625 = vshrl.u32 %v1624, 7
        %v1626 = vsub.s32 4, %v1625
        %v1627 = vrot.slane %v1618, %v1626
        %v1630 = vlaneseq
        %v1631 = vshrl.u32 %v1630, 7
        %v1632 = vsub.s32 0, %v1631
        %v1633 = vrot.slane %v1623, %v1632
        %v1634 = vlaneseq
        %v1635 = vshrl.u32 %v1634, 7
        %v1636 = vsub.s32 0, %v1635
        %v1637 = vrot.slane %v1627, %v1636
        %v1638 = vmul.f32 %v1600, %v1633
        %v1639 = vmul.f32 %v1612, %v1637
        %v1640 = vmul.f32 %v1601, %v1633
        %v1641 = vmul.f32 %v1613, %v1637
        %v1642 = vmul.f32 %v1602, %v1633
        %v1643 = vmul.f32 %v1614, %v1637
        %v1644 = vmul.f32 %v1603, %v1633
        %v1645 = vmul.f32 %v1615, %v1637
        %s1646 = scalar_lea.vmem [#allocation2], 224
        %v1647 = vld [vmem:[%s1646] sm:$0xff]
        %v1648 = vld [vmem:[%s1646 + $0x8] sm:$0xff]
        %v1649 = vld [vmem:[%s1646 + $0x10] sm:$0xff]
        %v1650 = vld [vmem:[%s1646 + $0x18] sm:$0xff]
        %v1652 = vsel %vm516, %v1647, 0
        %v1655 = vsel %vm516, %v1648, 0
        %v1658 = vsel %vm516, %v1649, 0
        %v1661 = vsel %vm516, %v1650, 0
        %1663 = vmatprep.subr.mxu0 %v1639
        %1664 = vmatpush1.msra.mxu0 %v1638
        %1665 = vmatprep.subr.mxu0 %v1641
        %1666 = vmatpush1.msra.mxu0 %v1640
        %1667 = vmatprep.subr.mxu0 %v1643
        %1668 = vmatpush1.msra.mxu0 %v1642
        %1669 = vmatprep.subr.mxu0 %v1645
        %1670 = vmatpush1.msra.mxu0 %v1644
        %1671 = vmatprep.subr.mxu0 0.0
        %1672 = vmatpush1.msra.mxu0 0.0
        %1673 = vmatprep.subr.mxu0 0.0
        %1674 = vmatpush1.msra.mxu0 0.0
        %1675 = vmatprep.subr.mxu0 0.0
        %1676 = vmatpush1.msra.mxu0 0.0
        %1677 = vmatprep.subr.mxu0 0.0
        %1678 = vmatpush1.msra.mxu0 0.0
        %1679 = vmatprep.subr.mxu0 0.0
        %1680 = vmatpush1.msra.mxu0 0.0
        %1681 = vmatprep.subr.mxu0 0.0
        %1682 = vmatpush1.msra.mxu0 0.0
        %1683 = vmatprep.subr.mxu0 0.0
        %1684 = vmatpush1.msra.mxu0 0.0
        %1685 = vmatprep.subr.mxu0 0.0
        %1686 = vmatpush1.msra.mxu0 0.0
        %1687 = vmatprep.subr.mxu0 0.0
        %1688 = vmatpush1.msra.mxu0 0.0
        %1689 = vmatprep.subr.mxu0 0.0
        %1690 = vmatpush1.msra.mxu0 0.0
        %1691 = vmatprep.subr.mxu0 0.0
        %1692 = vmatpush1.msra.mxu0 0.0
        %1693 = vmatprep.subr.mxu0 0.0
        %1694 = vmatpush1.msra.mxu0 0.0
        %1695 = vmatprep.subr.mxu0 0.0
        %1696 = vmatpush1.msra.mxu0 0.0
        %1697 = vmatprep.subr.mxu0 0.0
        %1698 = vmatpush1.msra.mxu0 0.0
        %1699 = vmatprep.subr.mxu0 0.0
        %1700 = vmatpush1.msra.mxu0 0.0
        %1701 = vmatprep.subr.mxu0 0.0
        %1702 = vmatpush1.msra.mxu0 0.0
        %1703 = vmatprep.subr.mxu0 0.0
        %1704 = vmatpush1.msra.mxu0 0.0
        %1705 = vmatprep.subr.mxu0 0.0
        %1706 = vmatpush1.msra.mxu0 0.0
        %1707 = vmatprep.subr.mxu0 0.0
        %1708 = vmatpush1.msra.mxu0 0.0
        %1709 = vmatprep.subr.mxu0 0.0
        %1710 = vmatpush1.msra.mxu0 0.0
        %1711 = vmatprep.subr.mxu0 0.0
        %1712 = vmatpush1.msra.mxu0 0.0
        %1713 = vmatprep.subr.mxu0 0.0
        %1714 = vmatpush1.msra.mxu0 0.0
        %1715 = vmatprep.subr.mxu0 0.0
        %1716 = vmatpush1.msra.mxu0 0.0
        %1717 = vmatprep.subr.mxu0 0.0
        %1718 = vmatpush1.msra.mxu0 0.0
        %1719 = vmatprep.subr.mxu0 0.0
        %1720 = vmatpush1.msra.mxu0 0.0
        %1721 = vmatprep.subr.mxu0 0.0
        %1722 = vmatpush1.msra.mxu0 0.0
        %1723 = vmatprep.subr.mxu0 0.0
        %1724 = vmatpush1.msra.mxu0 0.0
        %1725 = vmatprep.subr.mxu0 0.0
        %1726 = vmatpush1.msra.mxu0 0.0
        %1727 = vmatprep.mubr.f32.mxu0 0.0
        %1728 = vmatmul.mubr.f32.gmra.mrb[0].mxu0 %v1652
        %v1729 = vpop.f32.mrb[0].mxu0
        %v1730 = vadd.f32 0.0, %v1729
        %v1731 = vpop.f32.mrb[0].mxu0
        %v1732 = vadd.f32 0.0, %v1731
        %1733 = vmatprep.mubr.f32.mxu0 0.0
        %1734 = vmatmul.mubr.f32.gmra.mrb[0].mxu0 %v1655
        %v1735 = vpop.f32.mrb[0].mxu0
        %v1736 = vadd.f32 0.0, %v1735
        %v1737 = vpop.f32.mrb[0].mxu0
        %v1738 = vadd.f32 0.0, %v1737
        %1739 = vmatprep.mubr.f32.mxu0 0.0
        %1740 = vmatmul.mubr.f32.gmra.mrb[0].mxu0 %v1658
        %v1741 = vpop.f32.mrb[0].mxu0
        %v1742 = vadd.f32 0.0, %v1741
        %v1743 = vpop.f32.mrb[0].mxu0
        %v1744 = vadd.f32 0.0, %v1743
        %1745 = vmatprep.mubr.f32.mxu0 0.0
        %1746 = vmatmul.mubr.f32.gmra.mrb[0].mxu0 %v1661
        %v1747 = vpop.f32.mrb[0].mxu0
        %v1748 = vadd.f32 0.0, %v1747
        %v1749 = vpop.f32.mrb[0].mxu0
        %v1750 = vadd.f32 0.0, %v1749
        %1751 = vdwg.mxu0
        %v1752 = vadd.f32 %v1575, %v1730
        %v1753 = vadd.f32 %v1576, %v1732
        %v1754 = vadd.f32 %v1577, %v1736
        %v1755 = vadd.f32 %v1578, %v1738
        %v1756 = vadd.f32 %v1579, %v1742
        %v1757 = vadd.f32 %v1580, %v1744
        %v1758 = vadd.f32 %v1581, %v1748
        %v1759 = vadd.f32 %v1582, %v1750
        %1760 = vrot.lane.b32.xlu0 %v340, 111
        %v1761 = vpop.permute.xlu0 %1760
        %1762 = vrot.lane.b32.xlu0 %v341, 111
        %v1763 = vpop.permute.xlu0 %1762
        %1764 = vrot.lane.b32.xlu0 %v342, 111
        %v1765 = vpop.permute.xlu0 %1764
        %1766 = vrot.lane.b32.xlu0 %v343, 111
        %v1767 = vpop.permute.xlu0 %1766
        %1768 = vrot.lane.b32.xlu0 %v344, 111
        %v1769 = vpop.permute.xlu0 %1768
        %1770 = vrot.lane.b32.xlu0 %v345, 111
        %v1771 = vpop.permute.xlu0 %1770
        %1772 = vrot.lane.b32.xlu0 %v346, 111
        %v1773 = vpop.permute.xlu0 %1772
        %1774 = vrot.lane.b32.xlu0 %v347, 111
        %v1775 = vpop.permute.xlu0 %1774
        %vm1776 = vcmask 908288
        %v1777 = vsel %vm1776, %v1761, %v1763
        %v1778 = vsel %vm1776, %v1765, %v1767
        %v1779 = vsel %vm1776, %v1769, %v1771
        %v1780 = vsel %vm1776, %v1773, %v1775
        %v1789 = vsel %vm1776, %v1763, 0.0
        %v1790 = vsel %vm1776, %v1767, 0.0
        %v1791 = vsel %vm1776, %v1771, 0.0
        %v1792 = vsel %vm1776, %v1775, 0.0
        %vm1793 = vmand %vm1438, %vm756
        %vm1794 = vmand %vm1793, %vm762
        %v1795 = vsel %vm1794, %v404, 0.0
        %v1797 = vlaneseq
        %v1798 = vshrl.u32 %v1797, 7
        %v1799 = vsub.s32 0, %v1798
        %v1800 = vrot.slane %v1795, %v1799
        %v1801 = vlaneseq
        %v1802 = vshrl.u32 %v1801, 7
        %v1803 = vsub.s32 4, %v1802
        %v1804 = vrot.slane %v1795, %v1803
        %v1807 = vlaneseq
        %v1808 = vshrl.u32 %v1807, 7
        %v1809 = vsub.s32 0, %v1808
        %v1810 = vrot.slane %v1800, %v1809
        %v1811 = vlaneseq
        %v1812 = vshrl.u32 %v1811, 7
        %v1813 = vsub.s32 0, %v1812
        %v1814 = vrot.slane %v1804, %v1813
        %v1815 = vmul.f32 %v1777, %v1810
        %v1816 = vmul.f32 %v1789, %v1814
        %v1817 = vmul.f32 %v1778, %v1810
        %v1818 = vmul.f32 %v1790, %v1814
        %v1819 = vmul.f32 %v1779, %v1810
        %v1820 = vmul.f32 %v1791, %v1814
        %v1821 = vmul.f32 %v1780, %v1810
        %v1822 = vmul.f32 %v1792, %v1814
        %s1823 = scalar_lea.vmem [#allocation2], 256
        %v1824 = vld [vmem:[%s1823] sm:$0xff]
        %v1825 = vld [vmem:[%s1823 + $0x8] sm:$0xff]
        %v1826 = vld [vmem:[%s1823 + $0x10] sm:$0xff]
        %v1827 = vld [vmem:[%s1823 + $0x18] sm:$0xff]
        %v1829 = vsel %vm516, %v1824, 0
        %v1832 = vsel %vm516, %v1825, 0
        %v1835 = vsel %vm516, %v1826, 0
        %v1838 = vsel %vm516, %v1827, 0
        %1840 = vmatprep.subr.mxu0 %v1816
        %1841 = vmatpush1.msra.mxu0 %v1815
        %1842 = vmatprep.subr.mxu0 %v1818
        %1843 = vmatpush1.msra.mxu0 %v1817
        %1844 = vmatprep.subr.mxu0 %v1820
        %1845 = vmatpush1.msra.mxu0 %v1819
        %1846 = vmatprep.subr.mxu0 %v1822
        %1847 = vmatpush1.msra.mxu0 %v1821
        %1848 = vmatprep.subr.mxu0 0.0
        %1849 = vmatpush1.msra.mxu0 0.0
        %1850 = vmatprep.subr.mxu0 0.0
        %1851 = vmatpush1.msra.mxu0 0.0
        %1852 = vmatprep.subr.mxu0 0.0
        %1853 = vmatpush1.msra.mxu0 0.0
        %1854 = vmatprep.subr.mxu0 0.0
        %1855 = vmatpush1.msra.mxu0 0.0
        %1856 = vmatprep.subr.mxu0 0.0
        %1857 = vmatpush1.msra.mxu0 0.0
        %1858 = vmatprep.subr.mxu0 0.0
        %1859 = vmatpush1.msra.mxu0 0.0
        %1860 = vmatprep.subr.mxu0 0.0
        %1861 = vmatpush1.msra.mxu0 0.0
        %1862 = vmatprep.subr.mxu0 0.0
        %1863 = vmatpush1.msra.mxu0 0.0
        %1864 = vmatprep.subr.mxu0 0.0
        %1865 = vmatpush1.msra.mxu0 0.0
        %1866 = vmatprep.subr.mxu0 0.0
        %1867 = vmatpush1.msra.mxu0 0.0
        %1868 = vmatprep.subr.mxu0 0.0
        %1869 = vmatpush1.msra.mxu0 0.0
        %1870 = vmatprep.subr.mxu0 0.0
        %1871 = vmatpush1.msra.mxu0 0.0
        %1872 = vmatprep.subr.mxu0 0.0
        %1873 = vmatpush1.msra.mxu0 0.0
        %1874 = vmatprep.subr.mxu0 0.0
        %1875 = vmatpush1.msra.mxu0 0.0
        %1876 = vmatprep.subr.mxu0 0.0
        %1877 = vmatpush1.msra.mxu0 0.0
        %1878 = vmatprep.subr.mxu0 0.0
        %1879 = vmatpush1.msra.mxu0 0.0
        %1880 = vmatprep.subr.mxu0 0.0
        %1881 = vmatpush1.msra.mxu0 0.0
        %1882 = vmatprep.subr.mxu0 0.0
        %1883 = vmatpush1.msra.mxu0 0.0
        %1884 = vmatprep.subr.mxu0 0.0
        %1885 = vmatpush1.msra.mxu0 0.0
        %1886 = vmatprep.subr.mxu0 0.0
        %1887 = vmatpush1.msra.mxu0 0.0
        %1888 = vmatprep.subr.mxu0 0.0
        %1889 = vmatpush1.msra.mxu0 0.0
        %1890 = vmatprep.subr.mxu0 0.0
        %1891 = vmatpush1.msra.mxu0 0.0
        %1892 = vmatprep.subr.mxu0 0.0
        %1893 = vmatpush1.msra.mxu0 0.0
        %1894 = vmatprep.subr.mxu0 0.0
        %1895 = vmatpush1.msra.mxu0 0.0
        %1896 = vmatprep.subr.mxu0 0.0
        %1897 = vmatpush1.msra.mxu0 0.0
        %1898 = vmatprep.subr.mxu0 0.0
        %1899 = vmatpush1.msra.mxu0 0.0
        %1900 = vmatprep.subr.mxu0 0.0
        %1901 = vmatpush1.msra.mxu0 0.0
        %1902 = vmatprep.subr.mxu0 0.0
        %1903 = vmatpush1.msra.mxu0 0.0
        %1904 = vmatprep.mubr.f32.mxu0 0.0
        %1905 = vmatmul.mubr.f32.gmra.mrb[0].mxu0 %v1829
        %v1906 = vpop.f32.mrb[0].mxu0
        %v1907 = vadd.f32 0.0, %v1906
        %v1908 = vpop.f32.mrb[0].mxu0
        %v1909 = vadd.f32 0.0, %v1908
        %1910 = vmatprep.mubr.f32.mxu0 0.0
        %1911 = vmatmul.mubr.f32.gmra.mrb[0].mxu0 %v1832
        %v1912 = vpop.f32.mrb[0].mxu0
        %v1913 = vadd.f32 0.0, %v1912
        %v1914 = vpop.f32.mrb[0].mxu0
        %v1915 = vadd.f32 0.0, %v1914
        %1916 = vmatprep.mubr.f32.mxu0 0.0
        %1917 = vmatmul.mubr.f32.gmra.mrb[0].mxu0 %v1835
        %v1918 = vpop.f32.mrb[0].mxu0
        %v1919 = vadd.f32 0.0, %v1918
        %v1920 = vpop.f32.mrb[0].mxu0
        %v1921 = vadd.f32 0.0, %v1920
        %1922 = vmatprep.mubr.f32.mxu0 0.0
        %1923 = vmatmul.mubr.f32.gmra.mrb[0].mxu0 %v1838
        %v1924 = vpop.f32.mrb[0].mxu0
        %v1925 = vadd.f32 0.0, %v1924
        %v1926 = vpop.f32.mrb[0].mxu0
        %v1927 = vadd.f32 0.0, %v1926
        %1928 = vdwg.mxu0
        %v1929 = vadd.f32 %v1752, %v1907
        %v1930 = vadd.f32 %v1753, %v1909
        %v1931 = vadd.f32 %v1754, %v1913
        %v1932 = vadd.f32 %v1755, %v1915
        %v1933 = vadd.f32 %v1756, %v1919
        %v1934 = vadd.f32 %v1757, %v1921
        %v1935 = vadd.f32 %v1758, %v1925
        %v1936 = vadd.f32 %v1759, %v1927
        %v1937 = vld [vmem:[%s3] sm:$0xff]
        %v1938 = vld [vmem:[%s3 + $0x8] sm:$0xff]
        %v1939 = vld [vmem:[%s3 + $0x10] sm:$0xff]
        %v1940 = vld [vmem:[%s3 + $0x18] sm:$0xff]
        %1942 = vset.pattern.permute.xlu0 0
        %1943 = vperm.xlu0 %1942, %v1937
        %v1944 = vpop.permute.xlu0 %1943
        %1947 = vset.pattern.permute.xlu0 0
        %1948 = vperm.xlu0 %1947, %v1938
        %v1949 = vpop.permute.xlu0 %1948
        %1952 = vset.pattern.permute.xlu0 0
        %1953 = vperm.xlu0 %1952, %v1939
        %v1954 = vpop.permute.xlu0 %1953
        %1957 = vset.pattern.permute.xlu0 0
        %1958 = vperm.xlu0 %1957, %v1940
        %v1959 = vpop.permute.xlu0 %1958
        %v1961 = vmul.f32 %v1929, %v1944
        %v1962 = vmul.f32 %v1930, %v1944
        %v1963 = vmul.f32 %v1931, %v1949
        %v1964 = vmul.f32 %v1932, %v1949
        %v1965 = vmul.f32 %v1933, %v1954
        %v1966 = vmul.f32 %v1934, %v1954
        %v1967 = vmul.f32 %v1935, %v1959
        %v1968 = vmul.f32 %v1936, %v1959
        %s1969 = scalar_lea.vmem %s3, 32
        %v1970 = vld [vmem:[%s1969] sm:$0xff]
        %v1971 = vld [vmem:[%s1969 + $0x8] sm:$0xff]
        %v1972 = vld [vmem:[%s1969 + $0x10] sm:$0xff]
        %v1973 = vld [vmem:[%s1969 + $0x18] sm:$0xff]
        %1975 = vset.pattern.permute.xlu0 0
        %1976 = vperm.xlu0 %1975, %v1970
        %v1977 = vpop.permute.xlu0 %1976
        %1980 = vset.pattern.permute.xlu0 0
        %1981 = vperm.xlu0 %1980, %v1971
        %v1982 = vpop.permute.xlu0 %1981
        %1985 = vset.pattern.permute.xlu0 0
        %1986 = vperm.xlu0 %1985, %v1972
        %v1987 = vpop.permute.xlu0 %1986
        %1990 = vset.pattern.permute.xlu0 0
        %1991 = vperm.xlu0 %1990, %v1973
        %v1992 = vpop.permute.xlu0 %1991
        %v1994 = vadd.f32 %v1961, %v1977
        %v1995 = vadd.f32 %v1962, %v1977
        %v1996 = vadd.f32 %v1963, %v1982
        %v1997 = vadd.f32 %v1964, %v1982
        %v1998 = vadd.f32 %v1965, %v1987
        %v1999 = vadd.f32 %v1966, %v1987
        %v2000 = vadd.f32 %v1967, %v1992
        %v2001 = vadd.f32 %v1968, %v1992
        %v2002 = vmul.f32 %v1994, 0.5
        %v2003 = vmul.f32 %v1995, 0.5
        %v2004 = vmul.f32 %v1996, 0.5
        %v2005 = vmul.f32 %v1997, 0.5
        %v2006 = vmul.f32 %v1998, 0.5
        %v2007 = vmul.f32 %v1999, 0.5
        %v2008 = vmul.f32 %v2000, 0.5
        %v2009 = vmul.f32 %v2001, 0.5
        %v2010 = vmul.f32 %v1994, 0.70710677
        %v2011 = vmul.f32 %v1995, 0.70710677
        %v2012 = vmul.f32 %v1996, 0.70710677
        %v2013 = vmul.f32 %v1997, 0.70710677
        %v2014 = vmul.f32 %v1998, 0.70710677
        %v2015 = vmul.f32 %v1999, 0.70710677
        %v2016 = vmul.f32 %v2000, 0.70710677
        %v2017 = vmul.f32 %v2001, 0.70710677
        %v2018 = verf.f32.pop %v2010
        %v2019 = verf.f32.pop %v2011
        %v2020 = verf.f32.pop %v2012
        %v2021 = verf.f32.pop %v2013
        %v2022 = verf.f32.pop %v2014
        %v2023 = verf.f32.pop %v2015
        %v2024 = verf.f32.pop %v2016
        %v2025 = verf.f32.pop %v2017
        %v2026 = vadd.f32 %v2018, 1.0
        %v2027 = vadd.f32 %v2019, 1.0
        %v2028 = vadd.f32 %v2020, 1.0
        %v2029 = vadd.f32 %v2021, 1.0
        %v2030 = vadd.f32 %v2022, 1.0
        %v2031 = vadd.f32 %v2023, 1.0
        %v2032 = vadd.f32 %v2024, 1.0
        %v2033 = vadd.f32 %v2025, 1.0
        %v2034 = vmul.f32 %v2002, %v2026
        %v2035 = vmul.f32 %v2003, %v2027
        %v2036 = vmul.f32 %v2004, %v2028
        %v2037 = vmul.f32 %v2005, %v2029
        %v2038 = vmul.f32 %v2006, %v2030
        %v2039 = vmul.f32 %v2007, %v2031
        %v2040 = vmul.f32 %v2008, %v2032
        %v2041 = vmul.f32 %v2009, %v2033
        %2050 = vrot.lane.b32.xlu0 %v2034, 17
        %v2051 = vpop.permute.xlu0 %2050
        %2052 = vrot.lane.b32.xlu0 %v2035, 17
        %v2053 = vpop.permute.xlu0 %2052
        %2054 = vrot.lane.b32.xlu0 %v2036, 17
        %v2055 = vpop.permute.xlu0 %2054
        %2056 = vrot.lane.b32.xlu0 %v2037, 17
        %v2057 = vpop.permute.xlu0 %2056
        %2058 = vrot.lane.b32.xlu0 %v2038, 17
        %v2059 = vpop.permute.xlu0 %2058
        %2060 = vrot.lane.b32.xlu0 %v2039, 17
        %v2061 = vpop.permute.xlu0 %2060
        %2062 = vrot.lane.b32.xlu0 %v2040, 17
        %v2063 = vpop.permute.xlu0 %2062
        %2064 = vrot.lane.b32.xlu0 %v2041, 17
        %v2065 = vpop.permute.xlu0 %2064
        %v2066 = vsel %vm372, %v2051, %v2053
        %v2067 = vsel %vm372, %v2055, %v2057
        %v2068 = vsel %vm372, %v2059, %v2061
        %v2069 = vsel %vm372, %v2063, %v2065
        %v2078 = vsel %vm372, 0.0, %v2051
        %v2079 = vsel %vm372, 0.0, %v2055
        %v2080 = vsel %vm372, 0.0, %v2059
        %v2081 = vsel %vm372, 0.0, %v2063
        %v2082 = vmul.f32 %v2078, %v421
        %v2083 = vmul.f32 %v2066, %v425
        %v2084 = vmul.f32 %v2079, %v421
        %v2085 = vmul.f32 %v2067, %v425
        %v2086 = vmul.f32 %v2080, %v421
        %v2087 = vmul.f32 %v2068, %v425
        %v2088 = vmul.f32 %v2081, %v421
        %v2089 = vmul.f32 %v2069, %v425
        %v2090 = vld [vmem:[#allocation5] sm:$0xff]
        %v2091 = vld [vmem:[#allocation5 + $0x8] sm:$0xff]
        %v2092 = vld [vmem:[#allocation5 + $0x10] sm:$0xff]
        %v2093 = vld [vmem:[#allocation5 + $0x18] sm:$0xff]
        %2094 = vrot.lane.b32.xlu0 %v2034, 16
        %v2095 = vpop.permute.xlu0 %2094
        %2096 = vrot.lane.b32.xlu0 %v2035, 16
        %v2097 = vpop.permute.xlu0 %2096
        %2098 = vrot.lane.b32.xlu0 %v2036, 16
        %v2099 = vpop.permute.xlu0 %2098
        %2100 = vrot.lane.b32.xlu0 %v2037, 16
        %v2101 = vpop.permute.xlu0 %2100
        %2102 = vrot.lane.b32.xlu0 %v2038, 16
        %v2103 = vpop.permute.xlu0 %2102
        %2104 = vrot.lane.b32.xlu0 %v2039, 16
        %v2105 = vpop.permute.xlu0 %2104
        %2106 = vrot.lane.b32.xlu0 %v2040, 16
        %v2107 = vpop.permute.xlu0 %2106
        %2108 = vrot.lane.b32.xlu0 %v2041, 16
        %v2109 = vpop.permute.xlu0 %2108
        %v2110 = vsel %vm454, %v2095, %v2097
        %v2111 = vsel %vm454, %v2099, %v2101
        %v2112 = vsel %vm454, %v2103, %v2105
        %v2113 = vsel %vm454, %v2107, %v2109
        %v2122 = vsel %vm454, 0.0, %v2095
        %v2123 = vsel %vm454, 0.0, %v2099
        %v2124 = vsel %vm454, 0.0, %v2103
        %v2125 = vsel %vm454, 0.0, %v2107
        %v2126 = vmul.f32 %v2122, %v498
        %v2127 = vmul.f32 %v2110, %v502
        %v2128 = vmul.f32 %v2123, %v498
        %v2129 = vmul.f32 %v2111, %v502
        %v2130 = vmul.f32 %v2124, %v498
        %v2131 = vmul.f32 %v2112, %v502
        %v2132 = vmul.f32 %v2125, %v498
        %v2133 = vmul.f32 %v2113, %v502
        %s2134 = scalar_lea.vmem [#allocation5], 32
        %v2135 = vld [vmem:[%s2134] sm:$0xff]
        %v2136 = vld [vmem:[%s2134 + $0x8] sm:$0xff]
        %v2137 = vld [vmem:[%s2134 + $0x10] sm:$0xff]
        %v2138 = vld [vmem:[%s2134 + $0x18] sm:$0xff]
        %v2140 = vsel %vm516, %v2135, 0
        %v2143 = vsel %vm516, %v2136, 0
        %v2146 = vsel %vm516, %v2137, 0
        %v2149 = vsel %vm516, %v2138, 0
        %2151 = vmatprep.subr.mxu0 %v2127
        %2152 = vmatpush1.msra.mxu0 %v2126
        %2153 = vmatprep.subr.mxu0 %v2129
        %2154 = vmatpush1.msra.mxu0 %v2128
        %2155 = vmatprep.subr.mxu0 %v2131
        %2156 = vmatpush1.msra.mxu0 %v2130
        %2157 = vmatprep.subr.mxu0 %v2133
        %2158 = vmatpush1.msra.mxu0 %v2132
        %2159 = vmatprep.subr.mxu0 0.0
        %2160 = vmatpush1.msra.mxu0 0.0
        %2161 = vmatprep.subr.mxu0 0.0
        %2162 = vmatpush1.msra.mxu0 0.0
        %2163 = vmatprep.subr.mxu0 0.0
        %2164 = vmatpush1.msra.mxu0 0.0
        %2165 = vmatprep.subr.mxu0 0.0
        %2166 = vmatpush1.msra.mxu0 0.0
        %2167 = vmatprep.subr.mxu0 0.0
        %2168 = vmatpush1.msra.mxu0 0.0
        %2169 = vmatprep.subr.mxu0 0.0
        %2170 = vmatpush1.msra.mxu0 0.0
        %2171 = vmatprep.subr.mxu0 0.0
        %2172 = vmatpush1.msra.mxu0 0.0
        %2173 = vmatprep.subr.mxu0 0.0
        %2174 = vmatpush1.msra.mxu0 0.0
        %2175 = vmatprep.subr.mxu0 0.0
        %2176 = vmatpush1.msra.mxu0 0.0
        %2177 = vmatprep.subr.mxu0 0.0
        %2178 = vmatpush1.msra.mxu0 0.0
        %2179 = vmatprep.subr.mxu0 0.0
        %2180 = vmatpush1.msra.mxu0 0.0
        %2181 = vmatprep.subr.mxu0 0.0
        %2182 = vmatpush1.msra.mxu0 0.0
        %2183 = vmatprep.subr.mxu0 0.0
        %2184 = vmatpush1.msra.mxu0 0.0
        %2185 = vmatprep.subr.mxu0 0.0
        %2186 = vmatpush1.msra.mxu0 0.0
        %2187 = vmatprep.subr.mxu0 0.0
        %2188 = vmatpush1.msra.mxu0 0.0
        %2189 = vmatprep.subr.mxu0 0.0
        %2190 = vmatpush1.msra.mxu0 0.0
        %2191 = vmatprep.subr.mxu0 0.0
        %2192 = vmatpush1.msra.mxu0 0.0
        %2193 = vmatprep.subr.mxu0 0.0
        %2194 = vmatpush1.msra.mxu0 0.0
        %2195 = vmatprep.subr.mxu0 0.0
        %2196 = vmatpush1.msra.mxu0 0.0
        %2197 = vmatprep.subr.mxu0 0.0
        %2198 = vmatpush1.msra.mxu0 0.0
        %2199 = vmatprep.subr.mxu0 0.0
        %2200 = vmatpush1.msra.mxu0 0.0
        %2201 = vmatprep.subr.mxu0 0.0
        %2202 = vmatpush1.msra.mxu0 0.0
        %2203 = vmatprep.subr.mxu0 0.0
        %2204 = vmatpush1.msra.mxu0 0.0
        %2205 = vmatprep.subr.mxu0 0.0
        %2206 = vmatpush1.msra.mxu0 0.0
        %2207 = vmatprep.subr.mxu0 0.0
        %2208 = vmatpush1.msra.mxu0 0.0
        %2209 = vmatprep.subr.mxu0 0.0
        %2210 = vmatpush1.msra.mxu0 0.0
        %2211 = vmatprep.subr.mxu0 0.0
        %2212 = vmatpush1.msra.mxu0 0.0
        %2213 = vmatprep.subr.mxu0 0.0
        %2214 = vmatpush1.msra.mxu0 0.0
        %2215 = vmatprep.mubr.f32.mxu0 0.0
        %2216 = vmatmul.mubr.f32.gmra.mrb[0].mxu0 %v2140
        %v2217 = vpop.f32.mrb[0].mxu0
        %v2218 = vadd.f32 0.0, %v2217
        %v2219 = vpop.f32.mrb[0].mxu0
        %v2220 = vadd.f32 0.0, %v2219
        %2221 = vmatprep.mubr.f32.mxu0 0.0
        %2222 = vmatmul.mubr.f32.gmra.mrb[0].mxu0 %v2143
        %v2223 = vpop.f32.mrb[0].mxu0
        %v2224 = vadd.f32 0.0, %v2223
        %v2225 = vpop.f32.mrb[0].mxu0
        %v2226 = vadd.f32 0.0, %v2225
        %2227 = vmatprep.mubr.f32.mxu0 0.0
        %2228 = vmatmul.mubr.f32.gmra.mrb[0].mxu0 %v2146
        %v2229 = vpop.f32.mrb[0].mxu0
        %v2230 = vadd.f32 0.0, %v2229
        %v2231 = vpop.f32.mrb[0].mxu0
        %v2232 = vadd.f32 0.0, %v2231
        %2233 = vmatprep.mubr.f32.mxu0 0.0
        %2234 = vmatmul.mubr.f32.gmra.mrb[0].mxu0 %v2149
        %v2235 = vpop.f32.mrb[0].mxu0
        %v2236 = vadd.f32 0.0, %v2235
        %v2237 = vpop.f32.mrb[0].mxu0
        %v2238 = vadd.f32 0.0, %v2237
        %2239 = vdwg.mxu0
        %v2241 = vsel %vm516, %v2090, 0
        %v2244 = vsel %vm516, %v2091, 0
        %v2247 = vsel %vm516, %v2092, 0
        %v2250 = vsel %vm516, %v2093, 0
        %2252 = vmatprep.subr.mxu0 %v2083
        %2253 = vmatpush1.msra.mxu0 %v2082
        %2254 = vmatprep.subr.mxu0 %v2085
        %2255 = vmatpush1.msra.mxu0 %v2084
        %2256 = vmatprep.subr.mxu0 %v2087
        %2257 = vmatpush1.msra.mxu0 %v2086
        %2258 = vmatprep.subr.mxu0 %v2089
        %2259 = vmatpush1.msra.mxu0 %v2088
        %2260 = vmatprep.subr.mxu0 0.0
        %2261 = vmatpush1.msra.mxu0 0.0
        %2262 = vmatprep.subr.mxu0 0.0
        %2263 = vmatpush1.msra.mxu0 0.0
        %2264 = vmatprep.subr.mxu0 0.0
        %2265 = vmatpush1.msra.mxu0 0.0
        %2266 = vmatprep.subr.mxu0 0.0
        %2267 = vmatpush1.msra.mxu0 0.0
        %2268 = vmatprep.subr.mxu0 0.0
        %2269 = vmatpush1.msra.mxu0 0.0
        %2270 = vmatprep.subr.mxu0 0.0
        %2271 = vmatpush1.msra.mxu0 0.0
        %2272 = vmatprep.subr.mxu0 0.0
        %2273 = vmatpush1.msra.mxu0 0.0
        %2274 = vmatprep.subr.mxu0 0.0
        %2275 = vmatpush1.msra.mxu0 0.0
        %2276 = vmatprep.subr.mxu0 0.0
        %2277 = vmatpush1.msra.mxu0 0.0
        %2278 = vmatprep.subr.mxu0 0.0
        %2279 = vmatpush1.msra.mxu0 0.0
        %2280 = vmatprep.subr.mxu0 0.0
        %2281 = vmatpush1.msra.mxu0 0.0
        %2282 = vmatprep.subr.mxu0 0.0
        %2283 = vmatpush1.msra.mxu0 0.0
        %2284 = vmatprep.subr.mxu0 0.0
        %2285 = vmatpush1.msra.mxu0 0.0
        %2286 = vmatprep.subr.mxu0 0.0
        %2287 = vmatpush1.msra.mxu0 0.0
        %2288 = vmatprep.subr.mxu0 0.0
        %2289 = vmatpush1.msra.mxu0 0.0
        %2290 = vmatprep.subr.mxu0 0.0
        %2291 = vmatpush1.msra.mxu0 0.0
        %2292 = vmatprep.subr.mxu0 0.0
        %2293 = vmatpush1.msra.mxu0 0.0
        %2294 = vmatprep.subr.mxu0 0.0
        %2295 = vmatpush1.msra.mxu0 0.0
        %2296 = vmatprep.subr.mxu0 0.0
        %2297 = vmatpush1.msra.mxu0 0.0
        %2298 = vmatprep.subr.mxu0 0.0
        %2299 = vmatpush1.msra.mxu0 0.0
        %2300 = vmatprep.subr.mxu0 0.0
        %2301 = vmatpush1.msra.mxu0 0.0
        %2302 = vmatprep.subr.mxu0 0.0
        %2303 = vmatpush1.msra.mxu0 0.0
        %2304 = vmatprep.subr.mxu0 0.0
        %2305 = vmatpush1.msra.mxu0 0.0
        %2306 = vmatprep.subr.mxu0 0.0
        %2307 = vmatpush1.msra.mxu0 0.0
        %2308 = vmatprep.subr.mxu0 0.0
        %2309 = vmatpush1.msra.mxu0 0.0
        %2310 = vmatprep.subr.mxu0 0.0
        %2311 = vmatpush1.msra.mxu0 0.0
        %2312 = vmatprep.subr.mxu0 0.0
        %2313 = vmatpush1.msra.mxu0 0.0
        %2314 = vmatprep.subr.mxu0 0.0
        %2315 = vmatpush1.msra.mxu0 0.0
        %2316 = vmatprep.mubr.f32.mxu0 0.0
        %2317 = vmatmul.mubr.f32.gmra.mrb[0].mxu0 %v2241
        %v2318 = vpop.f32.mrb[0].mxu0
        %v2319 = vadd.f32 %v2218, %v2318
        %v2320 = vpop.f32.mrb[0].mxu0
        %v2321 = vadd.f32 %v2220, %v2320
        %2322 = vmatprep.mubr.f32.mxu0 0.0
        %2323 = vmatmul.mubr.f32.gmra.mrb[0].mxu0 %v2244
        %v2324 = vpop.f32.mrb[0].mxu0
        %v2325 = vadd.f32 %v2224, %v2324
        %v2326 = vpop.f32.mrb[0].mxu0
        %v2327 = vadd.f32 %v2226, %v2326
        %2328 = vmatprep.mubr.f32.mxu0 0.0
        %2329 = vmatmul.mubr.f32.gmra.mrb[0].mxu0 %v2247
        %v2330 = vpop.f32.mrb[0].mxu0
        %v2331 = vadd.f32 %v2230, %v2330
        %v2332 = vpop.f32.mrb[0].mxu0
        %v2333 = vadd.f32 %v2232, %v2332
        %2334 = vmatprep.mubr.f32.mxu0 0.0
        %2335 = vmatmul.mubr.f32.gmra.mrb[0].mxu0 %v2250
        %v2336 = vpop.f32.mrb[0].mxu0
        %v2337 = vadd.f32 %v2236, %v2336
        %v2338 = vpop.f32.mrb[0].mxu0
        %v2339 = vadd.f32 %v2238, %v2338
        %2340 = vdwg.mxu0
        %2341 = vrot.lane.b32.xlu0 %v2034, 15
        %v2342 = vpop.permute.xlu0 %2341
        %2343 = vrot.lane.b32.xlu0 %v2035, 15
        %v2344 = vpop.permute.xlu0 %2343
        %2345 = vrot.lane.b32.xlu0 %v2036, 15
        %v2346 = vpop.permute.xlu0 %2345
        %2347 = vrot.lane.b32.xlu0 %v2037, 15
        %v2348 = vpop.permute.xlu0 %2347
        %2349 = vrot.lane.b32.xlu0 %v2038, 15
        %v2350 = vpop.permute.xlu0 %2349
        %2351 = vrot.lane.b32.xlu0 %v2039, 15
        %v2352 = vpop.permute.xlu0 %2351
        %2353 = vrot.lane.b32.xlu0 %v2040, 15
        %v2354 = vpop.permute.xlu0 %2353
        %2355 = vrot.lane.b32.xlu0 %v2041, 15
        %v2356 = vpop.permute.xlu0 %2355
        %v2357 = vsel %vm735, %v2342, %v2344
        %v2358 = vsel %vm735, %v2346, %v2348
        %v2359 = vsel %vm735, %v2350, %v2352
        %v2360 = vsel %vm735, %v2354, %v2356
        %v2369 = vsel %vm735, 0.0, %v2342
        %v2370 = vsel %vm735, 0.0, %v2346
        %v2371 = vsel %vm735, 0.0, %v2350
        %v2372 = vsel %vm735, 0.0, %v2354
        %v2373 = vmul.f32 %v2369, %v779
        %v2374 = vmul.f32 %v2357, %v783
        %v2375 = vmul.f32 %v2370, %v779
        %v2376 = vmul.f32 %v2358, %v783
        %v2377 = vmul.f32 %v2371, %v779
        %v2378 = vmul.f32 %v2359, %v783
        %v2379 = vmul.f32 %v2372, %v779
        %v2380 = vmul.f32 %v2360, %v783
        %s2381 = scalar_lea.vmem [#allocation5], 64
        %v2382 = vld [vmem:[%s2381] sm:$0xff]
        %v2383 = vld [vmem:[%s2381 + $0x8] sm:$0xff]
        %v2384 = vld [vmem:[%s2381 + $0x10] sm:$0xff]
        %v2385 = vld [vmem:[%s2381 + $0x18] sm:$0xff]
        %v2387 = vsel %vm516, %v2382, 0
        %v2390 = vsel %vm516, %v2383, 0
        %v2393 = vsel %vm516, %v2384, 0
        %v2396 = vsel %vm516, %v2385, 0
        %2398 = vmatprep.subr.mxu0 %v2374
        %2399 = vmatpush1.msra.mxu0 %v2373
        %2400 = vmatprep.subr.mxu0 %v2376
        %2401 = vmatpush1.msra.mxu0 %v2375
        %2402 = vmatprep.subr.mxu0 %v2378
        %2403 = vmatpush1.msra.mxu0 %v2377
        %2404 = vmatprep.subr.mxu0 %v2380
        %2405 = vmatpush1.msra.mxu0 %v2379
        %2406 = vmatprep.subr.mxu0 0.0
        %2407 = vmatpush1.msra.mxu0 0.0
        %2408 = vmatprep.subr.mxu0 0.0
        %2409 = vmatpush1.msra.mxu0 0.0
        %2410 = vmatprep.subr.mxu0 0.0
        %2411 = vmatpush1.msra.mxu0 0.0
        %2412 = vmatprep.subr.mxu0 0.0
        %2413 = vmatpush1.msra.mxu0 0.0
        %2414 = vmatprep.subr.mxu0 0.0
        %2415 = vmatpush1.msra.mxu0 0.0
        %2416 = vmatprep.subr.mxu0 0.0
        %2417 = vmatpush1.msra.mxu0 0.0
        %2418 = vmatprep.subr.mxu0 0.0
        %2419 = vmatpush1.msra.mxu0 0.0
        %2420 = vmatprep.subr.mxu0 0.0
        %2421 = vmatpush1.msra.mxu0 0.0
        %2422 = vmatprep.subr.mxu0 0.0
        %2423 = vmatpush1.msra.mxu0 0.0
        %2424 = vmatprep.subr.mxu0 0.0
        %2425 = vmatpush1.msra.mxu0 0.0
        %2426 = vmatprep.subr.mxu0 0.0
        %2427 = vmatpush1.msra.mxu0 0.0
        %2428 = vmatprep.subr.mxu0 0.0
        %2429 = vmatpush1.msra.mxu0 0.0
        %2430 = vmatprep.subr.mxu0 0.0
        %2431 = vmatpush1.msra.mxu0 0.0
        %2432 = vmatprep.subr.mxu0 0.0
        %2433 = vmatpush1.msra.mxu0 0.0
        %2434 = vmatprep.subr.mxu0 0.0
        %2435 = vmatpush1.msra.mxu0 0.0
        %2436 = vmatprep.subr.mxu0 0.0
        %2437 = vmatpush1.msra.mxu0 0.0
        %2438 = vmatprep.subr.mxu0 0.0
        %2439 = vmatpush1.msra.mxu0 0.0
        %2440 = vmatprep.subr.mxu0 0.0
        %2441 = vmatpush1.msra.mxu0 0.0
        %2442 = vmatprep.subr.mxu0 0.0
        %2443 = vmatpush1.msra.mxu0 0.0
        %2444 = vmatprep.subr.mxu0 0.0
        %2445 = vmatpush1.msra.mxu0 0.0
        %2446 = vmatprep.subr.mxu0 0.0
        %2447 = vmatpush1.msra.mxu0 0.0
        %2448 = vmatprep.subr.mxu0 0.0
        %2449 = vmatpush1.msra.mxu0 0.0
        %2450 = vmatprep.subr.mxu0 0.0
        %2451 = vmatpush1.msra.mxu0 0.0
        %2452 = vmatprep.subr.mxu0 0.0
        %2453 = vmatpush1.msra.mxu0 0.0
        %2454 = vmatprep.subr.mxu0 0.0
        %2455 = vmatpush1.msra.mxu0 0.0
        %2456 = vmatprep.subr.mxu0 0.0
        %2457 = vmatpush1.msra.mxu0 0.0
        %2458 = vmatprep.subr.mxu0 0.0
        %2459 = vmatpush1.msra.mxu0 0.0
        %2460 = vmatprep.subr.mxu0 0.0
        %2461 = vmatpush1.msra.mxu0 0.0
        %2462 = vmatprep.mubr.f32.mxu0 0.0
        %2463 = vmatmul.mubr.f32.gmra.mrb[0].mxu0 %v2387
        %v2464 = vpop.f32.mrb[0].mxu0
        %v2465 = vadd.f32 0.0, %v2464
        %v2466 = vpop.f32.mrb[0].mxu0
        %v2467 = vadd.f32 0.0, %v2466
        %2468 = vmatprep.mubr.f32.mxu0 0.0
        %2469 = vmatmul.mubr.f32.gmra.mrb[0].mxu0 %v2390
        %v2470 = vpop.f32.mrb[0].mxu0
        %v2471 = vadd.f32 0.0, %v2470
        %v2472 = vpop.f32.mrb[0].mxu0
        %v2473 = vadd.f32 0.0, %v2472
        %2474 = vmatprep.mubr.f32.mxu0 0.0
        %2475 = vmatmul.mubr.f32.gmra.mrb[0].mxu0 %v2393
        %v2476 = vpop.f32.mrb[0].mxu0
        %v2477 = vadd.f32 0.0, %v2476
        %v2478 = vpop.f32.mrb[0].mxu0
        %v2479 = vadd.f32 0.0, %v2478
        %2480 = vmatprep.mubr.f32.mxu0 0.0
        %2481 = vmatmul.mubr.f32.gmra.mrb[0].mxu0 %v2396
        %v2482 = vpop.f32.mrb[0].mxu0
        %v2483 = vadd.f32 0.0, %v2482
        %v2484 = vpop.f32.mrb[0].mxu0
        %v2485 = vadd.f32 0.0, %v2484
        %2486 = vdwg.mxu0
        %v2487 = vadd.f32 %v2319, %v2465
        %v2488 = vadd.f32 %v2321, %v2467
        %v2489 = vadd.f32 %v2325, %v2471
        %v2490 = vadd.f32 %v2327, %v2473
        %v2491 = vadd.f32 %v2331, %v2477
        %v2492 = vadd.f32 %v2333, %v2479
        %v2493 = vadd.f32 %v2337, %v2483
        %v2494 = vadd.f32 %v2339, %v2485
        %2495 = vrot.lane.b32.xlu0 %v2034, 1
        %v2496 = vpop.permute.xlu0 %2495
        %2497 = vrot.lane.b32.xlu0 %v2035, 1
        %v2498 = vpop.permute.xlu0 %2497
        %2499 = vrot.lane.b32.xlu0 %v2036, 1
        %v2500 = vpop.permute.xlu0 %2499
        %2501 = vrot.lane.b32.xlu0 %v2037, 1
        %v2502 = vpop.permute.xlu0 %2501
        %2503 = vrot.lane.b32.xlu0 %v2038, 1
        %v2504 = vpop.permute.xlu0 %2503
        %2505 = vrot.lane.b32.xlu0 %v2039, 1
        %v2506 = vpop.permute.xlu0 %2505
        %2507 = vrot.lane.b32.xlu0 %v2040, 1
        %v2508 = vpop.permute.xlu0 %2507
        %2509 = vrot.lane.b32.xlu0 %v2041, 1
        %v2510 = vpop.permute.xlu0 %2509
        %v2511 = vsel %vm922, %v2496, %v2498
        %v2512 = vsel %vm922, %v2500, %v2502
        %v2513 = vsel %vm922, %v2504, %v2506
        %v2514 = vsel %vm922, %v2508, %v2510
        %v2523 = vsel %vm922, 0.0, %v2496
        %v2524 = vsel %vm922, 0.0, %v2500
        %v2525 = vsel %vm922, 0.0, %v2504
        %v2526 = vsel %vm922, 0.0, %v2508
        %v2527 = vmul.f32 %v2523, %v957
        %v2528 = vmul.f32 %v2511, %v961
        %v2529 = vmul.f32 %v2524, %v957
        %v2530 = vmul.f32 %v2512, %v961
        %v2531 = vmul.f32 %v2525, %v957
        %v2532 = vmul.f32 %v2513, %v961
        %v2533 = vmul.f32 %v2526, %v957
        %v2534 = vmul.f32 %v2514, %v961
        %s2535 = scalar_lea.vmem [#allocation5], 96
        %v2536 = vld [vmem:[%s2535] sm:$0xff]
        %v2537 = vld [vmem:[%s2535 + $0x8] sm:$0xff]
        %v2538 = vld [vmem:[%s2535 + $0x10] sm:$0xff]
        %v2539 = vld [vmem:[%s2535 + $0x18] sm:$0xff]
        %v2541 = vsel %vm516, %v2536, 0
        %v2544 = vsel %vm516, %v2537, 0
        %v2547 = vsel %vm516, %v2538, 0
        %v2550 = vsel %vm516, %v2539, 0
        %2552 = vmatprep.subr.mxu0 %v2528
        %2553 = vmatpush1.msra.mxu0 %v2527
        %2554 = vmatprep.subr.mxu0 %v2530
        %2555 = vmatpush1.msra.mxu0 %v2529
        %2556 = vmatprep.subr.mxu0 %v2532
        %2557 = vmatpush1.msra.mxu0 %v2531
        %2558 = vmatprep.subr.mxu0 %v2534
        %2559 = vmatpush1.msra.mxu0 %v2533
        %2560 = vmatprep.subr.mxu0 0.0
        %2561 = vmatpush1.msra.mxu0 0.0
        %2562 = vmatprep.subr.mxu0 0.0
        %2563 = vmatpush1.msra.mxu0 0.0
        %2564 = vmatprep.subr.mxu0 0.0
        %2565 = vmatpush1.msra.mxu0 0.0
        %2566 = vmatprep.subr.mxu0 0.0
        %2567 = vmatpush1.msra.mxu0 0.0
        %2568 = vmatprep.subr.mxu0 0.0
        %2569 = vmatpush1.msra.mxu0 0.0
        %2570 = vmatprep.subr.mxu0 0.0
        %2571 = vmatpush1.msra.mxu0 0.0
        %2572 = vmatprep.subr.mxu0 0.0
        %2573 = vmatpush1.msra.mxu0 0.0
        %2574 = vmatprep.subr.mxu0 0.0
        %2575 = vmatpush1.msra.mxu0 0.0
        %2576 = vmatprep.subr.mxu0 0.0
        %2577 = vmatpush1.msra.mxu0 0.0
        %2578 = vmatprep.subr.mxu0 0.0
        %2579 = vmatpush1.msra.mxu0 0.0
        %2580 = vmatprep.subr.mxu0 0.0
        %2581 = vmatpush1.msra.mxu0 0.0
        %2582 = vmatprep.subr.mxu0 0.0
        %2583 = vmatpush1.msra.mxu0 0.0
        %2584 = vmatprep.subr.mxu0 0.0
        %2585 = vmatpush1.msra.mxu0 0.0
        %2586 = vmatprep.subr.mxu0 0.0
        %2587 = vmatpush1.msra.mxu0 0.0
        %2588 = vmatprep.subr.mxu0 0.0
        %2589 = vmatpush1.msra.mxu0 0.0
        %2590 = vmatprep.subr.mxu0 0.0
        %2591 = vmatpush1.msra.mxu0 0.0
        %2592 = vmatprep.subr.mxu0 0.0
        %2593 = vmatpush1.msra.mxu0 0.0
        %2594 = vmatprep.subr.mxu0 0.0
        %2595 = vmatpush1.msra.mxu0 0.0
        %2596 = vmatprep.subr.mxu0 0.0
        %2597 = vmatpush1.msra.mxu0 0.0
        %2598 = vmatprep.subr.mxu0 0.0
        %2599 = vmatpush1.msra.mxu0 0.0
        %2600 = vmatprep.subr.mxu0 0.0
        %2601 = vmatpush1.msra.mxu0 0.0
        %2602 = vmatprep.subr.mxu0 0.0
        %2603 = vmatpush1.msra.mxu0 0.0
        %2604 = vmatprep.subr.mxu0 0.0
        %2605 = vmatpush1.msra.mxu0 0.0
        %2606 = vmatprep.subr.mxu0 0.0
        %2607 = vmatpush1.msra.mxu0 0.0
        %2608 = vmatprep.subr.mxu0 0.0
        %2609 = vmatpush1.msra.mxu0 0.0
        %2610 = vmatprep.subr.mxu0 0.0
        %2611 = vmatpush1.msra.mxu0 0.0
        %2612 = vmatprep.subr.mxu0 0.0
        %2613 = vmatpush1.msra.mxu0 0.0
        %2614 = vmatprep.subr.mxu0 0.0
        %2615 = vmatpush1.msra.mxu0 0.0
        %2616 = vmatprep.mubr.f32.mxu0 0.0
        %2617 = vmatmul.mubr.f32.gmra.mrb[0].mxu0 %v2541
        %v2618 = vpop.f32.mrb[0].mxu0
        %v2619 = vadd.f32 0.0, %v2618
        %v2620 = vpop.f32.mrb[0].mxu0
        %v2621 = vadd.f32 0.0, %v2620
        %2622 = vmatprep.mubr.f32.mxu0 0.0
        %2623 = vmatmul.mubr.f32.gmra.mrb[0].mxu0 %v2544
        %v2624 = vpop.f32.mrb[0].mxu0
        %v2625 = vadd.f32 0.0, %v2624
        %v2626 = vpop.f32.mrb[0].mxu0
        %v2627 = vadd.f32 0.0, %v2626
        %2628 = vmatprep.mubr.f32.mxu0 0.0
        %2629 = vmatmul.mubr.f32.gmra.mrb[0].mxu0 %v2547
        %v2630 = vpop.f32.mrb[0].mxu0
        %v2631 = vadd.f32 0.0, %v2630
        %v2632 = vpop.f32.mrb[0].mxu0
        %v2633 = vadd.f32 0.0, %v2632
        %2634 = vmatprep.mubr.f32.mxu0 0.0
        %2635 = vmatmul.mubr.f32.gmra.mrb[0].mxu0 %v2550
        %v2636 = vpop.f32.mrb[0].mxu0
        %v2637 = vadd.f32 0.0, %v2636
        %v2638 = vpop.f32.mrb[0].mxu0
        %v2639 = vadd.f32 0.0, %v2638
        %2640 = vdwg.mxu0
        %v2641 = vadd.f32 %v2487, %v2619
        %v2642 = vadd.f32 %v2488, %v2621
        %v2643 = vadd.f32 %v2489, %v2625
        %v2644 = vadd.f32 %v2490, %v2627
        %v2645 = vadd.f32 %v2491, %v2631
        %v2646 = vadd.f32 %v2492, %v2633
        %v2647 = vadd.f32 %v2493, %v2637
        %v2648 = vadd.f32 %v2494, %v2639
        %v2649 = vmul.f32 %v2034, %v1101
        %v2650 = vmul.f32 %v2035, %v1105
        %v2651 = vmul.f32 %v2036, %v1101
        %v2652 = vmul.f32 %v2037, %v1105
        %v2653 = vmul.f32 %v2038, %v1101
        %v2654 = vmul.f32 %v2039, %v1105
        %v2655 = vmul.f32 %v2040, %v1101
        %v2656 = vmul.f32 %v2041, %v1105
        %s2657 = scalar_lea.vmem [#allocation5], 128
        %v2658 = vld [vmem:[%s2657] sm:$0xff]
        %v2659 = vld [vmem:[%s2657 + $0x8] sm:$0xff]
        %v2660 = vld [vmem:[%s2657 + $0x10] sm:$0xff]
        %v2661 = vld [vmem:[%s2657 + $0x18] sm:$0xff]
        %v2663 = vsel %vm516, %v2658, 0
        %v2666 = vsel %vm516, %v2659, 0
        %v2669 = vsel %vm516, %v2660, 0
        %v2672 = vsel %vm516, %v2661, 0
        %2674 = vmatprep.subr.mxu0 %v2650
        %2675 = vmatpush1.msra.mxu0 %v2649
        %2676 = vmatprep.subr.mxu0 %v2652
        %2677 = vmatpush1.msra.mxu0 %v2651
        %2678 = vmatprep.subr.mxu0 %v2654
        %2679 = vmatpush1.msra.mxu0 %v2653
        %2680 = vmatprep.subr.mxu0 %v2656
        %2681 = vmatpush1.msra.mxu0 %v2655
        %2682 = vmatprep.subr.mxu0 0.0
        %2683 = vmatpush1.msra.mxu0 0.0
        %2684 = vmatprep.subr.mxu0 0.0
        %2685 = vmatpush1.msra.mxu0 0.0
        %2686 = vmatprep.subr.mxu0 0.0
        %2687 = vmatpush1.msra.mxu0 0.0
        %2688 = vmatprep.subr.mxu0 0.0
        %2689 = vmatpush1.msra.mxu0 0.0
        %2690 = vmatprep.subr.mxu0 0.0
        %2691 = vmatpush1.msra.mxu0 0.0
        %2692 = vmatprep.subr.mxu0 0.0
        %2693 = vmatpush1.msra.mxu0 0.0
        %2694 = vmatprep.subr.mxu0 0.0
        %2695 = vmatpush1.msra.mxu0 0.0
        %2696 = vmatprep.subr.mxu0 0.0
        %2697 = vmatpush1.msra.mxu0 0.0
        %2698 = vmatprep.subr.mxu0 0.0
        %2699 = vmatpush1.msra.mxu0 0.0
        %2700 = vmatprep.subr.mxu0 0.0
        %2701 = vmatpush1.msra.mxu0 0.0
        %2702 = vmatprep.subr.mxu0 0.0
        %2703 = vmatpush1.msra.mxu0 0.0
        %2704 = vmatprep.subr.mxu0 0.0
        %2705 = vmatpush1.msra.mxu0 0.0
        %2706 = vmatprep.subr.mxu0 0.0
        %2707 = vmatpush1.msra.mxu0 0.0
        %2708 = vmatprep.subr.mxu0 0.0
        %2709 = vmatpush1.msra.mxu0 0.0
        %2710 = vmatprep.subr.mxu0 0.0
        %2711 = vmatpush1.msra.mxu0 0.0
        %2712 = vmatprep.subr.mxu0 0.0
        %2713 = vmatpush1.msra.mxu0 0.0
        %2714 = vmatprep.subr.mxu0 0.0
        %2715 = vmatpush1.msra.mxu0 0.0
        %2716 = vmatprep.subr.mxu0 0.0
        %2717 = vmatpush1.msra.mxu0 0.0
        %2718 = vmatprep.subr.mxu0 0.0
        %2719 = vmatpush1.msra.mxu0 0.0
        %2720 = vmatprep.subr.mxu0 0.0
        %2721 = vmatpush1.msra.mxu0 0.0
        %2722 = vmatprep.subr.mxu0 0.0
        %2723 = vmatpush1.msra.mxu0 0.0
        %2724 = vmatprep.subr.mxu0 0.0
        %2725 = vmatpush1.msra.mxu0 0.0
        %2726 = vmatprep.subr.mxu0 0.0
        %2727 = vmatpush1.msra.mxu0 0.0
        %2728 = vmatprep.subr.mxu0 0.0
        %2729 = vmatpush1.msra.mxu0 0.0
        %2730 = vmatprep.subr.mxu0 0.0
        %2731 = vmatpush1.msra.mxu0 0.0
        %2732 = vmatprep.subr.mxu0 0.0
        %2733 = vmatpush1.msra.mxu0 0.0
        %2734 = vmatprep.subr.mxu0 0.0
        %2735 = vmatpush1.msra.mxu0 0.0
        %2736 = vmatprep.subr.mxu0 0.0
        %2737 = vmatpush1.msra.mxu0 0.0
        %2738 = vmatprep.mubr.f32.mxu0 0.0
        %2739 = vmatmul.mubr.f32.gmra.mrb[0].mxu0 %v2663
        %v2740 = vpop.f32.mrb[0].mxu0
        %v2741 = vadd.f32 0.0, %v2740
        %v2742 = vpop.f32.mrb[0].mxu0
        %v2743 = vadd.f32 0.0, %v2742
        %2744 = vmatprep.mubr.f32.mxu0 0.0
        %2745 = vmatmul.mubr.f32.gmra.mrb[0].mxu0 %v2666
        %v2746 = vpop.f32.mrb[0].mxu0
        %v2747 = vadd.f32 0.0, %v2746
        %v2748 = vpop.f32.mrb[0].mxu0
        %v2749 = vadd.f32 0.0, %v2748
        %2750 = vmatprep.mubr.f32.mxu0 0.0
        %2751 = vmatmul.mubr.f32.gmra.mrb[0].mxu0 %v2669
        %v2752 = vpop.f32.mrb[0].mxu0
        %v2753 = vadd.f32 0.0, %v2752
        %v2754 = vpop.f32.mrb[0].mxu0
        %v2755 = vadd.f32 0.0, %v2754
        %2756 = vmatprep.mubr.f32.mxu0 0.0
        %2757 = vmatmul.mubr.f32.gmra.mrb[0].mxu0 %v2672
        %v2758 = vpop.f32.mrb[0].mxu0
        %v2759 = vadd.f32 0.0, %v2758
        %v2760 = vpop.f32.mrb[0].mxu0
        %v2761 = vadd.f32 0.0, %v2760
        %2762 = vdwg.mxu0
        %v2763 = vadd.f32 %v2641, %v2741
        %v2764 = vadd.f32 %v2642, %v2743
        %v2765 = vadd.f32 %v2643, %v2747
        %v2766 = vadd.f32 %v2644, %v2749
        %v2767 = vadd.f32 %v2645, %v2753
        %v2768 = vadd.f32 %v2646, %v2755
        %v2769 = vadd.f32 %v2647, %v2759
        %v2770 = vadd.f32 %v2648, %v2761
        %2771 = vrot.lane.b32.xlu0 %v2034, 127
        %v2772 = vpop.permute.xlu0 %2771
        %2773 = vrot.lane.b32.xlu0 %v2035, 127
        %v2774 = vpop.permute.xlu0 %2773
        %2775 = vrot.lane.b32.xlu0 %v2036, 127
        %v2776 = vpop.permute.xlu0 %2775
        %2777 = vrot.lane.b32.xlu0 %v2037, 127
        %v2778 = vpop.permute.xlu0 %2777
        %2779 = vrot.lane.b32.xlu0 %v2038, 127
        %v2780 = vpop.permute.xlu0 %2779
        %2781 = vrot.lane.b32.xlu0 %v2039, 127
        %v2782 = vpop.permute.xlu0 %2781
        %2783 = vrot.lane.b32.xlu0 %v2040, 127
        %v2784 = vpop.permute.xlu0 %2783
        %2785 = vrot.lane.b32.xlu0 %v2041, 127
        %v2786 = vpop.permute.xlu0 %2785
        %v2787 = vsel %vm1244, %v2772, %v2774
        %v2788 = vsel %vm1244, %v2776, %v2778
        %v2789 = vsel %vm1244, %v2780, %v2782
        %v2790 = vsel %vm1244, %v2784, %v2786
        %v2799 = vsel %vm1244, %v2774, 0.0
        %v2800 = vsel %vm1244, %v2778, 0.0
        %v2801 = vsel %vm1244, %v2782, 0.0
        %v2802 = vsel %vm1244, %v2786, 0.0
        %v2803 = vmul.f32 %v2787, %v1278
        %v2804 = vmul.f32 %v2799, %v1282
        %v2805 = vmul.f32 %v2788, %v1278
        %v2806 = vmul.f32 %v2800, %v1282
        %v2807 = vmul.f32 %v2789, %v1278
        %v2808 = vmul.f32 %v2801, %v1282
        %v2809 = vmul.f32 %v2790, %v1278
        %v2810 = vmul.f32 %v2802, %v1282
        %s2811 = scalar_lea.vmem [#allocation5], 160
        %v2812 = vld [vmem:[%s2811] sm:$0xff]
        %v2813 = vld [vmem:[%s2811 + $0x8] sm:$0xff]
        %v2814 = vld [vmem:[%s2811 + $0x10] sm:$0xff]
        %v2815 = vld [vmem:[%s2811 + $0x18] sm:$0xff]
        %v2817 = vsel %vm516, %v2812, 0
        %v2820 = vsel %vm516, %v2813, 0
        %v2823 = vsel %vm516, %v2814, 0
        %v2826 = vsel %vm516, %v2815, 0
        %2828 = vmatprep.subr.mxu0 %v2804
        %2829 = vmatpush1.msra.mxu0 %v2803
        %2830 = vmatprep.subr.mxu0 %v2806
        %2831 = vmatpush1.msra.mxu0 %v2805
        %2832 = vmatprep.subr.mxu0 %v2808
        %2833 = vmatpush1.msra.mxu0 %v2807
        %2834 = vmatprep.subr.mxu0 %v2810
        %2835 = vmatpush1.msra.mxu0 %v2809
        %2836 = vmatprep.subr.mxu0 0.0
        %2837 = vmatpush1.msra.mxu0 0.0
        %2838 = vmatprep.subr.mxu0 0.0
        %2839 = vmatpush1.msra.mxu0 0.0
        %2840 = vmatprep.subr.mxu0 0.0
        %2841 = vmatpush1.msra.mxu0 0.0
        %2842 = vmatprep.subr.mxu0 0.0
        %2843 = vmatpush1.msra.mxu0 0.0
        %2844 = vmatprep.subr.mxu0 0.0
        %2845 = vmatpush1.msra.mxu0 0.0
        %2846 = vmatprep.subr.mxu0 0.0
        %2847 = vmatpush1.msra.mxu0 0.0
        %2848 = vmatprep.subr.mxu0 0.0
        %2849 = vmatpush1.msra.mxu0 0.0
        %2850 = vmatprep.subr.mxu0 0.0
        %2851 = vmatpush1.msra.mxu0 0.0
        %2852 = vmatprep.subr.mxu0 0.0
        %2853 = vmatpush1.msra.mxu0 0.0
        %2854 = vmatprep.subr.mxu0 0.0
        %2855 = vmatpush1.msra.mxu0 0.0
        %2856 = vmatprep.subr.mxu0 0.0
        %2857 = vmatpush1.msra.mxu0 0.0
        %2858 = vmatprep.subr.mxu0 0.0
        %2859 = vmatpush1.msra.mxu0 0.0
        %2860 = vmatprep.subr.mxu0 0.0
        %2861 = vmatpush1.msra.mxu0 0.0
        %2862 = vmatprep.subr.mxu0 0.0
        %2863 = vmatpush1.msra.mxu0 0.0
        %2864 = vmatprep.subr.mxu0 0.0
        %2865 = vmatpush1.msra.mxu0 0.0
        %2866 = vmatprep.subr.mxu0 0.0
        %2867 = vmatpush1.msra.mxu0 0.0
        %2868 = vmatprep.subr.mxu0 0.0
        %2869 = vmatpush1.msra.mxu0 0.0
        %2870 = vmatprep.subr.mxu0 0.0
        %2871 = vmatpush1.msra.mxu0 0.0
        %2872 = vmatprep.subr.mxu0 0.0
        %2873 = vmatpush1.msra.mxu0 0.0
        %2874 = vmatprep.subr.mxu0 0.0
        %2875 = vmatpush1.msra.mxu0 0.0
        %2876 = vmatprep.subr.mxu0 0.0
        %2877 = vmatpush1.msra.mxu0 0.0
        %2878 = vmatprep.subr.mxu0 0.0
        %2879 = vmatpush1.msra.mxu0 0.0
        %2880 = vmatprep.subr.mxu0 0.0
        %2881 = vmatpush1.msra.mxu0 0.0
        %2882 = vmatprep.subr.mxu0 0.0
        %2883 = vmatpush1.msra.mxu0 0.0
        %2884 = vmatprep.subr.mxu0 0.0
        %2885 = vmatpush1.msra.mxu0 0.0
        %2886 = vmatprep.subr.mxu0 0.0
        %2887 = vmatpush1.msra.mxu0 0.0
        %2888 = vmatprep.subr.mxu0 0.0
        %2889 = vmatpush1.msra.mxu0 0.0
        %2890 = vmatprep.subr.mxu0 0.0
        %2891 = vmatpush1.msra.mxu0 0.0
        %2892 = vmatprep.mubr.f32.mxu0 0.0
        %2893 = vmatmul.mubr.f32.gmra.mrb[0].mxu0 %v2817
        %v2894 = vpop.f32.mrb[0].mxu0
        %v2895 = vadd.f32 0.0, %v2894
        %v2896 = vpop.f32.mrb[0].mxu0
        %v2897 = vadd.f32 0.0, %v2896
        %2898 = vmatprep.mubr.f32.mxu0 0.0
        %2899 = vmatmul.mubr.f32.gmra.mrb[0].mxu0 %v2820
        %v2900 = vpop.f32.mrb[0].mxu0
        %v2901 = vadd.f32 0.0, %v2900
        %v2902 = vpop.f32.mrb[0].mxu0
        %v2903 = vadd.f32 0.0, %v2902
        %2904 = vmatprep.mubr.f32.mxu0 0.0
        %2905 = vmatmul.mubr.f32.gmra.mrb[0].mxu0 %v2823
        %v2906 = vpop.f32.mrb[0].mxu0
        %v2907 = vadd.f32 0.0, %v2906
        %v2908 = vpop.f32.mrb[0].mxu0
        %v2909 = vadd.f32 0.0, %v2908
        %2910 = vmatprep.mubr.f32.mxu0 0.0
        %2911 = vmatmul.mubr.f32.gmra.mrb[0].mxu0 %v2826
        %v2912 = vpop.f32.mrb[0].mxu0
        %v2913 = vadd.f32 0.0, %v2912
        %v2914 = vpop.f32.mrb[0].mxu0
        %v2915 = vadd.f32 0.0, %v2914
        %2916 = vdwg.mxu0
        %v2917 = vadd.f32 %v2763, %v2895
        %v2918 = vadd.f32 %v2764, %v2897
        %v2919 = vadd.f32 %v2765, %v2901
        %v2920 = vadd.f32 %v2766, %v2903
        %v2921 = vadd.f32 %v2767, %v2907
        %v2922 = vadd.f32 %v2768, %v2909
        %v2923 = vadd.f32 %v2769, %v2913
        %v2924 = vadd.f32 %v2770, %v2915
        %2925 = vrot.lane.b32.xlu0 %v2034, 113
        %v2926 = vpop.permute.xlu0 %2925
        %2927 = vrot.lane.b32.xlu0 %v2035, 113
        %v2928 = vpop.permute.xlu0 %2927
        %2929 = vrot.lane.b32.xlu0 %v2036, 113
        %v2930 = vpop.permute.xlu0 %2929
        %2931 = vrot.lane.b32.xlu0 %v2037, 113
        %v2932 = vpop.permute.xlu0 %2931
        %2933 = vrot.lane.b32.xlu0 %v2038, 113
        %v2934 = vpop.permute.xlu0 %2933
        %2935 = vrot.lane.b32.xlu0 %v2039, 113
        %v2936 = vpop.permute.xlu0 %2935
        %2937 = vrot.lane.b32.xlu0 %v2040, 113
        %v2938 = vpop.permute.xlu0 %2937
        %2939 = vrot.lane.b32.xlu0 %v2041, 113
        %v2940 = vpop.permute.xlu0 %2939
        %v2941 = vsel %vm1421, %v2926, %v2928
        %v2942 = vsel %vm1421, %v2930, %v2932
        %v2943 = vsel %vm1421, %v2934, %v2936
        %v2944 = vsel %vm1421, %v2938, %v2940
        %v2953 = vsel %vm1421, %v2928, 0.0
        %v2954 = vsel %vm1421, %v2932, 0.0
        %v2955 = vsel %vm1421, %v2936, 0.0
        %v2956 = vsel %vm1421, %v2940, 0.0
        %v2957 = vmul.f32 %v2941, %v1456
        %v2958 = vmul.f32 %v2953, %v1460
        %v2959 = vmul.f32 %v2942, %v1456
        %v2960 = vmul.f32 %v2954, %v1460
        %v2961 = vmul.f32 %v2943, %v1456
        %v2962 = vmul.f32 %v2955, %v1460
        %v2963 = vmul.f32 %v2944, %v1456
        %v2964 = vmul.f32 %v2956, %v1460
        %s2965 = scalar_lea.vmem [#allocation5], 192
        %v2966 = vld [vmem:[%s2965] sm:$0xff]
        %v2967 = vld [vmem:[%s2965 + $0x8] sm:$0xff]
        %v2968 = vld [vmem:[%s2965 + $0x10] sm:$0xff]
        %v2969 = vld [vmem:[%s2965 + $0x18] sm:$0xff]
        %v2971 = vsel %vm516, %v2966, 0
        %v2974 = vsel %vm516, %v2967, 0
        %v2977 = vsel %vm516, %v2968, 0
        %v2980 = vsel %vm516, %v2969, 0
        %2982 = vmatprep.subr.mxu0 %v2958
        %2983 = vmatpush1.msra.mxu0 %v2957
        %2984 = vmatprep.subr.mxu0 %v2960
        %2985 = vmatpush1.msra.mxu0 %v2959
        %2986 = vmatprep.subr.mxu0 %v2962
        %2987 = vmatpush1.msra.mxu0 %v2961
        %2988 = vmatprep.subr.mxu0 %v2964
        %2989 = vmatpush1.msra.mxu0 %v2963
        %2990 = vmatprep.subr.mxu0 0.0
        %2991 = vmatpush1.msra.mxu0 0.0
        %2992 = vmatprep.subr.mxu0 0.0
        %2993 = vmatpush1.msra.mxu0 0.0
        %2994 = vmatprep.subr.mxu0 0.0
        %2995 = vmatpush1.msra.mxu0 0.0
        %2996 = vmatprep.subr.mxu0 0.0
        %2997 = vmatpush1.msra.mxu0 0.0
        %2998 = vmatprep.subr.mxu0 0.0
        %2999 = vmatpush1.msra.mxu0 0.0
        %3000 = vmatprep.subr.mxu0 0.0
        %3001 = vmatpush1.msra.mxu0 0.0
        %3002 = vmatprep.subr.mxu0 0.0
        %3003 = vmatpush1.msra.mxu0 0.0
        %3004 = vmatprep.subr.mxu0 0.0
        %3005 = vmatpush1.msra.mxu0 0.0
        %3006 = vmatprep.subr.mxu0 0.0
        %3007 = vmatpush1.msra.mxu0 0.0
        %3008 = vmatprep.subr.mxu0 0.0
        %3009 = vmatpush1.msra.mxu0 0.0
        %3010 = vmatprep.subr.mxu0 0.0
        %3011 = vmatpush1.msra.mxu0 0.0
        %3012 = vmatprep.subr.mxu0 0.0
        %3013 = vmatpush1.msra.mxu0 0.0
        %3014 = vmatprep.subr.mxu0 0.0
        %3015 = vmatpush1.msra.mxu0 0.0
        %3016 = vmatprep.subr.mxu0 0.0
        %3017 = vmatpush1.msra.mxu0 0.0
        %3018 = vmatprep.subr.mxu0 0.0
        %3019 = vmatpush1.msra.mxu0 0.0
        %3020 = vmatprep.subr.mxu0 0.0
        %3021 = vmatpush1.msra.mxu0 0.0
        %3022 = vmatprep.subr.mxu0 0.0
        %3023 = vmatpush1.msra.mxu0 0.0
        %3024 = vmatprep.subr.mxu0 0.0
        %3025 = vmatpush1.msra.mxu0 0.0
        %3026 = vmatprep.subr.mxu0 0.0
        %3027 = vmatpush1.msra.mxu0 0.0
        %3028 = vmatprep.subr.mxu0 0.0
        %3029 = vmatpush1.msra.mxu0 0.0
        %3030 = vmatprep.subr.mxu0 0.0
        %3031 = vmatpush1.msra.mxu0 0.0
        %3032 = vmatprep.subr.mxu0 0.0
        %3033 = vmatpush1.msra.mxu0 0.0
        %3034 = vmatprep.subr.mxu0 0.0
        %3035 = vmatpush1.msra.mxu0 0.0
        %3036 = vmatprep.subr.mxu0 0.0
        %3037 = vmatpush1.msra.mxu0 0.0
        %3038 = vmatprep.subr.mxu0 0.0
        %3039 = vmatpush1.msra.mxu0 0.0
        %3040 = vmatprep.subr.mxu0 0.0
        %3041 = vmatpush1.msra.mxu0 0.0
        %3042 = vmatprep.subr.mxu0 0.0
        %3043 = vmatpush1.msra.mxu0 0.0
        %3044 = vmatprep.subr.mxu0 0.0
        %3045 = vmatpush1.msra.mxu0 0.0
        %3046 = vmatprep.mubr.f32.mxu0 0.0
        %3047 = vmatmul.mubr.f32.gmra.mrb[0].mxu0 %v2971
        %v3048 = vpop.f32.mrb[0].mxu0
        %v3049 = vadd.f32 0.0, %v3048
        %v3050 = vpop.f32.mrb[0].mxu0
        %v3051 = vadd.f32 0.0, %v3050
        %3052 = vmatprep.mubr.f32.mxu0 0.0
        %3053 = vmatmul.mubr.f32.gmra.mrb[0].mxu0 %v2974
        %v3054 = vpop.f32.mrb[0].mxu0
        %v3055 = vadd.f32 0.0, %v3054
        %v3056 = vpop.f32.mrb[0].mxu0
        %v3057 = vadd.f32 0.0, %v3056
        %3058 = vmatprep.mubr.f32.mxu0 0.0
        %3059 = vmatmul.mubr.f32.gmra.mrb[0].mxu0 %v2977
        %v3060 = vpop.f32.mrb[0].mxu0
        %v3061 = vadd.f32 0.0, %v3060
        %v3062 = vpop.f32.mrb[0].mxu0
        %v3063 = vadd.f32 0.0, %v3062
        %3064 = vmatprep.mubr.f32.mxu0 0.0
        %3065 = vmatmul.mubr.f32.gmra.mrb[0].mxu0 %v2980
        %v3066 = vpop.f32.mrb[0].mxu0
        %v3067 = vadd.f32 0.0, %v3066
        %v3068 = vpop.f32.mrb[0].mxu0
        %v3069 = vadd.f32 0.0, %v3068
        %3070 = vdwg.mxu0
        %v3071 = vadd.f32 %v2917, %v3049
        %v3072 = vadd.f32 %v2918, %v3051
        %v3073 = vadd.f32 %v2919, %v3055
        %v3074 = vadd.f32 %v2920, %v3057
        %v3075 = vadd.f32 %v2921, %v3061
        %v3076 = vadd.f32 %v2922, %v3063
        %v3077 = vadd.f32 %v2923, %v3067
        %v3078 = vadd.f32 %v2924, %v3069
        %3079 = vrot.lane.b32.xlu0 %v2034, 112
        %v3080 = vpop.permute.xlu0 %3079
        %3081 = vrot.lane.b32.xlu0 %v2035, 112
        %v3082 = vpop.permute.xlu0 %3081
        %3083 = vrot.lane.b32.xlu0 %v2036, 112
        %v3084 = vpop.permute.xlu0 %3083
        %3085 = vrot.lane.b32.xlu0 %v2037, 112
        %v3086 = vpop.permute.xlu0 %3085
        %3087 = vrot.lane.b32.xlu0 %v2038, 112
        %v3088 = vpop.permute.xlu0 %3087
        %3089 = vrot.lane.b32.xlu0 %v2039, 112
        %v3090 = vpop.permute.xlu0 %3089
        %3091 = vrot.lane.b32.xlu0 %v2040, 112
        %v3092 = vpop.permute.xlu0 %3091
        %3093 = vrot.lane.b32.xlu0 %v2041, 112
        %v3094 = vpop.permute.xlu0 %3093
        %v3095 = vsel %vm1599, %v3080, %v3082
        %v3096 = vsel %vm1599, %v3084, %v3086
        %v3097 = vsel %vm1599, %v3088, %v3090
        %v3098 = vsel %vm1599, %v3092, %v3094
        %v3107 = vsel %vm1599, %v3082, 0.0
        %v3108 = vsel %vm1599, %v3086, 0.0
        %v3109 = vsel %vm1599, %v3090, 0.0
        %v3110 = vsel %vm1599, %v3094, 0.0
        %v3111 = vmul.f32 %v3095, %v1633
        %v3112 = vmul.f32 %v3107, %v1637
        %v3113 = vmul.f32 %v3096, %v1633
        %v3114 = vmul.f32 %v3108, %v1637
        %v3115 = vmul.f32 %v3097, %v1633
        %v3116 = vmul.f32 %v3109, %v1637
        %v3117 = vmul.f32 %v3098, %v1633
        %v3118 = vmul.f32 %v3110, %v1637
        %s3119 = scalar_lea.vmem [#allocation5], 224
        %v3120 = vld [vmem:[%s3119] sm:$0xff]
        %v3121 = vld [vmem:[%s3119 + $0x8] sm:$0xff]
        %v3122 = vld [vmem:[%s3119 + $0x10] sm:$0xff]
        %v3123 = vld [vmem:[%s3119 + $0x18] sm:$0xff]
        %v3125 = vsel %vm516, %v3120, 0
        %v3128 = vsel %vm516, %v3121, 0
        %v3131 = vsel %vm516, %v3122, 0
        %v3134 = vsel %vm516, %v3123, 0
        %3136 = vmatprep.subr.mxu0 %v3112
        %3137 = vmatpush1.msra.mxu0 %v3111
        %3138 = vmatprep.subr.mxu0 %v3114
        %3139 = vmatpush1.msra.mxu0 %v3113
        %3140 = vmatprep.subr.mxu0 %v3116
        %3141 = vmatpush1.msra.mxu0 %v3115
        %3142 = vmatprep.subr.mxu0 %v3118
        %3143 = vmatpush1.msra.mxu0 %v3117
        %3144 = vmatprep.subr.mxu0 0.0
        %3145 = vmatpush1.msra.mxu0 0.0
        %3146 = vmatprep.subr.mxu0 0.0
        %3147 = vmatpush1.msra.mxu0 0.0
        %3148 = vmatprep.subr.mxu0 0.0
        %3149 = vmatpush1.msra.mxu0 0.0
        %3150 = vmatprep.subr.mxu0 0.0
        %3151 = vmatpush1.msra.mxu0 0.0
        %3152 = vmatprep.subr.mxu0 0.0
        %3153 = vmatpush1.msra.mxu0 0.0
        %3154 = vmatprep.subr.mxu0 0.0
        %3155 = vmatpush1.msra.mxu0 0.0
        %3156 = vmatprep.subr.mxu0 0.0
        %3157 = vmatpush1.msra.mxu0 0.0
        %3158 = vmatprep.subr.mxu0 0.0
        %3159 = vmatpush1.msra.mxu0 0.0
        %3160 = vmatprep.subr.mxu0 0.0
        %3161 = vmatpush1.msra.mxu0 0.0
        %3162 = vmatprep.subr.mxu0 0.0
        %3163 = vmatpush1.msra.mxu0 0.0
        %3164 = vmatprep.subr.mxu0 0.0
        %3165 = vmatpush1.msra.mxu0 0.0
        %3166 = vmatprep.subr.mxu0 0.0
        %3167 = vmatpush1.msra.mxu0 0.0
        %3168 = vmatprep.subr.mxu0 0.0
        %3169 = vmatpush1.msra.mxu0 0.0
        %3170 = vmatprep.subr.mxu0 0.0
        %3171 = vmatpush1.msra.mxu0 0.0
        %3172 = vmatprep.subr.mxu0 0.0
        %3173 = vmatpush1.msra.mxu0 0.0
        %3174 = vmatprep.subr.mxu0 0.0
        %3175 = vmatpush1.msra.mxu0 0.0
        %3176 = vmatprep.subr.mxu0 0.0
        %3177 = vmatpush1.msra.mxu0 0.0
        %3178 = vmatprep.subr.mxu0 0.0
        %3179 = vmatpush1.msra.mxu0 0.0
        %3180 = vmatprep.subr.mxu0 0.0
        %3181 = vmatpush1.msra.mxu0 0.0
        %3182 = vmatprep.subr.mxu0 0.0
        %3183 = vmatpush1.msra.mxu0 0.0
        %3184 = vmatprep.subr.mxu0 0.0
        %3185 = vmatpush1.msra.mxu0 0.0
        %3186 = vmatprep.subr.mxu0 0.0
        %3187 = vmatpush1.msra.mxu0 0.0
        %3188 = vmatprep.subr.mxu0 0.0
        %3189 = vmatpush1.msra.mxu0 0.0
        %3190 = vmatprep.subr.mxu0 0.0
        %3191 = vmatpush1.msra.mxu0 0.0
        %3192 = vmatprep.subr.mxu0 0.0
        %3193 = vmatpush1.msra.mxu0 0.0
        %3194 = vmatprep.subr.mxu0 0.0
        %3195 = vmatpush1.msra.mxu0 0.0
        %3196 = vmatprep.subr.mxu0 0.0
        %3197 = vmatpush1.msra.mxu0 0.0
        %3198 = vmatprep.subr.mxu0 0.0
        %3199 = vmatpush1.msra.mxu0 0.0
        %3200 = vmatprep.mubr.f32.mxu0 0.0
        %3201 = vmatmul.mubr.f32.gmra.mrb[0].mxu0 %v3125
        %v3202 = vpop.f32.mrb[0].mxu0
        %v3203 = vadd.f32 0.0, %v3202
        %v3204 = vpop.f32.mrb[0].mxu0
        %v3205 = vadd.f32 0.0, %v3204
        %3206 = vmatprep.mubr.f32.mxu0 0.0
        %3207 = vmatmul.mubr.f32.gmra.mrb[0].mxu0 %v3128
        %v3208 = vpop.f32.mrb[0].mxu0
        %v3209 = vadd.f32 0.0, %v3208
        %v3210 = vpop.f32.mrb[0].mxu0
        %v3211 = vadd.f32 0.0, %v3210
        %3212 = vmatprep.mubr.f32.mxu0 0.0
        %3213 = vmatmul.mubr.f32.gmra.mrb[0].mxu0 %v3131
        %v3214 = vpop.f32.mrb[0].mxu0
        %v3215 = vadd.f32 0.0, %v3214
        %v3216 = vpop.f32.mrb[0].mxu0
        %v3217 = vadd.f32 0.0, %v3216
        %3218 = vmatprep.mubr.f32.mxu0 0.0
        %3219 = vmatmul.mubr.f32.gmra.mrb[0].mxu0 %v3134
        %v3220 = vpop.f32.mrb[0].mxu0
        %v3221 = vadd.f32 0.0, %v3220
        %v3222 = vpop.f32.mrb[0].mxu0
        %v3223 = vadd.f32 0.0, %v3222
        %3224 = vdwg.mxu0
        %v3225 = vadd.f32 %v3071, %v3203
        %v3226 = vadd.f32 %v3072, %v3205
        %v3227 = vadd.f32 %v3073, %v3209
        %v3228 = vadd.f32 %v3074, %v3211
        %v3229 = vadd.f32 %v3075, %v3215
        %v3230 = vadd.f32 %v3076, %v3217
        %v3231 = vadd.f32 %v3077, %v3221
        %v3232 = vadd.f32 %v3078, %v3223
        %3233 = vrot.lane.b32.xlu0 %v2034, 111
        %v3234 = vpop.permute.xlu0 %3233
        %3235 = vrot.lane.b32.xlu0 %v2035, 111
        %v3236 = vpop.permute.xlu0 %3235
        %3237 = vrot.lane.b32.xlu0 %v2036, 111
        %v3238 = vpop.permute.xlu0 %3237
        %3239 = vrot.lane.b32.xlu0 %v2037, 111
        %v3240 = vpop.permute.xlu0 %3239
        %3241 = vrot.lane.b32.xlu0 %v2038, 111
        %v3242 = vpop.permute.xlu0 %3241
        %3243 = vrot.lane.b32.xlu0 %v2039, 111
        %v3244 = vpop.permute.xlu0 %3243
        %3245 = vrot.lane.b32.xlu0 %v2040, 111
        %v3246 = vpop.permute.xlu0 %3245
        %3247 = vrot.lane.b32.xlu0 %v2041, 111
        %v3248 = vpop.permute.xlu0 %3247
        %v3249 = vsel %vm1776, %v3234, %v3236
        %v3250 = vsel %vm1776, %v3238, %v3240
        %v3251 = vsel %vm1776, %v3242, %v3244
        %v3252 = vsel %vm1776, %v3246, %v3248
        %v3261 = vsel %vm1776, %v3236, 0.0
        %v3262 = vsel %vm1776, %v3240, 0.0
        %v3263 = vsel %vm1776, %v3244, 0.0
        %v3264 = vsel %vm1776, %v3248, 0.0
        %v3265 = vmul.f32 %v3249, %v1810
        %v3266 = vmul.f32 %v3261, %v1814
        %v3267 = vmul.f32 %v3250, %v1810
        %v3268 = vmul.f32 %v3262, %v1814
        %v3269 = vmul.f32 %v3251, %v1810
        %v3270 = vmul.f32 %v3263, %v1814
        %v3271 = vmul.f32 %v3252, %v1810
        %v3272 = vmul.f32 %v3264, %v1814
        %s3273 = scalar_lea.vmem [#allocation5], 256
        %v3274 = vld [vmem:[%s3273] sm:$0xff]
        %v3275 = vld [vmem:[%s3273 + $0x8] sm:$0xff]
        %v3276 = vld [vmem:[%s3273 + $0x10] sm:$0xff]
        %v3277 = vld [vmem:[%s3273 + $0x18] sm:$0xff]
        %v3279 = vsel %vm516, %v3274, 0
        %v3282 = vsel %vm516, %v3275, 0
        %v3285 = vsel %vm516, %v3276, 0
        %v3288 = vsel %vm516, %v3277, 0
        %3290 = vmatprep.subr.mxu0 %v3266
        %3291 = vmatpush1.msra.mxu0 %v3265
        %3292 = vmatprep.subr.mxu0 %v3268
        %3293 = vmatpush1.msra.mxu0 %v3267
        %3294 = vmatprep.subr.mxu0 %v3270
        %3295 = vmatpush1.msra.mxu0 %v3269
        %3296 = vmatprep.subr.mxu0 %v3272
        %3297 = vmatpush1.msra.mxu0 %v3271
        %3298 = vmatprep.subr.mxu0 0.0
        %3299 = vmatpush1.msra.mxu0 0.0
        %3300 = vmatprep.subr.mxu0 0.0
        %3301 = vmatpush1.msra.mxu0 0.0
        %3302 = vmatprep.subr.mxu0 0.0
        %3303 = vmatpush1.msra.mxu0 0.0
        %3304 = vmatprep.subr.mxu0 0.0
        %3305 = vmatpush1.msra.mxu0 0.0
        %3306 = vmatprep.subr.mxu0 0.0
        %3307 = vmatpush1.msra.mxu0 0.0
        %3308 = vmatprep.subr.mxu0 0.0
        %3309 = vmatpush1.msra.mxu0 0.0
        %3310 = vmatprep.subr.mxu0 0.0
        %3311 = vmatpush1.msra.mxu0 0.0
        %3312 = vmatprep.subr.mxu0 0.0
        %3313 = vmatpush1.msra.mxu0 0.0
        %3314 = vmatprep.subr.mxu0 0.0
        %3315 = vmatpush1.msra.mxu0 0.0
        %3316 = vmatprep.subr.mxu0 0.0
        %3317 = vmatpush1.msra.mxu0 0.0
        %3318 = vmatprep.subr.mxu0 0.0
        %3319 = vmatpush1.msra.mxu0 0.0
        %3320 = vmatprep.subr.mxu0 0.0
        %3321 = vmatpush1.msra.mxu0 0.0
        %3322 = vmatprep.subr.mxu0 0.0
        %3323 = vmatpush1.msra.mxu0 0.0
        %3324 = vmatprep.subr.mxu0 0.0
        %3325 = vmatpush1.msra.mxu0 0.0
        %3326 = vmatprep.subr.mxu0 0.0
        %3327 = vmatpush1.msra.mxu0 0.0
        %3328 = vmatprep.subr.mxu0 0.0
        %3329 = vmatpush1.msra.mxu0 0.0
        %3330 = vmatprep.subr.mxu0 0.0
        %3331 = vmatpush1.msra.mxu0 0.0
        %3332 = vmatprep.subr.mxu0 0.0
        %3333 = vmatpush1.msra.mxu0 0.0
        %3334 = vmatprep.subr.mxu0 0.0
        %3335 = vmatpush1.msra.mxu0 0.0
        %3336 = vmatprep.subr.mxu0 0.0
        %3337 = vmatpush1.msra.mxu0 0.0
        %3338 = vmatprep.subr.mxu0 0.0
        %3339 = vmatpush1.msra.mxu0 0.0
        %3340 = vmatprep.subr.mxu0 0.0
        %3341 = vmatpush1.msra.mxu0 0.0
        %3342 = vmatprep.subr.mxu0 0.0
        %3343 = vmatpush1.msra.mxu0 0.0
        %3344 = vmatprep.subr.mxu0 0.0
        %3345 = vmatpush1.msra.mxu0 0.0
        %3346 = vmatprep.subr.mxu0 0.0
        %3347 = vmatpush1.msra.mxu0 0.0
        %3348 = vmatprep.subr.mxu0 0.0
        %3349 = vmatpush1.msra.mxu0 0.0
        %3350 = vmatprep.subr.mxu0 0.0
        %3351 = vmatpush1.msra.mxu0 0.0
        %3352 = vmatprep.subr.mxu0 0.0
        %3353 = vmatpush1.msra.mxu0 0.0
        %3354 = vmatprep.mubr.f32.mxu0 0.0
        %3355 = vmatmul.mubr.f32.gmra.mrb[0].mxu0 %v3279
        %v3356 = vpop.f32.mrb[0].mxu0
        %v3357 = vadd.f32 0.0, %v3356
        %v3358 = vpop.f32.mrb[0].mxu0
        %v3359 = vadd.f32 0.0, %v3358
        %3360 = vmatprep.mubr.f32.mxu0 0.0
        %3361 = vmatmul.mubr.f32.gmra.mrb[0].mxu0 %v3282
        %v3362 = vpop.f32.mrb[0].mxu0
        %v3363 = vadd.f32 0.0, %v3362
        %v3364 = vpop.f32.mrb[0].mxu0
        %v3365 = vadd.f32 0.0, %v3364
        %3366 = vmatprep.mubr.f32.mxu0 0.0
        %3367 = vmatmul.mubr.f32.gmra.mrb[0].mxu0 %v3285
        %v3368 = vpop.f32.mrb[0].mxu0
        %v3369 = vadd.f32 0.0, %v3368
        %v3370 = vpop.f32.mrb[0].mxu0
        %v3371 = vadd.f32 0.0, %v3370
        %3372 = vmatprep.mubr.f32.mxu0 0.0
        %3373 = vmatmul.mubr.f32.gmra.mrb[0].mxu0 %v3288
        %v3374 = vpop.f32.mrb[0].mxu0
        %v3375 = vadd.f32 0.0, %v3374
        %v3376 = vpop.f32.mrb[0].mxu0
        %v3377 = vadd.f32 0.0, %v3376
        %3378 = vdwg.mxu0
        %v3379 = vadd.f32 %v3225, %v3357
        %v3380 = vadd.f32 %v3226, %v3359
        %v3381 = vadd.f32 %v3227, %v3363
        %v3382 = vadd.f32 %v3228, %v3365
        %v3383 = vadd.f32 %v3229, %v3369
        %v3384 = vadd.f32 %v3230, %v3371
        %v3385 = vadd.f32 %v3231, %v3375
        %v3386 = vadd.f32 %v3232, %v3377
        %s3387 = scalar_lea.vmem %s3, 64
        %v3388 = vld [vmem:[%s3387] sm:$0xff]
        %v3389 = vld [vmem:[%s3387 + $0x8] sm:$0xff]
        %v3390 = vld [vmem:[%s3387 + $0x10] sm:$0xff]
        %v3391 = vld [vmem:[%s3387 + $0x18] sm:$0xff]
        %3393 = vset.pattern.permute.xlu0 0
        %3394 = vperm.xlu0 %3393, %v3388
        %v3395 = vpop.permute.xlu0 %3394
        %3398 = vset.pattern.permute.xlu0 0
        %3399 = vperm.xlu0 %3398, %v3389
        %v3400 = vpop.permute.xlu0 %3399
        %3403 = vset.pattern.permute.xlu0 0
        %3404 = vperm.xlu0 %3403, %v3390
        %v3405 = vpop.permute.xlu0 %3404
        %3408 = vset.pattern.permute.xlu0 0
        %3409 = vperm.xlu0 %3408, %v3391
        %v3410 = vpop.permute.xlu0 %3409
        %v3412 = vmul.f32 %v3379, %v3395
        %v3413 = vmul.f32 %v3380, %v3395
        %v3414 = vmul.f32 %v3381, %v3400
        %v3415 = vmul.f32 %v3382, %v3400
        %v3416 = vmul.f32 %v3383, %v3405
        %v3417 = vmul.f32 %v3384, %v3405
        %v3418 = vmul.f32 %v3385, %v3410
        %v3419 = vmul.f32 %v3386, %v3410
        %s3420 = scalar_lea.vmem %s3, 96
        %v3421 = vld [vmem:[%s3420] sm:$0xff]
        %v3422 = vld [vmem:[%s3420 + $0x8] sm:$0xff]
        %v3423 = vld [vmem:[%s3420 + $0x10] sm:$0xff]
        %v3424 = vld [vmem:[%s3420 + $0x18] sm:$0xff]
        %3426 = vset.pattern.permute.xlu0 0
        %3427 = vperm.xlu0 %3426, %v3421
        %v3428 = vpop.permute.xlu0 %3427
        %3431 = vset.pattern.permute.xlu0 0
        %3432 = vperm.xlu0 %3431, %v3422
        %v3433 = vpop.permute.xlu0 %3432
        %3436 = vset.pattern.permute.xlu0 0
        %3437 = vperm.xlu0 %3436, %v3423
        %v3438 = vpop.permute.xlu0 %3437
        %3441 = vset.pattern.permute.xlu0 0
        %3442 = vperm.xlu0 %3441, %v3424
        %v3443 = vpop.permute.xlu0 %3442
        %v3445 = vadd.f32 %v3412, %v3428
        %v3446 = vadd.f32 %v3413, %v3428
        %v3447 = vadd.f32 %v3414, %v3433
        %v3448 = vadd.f32 %v3415, %v3433
        %v3449 = vadd.f32 %v3416, %v3438
        %v3450 = vadd.f32 %v3417, %v3438
        %v3451 = vadd.f32 %v3418, %v3443
        %v3452 = vadd.f32 %v3419, %v3443
        %vm3453 = vcmp.gt.f32.partialorder %v334, 0.5
        %v3454 = vsel %vm3453, 1, 0
        %v3455 = vlaneseq
        %v3456 = vshrl.u32 %v3455, 7
        %v3457 = vsub.s32 2, %v3456
        %v3458 = vrot.slane %v3454, %v3457
        %v3459 = vlaneseq
        %v3460 = vshrl.u32 %v3459, 7
        %v3461 = vsub.s32 6, %v3460
        %v3462 = vrot.slane %v3454, %v3461
        %v3463 = vlaneseq
        %v3464 = vshrl.u32 %v3463, 7
        %v3465 = vsub.s32 2, %v3464
        %v3466 = vrot.slane %v3458, %v3465
        %v3467 = vlaneseq
        %v3468 = vshrl.u32 %v3467, 7
        %v3469 = vsub.s32 2, %v3468
        %v3470 = vrot.slane %v3462, %v3469
        %vm3471 = vcmp.eq.s32.totalorder %v3466, 1
        %vm3472 = vcmp.eq.s32.totalorder %v3470, 1
        %v3473 = vsel %vm3471, %v3445, -inf
        %v3474 = vsel %vm3472, %v3446, -inf
        %v3475 = vsel %vm3471, %v3447, -inf
        %v3476 = vsel %vm3472, %v3448, -inf
        %v3477 = vsel %vm3471, %v3449, -inf
        %v3478 = vsel %vm3472, %v3450, -inf
        %v3479 = vsel %vm3471, %v3451, -inf
        %v3480 = vsel %vm3472, %v3452, -inf
        %v3481 = vmax.f32 %v3473, %v3474
        %3482 = vmax.xlane.f32.xlu0 %v3481
        %v3483 = vpop.xlane.xlu0 %3482
        %v3484 = vmax.f32 %v3475, %v3476
        %3485 = vmax.xlane.f32.xlu0 %v3484
        %v3486 = vpop.xlane.xlu0 %3485
        %v3487 = vmax.f32 %v3477, %v3478
        %3488 = vmax.xlane.f32.xlu0 %v3487
        %v3489 = vpop.xlane.xlu0 %3488
        %v3490 = vmax.f32 %v3479, %v3480
        %3491 = vmax.xlane.f32.xlu0 %v3490
        %v3492 = vpop.xlane.xlu0 %3491
        %v3493 = vlaneseq
        %v3494 = vshrl.u32 %v3493, 7
        %v3495 = vsub.s32 2, %v3494
        %v3496 = vrot.slane %v334, %v3495
        %v3497 = vlaneseq
        %v3498 = vshrl.u32 %v3497, 7
        %v3499 = vsub.s32 6, %v3498
        %v3500 = vrot.slane %v334, %v3499
        %v3503 = vlaneseq
        %v3504 = vshrl.u32 %v3503, 7
        %v3505 = vsub.s32 2, %v3504
        %v3506 = vrot.slane %v3496, %v3505
        %v3507 = vlaneseq
        %v3508 = vshrl.u32 %v3507, 7
        %v3509 = vsub.s32 2, %v3508
        %v3510 = vrot.slane %v3500, %v3509
        %v3511 = vmul.f32 %v3445, %v3506
        %v3512 = vmul.f32 %v3446, %v3510
        %v3513 = vmul.f32 %v3447, %v3506
        %v3514 = vmul.f32 %v3448, %v3510
        %v3515 = vmul.f32 %v3449, %v3506
        %v3516 = vmul.f32 %v3450, %v3510
        %v3517 = vmul.f32 %v3451, %v3506
        %v3518 = vmul.f32 %v3452, %v3510
        %v3519 = vadd.f32 %v3511, %v3512
        %3520 = vadd.xlane.f32.xlu0 %v3519
        %v3521 = vpop.xlane.xlu0 %3520
        %v3522 = vadd.f32 %v3513, %v3514
        %3523 = vadd.xlane.f32.xlu0 %v3522
        %v3524 = vpop.xlane.xlu0 %3523
        %v3525 = vadd.f32 %v3515, %v3516
        %3526 = vadd.xlane.f32.xlu0 %v3525
        %v3527 = vpop.xlane.xlu0 %3526
        %v3528 = vadd.f32 %v3517, %v3518
        %3529 = vadd.xlane.f32.xlu0 %v3528
        %v3530 = vpop.xlane.xlu0 %3529
        %v3531 = vmul.f32 %v3521, 0.00390625
        %v3532 = vmul.f32 %v3524, 0.00390625
        %v3533 = vmul.f32 %v3527, 0.00390625
        %v3534 = vmul.f32 %v3530, 0.00390625
        %v3535 = vsel %vm922, %v3483, %v3531
        %v3536 = vsel %vm922, %v3486, %v3532
        %v3537 = vsel %vm922, %v3489, %v3533
        %v3538 = vsel %vm922, %v3492, %v3534
        %v3540 = vsel %vm516, %v335, 0
        %3542 = vmatprep.subr.mxu0 0.0
        %3543 = vmatpush1.msra.mxu0 %v3535
        %3544 = vmatprep.subr.mxu0 0.0
        %3545 = vmatpush1.msra.mxu0 %v3536
        %3546 = vmatprep.subr.mxu0 0.0
        %3547 = vmatpush1.msra.mxu0 %v3537
        %3548 = vmatprep.subr.mxu0 0.0
        %3549 = vmatpush1.msra.mxu0 %v3538
        %3550 = vmatprep.subr.mxu0 0.0
        %3551 = vmatpush1.msra.mxu0 0.0
        %3552 = vmatprep.subr.mxu0 0.0
        %3553 = vmatpush1.msra.mxu0 0.0
        %3554 = vmatprep.subr.mxu0 0.0
        %3555 = vmatpush1.msra.mxu0 0.0
        %3556 = vmatprep.subr.mxu0 0.0
        %3557 = vmatpush1.msra.mxu0 0.0
        %3558 = vmatprep.subr.mxu0 0.0
        %3559 = vmatpush1.msra.mxu0 0.0
        %3560 = vmatprep.subr.mxu0 0.0
        %3561 = vmatpush1.msra.mxu0 0.0
        %3562 = vmatprep.subr.mxu0 0.0
        %3563 = vmatpush1.msra.mxu0 0.0
        %3564 = vmatprep.subr.mxu0 0.0
        %3565 = vmatpush1.msra.mxu0 0.0
        %3566 = vmatprep.subr.mxu0 0.0
        %3567 = vmatpush1.msra.mxu0 0.0
        %3568 = vmatprep.subr.mxu0 0.0
        %3569 = vmatpush1.msra.mxu0 0.0
        %3570 = vmatprep.subr.mxu0 0.0
        %3571 = vmatpush1.msra.mxu0 0.0
        %3572 = vmatprep.subr.mxu0 0.0
        %3573 = vmatpush1.msra.mxu0 0.0
        %3574 = vmatprep.subr.mxu0 0.0
        %3575 = vmatpush1.msra.mxu0 0.0
        %3576 = vmatprep.subr.mxu0 0.0
        %3577 = vmatpush1.msra.mxu0 0.0
        %3578 = vmatprep.subr.mxu0 0.0
        %3579 = vmatpush1.msra.mxu0 0.0
        %3580 = vmatprep.subr.mxu0 0.0
        %3581 = vmatpush1.msra.mxu0 0.0
        %3582 = vmatprep.subr.mxu0 0.0
        %3583 = vmatpush1.msra.mxu0 0.0
        %3584 = vmatprep.subr.mxu0 0.0
        %3585 = vmatpush1.msra.mxu0 0.0
        %3586 = vmatprep.subr.mxu0 0.0
        %3587 = vmatpush1.msra.mxu0 0.0
        %3588 = vmatprep.subr.mxu0 0.0
        %3589 = vmatpush1.msra.mxu0 0.0
        %3590 = vmatprep.subr.mxu0 0.0
        %3591 = vmatpush1.msra.mxu0 0.0
        %3592 = vmatprep.subr.mxu0 0.0
        %3593 = vmatpush1.msra.mxu0 0.0
        %3594 = vmatprep.subr.mxu0 0.0
        %3595 = vmatpush1.msra.mxu0 0.0
        %3596 = vmatprep.subr.mxu0 0.0
        %3597 = vmatpush1.msra.mxu0 0.0
        %3598 = vmatprep.subr.mxu0 0.0
        %3599 = vmatpush1.msra.mxu0 0.0
        %3600 = vmatprep.subr.mxu0 0.0
        %3601 = vmatpush1.msra.mxu0 0.0
        %3602 = vmatprep.subr.mxu0 0.0
        %3603 = vmatpush1.msra.mxu0 0.0
        %3604 = vmatprep.subr.mxu0 0.0
        %3605 = vmatpush1.msra.mxu0 0.0
        %3606 = vmatprep.mubr.f32.mxu0 0.0
        %3607 = vmatmul.mubr.f32.gmra.mrb[0].mxu0 %v3540
        %v3608 = vpop.f32.mrb[0].mxu0
        %v3609 = vadd.f32 0.0, %v3608
        %v3610 = vpop.f32.mrb[0].mxu0
        %3611 = vdwg.mxu0
        %v3612 = vmul.f32 %v3609, 0.5
        %v3613 = vmul.f32 %v3609, 0.70710677
        %v3614 = verf.f32.pop %v3613
        %v3615 = vadd.f32 %v3614, 1.0
        %v3616 = vmul.f32 %v3612, %v3615
        %vm3617 = vcmask 15360
        %v3619 = vsel %vm3617, %v336, 0
        %v3622 = vsel %vm3617, %v337, 0
        %v3625 = vsel %vm3617, %v338, 0
        %v3628 = vsel %vm3617, %v339, 0
        %vm3630 = vcmask 1041408
        %v3632 = vsel %vm3630, %v3616, 0
        %3634 = vmatprep.subr.mxu0 0.0
        %3635 = vmatpush1.msra.mxu0 %v3632
        %3636 = vmatprep.subr.mxu0 0.0
        %3637 = vmatpush1.msra.mxu0 0.0
        %3638 = vmatprep.subr.mxu0 0.0
        %3639 = vmatpush1.msra.mxu0 0.0
        %3640 = vmatprep.subr.mxu0 0.0
        %3641 = vmatpush1.msra.mxu0 0.0
        %3642 = vmatprep.subr.mxu0 0.0
        %3643 = vmatpush1.msra.mxu0 0.0
        %3644 = vmatprep.subr.mxu0 0.0
        %3645 = vmatpush1.msra.mxu0 0.0
        %3646 = vmatprep.subr.mxu0 0.0
        %3647 = vmatpush1.msra.mxu0 0.0
        %3648 = vmatprep.subr.mxu0 0.0
        %3649 = vmatpush1.msra.mxu0 0.0
        %3650 = vmatprep.subr.mxu0 0.0
        %3651 = vmatpush1.msra.mxu0 0.0
        %3652 = vmatprep.subr.mxu0 0.0
        %3653 = vmatpush1.msra.mxu0 0.0
        %3654 = vmatprep.subr.mxu0 0.0
        %3655 = vmatpush1.msra.mxu0 0.0
        %3656 = vmatprep.subr.mxu0 0.0
        %3657 = vmatpush1.msra.mxu0 0.0
        %3658 = vmatprep.subr.mxu0 0.0
        %3659 = vmatpush1.msra.mxu0 0.0
        %3660 = vmatprep.subr.mxu0 0.0
        %3661 = vmatpush1.msra.mxu0 0.0
        %3662 = vmatprep.subr.mxu0 0.0
        %3663 = vmatpush1.msra.mxu0 0.0
        %3664 = vmatprep.subr.mxu0 0.0
        %3665 = vmatpush1.msra.mxu0 0.0
        %3666 = vmatprep.subr.mxu0 0.0
        %3667 = vmatpush1.msra.mxu0 0.0
        %3668 = vmatprep.subr.mxu0 0.0
        %3669 = vmatpush1.msra.mxu0 0.0
        %3670 = vmatprep.subr.mxu0 0.0
        %3671 = vmatpush1.msra.mxu0 0.0
        %3672 = vmatprep.subr.mxu0 0.0
        %3673 = vmatpush1.msra.mxu0 0.0
        %3674 = vmatprep.subr.mxu0 0.0
        %3675 = vmatpush1.msra.mxu0 0.0
        %3676 = vmatprep.subr.mxu0 0.0
        %3677 = vmatpush1.msra.mxu0 0.0
        %3678 = vmatprep.subr.mxu0 0.0
        %3679 = vmatpush1.msra.mxu0 0.0
        %3680 = vmatprep.subr.mxu0 0.0
        %3681 = vmatpush1.msra.mxu0 0.0
        %3682 = vmatprep.subr.mxu0 0.0
        %3683 = vmatpush1.msra.mxu0 0.0
        %3684 = vmatprep.subr.mxu0 0.0
        %3685 = vmatpush1.msra.mxu0 0.0
        %3686 = vmatprep.subr.mxu0 0.0
        %3687 = vmatpush1.msra.mxu0 0.0
        %3688 = vmatprep.subr.mxu0 0.0
        %3689 = vmatpush1.msra.mxu0 0.0
        %3690 = vmatprep.subr.mxu0 0.0
        %3691 = vmatpush1.msra.mxu0 0.0
        %3692 = vmatprep.subr.mxu0 0.0
        %3693 = vmatpush1.msra.mxu0 0.0
        %3694 = vmatprep.subr.mxu0 0.0
        %3695 = vmatpush1.msra.mxu0 0.0
        %3696 = vmatprep.subr.mxu0 0.0
        %3697 = vmatpush1.msra.mxu0 0.0
        %3698 = vmatprep.mubr.f32.mxu0 0.0
        %3699 = vmatmul.mubr.f32.gmra.mrb[0].mxu0 %v3619
        %v3700 = vpop.f32.mrb[0].mxu0
        %v3701 = vadd.f32 0.0, %v3700
        %v3702 = vpop.f32.mrb[0].mxu0
        %3703 = vmatprep.mubr.f32.mxu0 0.0
        %3704 = vmatmul.mubr.f32.gmra.mrb[0].mxu0 %v3622
        %v3705 = vpop.f32.mrb[0].mxu0
        %v3706 = vadd.f32 0.0, %v3705
        %v3707 = vpop.f32.mrb[0].mxu0
        %3708 = vmatprep.mubr.f32.mxu0 0.0
        %3709 = vmatmul.mubr.f32.gmra.mrb[0].mxu0 %v3625
        %v3710 = vpop.f32.mrb[0].mxu0
        %v3711 = vadd.f32 0.0, %v3710
        %v3712 = vpop.f32.mrb[0].mxu0
        %3713 = vmatprep.mubr.f32.mxu0 0.0
        %3714 = vmatmul.mubr.f32.gmra.mrb[0].mxu0 %v3628
        %v3715 = vpop.f32.mrb[0].mxu0
        %v3716 = vadd.f32 0.0, %v3715
        %v3717 = vpop.f32.mrb[0].mxu0
        %3718 = vdwg.mxu0
        %3723 = vrot.lane.b32.xlu0 %v3701, 127
        %v3724 = vpop.permute.xlu0 %3723
        %3725 = vrot.lane.b32.xlu0 %v3706, 127
        %v3726 = vpop.permute.xlu0 %3725
        %3727 = vrot.lane.b32.xlu0 %v3711, 127
        %v3728 = vpop.permute.xlu0 %3727
        %3729 = vrot.lane.b32.xlu0 %v3716, 127
        %v3730 = vpop.permute.xlu0 %3729
        %v3735 = vadd.f32 %v3701, %v3724
        %v3736 = vadd.f32 %v3706, %v3726
        %v3737 = vadd.f32 %v3711, %v3728
        %v3738 = vadd.f32 %v3716, %v3730
        %v3739 = vxor.u32 %v3735, 2147483648
        %v3740 = vxor.u32 %v3736, 2147483648
        %v3741 = vxor.u32 %v3737, 2147483648
        %v3742 = vxor.u32 %v3738, 2147483648
        %v3743 = vmul.f32 %v3739, 1.442695
        %v3744 = vpow.pop %v3743
        %v3745 = vmul.f32 %v3740, 1.442695
        %v3746 = vpow.pop %v3745
        %v3747 = vmul.f32 %v3741, 1.442695
        %v3748 = vpow.pop %v3747
        %v3749 = vmul.f32 %v3742, 1.442695
        %v3750 = vpow.pop %v3749
        %v3751 = vadd.f32 %v3744, 1.0
        %v3752 = vadd.f32 %v3746, 1.0
        %v3753 = vadd.f32 %v3748, 1.0
        %v3754 = vadd.f32 %v3750, 1.0
        %v3755 = vrcp.pop %v3751
        %v3756 = vmul.f32 1.0, %v3755
        %v3757 = vrcp.pop %v3752
        %v3758 = vmul.f32 1.0, %v3757
        %v3759 = vrcp.pop %v3753
        %v3760 = vmul.f32 1.0, %v3759
        %v3761 = vrcp.pop %v3754
        %v3762 = vmul.f32 1.0, %v3761
        %3764 = vset.pattern.permute.xlu0 0
        %3765 = vperm.xlu0 %3764, %v3756
        %v3766 = vpop.permute.xlu0 %3765
        %3769 = vset.pattern.permute.xlu0 0
        %3770 = vperm.xlu0 %3769, %v3758
        %v3771 = vpop.permute.xlu0 %3770
        %3774 = vset.pattern.permute.xlu0 0
        %3775 = vperm.xlu0 %3774, %v3760
        %v3776 = vpop.permute.xlu0 %3775
        %3779 = vset.pattern.permute.xlu0 0
        %3780 = vperm.xlu0 %3779, %v3762
        %v3781 = vpop.permute.xlu0 %3780
        %v3783 = vmul.f32 %v3445, %v3766
        %v3784 = vmul.f32 %v3446, %v3766
        %v3785 = vmul.f32 %v3447, %v3771
        %v3786 = vmul.f32 %v3448, %v3771
        %v3787 = vmul.f32 %v3449, %v3776
        %v3788 = vmul.f32 %v3450, %v3776
        %v3789 = vmul.f32 %v3451, %v3781
        %v3790 = vmul.f32 %v3452, %v3781
        %v3791 = vadd.f32 %v3783, %v3785
        %v3792 = vadd.f32 %v3791, %v3787
        %v3793 = vadd.f32 %v3792, %v3789
        %v3794 = vrot.slane %v3793, 4
        %v3795 = vadd.f32 %v3793, %v3794
        %v3796 = vrot.slane %v3795, 2
        %v3797 = vadd.f32 %v3795, %v3796
        %v3798 = vrot.slane %v3797, 1
        %v3799 = vadd.f32 %v3797, %v3798
        %v3800 = vadd.f32 %v3784, %v3786
        %v3801 = vadd.f32 %v3800, %v3788
        %v3802 = vadd.f32 %v3801, %v3790
        %v3803 = vrot.slane %v3802, 4
        %v3804 = vadd.f32 %v3802, %v3803
        %v3805 = vrot.slane %v3804, 2
        %v3806 = vadd.f32 %v3804, %v3805
        %v3807 = vrot.slane %v3806, 1
        %v3808 = vadd.f32 %v3806, %v3807
        %v3809 = vrcp.pop 32.0
        %v3810 = vmul.f32 %v3799, %v3809
        %v3811 = vmul.f32 %v3808, %v3809
        %v3812 = vmax.f32 %v3783, %v3787
        %v3813 = vmax.f32 %v3785, %v3789
        %v3814 = vmax.f32 %v3812, %v3813
        %v3815 = vrot.slane %v3814, 4
        %v3816 = vmax.f32 %v3814, %v3815
        %v3817 = vrot.slane %v3816, 2
        %v3818 = vmax.f32 %v3816, %v3817
        %v3819 = vrot.slane %v3818, 1
        %v3820 = vmax.f32 %v3818, %v3819
        %v3821 = vmax.f32 %v3784, %v3788
        %v3822 = vmax.f32 %v3786, %v3790
        %v3823 = vmax.f32 %v3821, %v3822
        %v3824 = vrot.slane %v3823, 4
        %v3825 = vmax.f32 %v3823, %v3824
        %v3826 = vrot.slane %v3825, 2
        %v3827 = vmax.f32 %v3825, %v3826
        %v3828 = vrot.slane %v3827, 1
        %v3829 = vmax.f32 %v3827, %v3828
        %vm3830 = vcmask 1040384
        %v3831 = vsel %vm3830, %v3810, %v3820
        %v3832 = vsel %vm3830, %v3811, %v3829
        %3835 = vrot.lane.b32.xlu0 %v3831, 51
        %v3836 = vpop.permute.xlu0 %3835
        %3837 = vrot.lane.b32.xlu0 %v3832, 51
        %v3838 = vpop.permute.xlu0 %3837
        %vm3839 = vcmask 416768
        %v3840 = vsel %vm3839, %v3836, %v3838
        %v3843 = vsel %vm3839, 0.0, %v3836
        %vm3844 = vcmp.ge.f32.partialorder %v334, 3.0
        %vm3845 = vcmp.le.f32.partialorder %v334, 18.0
        %vm3846 = vmand %vm3844, %vm3845
        %v3847 = vsel %vm3844, 1, 0
        %v3848 = vrot.slane %v3847, 5
        %v3849 = vrot.slane %v3848, 4
        %vm3850 = vcmp.ne.s32.totalorder %v3849, 0
        %vm3851 = vmand %vm3846, %vm3850
        %v3852 = vsel %vm3845, 1, 0
        %v3853 = vrot.slane %v3852, 5
        %v3854 = vrot.slane %v3853, 4
        %vm3855 = vcmp.ne.s32.totalorder %v3854, 0
        %vm3856 = vmand %vm3851, %vm3855
        %v3857 = vsel %vm3856, %v404, 0.0
        %v3859 = vlaneseq
        %v3860 = vshrl.u32 %v3859, 7
        %v3861 = vsub.s32 0, %v3860
        %v3862 = vrot.slane %v3857, %v3861
        %v3863 = vlaneseq
        %v3864 = vshrl.u32 %v3863, 7
        %v3865 = vsub.s32 4, %v3864
        %v3866 = vrot.slane %v3857, %v3865
        %v3869 = vlaneseq
        %v3870 = vshrl.u32 %v3869, 7
        %v3871 = vsub.s32 0, %v3870
        %v3872 = vrot.slane %v3862, %v3871
        %v3873 = vlaneseq
        %v3874 = vshrl.u32 %v3873, 7
        %v3875 = vsub.s32 0, %v3874
        %v3876 = vrot.slane %v3866, %v3875
        %v3877 = vmul.f32 %v3843, %v3872
        %v3878 = vmul.f32 %v3840, %v3876
        %v3879 = vld [vmem:[%s6] sm:$0x3]
        %3881 = vset.pattern.permute.xlu0 0
        %3882 = vperm.xlu0 %3881, %v3879
        %v3883 = vpop.permute.xlu0 %3882
        %v3885 = vmul.f32 %v3877, %v3883
        %v3886 = vmul.f32 %v3878, %v3883
        %v3887 = vadd.f32 %v3885, 0.0
        %v3888 = vadd.f32 %v3886, 0.0
        %3889 = vrot.lane.b32.xlu0 %v3831, 50
        %v3890 = vpop.permute.xlu0 %3889
        %3891 = vrot.lane.b32.xlu0 %v3832, 50
        %v3892 = vpop.permute.xlu0 %3891
        %vm3893 = vcmask 408576
        %v3894 = vsel %vm3893, %v3890, %v3892
        %v3897 = vsel %vm3893, 0.0, %v3890
        %vm3898 = vcmp.ge.f32.partialorder %v334, 2.0
        %v3899 = vsel %vm3898, 1, 0
        %v3900 = vrot.slane %v3899, 5
        %v3901 = vrot.slane %v3900, 4
        %vm3902 = vcmp.ne.s32.totalorder %v3901, 0
        %vm3903 = vmand %vm3846, %vm3902
        %vm3904 = vcmp.le.f32.partialorder %v334, 17.0
        %v3905 = vsel %vm3904, 1, 0
        %v3906 = vrot.slane %v3905, 5
        %v3907 = vrot.slane %v3906, 4
        %vm3908 = vcmp.ne.s32.totalorder %v3907, 0
        %vm3909 = vmand %vm3903, %vm3908
        %v3910 = vsel %vm3909, %v404, 0.0
        %v3912 = vlaneseq
        %v3913 = vshrl.u32 %v3912, 7
        %v3914 = vsub.s32 0, %v3913
        %v3915 = vrot.slane %v3910, %v3914
        %v3916 = vlaneseq
        %v3917 = vshrl.u32 %v3916, 7
        %v3918 = vsub.s32 4, %v3917
        %v3919 = vrot.slane %v3910, %v3918
        %v3922 = vlaneseq
        %v3923 = vshrl.u32 %v3922, 7
        %v3924 = vsub.s32 0, %v3923
        %v3925 = vrot.slane %v3915, %v3924
        %v3926 = vlaneseq
        %v3927 = vshrl.u32 %v3926, 7
        %v3928 = vsub.s32 0, %v3927
        %v3929 = vrot.slane %v3919, %v3928
        %v3930 = vmul.f32 %v3897, %v3925
        %v3931 = vmul.f32 %v3894, %v3929
        %s3932 = scalar_lea.vmem %s6, 2
        %v3933 = vld [vmem:[%s3932] sm:$0x3]
        %3935 = vset.pattern.permute.xlu0 0
        %3936 = vperm.xlu0 %3935, %v3933
        %v3937 = vpop.permute.xlu0 %3936
        %v3939 = vmul.f32 %v3930, %v3937
        %v3940 = vmul.f32 %v3931, %v3937
        %v3941 = vadd.f32 %v3887, %v3939
        %v3942 = vadd.f32 %v3888, %v3940
        %3943 = vrot.lane.b32.xlu0 %v3831, 49
        %v3944 = vpop.permute.xlu0 %3943
        %3945 = vrot.lane.b32.xlu0 %v3832, 49
        %v3946 = vpop.permute.xlu0 %3945
        %vm3947 = vcmask 400384
        %v3948 = vsel %vm3947, %v3944, %v3946
        %v3951 = vsel %vm3947, 0.0, %v3944
        %vm3952 = vmand %vm3846, %vm395
        %vm3953 = vmand %vm3952, %vm400
        %v3954 = vsel %vm3953, %v404, 0.0
        %v3956 = vlaneseq
        %v3957 = vshrl.u32 %v3956, 7
        %v3958 = vsub.s32 0, %v3957
        %v3959 = vrot.slane %v3954, %v3958
        %v3960 = vlaneseq
        %v3961 = vshrl.u32 %v3960, 7
        %v3962 = vsub.s32 4, %v3961
        %v3963 = vrot.slane %v3954, %v3962
        %v3966 = vlaneseq
        %v3967 = vshrl.u32 %v3966, 7
        %v3968 = vsub.s32 0, %v3967
        %v3969 = vrot.slane %v3959, %v3968
        %v3970 = vlaneseq
        %v3971 = vshrl.u32 %v3970, 7
        %v3972 = vsub.s32 0, %v3971
        %v3973 = vrot.slane %v3963, %v3972
        %v3974 = vmul.f32 %v3951, %v3969
        %v3975 = vmul.f32 %v3948, %v3973
        %s3976 = scalar_lea.vmem %s6, 4
        %v3977 = vld [vmem:[%s3976] sm:$0x3]
        %3979 = vset.pattern.permute.xlu0 0
        %3980 = vperm.xlu0 %3979, %v3977
        %v3981 = vpop.permute.xlu0 %3980
        %v3983 = vmul.f32 %v3974, %v3981
        %v3984 = vmul.f32 %v3975, %v3981
        %v3985 = vadd.f32 %v3941, %v3983
        %v3986 = vadd.f32 %v3942, %v3984
        %3987 = vrot.lane.b32.xlu0 %v3831, 48
        %v3988 = vpop.permute.xlu0 %3987
        %3989 = vrot.lane.b32.xlu0 %v3832, 48
        %v3990 = vpop.permute.xlu0 %3989
        %vm3991 = vcmask 392192
        %v3992 = vsel %vm3991, %v3988, %v3990
        %v3995 = vsel %vm3991, 0.0, %v3988
        %vm3996 = vmand %vm3846, %vm475
        %vm3997 = vmand %vm3996, %vm481
        %v3998 = vsel %vm3997, %v404, 0.0
        %v4000 = vlaneseq
        %v4001 = vshrl.u32 %v4000, 7
        %v4002 = vsub.s32 0, %v4001
        %v4003 = vrot.slane %v3998, %v4002
        %v4004 = vlaneseq
        %v4005 = vshrl.u32 %v4004, 7
        %v4006 = vsub.s32 4, %v4005
        %v4007 = vrot.slane %v3998, %v4006
        %v4010 = vlaneseq
        %v4011 = vshrl.u32 %v4010, 7
        %v4012 = vsub.s32 0, %v4011
        %v4013 = vrot.slane %v4003, %v4012
        %v4014 = vlaneseq
        %v4015 = vshrl.u32 %v4014, 7
        %v4016 = vsub.s32 0, %v4015
        %v4017 = vrot.slane %v4007, %v4016
        %v4018 = vmul.f32 %v3995, %v4013
        %v4019 = vmul.f32 %v3992, %v4017
        %s4020 = scalar_lea.vmem %s6, 6
        %v4021 = vld [vmem:[%s4020] sm:$0x3]
        %4023 = vset.pattern.permute.xlu0 0
        %4024 = vperm.xlu0 %4023, %v4021
        %v4025 = vpop.permute.xlu0 %4024
        %v4027 = vmul.f32 %v4018, %v4025
        %v4028 = vmul.f32 %v4019, %v4025
        %v4029 = vadd.f32 %v3985, %v4027
        %v4030 = vadd.f32 %v3986, %v4028
        %4031 = vrot.lane.b32.xlu0 %v3831, 47
        %v4032 = vpop.permute.xlu0 %4031
        %4033 = vrot.lane.b32.xlu0 %v3832, 47
        %v4034 = vpop.permute.xlu0 %4033
        %vm4035 = vcmask 384000
        %v4036 = vsel %vm4035, %v4032, %v4034
        %v4039 = vsel %vm4035, 0.0, %v4032
        %vm4040 = vmand %vm3846, %vm756
        %vm4041 = vmand %vm4040, %vm762
        %v4042 = vsel %vm4041, %v404, 0.0
        %v4044 = vlaneseq
        %v4045 = vshrl.u32 %v4044, 7
        %v4046 = vsub.s32 0, %v4045
        %v4047 = vrot.slane %v4042, %v4046
        %v4048 = vlaneseq
        %v4049 = vshrl.u32 %v4048, 7
        %v4050 = vsub.s32 4, %v4049
        %v4051 = vrot.slane %v4042, %v4050
        %v4054 = vlaneseq
        %v4055 = vshrl.u32 %v4054, 7
        %v4056 = vsub.s32 0, %v4055
        %v4057 = vrot.slane %v4047, %v4056
        %v4058 = vlaneseq
        %v4059 = vshrl.u32 %v4058, 7
        %v4060 = vsub.s32 0, %v4059
        %v4061 = vrot.slane %v4051, %v4060
        %v4062 = vmul.f32 %v4039, %v4057
        %v4063 = vmul.f32 %v4036, %v4061
        %s4064 = scalar_lea.vmem %s6, 8
        %v4065 = vld [vmem:[%s4064] sm:$0x3]
        %4067 = vset.pattern.permute.xlu0 0
        %4068 = vperm.xlu0 %4067, %v4065
        %v4069 = vpop.permute.xlu0 %4068
        %v4071 = vmul.f32 %v4062, %v4069
        %v4072 = vmul.f32 %v4063, %v4069
        %v4073 = vadd.f32 %v4029, %v4071
        %v4074 = vadd.f32 %v4030, %v4072
        %4075 = vrot.lane.b32.xlu0 %v3831, 46
        %v4076 = vpop.permute.xlu0 %4075
        %4077 = vrot.lane.b32.xlu0 %v3832, 46
        %v4078 = vpop.permute.xlu0 %4077
        %vm4079 = vcmask 375808
        %v4080 = vsel %vm4079, %v4076, %v4078
        %v4083 = vsel %vm4079, 0.0, %v4076
        %vm4084 = vcmp.ge.f32.partialorder %v334, -2.0
        %v4085 = vsel %vm4084, 1, 0
        %v4086 = vrot.slane %v4085, 5
        %v4087 = vrot.slane %v4086, 4
        %vm4088 = vcmp.ne.s32.totalorder %v4087, 0
        %vm4089 = vmand %vm3846, %vm4088
        %vm4090 = vcmp.le.f32.partialorder %v334, 13.0
        %v4091 = vsel %vm4090, 1, 0
        %v4092 = vrot.slane %v4091, 5
        %v4093 = vrot.slane %v4092, 4
        %vm4094 = vcmp.ne.s32.totalorder %v4093, 0
        %vm4095 = vmand %vm4089, %vm4094
        %v4096 = vsel %vm4095, %v404, 0.0
        %v4098 = vlaneseq
        %v4099 = vshrl.u32 %v4098, 7
        %v4100 = vsub.s32 0, %v4099
        %v4101 = vrot.slane %v4096, %v4100
        %v4102 = vlaneseq
        %v4103 = vshrl.u32 %v4102, 7
        %v4104 = vsub.s32 4, %v4103
        %v4105 = vrot.slane %v4096, %v4104
        %v4108 = vlaneseq
        %v4109 = vshrl.u32 %v4108, 7
        %v4110 = vsub.s32 0, %v4109
        %v4111 = vrot.slane %v4101, %v4110
        %v4112 = vlaneseq
        %v4113 = vshrl.u32 %v4112, 7
        %v4114 = vsub.s32 0, %v4113
        %v4115 = vrot.slane %v4105, %v4114
        %v4116 = vmul.f32 %v4083, %v4111
        %v4117 = vmul.f32 %v4080, %v4115
        %s4118 = scalar_lea.vmem %s6, 10
        %v4119 = vld [vmem:[%s4118] sm:$0x3]
        %4121 = vset.pattern.permute.xlu0 0
        %4122 = vperm.xlu0 %4121, %v4119
        %v4123 = vpop.permute.xlu0 %4122
        %v4125 = vmul.f32 %v4116, %v4123
        %v4126 = vmul.f32 %v4117, %v4123
        %v4127 = vadd.f32 %v4073, %v4125
        %v4128 = vadd.f32 %v4074, %v4126
        %4129 = vrot.lane.b32.xlu0 %v3831, 45
        %v4130 = vpop.permute.xlu0 %4129
        %4131 = vrot.lane.b32.xlu0 %v3832, 45
        %v4132 = vpop.permute.xlu0 %4131
        %vm4133 = vcmask 367616
        %v4134 = vsel %vm4133, %v4130, %v4132
        %v4137 = vsel %vm4133, 0.0, %v4130
        %vm4138 = vcmp.ge.f32.partialorder %v334, -3.0
        %v4139 = vsel %vm4138, 1, 0
        %v4140 = vrot.slane %v4139, 5
        %v4141 = vrot.slane %v4140, 4
        %vm4142 = vcmp.ne.s32.totalorder %v4141, 0
        %vm4143 = vmand %vm3846, %vm4142
        %vm4144 = vcmp.le.f32.partialorder %v334, 12.0
        %v4145 = vsel %vm4144, 1, 0
        %v4146 = vrot.slane %v4145, 5
        %v4147 = vrot.slane %v4146, 4
        %vm4148 = vcmp.ne.s32.totalorder %v4147, 0
        %vm4149 = vmand %vm4143, %vm4148
        %v4150 = vsel %vm4149, %v404, 0.0
        %v4152 = vlaneseq
        %v4153 = vshrl.u32 %v4152, 7
        %v4154 = vsub.s32 0, %v4153
        %v4155 = vrot.slane %v4150, %v4154
        %v4156 = vlaneseq
        %v4157 = vshrl.u32 %v4156, 7
        %v4158 = vsub.s32 4, %v4157
        %v4159 = vrot.slane %v4150, %v4158
        %v4162 = vlaneseq
        %v4163 = vshrl.u32 %v4162, 7
        %v4164 = vsub.s32 0, %v4163
        %v4165 = vrot.slane %v4155, %v4164
        %v4166 = vlaneseq
        %v4167 = vshrl.u32 %v4166, 7
        %v4168 = vsub.s32 0, %v4167
        %v4169 = vrot.slane %v4159, %v4168
        %v4170 = vmul.f32 %v4137, %v4165
        %v4171 = vmul.f32 %v4134, %v4169
        %s4172 = scalar_lea.vmem %s6, 12
        %v4173 = vld [vmem:[%s4172] sm:$0x3]
        %4175 = vset.pattern.permute.xlu0 0
        %4176 = vperm.xlu0 %4175, %v4173
        %v4177 = vpop.permute.xlu0 %4176
        %v4179 = vmul.f32 %v4170, %v4177
        %v4180 = vmul.f32 %v4171, %v4177
        %v4181 = vadd.f32 %v4127, %v4179
        %v4182 = vadd.f32 %v4128, %v4180
        %4183 = vrot.lane.b32.xlu0 %v3831, 35
        %v4184 = vpop.permute.xlu0 %4183
        %4185 = vrot.lane.b32.xlu0 %v3832, 35
        %v4186 = vpop.permute.xlu0 %4185
        %vm4187 = vcmask 285696
        %v4188 = vsel %vm4187, %v4184, %v4186
        %v4191 = vsel %vm4187, 0.0, %v4184
        %vm4192 = vmand %vm3898, %vm3904
        %vm4193 = vmand %vm4192, %vm3850
        %vm4194 = vmand %vm4193, %vm3855
        %v4195 = vsel %vm4194, %v404, 0.0
        %v4197 = vlaneseq
        %v4198 = vshrl.u32 %v4197, 7
        %v4199 = vsub.s32 0, %v4198
        %v4200 = vrot.slane %v4195, %v4199
        %v4201 = vlaneseq
        %v4202 = vshrl.u32 %v4201, 7
        %v4203 = vsub.s32 4, %v4202
        %v4204 = vrot.slane %v4195, %v4203
        %v4207 = vlaneseq
        %v4208 = vshrl.u32 %v4207, 7
        %v4209 = vsub.s32 0, %v4208
        %v4210 = vrot.slane %v4200, %v4209
        %v4211 = vlaneseq
        %v4212 = vshrl.u32 %v4211, 7
        %v4213 = vsub.s32 0, %v4212
        %v4214 = vrot.slane %v4204, %v4213
        %v4215 = vmul.f32 %v4191, %v4210
        %v4216 = vmul.f32 %v4188, %v4214
        %s4217 = scalar_lea.vmem %s6, 14
        %v4218 = vld [vmem:[%s4217] sm:$0x3]
        %4220 = vset.pattern.permute.xlu0 0
        %4221 = vperm.xlu0 %4220, %v4218
        %v4222 = vpop.permute.xlu0 %4221
        %v4224 = vmul.f32 %v4215, %v4222
        %v4225 = vmul.f32 %v4216, %v4222
        %v4226 = vadd.f32 %v4181, %v4224
        %v4227 = vadd.f32 %v4182, %v4225
        %4228 = vrot.lane.b32.xlu0 %v3831, 34
        %v4229 = vpop.permute.xlu0 %4228
        %4230 = vrot.lane.b32.xlu0 %v3832, 34
        %v4231 = vpop.permute.xlu0 %4230
        %vm4232 = vcmask 277504
        %v4233 = vsel %vm4232, %v4229, %v4231
        %v4236 = vsel %vm4232, 0.0, %v4229
        %vm4237 = vmand %vm4192, %vm3902
        %vm4238 = vmand %vm4237, %vm3908
        %v4239 = vsel %vm4238, %v404, 0.0
        %v4241 = vlaneseq
        %v4242 = vshrl.u32 %v4241, 7
        %v4243 = vsub.s32 0, %v4242
        %v4244 = vrot.slane %v4239, %v4243
        %v4245 = vlaneseq
        %v4246 = vshrl.u32 %v4245, 7
        %v4247 = vsub.s32 4, %v4246
        %v4248 = vrot.slane %v4239, %v4247
        %v4251 = vlaneseq
        %v4252 = vshrl.u32 %v4251, 7
        %v4253 = vsub.s32 0, %v4252
        %v4254 = vrot.slane %v4244, %v4253
        %v4255 = vlaneseq
        %v4256 = vshrl.u32 %v4255, 7
        %v4257 = vsub.s32 0, %v4256
        %v4258 = vrot.slane %v4248, %v4257
        %v4259 = vmul.f32 %v4236, %v4254
        %v4260 = vmul.f32 %v4233, %v4258
        %s4261 = scalar_lea.vmem %s6, 16
        %v4262 = vld [vmem:[%s4261] sm:$0x3]
        %4264 = vset.pattern.permute.xlu0 0
        %4265 = vperm.xlu0 %4264, %v4262
        %v4266 = vpop.permute.xlu0 %4265
        %v4268 = vmul.f32 %v4259, %v4266
        %v4269 = vmul.f32 %v4260, %v4266
        %v4270 = vadd.f32 %v4226, %v4268
        %v4271 = vadd.f32 %v4227, %v4269
        %4272 = vrot.lane.b32.xlu0 %v3831, 33
        %v4273 = vpop.permute.xlu0 %4272
        %4274 = vrot.lane.b32.xlu0 %v3832, 33
        %v4275 = vpop.permute.xlu0 %4274
        %vm4276 = vcmask 269312
        %v4277 = vsel %vm4276, %v4273, %v4275
        %v4280 = vsel %vm4276, 0.0, %v4273
        %vm4281 = vmand %vm4192, %vm395
        %vm4282 = vmand %vm4281, %vm400
        %v4283 = vsel %vm4282, %v404, 0.0
        %v4285 = vlaneseq
        %v4286 = vshrl.u32 %v4285, 7
        %v4287 = vsub.s32 0, %v4286
        %v4288 = vrot.slane %v4283, %v4287
        %v4289 = vlaneseq
        %v4290 = vshrl.u32 %v4289, 7
        %v4291 = vsub.s32 4, %v4290
        %v4292 = vrot.slane %v4283, %v4291
        %v4295 = vlaneseq
        %v4296 = vshrl.u32 %v4295, 7
        %v4297 = vsub.s32 0, %v4296
        %v4298 = vrot.slane %v4288, %v4297
        %v4299 = vlaneseq
        %v4300 = vshrl.u32 %v4299, 7
        %v4301 = vsub.s32 0, %v4300
        %v4302 = vrot.slane %v4292, %v4301
        %v4303 = vmul.f32 %v4280, %v4298
        %v4304 = vmul.f32 %v4277, %v4302
        %s4305 = scalar_lea.vmem %s6, 18
        %v4306 = vld [vmem:[%s4305] sm:$0x3]
        %4308 = vset.pattern.permute.xlu0 0
        %4309 = vperm.xlu0 %4308, %v4306
        %v4310 = vpop.permute.xlu0 %4309
        %v4312 = vmul.f32 %v4303, %v4310
        %v4313 = vmul.f32 %v4304, %v4310
        %v4314 = vadd.f32 %v4270, %v4312
        %v4315 = vadd.f32 %v4271, %v4313
        %4316 = vrot.lane.b32.xlu0 %v3831, 32
        %v4317 = vpop.permute.xlu0 %4316
        %4318 = vrot.lane.b32.xlu0 %v3832, 32
        %v4319 = vpop.permute.xlu0 %4318
        %v4320 = vsel %vm516, %v4317, %v4319
        %v4323 = vsel %vm516, 0.0, %v4317
        %vm4324 = vmand %vm4192, %vm475
        %vm4325 = vmand %vm4324, %vm481
        %v4326 = vsel %vm4325, %v404, 0.0
        %v4328 = vlaneseq
        %v4329 = vshrl.u32 %v4328, 7
        %v4330 = vsub.s32 0, %v4329
        %v4331 = vrot.slane %v4326, %v4330
        %v4332 = vlaneseq
        %v4333 = vshrl.u32 %v4332, 7
        %v4334 = vsub.s32 4, %v4333
        %v4335 = vrot.slane %v4326, %v4334
        %v4338 = vlaneseq
        %v4339 = vshrl.u32 %v4338, 7
        %v4340 = vsub.s32 0, %v4339
        %v4341 = vrot.slane %v4331, %v4340
        %v4342 = vlaneseq
        %v4343 = vshrl.u32 %v4342, 7
        %v4344 = vsub.s32 0, %v4343
        %v4345 = vrot.slane %v4335, %v4344
        %v4346 = vmul.f32 %v4323, %v4341
        %v4347 = vmul.f32 %v4320, %v4345
        %s4348 = scalar_lea.vmem %s6, 20
        %v4349 = vld [vmem:[%s4348] sm:$0x3]
        %4351 = vset.pattern.permute.xlu0 0
        %4352 = vperm.xlu0 %4351, %v4349
        %v4353 = vpop.permute.xlu0 %4352
        %v4355 = vmul.f32 %v4346, %v4353
        %v4356 = vmul.f32 %v4347, %v4353
        %v4357 = vadd.f32 %v4314, %v4355
        %v4358 = vadd.f32 %v4315, %v4356
        %4359 = vrot.lane.b32.xlu0 %v3831, 31
        %v4360 = vpop.permute.xlu0 %4359
        %4361 = vrot.lane.b32.xlu0 %v3832, 31
        %v4362 = vpop.permute.xlu0 %4361
        %vm4363 = vcmask 252928
        %v4364 = vsel %vm4363, %v4360, %v4362
        %v4367 = vsel %vm4363, 0.0, %v4360
        %vm4368 = vmand %vm4192, %vm756
        %vm4369 = vmand %vm4368, %vm762
        %v4370 = vsel %vm4369, %v404, 0.0
        %v4372 = vlaneseq
        %v4373 = vshrl.u32 %v4372, 7
        %v4374 = vsub.s32 0, %v4373
        %v4375 = vrot.slane %v4370, %v4374
        %v4376 = vlaneseq
        %v4377 = vshrl.u32 %v4376, 7
        %v4378 = vsub.s32 4, %v4377
        %v4379 = vrot.slane %v4370, %v4378
        %v4382 = vlaneseq
        %v4383 = vshrl.u32 %v4382, 7
        %v4384 = vsub.s32 0, %v4383
        %v4385 = vrot.slane %v4375, %v4384
        %v4386 = vlaneseq
        %v4387 = vshrl.u32 %v4386, 7
        %v4388 = vsub.s32 0, %v4387
        %v4389 = vrot.slane %v4379, %v4388
        %v4390 = vmul.f32 %v4367, %v4385
        %v4391 = vmul.f32 %v4364, %v4389
        %s4392 = scalar_lea.vmem %s6, 22
        %v4393 = vld [vmem:[%s4392] sm:$0x3]
        %4395 = vset.pattern.permute.xlu0 0
        %4396 = vperm.xlu0 %4395, %v4393
        %v4397 = vpop.permute.xlu0 %4396
        %v4399 = vmul.f32 %v4390, %v4397
        %v4400 = vmul.f32 %v4391, %v4397
        %v4401 = vadd.f32 %v4357, %v4399
        %v4402 = vadd.f32 %v4358, %v4400
        %4403 = vrot.lane.b32.xlu0 %v3831, 30
        %v4404 = vpop.permute.xlu0 %4403
        %4405 = vrot.lane.b32.xlu0 %v3832, 30
        %v4406 = vpop.permute.xlu0 %4405
        %vm4407 = vcmask 244736
        %v4408 = vsel %vm4407, %v4404, %v4406
        %v4411 = vsel %vm4407, 0.0, %v4404
        %vm4412 = vmand %vm4192, %vm4088
        %vm4413 = vmand %vm4412, %vm4094
        %v4414 = vsel %vm4413, %v404, 0.0
        %v4416 = vlaneseq
        %v4417 = vshrl.u32 %v4416, 7
        %v4418 = vsub.s32 0, %v4417
        %v4419 = vrot.slane %v4414, %v4418
        %v4420 = vlaneseq
        %v4421 = vshrl.u32 %v4420, 7
        %v4422 = vsub.s32 4, %v4421
        %v4423 = vrot.slane %v4414, %v4422
        %v4426 = vlaneseq
        %v4427 = vshrl.u32 %v4426, 7
        %v4428 = vsub.s32 0, %v4427
        %v4429 = vrot.slane %v4419, %v4428
        %v4430 = vlaneseq
        %v4431 = vshrl.u32 %v4430, 7
        %v4432 = vsub.s32 0, %v4431
        %v4433 = vrot.slane %v4423, %v4432
        %v4434 = vmul.f32 %v4411, %v4429
        %v4435 = vmul.f32 %v4408, %v4433
        %s4436 = scalar_lea.vmem %s6, 24
        %v4437 = vld [vmem:[%s4436] sm:$0x3]
        %4439 = vset.pattern.permute.xlu0 0
        %4440 = vperm.xlu0 %4439, %v4437
        %v4441 = vpop.permute.xlu0 %4440
        %v4443 = vmul.f32 %v4434, %v4441
        %v4444 = vmul.f32 %v4435, %v4441
        %v4445 = vadd.f32 %v4401, %v4443
        %v4446 = vadd.f32 %v4402, %v4444
        %4447 = vrot.lane.b32.xlu0 %v3831, 29
        %v4448 = vpop.permute.xlu0 %4447
        %4449 = vrot.lane.b32.xlu0 %v3832, 29
        %v4450 = vpop.permute.xlu0 %4449
        %vm4451 = vcmask 236544
        %v4452 = vsel %vm4451, %v4448, %v4450
        %v4455 = vsel %vm4451, 0.0, %v4448
        %vm4456 = vmand %vm4192, %vm4142
        %vm4457 = vmand %vm4456, %vm4148
        %v4458 = vsel %vm4457, %v404, 0.0
        %v4460 = vlaneseq
        %v4461 = vshrl.u32 %v4460, 7
        %v4462 = vsub.s32 0, %v4461
        %v4463 = vrot.slane %v4458, %v4462
        %v4464 = vlaneseq
        %v4465 = vshrl.u32 %v4464, 7
        %v4466 = vsub.s32 4, %v4465
        %v4467 = vrot.slane %v4458, %v4466
        %v4470 = vlaneseq
        %v4471 = vshrl.u32 %v4470, 7
        %v4472 = vsub.s32 0, %v4471
        %v4473 = vrot.slane %v4463, %v4472
        %v4474 = vlaneseq
        %v4475 = vshrl.u32 %v4474, 7
        %v4476 = vsub.s32 0, %v4475
        %v4477 = vrot.slane %v4467, %v4476
        %v4478 = vmul.f32 %v4455, %v4473
        %v4479 = vmul.f32 %v4452, %v4477
        %s4480 = scalar_lea.vmem %s6, 26
        %v4481 = vld [vmem:[%s4480] sm:$0x3]
        %4483 = vset.pattern.permute.xlu0 0
        %4484 = vperm.xlu0 %4483, %v4481
        %v4485 = vpop.permute.xlu0 %4484
        %v4487 = vmul.f32 %v4478, %v4485
        %v4488 = vmul.f32 %v4479, %v4485
        %v4489 = vadd.f32 %v4445, %v4487
        %v4490 = vadd.f32 %v4446, %v4488
        %4491 = vrot.lane.b32.xlu0 %v3831, 19
        %v4492 = vpop.permute.xlu0 %4491
        %4493 = vrot.lane.b32.xlu0 %v3832, 19
        %v4494 = vpop.permute.xlu0 %4493
        %vm4495 = vcmask 154624
        %v4496 = vsel %vm4495, %v4492, %v4494
        %v4499 = vsel %vm4495, 0.0, %v4492
        %vm4500 = vmand %vm391, %vm3850
        %vm4501 = vmand %vm4500, %vm3855
        %v4502 = vsel %vm4501, %v404, 0.0
        %v4504 = vlaneseq
        %v4505 = vshrl.u32 %v4504, 7
        %v4506 = vsub.s32 0, %v4505
        %v4507 = vrot.slane %v4502, %v4506
        %v4508 = vlaneseq
        %v4509 = vshrl.u32 %v4508, 7
        %v4510 = vsub.s32 4, %v4509
        %v4511 = vrot.slane %v4502, %v4510
        %v4514 = vlaneseq
        %v4515 = vshrl.u32 %v4514, 7
        %v4516 = vsub.s32 0, %v4515
        %v4517 = vrot.slane %v4507, %v4516
        %v4518 = vlaneseq
        %v4519 = vshrl.u32 %v4518, 7
        %v4520 = vsub.s32 0, %v4519
        %v4521 = vrot.slane %v4511, %v4520
        %v4522 = vmul.f32 %v4499, %v4517
        %v4523 = vmul.f32 %v4496, %v4521
        %s4524 = scalar_lea.vmem %s6, 28
        %v4525 = vld [vmem:[%s4524] sm:$0x3]
        %4527 = vset.pattern.permute.xlu0 0
        %4528 = vperm.xlu0 %4527, %v4525
        %v4529 = vpop.permute.xlu0 %4528
        %v4531 = vmul.f32 %v4522, %v4529
        %v4532 = vmul.f32 %v4523, %v4529
        %v4533 = vadd.f32 %v4489, %v4531
        %v4534 = vadd.f32 %v4490, %v4532
        %4535 = vrot.lane.b32.xlu0 %v3831, 18
        %v4536 = vpop.permute.xlu0 %4535
        %4537 = vrot.lane.b32.xlu0 %v3832, 18
        %v4538 = vpop.permute.xlu0 %4537
        %vm4539 = vcmask 146432
        %v4540 = vsel %vm4539, %v4536, %v4538
        %v4543 = vsel %vm4539, 0.0, %v4536
        %vm4544 = vmand %vm391, %vm3902
        %vm4545 = vmand %vm4544, %vm3908
        %v4546 = vsel %vm4545, %v404, 0.0
        %v4548 = vlaneseq
        %v4549 = vshrl.u32 %v4548, 7
        %v4550 = vsub.s32 0, %v4549
        %v4551 = vrot.slane %v4546, %v4550
        %v4552 = vlaneseq
        %v4553 = vshrl.u32 %v4552, 7
        %v4554 = vsub.s32 4, %v4553
        %v4555 = vrot.slane %v4546, %v4554
        %v4558 = vlaneseq
        %v4559 = vshrl.u32 %v4558, 7
        %v4560 = vsub.s32 0, %v4559
        %v4561 = vrot.slane %v4551, %v4560
        %v4562 = vlaneseq
        %v4563 = vshrl.u32 %v4562, 7
        %v4564 = vsub.s32 0, %v4563
        %v4565 = vrot.slane %v4555, %v4564
        %v4566 = vmul.f32 %v4543, %v4561
        %v4567 = vmul.f32 %v4540, %v4565
        %s4568 = scalar_lea.vmem %s6, 30
        %v4569 = vld [vmem:[%s4568] sm:$0x3]
        %4571 = vset.pattern.permute.xlu0 0
        %4572 = vperm.xlu0 %4571, %v4569
        %v4573 = vpop.permute.xlu0 %4572
        %v4575 = vmul.f32 %v4566, %v4573
        %v4576 = vmul.f32 %v4567, %v4573
        %v4577 = vadd.f32 %v4533, %v4575
        %v4578 = vadd.f32 %v4534, %v4576
        %4579 = vrot.lane.b32.xlu0 %v3831, 17
        %v4580 = vpop.permute.xlu0 %4579
        %4581 = vrot.lane.b32.xlu0 %v3832, 17
        %v4582 = vpop.permute.xlu0 %4581
        %v4583 = vsel %vm372, %v4580, %v4582
        %v4586 = vsel %vm372, 0.0, %v4580
        %v4587 = vmul.f32 %v4586, %v421
        %v4588 = vmul.f32 %v4583, %v425
        %s4589 = scalar_lea.vmem %s6, 32
        %v4590 = vld [vmem:[%s4589] sm:$0x3]
        %4592 = vset.pattern.permute.xlu0 0
        %4593 = vperm.xlu0 %4592, %v4590
        %v4594 = vpop.permute.xlu0 %4593
        %v4596 = vmul.f32 %v4587, %v4594
        %v4597 = vmul.f32 %v4588, %v4594
        %v4598 = vadd.f32 %v4577, %v4596
        %v4599 = vadd.f32 %v4578, %v4597
        %4600 = vrot.lane.b32.xlu0 %v3831, 16
        %v4601 = vpop.permute.xlu0 %4600
        %4602 = vrot.lane.b32.xlu0 %v3832, 16
        %v4603 = vpop.permute.xlu0 %4602
        %v4604 = vsel %vm454, %v4601, %v4603
        %v4607 = vsel %vm454, 0.0, %v4601
        %v4608 = vmul.f32 %v4607, %v498
        %v4609 = vmul.f32 %v4604, %v502
        %s4610 = scalar_lea.vmem %s6, 34
        %v4611 = vld [vmem:[%s4610] sm:$0x3]
        %4613 = vset.pattern.permute.xlu0 0
        %4614 = vperm.xlu0 %4613, %v4611
        %v4615 = vpop.permute.xlu0 %4614
        %v4617 = vmul.f32 %v4608, %v4615
        %v4618 = vmul.f32 %v4609, %v4615
        %v4619 = vadd.f32 %v4598, %v4617
        %v4620 = vadd.f32 %v4599, %v4618
        %4621 = vrot.lane.b32.xlu0 %v3831, 15
        %v4622 = vpop.permute.xlu0 %4621
        %4623 = vrot.lane.b32.xlu0 %v3832, 15
        %v4624 = vpop.permute.xlu0 %4623
        %v4625 = vsel %vm735, %v4622, %v4624
        %v4628 = vsel %vm735, 0.0, %v4622
        %v4629 = vmul.f32 %v4628, %v779
        %v4630 = vmul.f32 %v4625, %v783
        %s4631 = scalar_lea.vmem %s6, 36
        %v4632 = vld [vmem:[%s4631] sm:$0x3]
        %4634 = vset.pattern.permute.xlu0 0
        %4635 = vperm.xlu0 %4634, %v4632
        %v4636 = vpop.permute.xlu0 %4635
        %v4638 = vmul.f32 %v4629, %v4636
        %v4639 = vmul.f32 %v4630, %v4636
        %v4640 = vadd.f32 %v4619, %v4638
        %v4641 = vadd.f32 %v4620, %v4639
        %4642 = vrot.lane.b32.xlu0 %v3831, 14
        %v4643 = vpop.permute.xlu0 %4642
        %4644 = vrot.lane.b32.xlu0 %v3832, 14
        %v4645 = vpop.permute.xlu0 %4644
        %vm4646 = vcmask 113664
        %v4647 = vsel %vm4646, %v4643, %v4645
        %v4650 = vsel %vm4646, 0.0, %v4643
        %vm4651 = vmand %vm391, %vm4088
        %vm4652 = vmand %vm4651, %vm4094
        %v4653 = vsel %vm4652, %v404, 0.0
        %v4655 = vlaneseq
        %v4656 = vshrl.u32 %v4655, 7
        %v4657 = vsub.s32 0, %v4656
        %v4658 = vrot.slane %v4653, %v4657
        %v4659 = vlaneseq
        %v4660 = vshrl.u32 %v4659, 7
        %v4661 = vsub.s32 4, %v4660
        %v4662 = vrot.slane %v4653, %v4661
        %v4665 = vlaneseq
        %v4666 = vshrl.u32 %v4665, 7
        %v4667 = vsub.s32 0, %v4666
        %v4668 = vrot.slane %v4658, %v4667
        %v4669 = vlaneseq
        %v4670 = vshrl.u32 %v4669, 7
        %v4671 = vsub.s32 0, %v4670
        %v4672 = vrot.slane %v4662, %v4671
        %v4673 = vmul.f32 %v4650, %v4668
        %v4674 = vmul.f32 %v4647, %v4672
        %s4675 = scalar_lea.vmem %s6, 38
        %v4676 = vld [vmem:[%s4675] sm:$0x3]
        %4678 = vset.pattern.permute.xlu0 0
        %4679 = vperm.xlu0 %4678, %v4676
        %v4680 = vpop.permute.xlu0 %4679
        %v4682 = vmul.f32 %v4673, %v4680
        %v4683 = vmul.f32 %v4674, %v4680
        %v4684 = vadd.f32 %v4640, %v4682
        %v4685 = vadd.f32 %v4641, %v4683
        %4686 = vrot.lane.b32.xlu0 %v3831, 13
        %v4687 = vpop.permute.xlu0 %4686
        %4688 = vrot.lane.b32.xlu0 %v3832, 13
        %v4689 = vpop.permute.xlu0 %4688
        %vm4690 = vcmask 105472
        %v4691 = vsel %vm4690, %v4687, %v4689
        %v4694 = vsel %vm4690, 0.0, %v4687
        %vm4695 = vmand %vm391, %vm4142
        %vm4696 = vmand %vm4695, %vm4148
        %v4697 = vsel %vm4696, %v404, 0.0
        %v4699 = vlaneseq
        %v4700 = vshrl.u32 %v4699, 7
        %v4701 = vsub.s32 0, %v4700
        %v4702 = vrot.slane %v4697, %v4701
        %v4703 = vlaneseq
        %v4704 = vshrl.u32 %v4703, 7
        %v4705 = vsub.s32 4, %v4704
        %v4706 = vrot.slane %v4697, %v4705
        %v4709 = vlaneseq
        %v4710 = vshrl.u32 %v4709, 7
        %v4711 = vsub.s32 0, %v4710
        %v4712 = vrot.slane %v4702, %v4711
        %v4713 = vlaneseq
        %v4714 = vshrl.u32 %v4713, 7
        %v4715 = vsub.s32 0, %v4714
        %v4716 = vrot.slane %v4706, %v4715
        %v4717 = vmul.f32 %v4694, %v4712
        %v4718 = vmul.f32 %v4691, %v4716
        %s4719 = scalar_lea.vmem %s6, 40
        %v4720 = vld [vmem:[%s4719] sm:$0x3]
        %4722 = vset.pattern.permute.xlu0 0
        %4723 = vperm.xlu0 %4722, %v4720
        %v4724 = vpop.permute.xlu0 %4723
        %v4726 = vmul.f32 %v4717, %v4724
        %v4727 = vmul.f32 %v4718, %v4724
        %v4728 = vadd.f32 %v4684, %v4726
        %v4729 = vadd.f32 %v4685, %v4727
        %4730 = vrot.lane.b32.xlu0 %v3831, 3
        %v4731 = vpop.permute.xlu0 %4730
        %4732 = vrot.lane.b32.xlu0 %v3832, 3
        %v4733 = vpop.permute.xlu0 %4732
        %vm4734 = vcmask 23552
        %v4735 = vsel %vm4734, %v4731, %v4733
        %v4738 = vsel %vm4734, 0.0, %v4731
        %vm4739 = vmand %vm939, %vm3850
        %vm4740 = vmand %vm4739, %vm3855
        %v4741 = vsel %vm4740, %v404, 0.0
        %v4743 = vlaneseq
        %v4744 = vshrl.u32 %v4743, 7
        %v4745 = vsub.s32 0, %v4744
        %v4746 = vrot.slane %v4741, %v4745
        %v4747 = vlaneseq
        %v4748 = vshrl.u32 %v4747, 7
        %v4749 = vsub.s32 4, %v4748
        %v4750 = vrot.slane %v4741, %v4749
        %v4753 = vlaneseq
        %v4754 = vshrl.u32 %v4753, 7
        %v4755 = vsub.s32 0, %v4754
        %v4756 = vrot.slane %v4746, %v4755
        %v4757 = vlaneseq
        %v4758 = vshrl.u32 %v4757, 7
        %v4759 = vsub.s32 0, %v4758
        %v4760 = vrot.slane %v4750, %v4759
        %v4761 = vmul.f32 %v4738, %v4756
        %v4762 = vmul.f32 %v4735, %v4760
        %s4763 = scalar_lea.vmem %s6, 42
        %v4764 = vld [vmem:[%s4763] sm:$0x3]
        %4766 = vset.pattern.permute.xlu0 0
        %4767 = vperm.xlu0 %4766, %v4764
        %v4768 = vpop.permute.xlu0 %4767
        %v4770 = vmul.f32 %v4761, %v4768
        %v4771 = vmul.f32 %v4762, %v4768
        %v4772 = vadd.f32 %v4728, %v4770
        %v4773 = vadd.f32 %v4729, %v4771
        %4774 = vrot.lane.b32.xlu0 %v3831, 2
        %v4775 = vpop.permute.xlu0 %4774
        %4776 = vrot.lane.b32.xlu0 %v3832, 2
        %v4777 = vpop.permute.xlu0 %4776
        %v4778 = vsel %vm3617, %v4775, %v4777
        %v4781 = vsel %vm3617, 0.0, %v4775
        %vm4782 = vmand %vm939, %vm3902
        %vm4783 = vmand %vm4782, %vm3908
        %v4784 = vsel %vm4783, %v404, 0.0
        %v4786 = vlaneseq
        %v4787 = vshrl.u32 %v4786, 7
        %v4788 = vsub.s32 0, %v4787
        %v4789 = vrot.slane %v4784, %v4788
        %v4790 = vlaneseq
        %v4791 = vshrl.u32 %v4790, 7
        %v4792 = vsub.s32 4, %v4791
        %v4793 = vrot.slane %v4784, %v4792
        %v4796 = vlaneseq
        %v4797 = vshrl.u32 %v4796, 7
        %v4798 = vsub.s32 0, %v4797
        %v4799 = vrot.slane %v4789, %v4798
        %v4800 = vlaneseq
        %v4801 = vshrl.u32 %v4800, 7
        %v4802 = vsub.s32 0, %v4801
        %v4803 = vrot.slane %v4793, %v4802
        %v4804 = vmul.f32 %v4781, %v4799
        %v4805 = vmul.f32 %v4778, %v4803
        %s4806 = scalar_lea.vmem %s6, 44
        %v4807 = vld [vmem:[%s4806] sm:$0x3]
        %4809 = vset.pattern.permute.xlu0 0
        %4810 = vperm.xlu0 %4809, %v4807
        %v4811 = vpop.permute.xlu0 %4810
        %v4813 = vmul.f32 %v4804, %v4811
        %v4814 = vmul.f32 %v4805, %v4811
        %v4815 = vadd.f32 %v4772, %v4813
        %v4816 = vadd.f32 %v4773, %v4814
        %4817 = vrot.lane.b32.xlu0 %v3831, 1
        %v4818 = vpop.permute.xlu0 %4817
        %4819 = vrot.lane.b32.xlu0 %v3832, 1
        %v4820 = vpop.permute.xlu0 %4819
        %v4821 = vsel %vm922, %v4818, %v4820
        %v4824 = vsel %vm922, 0.0, %v4818
        %v4825 = vmul.f32 %v4824, %v957
        %v4826 = vmul.f32 %v4821, %v961
        %s4827 = scalar_lea.vmem %s6, 46
        %v4828 = vld [vmem:[%s4827] sm:$0x3]
        %4830 = vset.pattern.permute.xlu0 0
        %4831 = vperm.xlu0 %4830, %v4828
        %v4832 = vpop.permute.xlu0 %4831
        %v4834 = vmul.f32 %v4825, %v4832
        %v4835 = vmul.f32 %v4826, %v4832
        %v4836 = vadd.f32 %v4815, %v4834
        %v4837 = vadd.f32 %v4816, %v4835
        %v4838 = vmul.f32 %v3831, %v1101
        %v4839 = vmul.f32 %v3832, %v1105
        %s4840 = scalar_lea.vmem %s6, 48
        %v4841 = vld [vmem:[%s4840] sm:$0x3]
        %4843 = vset.pattern.permute.xlu0 0
        %4844 = vperm.xlu0 %4843, %v4841
        %v4845 = vpop.permute.xlu0 %4844
        %v4847 = vmul.f32 %v4838, %v4845
        %v4848 = vmul.f32 %v4839, %v4845
        %v4849 = vadd.f32 %v4836, %v4847
        %v4850 = vadd.f32 %v4837, %v4848
        %4851 = vrot.lane.b32.xlu0 %v3831, 127
        %v4852 = vpop.permute.xlu0 %4851
        %4853 = vrot.lane.b32.xlu0 %v3832, 127
        %v4854 = vpop.permute.xlu0 %4853
        %v4855 = vsel %vm1244, %v4852, %v4854
        %v4858 = vsel %vm1244, %v4854, 0.0
        %v4859 = vmul.f32 %v4855, %v1278
        %v4860 = vmul.f32 %v4858, %v1282
        %s4861 = scalar_lea.vmem %s6, 50
        %v4862 = vld [vmem:[%s4861] sm:$0x3]
        %4864 = vset.pattern.permute.xlu0 0
        %4865 = vperm.xlu0 %4864, %v4862
        %v4866 = vpop.permute.xlu0 %4865
        %v4868 = vmul.f32 %v4859, %v4866
        %v4869 = vmul.f32 %v4860, %v4866
        %v4870 = vadd.f32 %v4849, %v4868
        %v4871 = vadd.f32 %v4850, %v4869
        %4872 = vrot.lane.b32.xlu0 %v3831, 126
        %v4873 = vpop.permute.xlu0 %4872
        %4874 = vrot.lane.b32.xlu0 %v3832, 126
        %v4875 = vpop.permute.xlu0 %4874
        %vm4876 = vcmask 1031168
        %v4877 = vsel %vm4876, %v4873, %v4875
        %v4880 = vsel %vm4876, %v4875, 0.0
        %vm4881 = vmand %vm939, %vm4088
        %vm4882 = vmand %vm4881, %vm4094
        %v4883 = vsel %vm4882, %v404, 0.0
        %v4885 = vlaneseq
        %v4886 = vshrl.u32 %v4885, 7
        %v4887 = vsub.s32 0, %v4886
        %v4888 = vrot.slane %v4883, %v4887
        %v4889 = vlaneseq
        %v4890 = vshrl.u32 %v4889, 7
        %v4891 = vsub.s32 4, %v4890
        %v4892 = vrot.slane %v4883, %v4891
        %v4895 = vlaneseq
        %v4896 = vshrl.u32 %v4895, 7
        %v4897 = vsub.s32 0, %v4896
        %v4898 = vrot.slane %v4888, %v4897
        %v4899 = vlaneseq
        %v4900 = vshrl.u32 %v4899, 7
        %v4901 = vsub.s32 0, %v4900
        %v4902 = vrot.slane %v4892, %v4901
        %v4903 = vmul.f32 %v4877, %v4898
        %v4904 = vmul.f32 %v4880, %v4902
        %s4905 = scalar_lea.vmem %s6, 52
        %v4906 = vld [vmem:[%s4905] sm:$0x3]
        %4908 = vset.pattern.permute.xlu0 0
        %4909 = vperm.xlu0 %4908, %v4906
        %v4910 = vpop.permute.xlu0 %4909
        %v4912 = vmul.f32 %v4903, %v4910
        %v4913 = vmul.f32 %v4904, %v4910
        %v4914 = vadd.f32 %v4870, %v4912
        %v4915 = vadd.f32 %v4871, %v4913
        %4916 = vrot.lane.b32.xlu0 %v3831, 125
        %v4917 = vpop.permute.xlu0 %4916
        %4918 = vrot.lane.b32.xlu0 %v3832, 125
        %v4919 = vpop.permute.xlu0 %4918
        %vm4920 = vcmask 1022976
        %v4921 = vsel %vm4920, %v4917, %v4919
        %v4924 = vsel %vm4920, %v4919, 0.0
        %vm4925 = vmand %vm939, %vm4142
        %vm4926 = vmand %vm4925, %vm4148
        %v4927 = vsel %vm4926, %v404, 0.0
        %v4929 = vlaneseq
        %v4930 = vshrl.u32 %v4929, 7
        %v4931 = vsub.s32 0, %v4930
        %v4932 = vrot.slane %v4927, %v4931
        %v4933 = vlaneseq
        %v4934 = vshrl.u32 %v4933, 7
        %v4935 = vsub.s32 4, %v4934
        %v4936 = vrot.slane %v4927, %v4935
        %v4939 = vlaneseq
        %v4940 = vshrl.u32 %v4939, 7
        %v4941 = vsub.s32 0, %v4940
        %v4942 = vrot.slane %v4932, %v4941
        %v4943 = vlaneseq
        %v4944 = vshrl.u32 %v4943, 7
        %v4945 = vsub.s32 0, %v4944
        %v4946 = vrot.slane %v4936, %v4945
        %v4947 = vmul.f32 %v4921, %v4942
        %v4948 = vmul.f32 %v4924, %v4946
        %s4949 = scalar_lea.vmem %s6, 54
        %v4950 = vld [vmem:[%s4949] sm:$0x3]
        %4952 = vset.pattern.permute.xlu0 0
        %4953 = vperm.xlu0 %4952, %v4950
        %v4954 = vpop.permute.xlu0 %4953
        %v4956 = vmul.f32 %v4947, %v4954
        %v4957 = vmul.f32 %v4948, %v4954
        %v4958 = vadd.f32 %v4914, %v4956
        %v4959 = vadd.f32 %v4915, %v4957
        %4960 = vrot.lane.b32.xlu0 %v3831, 115
        %v4961 = vpop.permute.xlu0 %4960
        %4962 = vrot.lane.b32.xlu0 %v3832, 115
        %v4963 = vpop.permute.xlu0 %4962
        %vm4964 = vcmask 941056
        %v4965 = vsel %vm4964, %v4961, %v4963
        %v4968 = vsel %vm4964, %v4963, 0.0
        %vm4969 = vmand %vm1438, %vm3850
        %vm4970 = vmand %vm4969, %vm3855
        %v4971 = vsel %vm4970, %v404, 0.0
        %v4973 = vlaneseq
        %v4974 = vshrl.u32 %v4973, 7
        %v4975 = vsub.s32 0, %v4974
        %v4976 = vrot.slane %v4971, %v4975
        %v4977 = vlaneseq
        %v4978 = vshrl.u32 %v4977, 7
        %v4979 = vsub.s32 4, %v4978
        %v4980 = vrot.slane %v4971, %v4979
        %v4983 = vlaneseq
        %v4984 = vshrl.u32 %v4983, 7
        %v4985 = vsub.s32 0, %v4984
        %v4986 = vrot.slane %v4976, %v4985
        %v4987 = vlaneseq
        %v4988 = vshrl.u32 %v4987, 7
        %v4989 = vsub.s32 0, %v4988
        %v4990 = vrot.slane %v4980, %v4989
        %v4991 = vmul.f32 %v4965, %v4986
        %v4992 = vmul.f32 %v4968, %v4990
        %s4993 = scalar_lea.vmem %s6, 56
        %v4994 = vld [vmem:[%s4993] sm:$0x3]
        %4996 = vset.pattern.permute.xlu0 0
        %4997 = vperm.xlu0 %4996, %v4994
        %v4998 = vpop.permute.xlu0 %4997
        %v5000 = vmul.f32 %v4991, %v4998
        %v5001 = vmul.f32 %v4992, %v4998
        %v5002 = vadd.f32 %v4958, %v5000
        %v5003 = vadd.f32 %v4959, %v5001
        %5004 = vrot.lane.b32.xlu0 %v3831, 114
        %v5005 = vpop.permute.xlu0 %5004
        %5006 = vrot.lane.b32.xlu0 %v3832, 114
        %v5007 = vpop.permute.xlu0 %5006
        %vm5008 = vcmask 932864
        %v5009 = vsel %vm5008, %v5005, %v5007
        %v5012 = vsel %vm5008, %v5007, 0.0
        %vm5013 = vmand %vm1438, %vm3902
        %vm5014 = vmand %vm5013, %vm3908
        %v5015 = vsel %vm5014, %v404, 0.0
        %v5017 = vlaneseq
        %v5018 = vshrl.u32 %v5017, 7
        %v5019 = vsub.s32 0, %v5018
        %v5020 = vrot.slane %v5015, %v5019
        %v5021 = vlaneseq
        %v5022 = vshrl.u32 %v5021, 7
        %v5023 = vsub.s32 4, %v5022
        %v5024 = vrot.slane %v5015, %v5023
        %v5027 = vlaneseq
        %v5028 = vshrl.u32 %v5027, 7
        %v5029 = vsub.s32 0, %v5028
        %v5030 = vrot.slane %v5020, %v5029
        %v5031 = vlaneseq
        %v5032 = vshrl.u32 %v5031, 7
        %v5033 = vsub.s32 0, %v5032
        %v5034 = vrot.slane %v5024, %v5033
        %v5035 = vmul.f32 %v5009, %v5030
        %v5036 = vmul.f32 %v5012, %v5034
        %s5037 = scalar_lea.vmem %s6, 58
        %v5038 = vld [vmem:[%s5037] sm:$0x3]
        %5040 = vset.pattern.permute.xlu0 0
        %5041 = vperm.xlu0 %5040, %v5038
        %v5042 = vpop.permute.xlu0 %5041
        %v5044 = vmul.f32 %v5035, %v5042
        %v5045 = vmul.f32 %v5036, %v5042
        %v5046 = vadd.f32 %v5002, %v5044
        %v5047 = vadd.f32 %v5003, %v5045
        %5048 = vrot.lane.b32.xlu0 %v3831, 113
        %v5049 = vpop.permute.xlu0 %5048
        %5050 = vrot.lane.b32.xlu0 %v3832, 113
        %v5051 = vpop.permute.xlu0 %5050
        %v5052 = vsel %vm1421, %v5049, %v5051
        %v5055 = vsel %vm1421, %v5051, 0.0
        %v5056 = vmul.f32 %v5052, %v1456
        %v5057 = vmul.f32 %v5055, %v1460
        %s5058 = scalar_lea.vmem %s6, 60
        %v5059 = vld [vmem:[%s5058] sm:$0x3]
        %5061 = vset.pattern.permute.xlu0 0
        %5062 = vperm.xlu0 %5061, %v5059
        %v5063 = vpop.permute.xlu0 %5062
        %v5065 = vmul.f32 %v5056, %v5063
        %v5066 = vmul.f32 %v5057, %v5063
        %v5067 = vadd.f32 %v5046, %v5065
        %v5068 = vadd.f32 %v5047, %v5066
        %5069 = vrot.lane.b32.xlu0 %v3831, 112
        %v5070 = vpop.permute.xlu0 %5069
        %5071 = vrot.lane.b32.xlu0 %v3832, 112
        %v5072 = vpop.permute.xlu0 %5071
        %v5073 = vsel %vm1599, %v5070, %v5072
        %v5076 = vsel %vm1599, %v5072, 0.0
        %v5077 = vmul.f32 %v5073, %v1633
        %v5078 = vmul.f32 %v5076, %v1637
        %s5079 = scalar_lea.vmem %s6, 62
        %v5080 = vld [vmem:[%s5079] sm:$0x3]
        %5082 = vset.pattern.permute.xlu0 0
        %5083 = vperm.xlu0 %5082, %v5080
        %v5084 = vpop.permute.xlu0 %5083
        %v5086 = vmul.f32 %v5077, %v5084
        %v5087 = vmul.f32 %v5078, %v5084
        %v5088 = vadd.f32 %v5067, %v5086
        %v5089 = vadd.f32 %v5068, %v5087
        %5090 = vrot.lane.b32.xlu0 %v3831, 111
        %v5091 = vpop.permute.xlu0 %5090
        %5092 = vrot.lane.b32.xlu0 %v3832, 111
        %v5093 = vpop.permute.xlu0 %5092
        %v5094 = vsel %vm1776, %v5091, %v5093
        %v5097 = vsel %vm1776, %v5093, 0.0
        %v5098 = vmul.f32 %v5094, %v1810
        %v5099 = vmul.f32 %v5097, %v1814
        %s5100 = scalar_lea.vmem %s6, 64
        %v5101 = vld [vmem:[%s5100] sm:$0x3]
        %5103 = vset.pattern.permute.xlu0 0
        %5104 = vperm.xlu0 %5103, %v5101
        %v5105 = vpop.permute.xlu0 %5104
        %v5107 = vmul.f32 %v5098, %v5105
        %v5108 = vmul.f32 %v5099, %v5105
        %v5109 = vadd.f32 %v5088, %v5107
        %v5110 = vadd.f32 %v5089, %v5108
        %5111 = vrot.lane.b32.xlu0 %v3831, 110
        %v5112 = vpop.permute.xlu0 %5111
        %5113 = vrot.lane.b32.xlu0 %v3832, 110
        %v5114 = vpop.permute.xlu0 %5113
        %vm5115 = vcmask 900096
        %v5116 = vsel %vm5115, %v5112, %v5114
        %v5119 = vsel %vm5115, %v5114, 0.0
        %vm5120 = vmand %vm1438, %vm4088
        %vm5121 = vmand %vm5120, %vm4094
        %v5122 = vsel %vm5121, %v404, 0.0
        %v5124 = vlaneseq
        %v5125 = vshrl.u32 %v5124, 7
        %v5126 = vsub.s32 0, %v5125
        %v5127 = vrot.slane %v5122, %v5126
        %v5128 = vlaneseq
        %v5129 = vshrl.u32 %v5128, 7
        %v5130 = vsub.s32 4, %v5129
        %v5131 = vrot.slane %v5122, %v5130
        %v5134 = vlaneseq
        %v5135 = vshrl.u32 %v5134, 7
        %v5136 = vsub.s32 0, %v5135
        %v5137 = vrot.slane %v5127, %v5136
        %v5138 = vlaneseq
        %v5139 = vshrl.u32 %v5138, 7
        %v5140 = vsub.s32 0, %v5139
        %v5141 = vrot.slane %v5131, %v5140
        %v5142 = vmul.f32 %v5116, %v5137
        %v5143 = vmul.f32 %v5119, %v5141
        %s5144 = scalar_lea.vmem %s6, 66
        %v5145 = vld [vmem:[%s5144] sm:$0x3]
        %5147 = vset.pattern.permute.xlu0 0
        %5148 = vperm.xlu0 %5147, %v5145
        %v5149 = vpop.permute.xlu0 %5148
        %v5151 = vmul.f32 %v5142, %v5149
        %v5152 = vmul.f32 %v5143, %v5149
        %v5153 = vadd.f32 %v5109, %v5151
        %v5154 = vadd.f32 %v5110, %v5152
        %5155 = vrot.lane.b32.xlu0 %v3831, 109
        %v5156 = vpop.permute.xlu0 %5155
        %5157 = vrot.lane.b32.xlu0 %v3832, 109
        %v5158 = vpop.permute.xlu0 %5157
        %vm5159 = vcmask 891904
        %v5160 = vsel %vm5159, %v5156, %v5158
        %v5163 = vsel %vm5159, %v5158, 0.0
        %vm5164 = vmand %vm1438, %vm4142
        %vm5165 = vmand %vm5164, %vm4148
        %v5166 = vsel %vm5165, %v404, 0.0
        %v5168 = vlaneseq
        %v5169 = vshrl.u32 %v5168, 7
        %v5170 = vsub.s32 0, %v5169
        %v5171 = vrot.slane %v5166, %v5170
        %v5172 = vlaneseq
        %v5173 = vshrl.u32 %v5172, 7
        %v5174 = vsub.s32 4, %v5173
        %v5175 = vrot.slane %v5166, %v5174
        %v5178 = vlaneseq
        %v5179 = vshrl.u32 %v5178, 7
        %v5180 = vsub.s32 0, %v5179
        %v5181 = vrot.slane %v5171, %v5180
        %v5182 = vlaneseq
        %v5183 = vshrl.u32 %v5182, 7
        %v5184 = vsub.s32 0, %v5183
        %v5185 = vrot.slane %v5175, %v5184
        %v5186 = vmul.f32 %v5160, %v5181
        %v5187 = vmul.f32 %v5163, %v5185
        %s5188 = scalar_lea.vmem %s6, 68
        %v5189 = vld [vmem:[%s5188] sm:$0x3]
        %5191 = vset.pattern.permute.xlu0 0
        %5192 = vperm.xlu0 %5191, %v5189
        %v5193 = vpop.permute.xlu0 %5192
        %v5195 = vmul.f32 %v5186, %v5193
        %v5196 = vmul.f32 %v5187, %v5193
        %v5197 = vadd.f32 %v5153, %v5195
        %v5198 = vadd.f32 %v5154, %v5196
        %5199 = vrot.lane.b32.xlu0 %v3831, 99
        %v5200 = vpop.permute.xlu0 %5199
        %5201 = vrot.lane.b32.xlu0 %v3832, 99
        %v5202 = vpop.permute.xlu0 %5201
        %vm5203 = vcmask 809984
        %v5204 = vsel %vm5203, %v5200, %v5202
        %v5207 = vsel %vm5203, %v5202, 0.0
        %vm5208 = vmand %vm4084, %vm4090
        %vm5209 = vmand %vm5208, %vm3850
        %vm5210 = vmand %vm5209, %vm3855
        %v5211 = vsel %vm5210, %v404, 0.0
        %v5213 = vlaneseq
        %v5214 = vshrl.u32 %v5213, 7
        %v5215 = vsub.s32 0, %v5214
        %v5216 = vrot.slane %v5211, %v5215
        %v5217 = vlaneseq
        %v5218 = vshrl.u32 %v5217, 7
        %v5219 = vsub.s32 4, %v5218
        %v5220 = vrot.slane %v5211, %v5219
        %v5223 = vlaneseq
        %v5224 = vshrl.u32 %v5223, 7
        %v5225 = vsub.s32 0, %v5224
        %v5226 = vrot.slane %v5216, %v5225
        %v5227 = vlaneseq
        %v5228 = vshrl.u32 %v5227, 7
        %v5229 = vsub.s32 0, %v5228
        %v5230 = vrot.slane %v5220, %v5229
        %v5231 = vmul.f32 %v5204, %v5226
        %v5232 = vmul.f32 %v5207, %v5230
        %s5233 = scalar_lea.vmem %s6, 70
        %v5234 = vld [vmem:[%s5233] sm:$0x3]
        %5236 = vset.pattern.permute.xlu0 0
        %5237 = vperm.xlu0 %5236, %v5234
        %v5238 = vpop.permute.xlu0 %5237
        %v5240 = vmul.f32 %v5231, %v5238
        %v5241 = vmul.f32 %v5232, %v5238
        %v5242 = vadd.f32 %v5197, %v5240
        %v5243 = vadd.f32 %v5198, %v5241
        %5244 = vrot.lane.b32.xlu0 %v3831, 98
        %v5245 = vpop.permute.xlu0 %5244
        %5246 = vrot.lane.b32.xlu0 %v3832, 98
        %v5247 = vpop.permute.xlu0 %5246
        %vm5248 = vcmask 801792
        %v5249 = vsel %vm5248, %v5245, %v5247
        %v5252 = vsel %vm5248, %v5247, 0.0
        %vm5253 = vmand %vm5208, %vm3902
        %vm5254 = vmand %vm5253, %vm3908
        %v5255 = vsel %vm5254, %v404, 0.0
        %v5257 = vlaneseq
        %v5258 = vshrl.u32 %v5257, 7
        %v5259 = vsub.s32 0, %v5258
        %v5260 = vrot.slane %v5255, %v5259
        %v5261 = vlaneseq
        %v5262 = vshrl.u32 %v5261, 7
        %v5263 = vsub.s32 4, %v5262
        %v5264 = vrot.slane %v5255, %v5263
        %v5267 = vlaneseq
        %v5268 = vshrl.u32 %v5267, 7
        %v5269 = vsub.s32 0, %v5268
        %v5270 = vrot.slane %v5260, %v5269
        %v5271 = vlaneseq
        %v5272 = vshrl.u32 %v5271, 7
        %v5273 = vsub.s32 0, %v5272
        %v5274 = vrot.slane %v5264, %v5273
        %v5275 = vmul.f32 %v5249, %v5270
        %v5276 = vmul.f32 %v5252, %v5274
        %s5277 = scalar_lea.vmem %s6, 72
        %v5278 = vld [vmem:[%s5277] sm:$0x3]
        %5280 = vset.pattern.permute.xlu0 0
        %5281 = vperm.xlu0 %5280, %v5278
        %v5282 = vpop.permute.xlu0 %5281
        %v5284 = vmul.f32 %v5275, %v5282
        %v5285 = vmul.f32 %v5276, %v5282
        %v5286 = vadd.f32 %v5242, %v5284
        %v5287 = vadd.f32 %v5243, %v5285
        %5288 = vrot.lane.b32.xlu0 %v3831, 97
        %v5289 = vpop.permute.xlu0 %5288
        %5290 = vrot.lane.b32.xlu0 %v3832, 97
        %v5291 = vpop.permute.xlu0 %5290
        %vm5292 = vcmask 793600
        %v5293 = vsel %vm5292, %v5289, %v5291
        %v5296 = vsel %vm5292, %v5291, 0.0
        %vm5297 = vmand %vm5208, %vm395
        %vm5298 = vmand %vm5297, %vm400
        %v5299 = vsel %vm5298, %v404, 0.0
        %v5301 = vlaneseq
        %v5302 = vshrl.u32 %v5301, 7
        %v5303 = vsub.s32 0, %v5302
        %v5304 = vrot.slane %v5299, %v5303
        %v5305 = vlaneseq
        %v5306 = vshrl.u32 %v5305, 7
        %v5307 = vsub.s32 4, %v5306
        %v5308 = vrot.slane %v5299, %v5307
        %v5311 = vlaneseq
        %v5312 = vshrl.u32 %v5311, 7
        %v5313 = vsub.s32 0, %v5312
        %v5314 = vrot.slane %v5304, %v5313
        %v5315 = vlaneseq
        %v5316 = vshrl.u32 %v5315, 7
        %v5317 = vsub.s32 0, %v5316
        %v5318 = vrot.slane %v5308, %v5317
        %v5319 = vmul.f32 %v5293, %v5314
        %v5320 = vmul.f32 %v5296, %v5318
        %s5321 = scalar_lea.vmem %s6, 74
        %v5322 = vld [vmem:[%s5321] sm:$0x3]
        %5324 = vset.pattern.permute.xlu0 0
        %5325 = vperm.xlu0 %5324, %v5322
        %v5326 = vpop.permute.xlu0 %5325
        %v5328 = vmul.f32 %v5319, %v5326
        %v5329 = vmul.f32 %v5320, %v5326
        %v5330 = vadd.f32 %v5286, %v5328
        %v5331 = vadd.f32 %v5287, %v5329
        %5332 = vrot.lane.b32.xlu0 %v3831, 96
        %v5333 = vpop.permute.xlu0 %5332
        %5334 = vrot.lane.b32.xlu0 %v3832, 96
        %v5335 = vpop.permute.xlu0 %5334
        %vm5336 = vcmask 785408
        %v5337 = vsel %vm5336, %v5333, %v5335
        %v5340 = vsel %vm5336, %v5335, 0.0
        %vm5341 = vmand %vm5208, %vm475
        %vm5342 = vmand %vm5341, %vm481
        %v5343 = vsel %vm5342, %v404, 0.0
        %v5345 = vlaneseq
        %v5346 = vshrl.u32 %v5345, 7
        %v5347 = vsub.s32 0, %v5346
        %v5348 = vrot.slane %v5343, %v5347
        %v5349 = vlaneseq
        %v5350 = vshrl.u32 %v5349, 7
        %v5351 = vsub.s32 4, %v5350
        %v5352 = vrot.slane %v5343, %v5351
        %v5355 = vlaneseq
        %v5356 = vshrl.u32 %v5355, 7
        %v5357 = vsub.s32 0, %v5356
        %v5358 = vrot.slane %v5348, %v5357
        %v5359 = vlaneseq
        %v5360 = vshrl.u32 %v5359, 7
        %v5361 = vsub.s32 0, %v5360
        %v5362 = vrot.slane %v5352, %v5361
        %v5363 = vmul.f32 %v5337, %v5358
        %v5364 = vmul.f32 %v5340, %v5362
        %s5365 = scalar_lea.vmem %s6, 76
        %v5366 = vld [vmem:[%s5365] sm:$0x3]
        %5368 = vset.pattern.permute.xlu0 0
        %5369 = vperm.xlu0 %5368, %v5366
        %v5370 = vpop.permute.xlu0 %5369
        %v5372 = vmul.f32 %v5363, %v5370
        %v5373 = vmul.f32 %v5364, %v5370
        %v5374 = vadd.f32 %v5330, %v5372
        %v5375 = vadd.f32 %v5331, %v5373
        %5376 = vrot.lane.b32.xlu0 %v3831, 95
        %v5377 = vpop.permute.xlu0 %5376
        %5378 = vrot.lane.b32.xlu0 %v3832, 95
        %v5379 = vpop.permute.xlu0 %5378
        %vm5380 = vcmask 777216
        %v5381 = vsel %vm5380, %v5377, %v5379
        %v5384 = vsel %vm5380, %v5379, 0.0
        %vm5385 = vmand %vm5208, %vm756
        %vm5386 = vmand %vm5385, %vm762
        %v5387 = vsel %vm5386, %v404, 0.0
        %v5389 = vlaneseq
        %v5390 = vshrl.u32 %v5389, 7
        %v5391 = vsub.s32 0, %v5390
        %v5392 = vrot.slane %v5387, %v5391
        %v5393 = vlaneseq
        %v5394 = vshrl.u32 %v5393, 7
        %v5395 = vsub.s32 4, %v5394
        %v5396 = vrot.slane %v5387, %v5395
        %v5399 = vlaneseq
        %v5400 = vshrl.u32 %v5399, 7
        %v5401 = vsub.s32 0, %v5400
        %v5402 = vrot.slane %v5392, %v5401
        %v5403 = vlaneseq
        %v5404 = vshrl.u32 %v5403, 7
        %v5405 = vsub.s32 0, %v5404
        %v5406 = vrot.slane %v5396, %v5405
        %v5407 = vmul.f32 %v5381, %v5402
        %v5408 = vmul.f32 %v5384, %v5406
        %s5409 = scalar_lea.vmem %s6, 78
        %v5410 = vld [vmem:[%s5409] sm:$0x3]
        %5412 = vset.pattern.permute.xlu0 0
        %5413 = vperm.xlu0 %5412, %v5410
        %v5414 = vpop.permute.xlu0 %5413
        %v5416 = vmul.f32 %v5407, %v5414
        %v5417 = vmul.f32 %v5408, %v5414
        %v5418 = vadd.f32 %v5374, %v5416
        %v5419 = vadd.f32 %v5375, %v5417
        %5420 = vrot.lane.b32.xlu0 %v3831, 94
        %v5421 = vpop.permute.xlu0 %5420
        %5422 = vrot.lane.b32.xlu0 %v3832, 94
        %v5423 = vpop.permute.xlu0 %5422
        %vm5424 = vcmask 769024
        %v5425 = vsel %vm5424, %v5421, %v5423
        %v5428 = vsel %vm5424, %v5423, 0.0
        %vm5429 = vmand %vm5208, %vm4088
        %vm5430 = vmand %vm5429, %vm4094
        %v5431 = vsel %vm5430, %v404, 0.0
        %v5433 = vlaneseq
        %v5434 = vshrl.u32 %v5433, 7
        %v5435 = vsub.s32 0, %v5434
        %v5436 = vrot.slane %v5431, %v5435
        %v5437 = vlaneseq
        %v5438 = vshrl.u32 %v5437, 7
        %v5439 = vsub.s32 4, %v5438
        %v5440 = vrot.slane %v5431, %v5439
        %v5443 = vlaneseq
        %v5444 = vshrl.u32 %v5443, 7
        %v5445 = vsub.s32 0, %v5444
        %v5446 = vrot.slane %v5436, %v5445
        %v5447 = vlaneseq
        %v5448 = vshrl.u32 %v5447, 7
        %v5449 = vsub.s32 0, %v5448
        %v5450 = vrot.slane %v5440, %v5449
        %v5451 = vmul.f32 %v5425, %v5446
        %v5452 = vmul.f32 %v5428, %v5450
        %s5453 = scalar_lea.vmem %s6, 80
        %v5454 = vld [vmem:[%s5453] sm:$0x3]
        %5456 = vset.pattern.permute.xlu0 0
        %5457 = vperm.xlu0 %5456, %v5454
        %v5458 = vpop.permute.xlu0 %5457
        %v5460 = vmul.f32 %v5451, %v5458
        %v5461 = vmul.f32 %v5452, %v5458
        %v5462 = vadd.f32 %v5418, %v5460
        %v5463 = vadd.f32 %v5419, %v5461
        %5464 = vrot.lane.b32.xlu0 %v3831, 93
        %v5465 = vpop.permute.xlu0 %5464
        %5466 = vrot.lane.b32.xlu0 %v3832, 93
        %v5467 = vpop.permute.xlu0 %5466
        %vm5468 = vcmask 760832
        %v5469 = vsel %vm5468, %v5465, %v5467
        %v5472 = vsel %vm5468, %v5467, 0.0
        %vm5473 = vmand %vm5208, %vm4142
        %vm5474 = vmand %vm5473, %vm4148
        %v5475 = vsel %vm5474, %v404, 0.0
        %v5477 = vlaneseq
        %v5478 = vshrl.u32 %v5477, 7
        %v5479 = vsub.s32 0, %v5478
        %v5480 = vrot.slane %v5475, %v5479
        %v5481 = vlaneseq
        %v5482 = vshrl.u32 %v5481, 7
        %v5483 = vsub.s32 4, %v5482
        %v5484 = vrot.slane %v5475, %v5483
        %v5487 = vlaneseq
        %v5488 = vshrl.u32 %v5487, 7
        %v5489 = vsub.s32 0, %v5488
        %v5490 = vrot.slane %v5480, %v5489
        %v5491 = vlaneseq
        %v5492 = vshrl.u32 %v5491, 7
        %v5493 = vsub.s32 0, %v5492
        %v5494 = vrot.slane %v5484, %v5493
        %v5495 = vmul.f32 %v5469, %v5490
        %v5496 = vmul.f32 %v5472, %v5494
        %s5497 = scalar_lea.vmem %s6, 82
        %v5498 = vld [vmem:[%s5497] sm:$0x3]
        %5500 = vset.pattern.permute.xlu0 0
        %5501 = vperm.xlu0 %5500, %v5498
        %v5502 = vpop.permute.xlu0 %5501
        %v5504 = vmul.f32 %v5495, %v5502
        %v5505 = vmul.f32 %v5496, %v5502
        %v5506 = vadd.f32 %v5462, %v5504
        %v5507 = vadd.f32 %v5463, %v5505
        %5508 = vrot.lane.b32.xlu0 %v3831, 83
        %v5509 = vpop.permute.xlu0 %5508
        %5510 = vrot.lane.b32.xlu0 %v3832, 83
        %v5511 = vpop.permute.xlu0 %5510
        %vm5512 = vcmask 678912
        %v5513 = vsel %vm5512, %v5509, %v5511
        %v5516 = vsel %vm5512, %v5511, 0.0
        %vm5517 = vmand %vm4138, %vm4144
        %vm5518 = vmand %vm5517, %vm3850
        %vm5519 = vmand %vm5518, %vm3855
        %v5520 = vsel %vm5519, %v404, 0.0
        %v5522 = vlaneseq
        %v5523 = vshrl.u32 %v5522, 7
        %v5524 = vsub.s32 0, %v5523
        %v5525 = vrot.slane %v5520, %v5524
        %v5526 = vlaneseq
        %v5527 = vshrl.u32 %v5526, 7
        %v5528 = vsub.s32 4, %v5527
        %v5529 = vrot.slane %v5520, %v5528
        %v5532 = vlaneseq
        %v5533 = vshrl.u32 %v5532, 7
        %v5534 = vsub.s32 0, %v5533
        %v5535 = vrot.slane %v5525, %v5534
        %v5536 = vlaneseq
        %v5537 = vshrl.u32 %v5536, 7
        %v5538 = vsub.s32 0, %v5537
        %v5539 = vrot.slane %v5529, %v5538
        %v5540 = vmul.f32 %v5513, %v5535
        %v5541 = vmul.f32 %v5516, %v5539
        %s5542 = scalar_lea.vmem %s6, 84
        %v5543 = vld [vmem:[%s5542] sm:$0x3]
        %5545 = vset.pattern.permute.xlu0 0
        %5546 = vperm.xlu0 %5545, %v5543
        %v5547 = vpop.permute.xlu0 %5546
        %v5549 = vmul.f32 %v5540, %v5547
        %v5550 = vmul.f32 %v5541, %v5547
        %v5551 = vadd.f32 %v5506, %v5549
        %v5552 = vadd.f32 %v5507, %v5550
        %5553 = vrot.lane.b32.xlu0 %v3831, 82
        %v5554 = vpop.permute.xlu0 %5553
        %5555 = vrot.lane.b32.xlu0 %v3832, 82
        %v5556 = vpop.permute.xlu0 %5555
        %vm5557 = vcmask 670720
        %v5558 = vsel %vm5557, %v5554, %v5556
        %v5561 = vsel %vm5557, %v5556, 0.0
        %vm5562 = vmand %vm5517, %vm3902
        %vm5563 = vmand %vm5562, %vm3908
        %v5564 = vsel %vm5563, %v404, 0.0
        %v5566 = vlaneseq
        %v5567 = vshrl.u32 %v5566, 7
        %v5568 = vsub.s32 0, %v5567
        %v5569 = vrot.slane %v5564, %v5568
        %v5570 = vlaneseq
        %v5571 = vshrl.u32 %v5570, 7
        %v5572 = vsub.s32 4, %v5571
        %v5573 = vrot.slane %v5564, %v5572
        %v5576 = vlaneseq
        %v5577 = vshrl.u32 %v5576, 7
        %v5578 = vsub.s32 0, %v5577
        %v5579 = vrot.slane %v5569, %v5578
        %v5580 = vlaneseq
        %v5581 = vshrl.u32 %v5580, 7
        %v5582 = vsub.s32 0, %v5581
        %v5583 = vrot.slane %v5573, %v5582
        %v5584 = vmul.f32 %v5558, %v5579
        %v5585 = vmul.f32 %v5561, %v5583
        %s5586 = scalar_lea.vmem %s6, 86
        %v5587 = vld [vmem:[%s5586] sm:$0x3]
        %5589 = vset.pattern.permute.xlu0 0
        %5590 = vperm.xlu0 %5589, %v5587
        %v5591 = vpop.permute.xlu0 %5590
        %v5593 = vmul.f32 %v5584, %v5591
        %v5594 = vmul.f32 %v5585, %v5591
        %v5595 = vadd.f32 %v5551, %v5593
        %v5596 = vadd.f32 %v5552, %v5594
        %5597 = vrot.lane.b32.xlu0 %v3831, 81
        %v5598 = vpop.permute.xlu0 %5597
        %5599 = vrot.lane.b32.xlu0 %v3832, 81
        %v5600 = vpop.permute.xlu0 %5599
        %vm5601 = vcmask 662528
        %v5602 = vsel %vm5601, %v5598, %v5600
        %v5605 = vsel %vm5601, %v5600, 0.0
        %vm5606 = vmand %vm5517, %vm395
        %vm5607 = vmand %vm5606, %vm400
        %v5608 = vsel %vm5607, %v404, 0.0
        %v5610 = vlaneseq
        %v5611 = vshrl.u32 %v5610, 7
        %v5612 = vsub.s32 0, %v5611
        %v5613 = vrot.slane %v5608, %v5612
        %v5614 = vlaneseq
        %v5615 = vshrl.u32 %v5614, 7
        %v5616 = vsub.s32 4, %v5615
        %v5617 = vrot.slane %v5608, %v5616
        %v5620 = vlaneseq
        %v5621 = vshrl.u32 %v5620, 7
        %v5622 = vsub.s32 0, %v5621
        %v5623 = vrot.slane %v5613, %v5622
        %v5624 = vlaneseq
        %v5625 = vshrl.u32 %v5624, 7
        %v5626 = vsub.s32 0, %v5625
        %v5627 = vrot.slane %v5617, %v5626
        %v5628 = vmul.f32 %v5602, %v5623
        %v5629 = vmul.f32 %v5605, %v5627
        %s5630 = scalar_lea.vmem %s6, 88
        %v5631 = vld [vmem:[%s5630] sm:$0x3]
        %5633 = vset.pattern.permute.xlu0 0
        %5634 = vperm.xlu0 %5633, %v5631
        %v5635 = vpop.permute.xlu0 %5634
        %v5637 = vmul.f32 %v5628, %v5635
        %v5638 = vmul.f32 %v5629, %v5635
        %v5639 = vadd.f32 %v5595, %v5637
        %v5640 = vadd.f32 %v5596, %v5638
        %5641 = vrot.lane.b32.xlu0 %v3831, 80
        %v5642 = vpop.permute.xlu0 %5641
        %5643 = vrot.lane.b32.xlu0 %v3832, 80
        %v5644 = vpop.permute.xlu0 %5643
        %vm5645 = vcmask 654336
        %v5646 = vsel %vm5645, %v5642, %v5644
        %v5649 = vsel %vm5645, %v5644, 0.0
        %vm5650 = vmand %vm5517, %vm475
        %vm5651 = vmand %vm5650, %vm481
        %v5652 = vsel %vm5651, %v404, 0.0
        %v5654 = vlaneseq
        %v5655 = vshrl.u32 %v5654, 7
        %v5656 = vsub.s32 0, %v5655
        %v5657 = vrot.slane %v5652, %v5656
        %v5658 = vlaneseq
        %v5659 = vshrl.u32 %v5658, 7
        %v5660 = vsub.s32 4, %v5659
        %v5661 = vrot.slane %v5652, %v5660
        %v5664 = vlaneseq
        %v5665 = vshrl.u32 %v5664, 7
        %v5666 = vsub.s32 0, %v5665
        %v5667 = vrot.slane %v5657, %v5666
        %v5668 = vlaneseq
        %v5669 = vshrl.u32 %v5668, 7
        %v5670 = vsub.s32 0, %v5669
        %v5671 = vrot.slane %v5661, %v5670
        %v5672 = vmul.f32 %v5646, %v5667
        %v5673 = vmul.f32 %v5649, %v5671
        %s5674 = scalar_lea.vmem %s6, 90
        %v5675 = vld [vmem:[%s5674] sm:$0x3]
        %5677 = vset.pattern.permute.xlu0 0
        %5678 = vperm.xlu0 %5677, %v5675
        %v5679 = vpop.permute.xlu0 %5678
        %v5681 = vmul.f32 %v5672, %v5679
        %v5682 = vmul.f32 %v5673, %v5679
        %v5683 = vadd.f32 %v5639, %v5681
        %v5684 = vadd.f32 %v5640, %v5682
        %5685 = vrot.lane.b32.xlu0 %v3831, 79
        %v5686 = vpop.permute.xlu0 %5685
        %5687 = vrot.lane.b32.xlu0 %v3832, 79
        %v5688 = vpop.permute.xlu0 %5687
        %vm5689 = vcmask 646144
        %v5690 = vsel %vm5689, %v5686, %v5688
        %v5693 = vsel %vm5689, %v5688, 0.0
        %vm5694 = vmand %vm5517, %vm756
        %vm5695 = vmand %vm5694, %vm762
        %v5696 = vsel %vm5695, %v404, 0.0
        %v5698 = vlaneseq
        %v5699 = vshrl.u32 %v5698, 7
        %v5700 = vsub.s32 0, %v5699
        %v5701 = vrot.slane %v5696, %v5700
        %v5702 = vlaneseq
        %v5703 = vshrl.u32 %v5702, 7
        %v5704 = vsub.s32 4, %v5703
        %v5705 = vrot.slane %v5696, %v5704
        %v5708 = vlaneseq
        %v5709 = vshrl.u32 %v5708, 7
        %v5710 = vsub.s32 0, %v5709
        %v5711 = vrot.slane %v5701, %v5710
        %v5712 = vlaneseq
        %v5713 = vshrl.u32 %v5712, 7
        %v5714 = vsub.s32 0, %v5713
        %v5715 = vrot.slane %v5705, %v5714
        %v5716 = vmul.f32 %v5690, %v5711
        %v5717 = vmul.f32 %v5693, %v5715
        %s5718 = scalar_lea.vmem %s6, 92
        %v5719 = vld [vmem:[%s5718] sm:$0x3]
        %5721 = vset.pattern.permute.xlu0 0
        %5722 = vperm.xlu0 %5721, %v5719
        %v5723 = vpop.permute.xlu0 %5722
        %v5725 = vmul.f32 %v5716, %v5723
        %v5726 = vmul.f32 %v5717, %v5723
        %v5727 = vadd.f32 %v5683, %v5725
        %v5728 = vadd.f32 %v5684, %v5726
        %5729 = vrot.lane.b32.xlu0 %v3831, 78
        %v5730 = vpop.permute.xlu0 %5729
        %5731 = vrot.lane.b32.xlu0 %v3832, 78
        %v5732 = vpop.permute.xlu0 %5731
        %vm5733 = vcmask 637952
        %v5734 = vsel %vm5733, %v5730, %v5732
        %v5737 = vsel %vm5733, %v5732, 0.0
        %vm5738 = vmand %vm5517, %vm4088
        %vm5739 = vmand %vm5738, %vm4094
        %v5740 = vsel %vm5739, %v404, 0.0
        %v5742 = vlaneseq
        %v5743 = vshrl.u32 %v5742, 7
        %v5744 = vsub.s32 0, %v5743
        %v5745 = vrot.slane %v5740, %v5744
        %v5746 = vlaneseq
        %v5747 = vshrl.u32 %v5746, 7
        %v5748 = vsub.s32 4, %v5747
        %v5749 = vrot.slane %v5740, %v5748
        %v5752 = vlaneseq
        %v5753 = vshrl.u32 %v5752, 7
        %v5754 = vsub.s32 0, %v5753
        %v5755 = vrot.slane %v5745, %v5754
        %v5756 = vlaneseq
        %v5757 = vshrl.u32 %v5756, 7
        %v5758 = vsub.s32 0, %v5757
        %v5759 = vrot.slane %v5749, %v5758
        %v5760 = vmul.f32 %v5734, %v5755
        %v5761 = vmul.f32 %v5737, %v5759
        %s5762 = scalar_lea.vmem %s6, 94
        %v5763 = vld [vmem:[%s5762] sm:$0x3]
        %5765 = vset.pattern.permute.xlu0 0
        %5766 = vperm.xlu0 %5765, %v5763
        %v5767 = vpop.permute.xlu0 %5766
        %v5769 = vmul.f32 %v5760, %v5767
        %v5770 = vmul.f32 %v5761, %v5767
        %v5771 = vadd.f32 %v5727, %v5769
        %v5772 = vadd.f32 %v5728, %v5770
        %5773 = vrot.lane.b32.xlu0 %v3831, 77
        %v5774 = vpop.permute.xlu0 %5773
        %5775 = vrot.lane.b32.xlu0 %v3832, 77
        %v5776 = vpop.permute.xlu0 %5775
        %vm5777 = vcmask 629760
        %v5778 = vsel %vm5777, %v5774, %v5776
        %v5781 = vsel %vm5777, %v5776, 0.0
        %vm5782 = vmand %vm5517, %vm4142
        %vm5783 = vmand %vm5782, %vm4148
        %v5784 = vsel %vm5783, %v404, 0.0
        %v5786 = vlaneseq
        %v5787 = vshrl.u32 %v5786, 7
        %v5788 = vsub.s32 0, %v5787
        %v5789 = vrot.slane %v5784, %v5788
        %v5790 = vlaneseq
        %v5791 = vshrl.u32 %v5790, 7
        %v5792 = vsub.s32 4, %v5791
        %v5793 = vrot.slane %v5784, %v5792
        %v5796 = vlaneseq
        %v5797 = vshrl.u32 %v5796, 7
        %v5798 = vsub.s32 0, %v5797
        %v5799 = vrot.slane %v5789, %v5798
        %v5800 = vlaneseq
        %v5801 = vshrl.u32 %v5800, 7
        %v5802 = vsub.s32 0, %v5801
        %v5803 = vrot.slane %v5793, %v5802
        %v5804 = vmul.f32 %v5778, %v5799
        %v5805 = vmul.f32 %v5781, %v5803
        %s5806 = scalar_lea.vmem %s6, 96
        %v5807 = vld [vmem:[%s5806] sm:$0x3]
        %5809 = vset.pattern.permute.xlu0 0
        %5810 = vperm.xlu0 %5809, %v5807
        %v5811 = vpop.permute.xlu0 %5810
        %v5813 = vmul.f32 %v5804, %v5811
        %v5814 = vmul.f32 %v5805, %v5811
        %v5815 = vadd.f32 %v5771, %v5813
        %v5816 = vadd.f32 %v5772, %v5814
        %v5817 = vsel %vm3630, %v5815, 0.0
        %v5818 = vrot.slane %v5817, 4
        %v5819 = vadd.f32 %v5817, %v5818
        %v5820 = vrot.slane %v5819, 2
        %v5821 = vadd.f32 %v5819, %v5820
        %v5822 = vrot.slane %v5821, 1
        %v5823 = vadd.f32 %v5821, %v5822
        %v5824 = vsel %vm3630, %v5816, 0.0
        %v5825 = vrot.slane %v5824, 4
        %v5826 = vadd.f32 %v5824, %v5825
        %v5827 = vrot.slane %v5826, 2
        %v5828 = vadd.f32 %v5826, %v5827
        %v5829 = vrot.slane %v5828, 1
        %v5830 = vadd.f32 %v5828, %v5829
        %v5831 = vxor.u32 %v5823, 2147483648
        %v5832 = vxor.u32 %v5830, 2147483648
        %v5833 = vmul.f32 %v5831, 1.442695
        %v5834 = vpow.pop %v5833
        %v5835 = vmul.f32 %v5832, 1.442695
        %v5836 = vpow.pop %v5835
        %v5837 = vadd.f32 %v5834, 1.0
        %v5838 = vadd.f32 %v5836, 1.0
        %v5839 = vrcp.pop %v5837
        %v5840 = vmul.f32 1.0, %v5839
        %v5841 = vrcp.pop %v5838
        %v5842 = vmul.f32 1.0, %v5841
        %v5843 = vmul.f32 %v3783, %v5840
        %v5844 = vmul.f32 %v3784, %v5842
        %v5845 = vmul.f32 %v3785, %v5840
        %v5846 = vmul.f32 %v3786, %v5842
        %v5847 = vmul.f32 %v3787, %v5840
        %v5848 = vmul.f32 %v3788, %v5842
        %v5849 = vmul.f32 %v3789, %v5840
        %v5850 = vmul.f32 %v3790, %v5842
        %v5851 = vadd.f32 %v340, %v5843
        %v5852 = vadd.f32 %v341, %v5844
        %v5853 = vadd.f32 %v342, %v5845
        %v5854 = vadd.f32 %v343, %v5846
        %v5855 = vadd.f32 %v344, %v5847
        %v5856 = vadd.f32 %v345, %v5848
        %v5857 = vadd.f32 %v346, %v5849
        %v5858 = vadd.f32 %v347, %v5850
        %v5859 = vmul.f32 %v5851, 0.5
        %v5860 = vmul.f32 %v5852, 0.5
        %v5861 = vmul.f32 %v5853, 0.5
        %v5862 = vmul.f32 %v5854, 0.5
        %v5863 = vmul.f32 %v5855, 0.5
        %v5864 = vmul.f32 %v5856, 0.5
        %v5865 = vmul.f32 %v5857, 0.5
        %v5866 = vmul.f32 %v5858, 0.5
        %v5867 = vmul.f32 %v5851, 0.70710677
        %v5868 = vmul.f32 %v5852, 0.70710677
        %v5869 = vmul.f32 %v5853, 0.70710677
        %v5870 = vmul.f32 %v5854, 0.70710677
        %v5871 = vmul.f32 %v5855, 0.70710677
        %v5872 = vmul.f32 %v5856, 0.70710677
        %v5873 = vmul.f32 %v5857, 0.70710677
        %v5874 = vmul.f32 %v5858, 0.70710677
        %v5875 = verf.f32.pop %v5867
        %v5876 = verf.f32.pop %v5868
        %v5877 = verf.f32.pop %v5869
        %v5878 = verf.f32.pop %v5870
        %v5879 = verf.f32.pop %v5871
        %v5880 = verf.f32.pop %v5872
        %v5881 = verf.f32.pop %v5873
        %v5882 = verf.f32.pop %v5874
        %v5883 = vadd.f32 %v5875, 1.0
        %v5884 = vadd.f32 %v5876, 1.0
        %v5885 = vadd.f32 %v5877, 1.0
        %v5886 = vadd.f32 %v5878, 1.0
        %v5887 = vadd.f32 %v5879, 1.0
        %v5888 = vadd.f32 %v5880, 1.0
        %v5889 = vadd.f32 %v5881, 1.0
        %v5890 = vadd.f32 %v5882, 1.0
        %v5891 = vmul.f32 %v5859, %v5883
        %v5892 = vmul.f32 %v5860, %v5884
        %v5893 = vmul.f32 %v5861, %v5885
        %v5894 = vmul.f32 %v5862, %v5886
        %v5895 = vmul.f32 %v5863, %v5887
        %v5896 = vmul.f32 %v5864, %v5888
        %v5897 = vmul.f32 %v5865, %v5889
        %v5898 = vmul.f32 %v5866, %v5890
        %5899 = vst [vmem:[%s328] sm:$0xff] %v5891
        %5900 = vst [vmem:[%s328 + $0x8] sm:$0xff] %v5892
        %5901 = vst [vmem:[%s328 + $0x10] sm:$0xff] %v5893
        %5902 = vst [vmem:[%s328 + $0x18] sm:$0xff] %v5894
        %5903 = vst [vmem:[%s328 + $0x20] sm:$0xff] %v5895
        %5904 = vst [vmem:[%s328 + $0x28] sm:$0xff] %v5896
        %5905 = vst [vmem:[%s328 + $0x30] sm:$0xff] %v5897
        %5906 = vst [vmem:[%s328 + $0x38] sm:$0xff] %v5898
        %s5907 = sand.u32 %s205, 1
        %s5908 = scalar_lea.sflag [#allocation4], %s5907
        %s5909 = sand.u32 %s205, 1
        %s5910 = smul.addr %s5909, 64
        %s5911 = scalar_lea.vmem [#allocation7], %s5910
        // Predicated region
        $region61: #{tpu_custom_call.1} parent=51 // pred_check
          %p5912 = pneg %p215
        $region62: #{tpu_custom_call.1} parent=51 // pred_check_branch
          %5914 = sbr.rel (%p5912) target = $region64
        $region63: #{tpu_custom_call.1} parent=51 // pred_region
          %s5916 = ssub.s32 1024, 1024
          %5917 = vsyncadd %s5908, %s5916
          %s5918 = smul.addr %s24, 8
          %s5919 = smul.addr %s5918, 128
          %s5920 = scalar_lea.hbm %s8, %s5919
          %s5921 = sshll.u32 %s5911, 4
          %s5922 = int_to_ptr.vmem [resolvable:$true] %s5921
          %5927 = dma.vmem_to_hbm [thread:$0]  %s5922, 1024, %s5920, %s5908, 256, 256, 16
        $region64: #{tpu_custom_call.1} parent=51 // pred_fallthru
          _
      $region52: #{tpu_custom_call.1} parent=5 // pred_fallthru
        _
      %p5928 = scmp.le.s32.totalorder 2, %s19
      // Predicated region
      $region65: #{tpu_custom_call.1} parent=5 // pred_check
        %p5929 = pneg %p5928
      $region66: #{tpu_custom_call.1} parent=5 // pred_check_branch
        %5931 = sbr.rel (%p5929) target = $region68
      $region67: #{tpu_custom_call.1} parent=5 // pred_region
        %s5932 = ssub.s32 %s19, 2
        // Predicated region
        $region69: #{tpu_custom_call.1} parent=67 // pred_check
          %p5933 = pneg %p221
        $region70: #{tpu_custom_call.1} parent=67 // pred_check_branch
          %5935 = sbr.rel (%p5933) target = $region72
        $region71: #{tpu_custom_call.1} parent=67 // pred_region
          %s5936 = sand.u32 %s206, 1
          %s5937 = scalar_lea.sflag [#allocation4], %s5936
          %s5938 = sand.u32 %s206, 1
          %s5939 = smul.addr %s5938, 64
          %s5940 = scalar_lea.vmem [#allocation7], %s5939
          %5941 = dma.done %s5937, 1024
        $region72: #{tpu_custom_call.1} parent=67 // pred_fallthru
          _
      $region68: #{tpu_custom_call.1} parent=5 // pred_fallthru
        _
    $region6: #{tpu_custom_call.1} parent=1 // loop_footer
      %s23 = sadd.s32 1, %s19
    $region7: #{tpu_custom_call.1} parent=1 // loop_footer_branch
      %18 = sbr.rel target = $region3
    $region8: #{tpu_custom_call.1} parent=1 // loop_exit
      _
    %5942 = vsyncpa [#allocation3], 1
    %s5943 = scalar_lea.sflag [#allocation3], 1
    %5944 = vsyncpa %s5943, 1
    %5945 = vsyncpa [#allocation6], 1
    %5946 = vsyncpa [#allocation4], 1
    %s5947 = scalar_lea.sflag [#allocation4], 1
    %5948 = vsyncpa %s5947, 1

</llo_original>
